<compile_context>
chip_gen: v5e
topology: v5e:2x2
jax: 0.10.0
libtpu: 0.0.40
codegen_flags: <defaults>
</compile_context>

<pallas_src>
import functools

import jax
import jax.numpy as jnp
from jax import lax
from jax.experimental import pallas as pl
from jax.experimental.pallas import tpu as pltpu

EPS = 1e-5


def _resblock_kernel(x_ref, w1_ref, w2_ref, o_ref, pad_ref, *, compute_dtype):
    # x_ref  : (B, H, W, C)   input block (also provides the residual)
    # w*_ref : (9, C, C)      3x3 weights, tap-major (HWIO reshaped)
    # o_ref  : (B, H, W, C)
    # pad_ref: (H+2, W, C)    compute_dtype scratch, zero rows at 0 and H+1,
    #                         reused by both convs of every image in the block.
    B, H, W, C = x_ref.shape
    HW = H * W

    # Zero only the two halo rows once; the interior is rewritten every conv.
    pad_ref[0:1] = jnp.zeros((1, W, C), compute_dtype)
    pad_ref[H + 1:H + 2] = jnp.zeros((1, W, C), compute_dtype)

    # Column-shift masks (hoisted once).  After rolling a flattened (HW, C)
    # tap by +/-1 along sublanes, the only positions that differ from a true
    # per-row shift are exactly the w==0 / w==W-1 columns, which the conv's
    # zero W-padding requires to be zero anyway.
    col = lax.broadcasted_iota(jnp.int32, (H, W, C), 1).reshape(HW, C)
    left_keep = (col != 0).astype(compute_dtype)        # zeroes column w == 0
    right_keep = (col != W - 1).astype(compute_dtype)   # zeroes column w == W-1

    def conv3x3(src_hwc, w_ref):
        # 9 accumulating matmuls, one per tap.  Taps are aligned outer-dim
        # slices of the H-padded scratch; W shifts go through the XLU roll +
        # mask (no misaligned sublane slices, no materialized im2col).
        pad_ref[1:H + 1] = src_hwc.astype(compute_dtype)
        acc = jnp.zeros((HW, C), jnp.float32)
        for t in range(9):
            ki, kj = divmod(t, 3)
            tap = pad_ref[ki:ki + H].reshape(HW, C)
            if kj == 0:        # dx = -1: output column w reads column w-1
                tap = pltpu.roll(tap, 1, axis=0) * left_keep
            elif kj == 2:      # dx = +1: output column w reads column w+1
                tap = pltpu.roll(tap, HW - 1, axis=0) * right_keep
            acc = acc + jnp.dot(tap, w_ref[t],
                                preferred_element_type=jnp.float32)
        return acc

    def instance_norm(y):
        # y: (HW, C) f32; per-channel biased stats over HW (centered two-pass
        # for robustness); rsqrt runs on the EUP.
        mean = jnp.mean(y, axis=0, keepdims=True)
        cen = y - mean
        var = jnp.mean(cen * cen, axis=0, keepdims=True)
        return cen * lax.rsqrt(var + EPS)

    for b in range(B):
        # conv1 -> IN -> ReLU  (conv bias omitted: cancelled exactly by IN mean)
        y1 = jnp.maximum(instance_norm(conv3x3(x_ref[b], w1_ref)), 0.0)
        # conv2 -> IN
        y2 = instance_norm(conv3x3(y1.reshape(H, W, C), w2_ref))
        # residual add (re-read the input block; f32 math, cast on store)
        o_ref[b] = (y2.reshape(H, W, C)
                    + x_ref[b].astype(jnp.float32)).astype(o_ref.dtype)


def _vmem_bytes_estimate(bt, H, W, C, io_itemsize, cd_itemsize):
    hw = H * W
    return int(1.3 * (
        2 * 2 * bt * hw * C * io_itemsize     # double-buffered in + out blocks
        + 2 * 2 * 9 * C * C * cd_itemsize     # double-buffered weight blocks
        + (H + 2) * W * C * cd_itemsize       # H-padded scratch (shared)
        + 2 * hw * C * cd_itemsize            # roll masks
        + 5 * hw * C * 4))                    # live f32 activations / accumulator


def _vmem_cap_bytes():
    # Generation-aware cap (v5e/v6e: 128 MiB, v7x: 64 MiB per TensorCore);
    # leave ~25% headroom for the compiler's own buffers.
    try:
        cap = int(pltpu.get_tpu_info().vmem_capacity_bytes)
    except Exception:
        cap = 64 * 1024 * 1024
    return (3 * cap) // 4


@functools.partial(jax.jit, static_argnames=("compute_dtype", "batch_tile"))
def residual_block(x_nchw, w1_hwio, b1, w2_hwio, b2, *,
                   compute_dtype=jnp.bfloat16, batch_tile=None):
    """x_nchw: (N, C, H, W); weights HWIO (3,3,C,C); biases (C,).

    Biases are accepted for API parity with the PyTorch module but unused: a
    per-channel bias added immediately before InstanceNorm2d (affine=False) is
    exactly cancelled by the mean subtraction.  compute_dtype controls the MXU
    operand dtype (bf16 default: the v5e MXU is bf16-only and it is ~2x faster
    on v6e/v7x); all normalization / ReLU / residual math stays f32.
    """
    del b1, b2
    N, C, H, W = x_nchw.shape
    x = jnp.transpose(x_nchw, (0, 2, 3, 1))                  # NHWC, C on lanes

    w1 = w1_hwio.reshape(9, C, C).astype(compute_dtype)      # tap-major
    w2 = w2_hwio.reshape(9, C, C).astype(compute_dtype)
    cd_itemsize = jnp.dtype(compute_dtype).itemsize

    # Batch-tile small images: several images per grid step amortize the
    # ~0.35us per-step overhead and raise MXU occupancy.
    if batch_tile is None:
        per_img = (4 * H * W * C * x.dtype.itemsize          # dbuf'd in + out
                   + 5 * H * W * C * 4)                      # live f32 temporaries
        batch_tile = max(1, min(N, (8 * 1024 * 1024) // max(per_img, 1)))
        while N % batch_tile:
            batch_tile -= 1
    assert N % batch_tile == 0, (N, batch_tile)

    kernel = functools.partial(_resblock_kernel, compute_dtype=compute_dtype)

    compiler_kwargs = dict(dimension_semantics=("parallel",))
    est = _vmem_bytes_estimate(batch_tile, H, W, C, x.dtype.itemsize,
                               cd_itemsize)
    if est > 32 * 1024 * 1024:
        # TODO(synk): switch to row-band spatial tiling (halo + two-pass IN)
        # for very large images instead of only raising the VMEM budget.
        compiler_kwargs["vmem_limit_bytes"] = int(min(est, _vmem_cap_bytes()))

    out_nhwc = pl.pallas_call(
        kernel,
        out_shape=jax.ShapeDtypeStruct((N, H, W, C), x.dtype),
        grid_spec=pltpu.PrefetchScalarGridSpec(
            num_scalar_prefetch=0,
            grid=(N // batch_tile,),
            in_specs=[
                pl.BlockSpec((batch_tile, H, W, C), lambda b: (b, 0, 0, 0)),
                # TODO(synk): weights are grid-constant; pipeline_mode=
                # pl.Buffered(1) would drop one buffer pair per weight array.
                pl.BlockSpec((9, C, C), lambda b: (0, 0, 0)),
                pl.BlockSpec((9, C, C), lambda b: (0, 0, 0)),
            ],
            out_specs=pl.BlockSpec((batch_tile, H, W, C),
                                   lambda b: (b, 0, 0, 0)),
            scratch_shapes=[
                pltpu.VMEM((H + 2, W, C), compute_dtype),
            ],
        ),
        compiler_params=pltpu.CompilerParams(**compiler_kwargs),
    )(x, w1, w2)

    return jnp.transpose(out_nhwc, (0, 3, 1, 2))             # back to NCHW


def _reference(x_nchw, w1_hwio, b1, w2_hwio, b2):
    """Pure-JAX reference matching PyTorch semantics (NCHW, InstanceNorm2d defaults)."""
    w1 = jnp.transpose(w1_hwio, (3, 2, 0, 1))  # OIHW
    w2 = jnp.transpose(w2_hwio, (3, 2, 0, 1))

    def conv(x, w, b):
        y = lax.conv_general_dilated(
            x, w, (1, 1), ((1, 1), (1, 1)),
            dimension_numbers=("NCHW", "OIHW", "NCHW"),
            precision=lax.Precision.HIGHEST)
        return y + b[None, :, None, None]

    def inorm(y):
        mean = jnp.mean(y, axis=(2, 3), keepdims=True)
        var = jnp.mean((y - mean) ** 2, axis=(2, 3), keepdims=True)
        return (y - mean) / jnp.sqrt(var + EPS)

    out = jax.nn.relu(inorm(conv(x_nchw, w1, b1)))
    out = inorm(conv(out, w2, b2))
    return out + x_nchw


if __name__ == "__main__":
    def make_params(key, C):
        k1, k2, k3, k4 = jax.random.split(key, 4)
        bound = 1.0 / ((C * 9) ** 0.5)
        w1 = jax.random.uniform(k1, (3, 3, C, C), jnp.float32, -bound, bound)
        b1 = jax.random.uniform(k2, (C,), jnp.float32, -bound, bound)
        w2 = jax.random.uniform(k3, (3, 3, C, C), jnp.float32, -bound, bound)
        b2 = jax.random.uniform(k4, (C,), jnp.float32, -bound, bound)
        return w1, b1, w2, b2

    key = jax.random.PRNGKey(0)
    kx1, kp1, kx2, kp2 = jax.random.split(key, 4)

    # Case 1: spec-example shapes, exact f32 MXU path vs. reference.
    N, C, H, W = 2, 4, 16, 16
    x = jax.random.normal(kx1, (N, C, H, W), jnp.float32)
    p = make_params(kp1, C)
    out = residual_block(x, *p, compute_dtype=jnp.float32)
    jax.block_until_ready(out)
    ref = _reference(x, *p)
    assert out.shape == (N, C, H, W)
    assert jnp.allclose(out, ref, atol=2e-3, rtol=2e-3), (
        float(jnp.max(jnp.abs(out - ref))))

    # Case 2: default bf16 MXU operands (fast path on all generations); the
    # two InstanceNorms amplify bf16 rounding noise slightly.
    out_bf = residual_block(x, *p)
    jax.block_until_ready(out_bf)
    assert float(jnp.max(jnp.abs(out_bf - ref))) < 0.15

    # Case 3: lane-dense channels + batch_tile > 1 (two images per grid step,
    # two grid steps).
    N2, C2, H2, W2 = 4, 128, 16, 16
    x2 = jax.random.normal(kx2, (N2, C2, H2, W2), jnp.float32)
    p2 = make_params(kp2, C2)
    out2 = residual_block(x2, *p2, batch_tile=2)
    jax.block_until_ready(out2)
    ref2 = _reference(x2, *p2)
    assert out2.shape == (N2, C2, H2, W2)
    assert float(jnp.max(jnp.abs(out2 - ref2))) < 0.15

    print("KERNEL_OK")
</pallas_src>

<mosaic_0001>
module attributes {stable_mosaic.version = 11 : i64} {
  func.func @_resblock_kernel(%arg0: i32, %arg1: memref<2x16x16x4xf32, #tpu.memory_space<vmem>>, %arg2: memref<9x4x4xf32, #tpu.memory_space<vmem>>, %arg3: memref<9x4x4xf32, #tpu.memory_space<vmem>>, %arg4: memref<2x16x16x4xf32, #tpu.memory_space<vmem>>, %arg5: memref<18x16x4xf32, #tpu.memory_space<vmem>>) attributes {dimension_semantics = [#tpu.dimension_semantics<parallel>], iteration_bounds = array<i64: 1>, scalar_prefetch = 0 : i64, scratch_operands = 1 : i64, tpu.core_type = #tpu.core_type<tc>, window_params = [{transform_indices = @transform_0, window_bounds = array<i64: 2, 16, 16, 4>}, {pipeline_mode = #tpu.pipeline_mode<synchronous>, transform_indices = @transform_1, window_bounds = array<i64: 9, 4, 4>}, {pipeline_mode = #tpu.pipeline_mode<synchronous>, transform_indices = @transform_2, window_bounds = array<i64: 9, 4, 4>}, {transform_indices = @transform_3, window_bounds = array<i64: 2, 16, 16, 4>}]} {
    %cst = arith.constant 0.000000e+00 : f32
    %0 = vector.broadcast %cst : f32 to vector<1x16x4xf32>
    %c0 = arith.constant 0 : index
    %c0_0 = arith.constant 0 : index
    %c0_1 = arith.constant 0 : index
    %1 = vector.load %arg5[%c0, %c0_0, %c0_1] : memref<18x16x4xf32, #tpu.memory_space<vmem>>, vector<1x16x4xf32>
    tpu.vector_store %arg5[%c0, %c0_0, %c0_1], %0 {strides = array<i32>} : memref<18x16x4xf32, #tpu.memory_space<vmem>>, vector<1x16x4xf32>,
    %cst_2 = arith.constant 0.000000e+00 : f32
    %2 = vector.broadcast %cst_2 : f32 to vector<1x16x4xf32>
    %c17 = arith.constant 17 : index
    %c0_3 = arith.constant 0 : index
    %c0_4 = arith.constant 0 : index
    %3 = vector.load %arg5[%c17, %c0_3, %c0_4] : memref<18x16x4xf32, #tpu.memory_space<vmem>>, vector<1x16x4xf32>
    tpu.vector_store %arg5[%c17, %c0_3, %c0_4], %2 {strides = array<i32>} : memref<18x16x4xf32, #tpu.memory_space<vmem>>, vector<1x16x4xf32>,
    %4 = tpu.iota {dimensions = array<i32: 1>} : vector<16x16x4xi32>
    %5 = vector.shape_cast %4 : vector<16x16x4xi32> to vector<256x4xi32>
    %c0_i32 = arith.constant 0 : i32
    %6 = vector.broadcast %c0_i32 : i32 to vector<256x4xi32>
    %7 = arith.cmpi ne, %5, %6 : vector<256x4xi32>
    %8 = arith.extui %7 : vector<256x4xi1> to vector<256x4xi32>
    %9 = arith.sitofp %8 : vector<256x4xi32> to vector<256x4xf32>
    %c15_i32 = arith.constant 15 : i32
    %10 = vector.broadcast %c15_i32 : i32 to vector<256x4xi32>
    %11 = arith.cmpi ne, %5, %10 : vector<256x4xi32>
    %12 = arith.extui %11 : vector<256x4xi1> to vector<256x4xi32>
    %13 = arith.sitofp %12 : vector<256x4xi32> to vector<256x4xf32>
    %c0_5 = arith.constant 0 : index
    %c0_6 = arith.constant 0 : index
    %c0_7 = arith.constant 0 : index
    %c0_8 = arith.constant 0 : index
    %14 = vector.load %arg1[%c0_5, %c0_6, %c0_7, %c0_8] : memref<2x16x16x4xf32, #tpu.memory_space<vmem>>, vector<1x16x16x4xf32>
    %15 = vector.shape_cast %14 : vector<1x16x16x4xf32> to vector<16x16x4xf32>
    %c1 = arith.constant 1 : index
    %c0_9 = arith.constant 0 : index
    %c0_10 = arith.constant 0 : index
    %16 = vector.load %arg5[%c1, %c0_9, %c0_10] : memref<18x16x4xf32, #tpu.memory_space<vmem>>, vector<16x16x4xf32>
    tpu.vector_store %arg5[%c1, %c0_9, %c0_10], %15 {strides = array<i32>} : memref<18x16x4xf32, #tpu.memory_space<vmem>>, vector<16x16x4xf32>,
    %cst_11 = arith.constant 0.000000e+00 : f32
    %17 = vector.broadcast %cst_11 : f32 to vector<256x4xf32>
    %c0_12 = arith.constant 0 : index
    %c0_13 = arith.constant 0 : index
    %c0_14 = arith.constant 0 : index
    %18 = vector.load %arg5[%c0_12, %c0_13, %c0_14] : memref<18x16x4xf32, #tpu.memory_space<vmem>>, vector<16x16x4xf32>
    %19 = vector.shape_cast %18 : vector<16x16x4xf32> to vector<256x4xf32>
    %c1_i32 = arith.constant 1 : i32
    %20 = tpu.dynamic_rotate %19 by %c1_i32 dim 0 : vector<256x4xf32>, i32 -> vector<256x4xf32>
    %21 = arith.mulf %20, %9 : vector<256x4xf32>
    %c0_15 = arith.constant 0 : index
    %c0_16 = arith.constant 0 : index
    %c0_17 = arith.constant 0 : index
    %22 = vector.load %arg2[%c0_15, %c0_16, %c0_17] : memref<9x4x4xf32, #tpu.memory_space<vmem>>, vector<1x4x4xf32>
    %23 = vector.shape_cast %22 : vector<1x4x4xf32> to vector<4x4xf32>
    %cst_18 = arith.constant dense<0.000000e+00> : vector<256x4xf32>
    %24 = tpu.matmul %21, %23, %cst_18 {dimension_numbers = #tpu.dot_dimension_numbers<[1], [0], [0], [1], [0, 0, 1, 1], [], []>} : vector<256x4xf32>, vector<4x4xf32>, vector<256x4xf32> -> vector<256x4xf32>
    %25 = arith.addf %17, %24 : vector<256x4xf32>
    %c0_19 = arith.constant 0 : index
    %c0_20 = arith.constant 0 : index
    %c0_21 = arith.constant 0 : index
    %26 = vector.load %arg5[%c0_19, %c0_20, %c0_21] : memref<18x16x4xf32, #tpu.memory_space<vmem>>, vector<16x16x4xf32>
    %27 = vector.shape_cast %26 : vector<16x16x4xf32> to vector<256x4xf32>
    %c1_22 = arith.constant 1 : index
    %c0_23 = arith.constant 0 : index
    %c0_24 = arith.constant 0 : index
    %28 = vector.load %arg2[%c1_22, %c0_23, %c0_24] : memref<9x4x4xf32, #tpu.memory_space<vmem>>, vector<1x4x4xf32>
    %29 = vector.shape_cast %28 : vector<1x4x4xf32> to vector<4x4xf32>
    %cst_25 = arith.constant dense<0.000000e+00> : vector<256x4xf32>
    %30 = tpu.matmul %27, %29, %cst_25 {dimension_numbers = #tpu.dot_dimension_numbers<[1], [0], [0], [1], [0, 0, 1, 1], [], []>} : vector<256x4xf32>, vector<4x4xf32>, vector<256x4xf32> -> vector<256x4xf32>
    %31 = arith.addf %25, %30 : vector<256x4xf32>
    %c0_26 = arith.constant 0 : index
    %c0_27 = arith.constant 0 : index
    %c0_28 = arith.constant 0 : index
    %32 = vector.load %arg5[%c0_26, %c0_27, %c0_28] : memref<18x16x4xf32, #tpu.memory_space<vmem>>, vector<16x16x4xf32>
    %33 = vector.shape_cast %32 : vector<16x16x4xf32> to vector<256x4xf32>
    %c255_i32 = arith.constant 255 : i32
    %34 = tpu.dynamic_rotate %33 by %c255_i32 dim 0 : vector<256x4xf32>, i32 -> vector<256x4xf32>
    %35 = arith.mulf %34, %13 : vector<256x4xf32>
    %c2 = arith.constant 2 : index
    %c0_29 = arith.constant 0 : index
    %c0_30 = arith.constant 0 : index
    %36 = vector.load %arg2[%c2, %c0_29, %c0_30] : memref<9x4x4xf32, #tpu.memory_space<vmem>>, vector<1x4x4xf32>
    %37 = vector.shape_cast %36 : vector<1x4x4xf32> to vector<4x4xf32>
    %cst_31 = arith.constant dense<0.000000e+00> : vector<256x4xf32>
    %38 = tpu.matmul %35, %37, %cst_31 {dimension_numbers = #tpu.dot_dimension_numbers<[1], [0], [0], [1], [0, 0, 1, 1], [], []>} : vector<256x4xf32>, vector<4x4xf32>, vector<256x4xf32> -> vector<256x4xf32>
    %39 = arith.addf %31, %38 : vector<256x4xf32>
    %c1_32 = arith.constant 1 : index
    %c0_33 = arith.constant 0 : index
    %c0_34 = arith.constant 0 : index
    %40 = vector.load %arg5[%c1_32, %c0_33, %c0_34] : memref<18x16x4xf32, #tpu.memory_space<vmem>>, vector<16x16x4xf32>
    %41 = vector.shape_cast %40 : vector<16x16x4xf32> to vector<256x4xf32>
    %c1_i32_35 = arith.constant 1 : i32
    %42 = tpu.dynamic_rotate %41 by %c1_i32_35 dim 0 : vector<256x4xf32>, i32 -> vector<256x4xf32>
    %43 = arith.mulf %42, %9 : vector<256x4xf32>
    %c3 = arith.constant 3 : index
    %c0_36 = arith.constant 0 : index
    %c0_37 = arith.constant 0 : index
    %44 = vector.load %arg2[%c3, %c0_36, %c0_37] : memref<9x4x4xf32, #tpu.memory_space<vmem>>, vector<1x4x4xf32>
    %45 = vector.shape_cast %44 : vector<1x4x4xf32> to vector<4x4xf32>
    %cst_38 = arith.constant dense<0.000000e+00> : vector<256x4xf32>
    %46 = tpu.matmul %43, %45, %cst_38 {dimension_numbers = #tpu.dot_dimension_numbers<[1], [0], [0], [1], [0, 0, 1, 1], [], []>} : vector<256x4xf32>, vector<4x4xf32>, vector<256x4xf32> -> vector<256x4xf32>
    %47 = arith.addf %39, %46 : vector<256x4xf32>
    %c1_39 = arith.constant 1 : index
    %c0_40 = arith.constant 0 : index
    %c0_41 = arith.constant 0 : index
    %48 = vector.load %arg5[%c1_39, %c0_40, %c0_41] : memref<18x16x4xf32, #tpu.memory_space<vmem>>, vector<16x16x4xf32>
    %49 = vector.shape_cast %48 : vector<16x16x4xf32> to vector<256x4xf32>
    %c4 = arith.constant 4 : index
    %c0_42 = arith.constant 0 : index
    %c0_43 = arith.constant 0 : index
    %50 = vector.load %arg2[%c4, %c0_42, %c0_43] : memref<9x4x4xf32, #tpu.memory_space<vmem>>, vector<1x4x4xf32>
    %51 = vector.shape_cast %50 : vector<1x4x4xf32> to vector<4x4xf32>
    %cst_44 = arith.constant dense<0.000000e+00> : vector<256x4xf32>
    %52 = tpu.matmul %49, %51, %cst_44 {dimension_numbers = #tpu.dot_dimension_numbers<[1], [0], [0], [1], [0, 0, 1, 1], [], []>} : vector<256x4xf32>, vector<4x4xf32>, vector<256x4xf32> -> vector<256x4xf32>
    %53 = arith.addf %47, %52 : vector<256x4xf32>
    %c1_45 = arith.constant 1 : index
    %c0_46 = arith.constant 0 : index
    %c0_47 = arith.constant 0 : index
    %54 = vector.load %arg5[%c1_45, %c0_46, %c0_47] : memref<18x16x4xf32, #tpu.memory_space<vmem>>, vector<16x16x4xf32>
    %55 = vector.shape_cast %54 : vector<16x16x4xf32> to vector<256x4xf32>
    %c255_i32_48 = arith.constant 255 : i32
    %56 = tpu.dynamic_rotate %55 by %c255_i32_48 dim 0 : vector<256x4xf32>, i32 -> vector<256x4xf32>
    %57 = arith.mulf %56, %13 : vector<256x4xf32>
    %c5 = arith.constant 5 : index
    %c0_49 = arith.constant 0 : index
    %c0_50 = arith.constant 0 : index
    %58 = vector.load %arg2[%c5, %c0_49, %c0_50] : memref<9x4x4xf32, #tpu.memory_space<vmem>>, vector<1x4x4xf32>
    %59 = vector.shape_cast %58 : vector<1x4x4xf32> to vector<4x4xf32>
    %cst_51 = arith.constant dense<0.000000e+00> : vector<256x4xf32>
    %60 = tpu.matmul %57, %59, %cst_51 {dimension_numbers = #tpu.dot_dimension_numbers<[1], [0], [0], [1], [0, 0, 1, 1], [], []>} : vector<256x4xf32>, vector<4x4xf32>, vector<256x4xf32> -> vector<256x4xf32>
    %61 = arith.addf %53, %60 : vector<256x4xf32>
    %c2_52 = arith.constant 2 : index
    %c0_53 = arith.constant 0 : index
    %c0_54 = arith.constant 0 : index
    %62 = vector.load %arg5[%c2_52, %c0_53, %c0_54] : memref<18x16x4xf32, #tpu.memory_space<vmem>>, vector<16x16x4xf32>
    %63 = vector.shape_cast %62 : vector<16x16x4xf32> to vector<256x4xf32>
    %c1_i32_55 = arith.constant 1 : i32
    %64 = tpu.dynamic_rotate %63 by %c1_i32_55 dim 0 : vector<256x4xf32>, i32 -> vector<256x4xf32>
    %65 = arith.mulf %64, %9 : vector<256x4xf32>
    %c6 = arith.constant 6 : index
    %c0_56 = arith.constant 0 : index
    %c0_57 = arith.constant 0 : index
    %66 = vector.load %arg2[%c6, %c0_56, %c0_57] : memref<9x4x4xf32, #tpu.memory_space<vmem>>, vector<1x4x4xf32>
    %67 = vector.shape_cast %66 : vector<1x4x4xf32> to vector<4x4xf32>
    %cst_58 = arith.constant dense<0.000000e+00> : vector<256x4xf32>
    %68 = tpu.matmul %65, %67, %cst_58 {dimension_numbers = #tpu.dot_dimension_numbers<[1], [0], [0], [1], [0, 0, 1, 1], [], []>} : vector<256x4xf32>, vector<4x4xf32>, vector<256x4xf32> -> vector<256x4xf32>
    %69 = arith.addf %61, %68 : vector<256x4xf32>
    %c2_59 = arith.constant 2 : index
    %c0_60 = arith.constant 0 : index
    %c0_61 = arith.constant 0 : index
    %70 = vector.load %arg5[%c2_59, %c0_60, %c0_61] : memref<18x16x4xf32, #tpu.memory_space<vmem>>, vector<16x16x4xf32>
    %71 = vector.shape_cast %70 : vector<16x16x4xf32> to vector<256x4xf32>
    %c7 = arith.constant 7 : index
    %c0_62 = arith.constant 0 : index
    %c0_63 = arith.constant 0 : index
    %72 = vector.load %arg2[%c7, %c0_62, %c0_63] : memref<9x4x4xf32, #tpu.memory_space<vmem>>, vector<1x4x4xf32>
    %73 = vector.shape_cast %72 : vector<1x4x4xf32> to vector<4x4xf32>
    %cst_64 = arith.constant dense<0.000000e+00> : vector<256x4xf32>
    %74 = tpu.matmul %71, %73, %cst_64 {dimension_numbers = #tpu.dot_dimension_numbers<[1], [0], [0], [1], [0, 0, 1, 1], [], []>} : vector<256x4xf32>, vector<4x4xf32>, vector<256x4xf32> -> vector<256x4xf32>
    %75 = arith.addf %69, %74 : vector<256x4xf32>
    %c2_65 = arith.constant 2 : index
    %c0_66 = arith.constant 0 : index
    %c0_67 = arith.constant 0 : index
    %76 = vector.load %arg5[%c2_65, %c0_66, %c0_67] : memref<18x16x4xf32, #tpu.memory_space<vmem>>, vector<16x16x4xf32>
    %77 = vector.shape_cast %76 : vector<16x16x4xf32> to vector<256x4xf32>
    %c255_i32_68 = arith.constant 255 : i32
    %78 = tpu.dynamic_rotate %77 by %c255_i32_68 dim 0 : vector<256x4xf32>, i32 -> vector<256x4xf32>
    %79 = arith.mulf %78, %13 : vector<256x4xf32>
    %c8 = arith.constant 8 : index
    %c0_69 = arith.constant 0 : index
    %c0_70 = arith.constant 0 : index
    %80 = vector.load %arg2[%c8, %c0_69, %c0_70] : memref<9x4x4xf32, #tpu.memory_space<vmem>>, vector<1x4x4xf32>
    %81 = vector.shape_cast %80 : vector<1x4x4xf32> to vector<4x4xf32>
    %cst_71 = arith.constant dense<0.000000e+00> : vector<256x4xf32>
    %82 = tpu.matmul %79, %81, %cst_71 {dimension_numbers = #tpu.dot_dimension_numbers<[1], [0], [0], [1], [0, 0, 1, 1], [], []>} : vector<256x4xf32>, vector<4x4xf32>, vector<256x4xf32> -> vector<256x4xf32>
    %83 = arith.addf %75, %82 : vector<256x4xf32>
    %cst_72 = arith.constant dense<0.000000e+00> : vector<4xf32>
    %84 = vector.multi_reduction <add>, %83, %cst_72 [0] : vector<256x4xf32> to vector<4xf32>
    %85 = vector.shape_cast %84 : vector<4xf32> to vector<1x4xf32>
    %cst_73 = arith.constant 2.560000e+02 : f32
    %86 = vector.broadcast %cst_73 : f32 to vector<1x4xf32>
    %87 = arith.divf %85, %86 : vector<1x4xf32>
    %88 = vector.broadcast %87 : vector<1x4xf32> to vector<256x4xf32>
    %89 = arith.subf %83, %88 : vector<256x4xf32>
    %90 = arith.mulf %89, %89 : vector<256x4xf32>
    %cst_74 = arith.constant dense<0.000000e+00> : vector<4xf32>
    %91 = vector.multi_reduction <add>, %90, %cst_74 [0] : vector<256x4xf32> to vector<4xf32>
    %92 = vector.shape_cast %91 : vector<4xf32> to vector<1x4xf32>
    %cst_75 = arith.constant 2.560000e+02 : f32
    %93 = vector.broadcast %cst_75 : f32 to vector<1x4xf32>
    %94 = arith.divf %92, %93 : vector<1x4xf32>
    %cst_76 = arith.constant 9.99999974E-6 : f32
    %95 = vector.broadcast %cst_76 : f32 to vector<1x4xf32>
    %96 = arith.addf %94, %95 : vector<1x4xf32>
    %97 = math.rsqrt %96 : vector<1x4xf32>
    %98 = vector.broadcast %97 : vector<1x4xf32> to vector<256x4xf32>
    %99 = arith.mulf %89, %98 : vector<256x4xf32>
    %cst_77 = arith.constant 0.000000e+00 : f32
    %100 = vector.broadcast %cst_77 : f32 to vector<256x4xf32>
    %101 = arith.maximumf %99, %100 : vector<256x4xf32>
    %102 = vector.shape_cast %101 : vector<256x4xf32> to vector<16x16x4xf32>
    %c1_78 = arith.constant 1 : index
    %c0_79 = arith.constant 0 : index
    %c0_80 = arith.constant 0 : index
    %103 = vector.load %arg5[%c1_78, %c0_79, %c0_80] : memref<18x16x4xf32, #tpu.memory_space<vmem>>, vector<16x16x4xf32>
    tpu.vector_store %arg5[%c1_78, %c0_79, %c0_80], %102 {strides = array<i32>} : memref<18x16x4xf32, #tpu.memory_space<vmem>>, vector<16x16x4xf32>,
    %cst_81 = arith.constant 0.000000e+00 : f32
    %104 = vector.broadcast %cst_81 : f32 to vector<256x4xf32>
    %c0_82 = arith.constant 0 : index
    %c0_83 = arith.constant 0 : index
    %c0_84 = arith.constant 0 : index
    %105 = vector.load %arg5[%c0_82, %c0_83, %c0_84] : memref<18x16x4xf32, #tpu.memory_space<vmem>>, vector<16x16x4xf32>
    %106 = vector.shape_cast %105 : vector<16x16x4xf32> to vector<256x4xf32>
    %c1_i32_85 = arith.constant 1 : i32
    %107 = tpu.dynamic_rotate %106 by %c1_i32_85 dim 0 : vector<256x4xf32>, i32 -> vector<256x4xf32>
    %108 = arith.mulf %107, %9 : vector<256x4xf32>
    %c0_86 = arith.constant 0 : index
    %c0_87 = arith.constant 0 : index
    %c0_88 = arith.constant 0 : index
    %109 = vector.load %arg3[%c0_86, %c0_87, %c0_88] : memref<9x4x4xf32, #tpu.memory_space<vmem>>, vector<1x4x4xf32>
    %110 = vector.shape_cast %109 : vector<1x4x4xf32> to vector<4x4xf32>
    %cst_89 = arith.constant dense<0.000000e+00> : vector<256x4xf32>
    %111 = tpu.matmul %108, %110, %cst_89 {dimension_numbers = #tpu.dot_dimension_numbers<[1], [0], [0], [1], [0, 0, 1, 1], [], []>} : vector<256x4xf32>, vector<4x4xf32>, vector<256x4xf32> -> vector<256x4xf32>
    %112 = arith.addf %104, %111 : vector<256x4xf32>
    %c0_90 = arith.constant 0 : index
    %c0_91 = arith.constant 0 : index
    %c0_92 = arith.constant 0 : index
    %113 = vector.load %arg5[%c0_90, %c0_91, %c0_92] : memref<18x16x4xf32, #tpu.memory_space<vmem>>, vector<16x16x4xf32>
    %114 = vector.shape_cast %113 : vector<16x16x4xf32> to vector<256x4xf32>
    %c1_93 = arith.constant 1 : index
    %c0_94 = arith.constant 0 : index
    %c0_95 = arith.constant 0 : index
    %115 = vector.load %arg3[%c1_93, %c0_94, %c0_95] : memref<9x4x4xf32, #tpu.memory_space<vmem>>, vector<1x4x4xf32>
    %116 = vector.shape_cast %115 : vector<1x4x4xf32> to vector<4x4xf32>
    %cst_96 = arith.constant dense<0.000000e+00> : vector<256x4xf32>
    %117 = tpu.matmul %114, %116, %cst_96 {dimension_numbers = #tpu.dot_dimension_numbers<[1], [0], [0], [1], [0, 0, 1, 1], [], []>} : vector<256x4xf32>, vector<4x4xf32>, vector<256x4xf32> -> vector<256x4xf32>
    %118 = arith.addf %112, %117 : vector<256x4xf32>
    %c0_97 = arith.constant 0 : index
    %c0_98 = arith.constant 0 : index
    %c0_99 = arith.constant 0 : index
    %119 = vector.load %arg5[%c0_97, %c0_98, %c0_99] : memref<18x16x4xf32, #tpu.memory_space<vmem>>, vector<16x16x4xf32>
    %120 = vector.shape_cast %119 : vector<16x16x4xf32> to vector<256x4xf32>
    %c255_i32_100 = arith.constant 255 : i32
    %121 = tpu.dynamic_rotate %120 by %c255_i32_100 dim 0 : vector<256x4xf32>, i32 -> vector<256x4xf32>
    %122 = arith.mulf %121, %13 : vector<256x4xf32>
    %c2_101 = arith.constant 2 : index
    %c0_102 = arith.constant 0 : index
    %c0_103 = arith.constant 0 : index
    %123 = vector.load %arg3[%c2_101, %c0_102, %c0_103] : memref<9x4x4xf32, #tpu.memory_space<vmem>>, vector<1x4x4xf32>
    %124 = vector.shape_cast %123 : vector<1x4x4xf32> to vector<4x4xf32>
    %cst_104 = arith.constant dense<0.000000e+00> : vector<256x4xf32>
    %125 = tpu.matmul %122, %124, %cst_104 {dimension_numbers = #tpu.dot_dimension_numbers<[1], [0], [0], [1], [0, 0, 1, 1], [], []>} : vector<256x4xf32>, vector<4x4xf32>, vector<256x4xf32> -> vector<256x4xf32>
    %126 = arith.addf %118, %125 : vector<256x4xf32>
    %c1_105 = arith.constant 1 : index
    %c0_106 = arith.constant 0 : index
    %c0_107 = arith.constant 0 : index
    %127 = vector.load %arg5[%c1_105, %c0_106, %c0_107] : memref<18x16x4xf32, #tpu.memory_space<vmem>>, vector<16x16x4xf32>
    %128 = vector.shape_cast %127 : vector<16x16x4xf32> to vector<256x4xf32>
    %c1_i32_108 = arith.constant 1 : i32
    %129 = tpu.dynamic_rotate %128 by %c1_i32_108 dim 0 : vector<256x4xf32>, i32 -> vector<256x4xf32>
    %130 = arith.mulf %129, %9 : vector<256x4xf32>
    %c3_109 = arith.constant 3 : index
    %c0_110 = arith.constant 0 : index
    %c0_111 = arith.constant 0 : index
    %131 = vector.load %arg3[%c3_109, %c0_110, %c0_111] : memref<9x4x4xf32, #tpu.memory_space<vmem>>, vector<1x4x4xf32>
    %132 = vector.shape_cast %131 : vector<1x4x4xf32> to vector<4x4xf32>
    %cst_112 = arith.constant dense<0.000000e+00> : vector<256x4xf32>
    %133 = tpu.matmul %130, %132, %cst_112 {dimension_numbers = #tpu.dot_dimension_numbers<[1], [0], [0], [1], [0, 0, 1, 1], [], []>} : vector<256x4xf32>, vector<4x4xf32>, vector<256x4xf32> -> vector<256x4xf32>
    %134 = arith.addf %126, %133 : vector<256x4xf32>
    %c1_113 = arith.constant 1 : index
    %c0_114 = arith.constant 0 : index
    %c0_115 = arith.constant 0 : index
    %135 = vector.load %arg5[%c1_113, %c0_114, %c0_115] : memref<18x16x4xf32, #tpu.memory_space<vmem>>, vector<16x16x4xf32>
    %136 = vector.shape_cast %135 : vector<16x16x4xf32> to vector<256x4xf32>
    %c4_116 = arith.constant 4 : index
    %c0_117 = arith.constant 0 : index
    %c0_118 = arith.constant 0 : index
    %137 = vector.load %arg3[%c4_116, %c0_117, %c0_118] : memref<9x4x4xf32, #tpu.memory_space<vmem>>, vector<1x4x4xf32>
    %138 = vector.shape_cast %137 : vector<1x4x4xf32> to vector<4x4xf32>
    %cst_119 = arith.constant dense<0.000000e+00> : vector<256x4xf32>
    %139 = tpu.matmul %136, %138, %cst_119 {dimension_numbers = #tpu.dot_dimension_numbers<[1], [0], [0], [1], [0, 0, 1, 1], [], []>} : vector<256x4xf32>, vector<4x4xf32>, vector<256x4xf32> -> vector<256x4xf32>
    %140 = arith.addf %134, %139 : vector<256x4xf32>
    %c1_120 = arith.constant 1 : index
    %c0_121 = arith.constant 0 : index
    %c0_122 = arith.constant 0 : index
    %141 = vector.load %arg5[%c1_120, %c0_121, %c0_122] : memref<18x16x4xf32, #tpu.memory_space<vmem>>, vector<16x16x4xf32>
    %142 = vector.shape_cast %141 : vector<16x16x4xf32> to vector<256x4xf32>
    %c255_i32_123 = arith.constant 255 : i32
    %143 = tpu.dynamic_rotate %142 by %c255_i32_123 dim 0 : vector<256x4xf32>, i32 -> vector<256x4xf32>
    %144 = arith.mulf %143, %13 : vector<256x4xf32>
    %c5_124 = arith.constant 5 : index
    %c0_125 = arith.constant 0 : index
    %c0_126 = arith.constant 0 : index
    %145 = vector.load %arg3[%c5_124, %c0_125, %c0_126] : memref<9x4x4xf32, #tpu.memory_space<vmem>>, vector<1x4x4xf32>
    %146 = vector.shape_cast %145 : vector<1x4x4xf32> to vector<4x4xf32>
    %cst_127 = arith.constant dense<0.000000e+00> : vector<256x4xf32>
    %147 = tpu.matmul %144, %146, %cst_127 {dimension_numbers = #tpu.dot_dimension_numbers<[1], [0], [0], [1], [0, 0, 1, 1], [], []>} : vector<256x4xf32>, vector<4x4xf32>, vector<256x4xf32> -> vector<256x4xf32>
    %148 = arith.addf %140, %147 : vector<256x4xf32>
    %c2_128 = arith.constant 2 : index
    %c0_129 = arith.constant 0 : index
    %c0_130 = arith.constant 0 : index
    %149 = vector.load %arg5[%c2_128, %c0_129, %c0_130] : memref<18x16x4xf32, #tpu.memory_space<vmem>>, vector<16x16x4xf32>
    %150 = vector.shape_cast %149 : vector<16x16x4xf32> to vector<256x4xf32>
    %c1_i32_131 = arith.constant 1 : i32
    %151 = tpu.dynamic_rotate %150 by %c1_i32_131 dim 0 : vector<256x4xf32>, i32 -> vector<256x4xf32>
    %152 = arith.mulf %151, %9 : vector<256x4xf32>
    %c6_132 = arith.constant 6 : index
    %c0_133 = arith.constant 0 : index
    %c0_134 = arith.constant 0 : index
    %153 = vector.load %arg3[%c6_132, %c0_133, %c0_134] : memref<9x4x4xf32, #tpu.memory_space<vmem>>, vector<1x4x4xf32>
    %154 = vector.shape_cast %153 : vector<1x4x4xf32> to vector<4x4xf32>
    %cst_135 = arith.constant dense<0.000000e+00> : vector<256x4xf32>
    %155 = tpu.matmul %152, %154, %cst_135 {dimension_numbers = #tpu.dot_dimension_numbers<[1], [0], [0], [1], [0, 0, 1, 1], [], []>} : vector<256x4xf32>, vector<4x4xf32>, vector<256x4xf32> -> vector<256x4xf32>
    %156 = arith.addf %148, %155 : vector<256x4xf32>
    %c2_136 = arith.constant 2 : index
    %c0_137 = arith.constant 0 : index
    %c0_138 = arith.constant 0 : index
    %157 = vector.load %arg5[%c2_136, %c0_137, %c0_138] : memref<18x16x4xf32, #tpu.memory_space<vmem>>, vector<16x16x4xf32>
    %158 = vector.shape_cast %157 : vector<16x16x4xf32> to vector<256x4xf32>
    %c7_139 = arith.constant 7 : index
    %c0_140 = arith.constant 0 : index
    %c0_141 = arith.constant 0 : index
    %159 = vector.load %arg3[%c7_139, %c0_140, %c0_141] : memref<9x4x4xf32, #tpu.memory_space<vmem>>, vector<1x4x4xf32>
    %160 = vector.shape_cast %159 : vector<1x4x4xf32> to vector<4x4xf32>
    %cst_142 = arith.constant dense<0.000000e+00> : vector<256x4xf32>
    %161 = tpu.matmul %158, %160, %cst_142 {dimension_numbers = #tpu.dot_dimension_numbers<[1], [0], [0], [1], [0, 0, 1, 1], [], []>} : vector<256x4xf32>, vector<4x4xf32>, vector<256x4xf32> -> vector<256x4xf32>
    %162 = arith.addf %156, %161 : vector<256x4xf32>
    %c2_143 = arith.constant 2 : index
    %c0_144 = arith.constant 0 : index
    %c0_145 = arith.constant 0 : index
    %163 = vector.load %arg5[%c2_143, %c0_144, %c0_145] : memref<18x16x4xf32, #tpu.memory_space<vmem>>, vector<16x16x4xf32>
    %164 = vector.shape_cast %163 : vector<16x16x4xf32> to vector<256x4xf32>
    %c255_i32_146 = arith.constant 255 : i32
    %165 = tpu.dynamic_rotate %164 by %c255_i32_146 dim 0 : vector<256x4xf32>, i32 -> vector<256x4xf32>
    %166 = arith.mulf %165, %13 : vector<256x4xf32>
    %c8_147 = arith.constant 8 : index
    %c0_148 = arith.constant 0 : index
    %c0_149 = arith.constant 0 : index
    %167 = vector.load %arg3[%c8_147, %c0_148, %c0_149] : memref<9x4x4xf32, #tpu.memory_space<vmem>>, vector<1x4x4xf32>
    %168 = vector.shape_cast %167 : vector<1x4x4xf32> to vector<4x4xf32>
    %cst_150 = arith.constant dense<0.000000e+00> : vector<256x4xf32>
    %169 = tpu.matmul %166, %168, %cst_150 {dimension_numbers = #tpu.dot_dimension_numbers<[1], [0], [0], [1], [0, 0, 1, 1], [], []>} : vector<256x4xf32>, vector<4x4xf32>, vector<256x4xf32> -> vector<256x4xf32>
    %170 = arith.addf %162, %169 : vector<256x4xf32>
    %cst_151 = arith.constant dense<0.000000e+00> : vector<4xf32>
    %171 = vector.multi_reduction <add>, %170, %cst_151 [0] : vector<256x4xf32> to vector<4xf32>
    %172 = vector.shape_cast %171 : vector<4xf32> to vector<1x4xf32>
    %cst_152 = arith.constant 2.560000e+02 : f32
    %173 = vector.broadcast %cst_152 : f32 to vector<1x4xf32>
    %174 = arith.divf %172, %173 : vector<1x4xf32>
    %175 = vector.broadcast %174 : vector<1x4xf32> to vector<256x4xf32>
    %176 = arith.subf %170, %175 : vector<256x4xf32>
    %177 = arith.mulf %176, %176 : vector<256x4xf32>
    %cst_153 = arith.constant dense<0.000000e+00> : vector<4xf32>
    %178 = vector.multi_reduction <add>, %177, %cst_153 [0] : vector<256x4xf32> to vector<4xf32>
    %179 = vector.shape_cast %178 : vector<4xf32> to vector<1x4xf32>
    %cst_154 = arith.constant 2.560000e+02 : f32
    %180 = vector.broadcast %cst_154 : f32 to vector<1x4xf32>
    %181 = arith.divf %179, %180 : vector<1x4xf32>
    %cst_155 = arith.constant 9.99999974E-6 : f32
    %182 = vector.broadcast %cst_155 : f32 to vector<1x4xf32>
    %183 = arith.addf %181, %182 : vector<1x4xf32>
    %184 = math.rsqrt %183 : vector<1x4xf32>
    %185 = vector.broadcast %184 : vector<1x4xf32> to vector<256x4xf32>
    %186 = arith.mulf %176, %185 : vector<256x4xf32>
    %187 = vector.shape_cast %186 : vector<256x4xf32> to vector<16x16x4xf32>
    %c0_156 = arith.constant 0 : index
    %c0_157 = arith.constant 0 : index
    %c0_158 = arith.constant 0 : index
    %c0_159 = arith.constant 0 : index
    %188 = vector.load %arg1[%c0_156, %c0_157, %c0_158, %c0_159] : memref<2x16x16x4xf32, #tpu.memory_space<vmem>>, vector<1x16x16x4xf32>
    %189 = vector.shape_cast %188 : vector<1x16x16x4xf32> to vector<16x16x4xf32>
    %190 = arith.addf %187, %189 : vector<16x16x4xf32>
    %c0_160 = arith.constant 0 : index
    %c0_161 = arith.constant 0 : index
    %c0_162 = arith.constant 0 : index
    %c0_163 = arith.constant 0 : index
    %191 = vector.load %arg4[%c0_160, %c0_161, %c0_162, %c0_163] : memref<2x16x16x4xf32, #tpu.memory_space<vmem>>, vector<1x16x16x4xf32>
    %192 = vector.shape_cast %191 : vector<1x16x16x4xf32> to vector<16x16x4xf32>
    %193 = vector.shape_cast %190 : vector<16x16x4xf32> to vector<1x16x16x4xf32>
    tpu.vector_store %arg4[%c0_160, %c0_161, %c0_162, %c0_163], %193 {strides = array<i32>} : memref<2x16x16x4xf32, #tpu.memory_space<vmem>>, vector<1x16x16x4xf32>,
    %c1_164 = arith.constant 1 : index
    %c0_165 = arith.constant 0 : index
    %c0_166 = arith.constant 0 : index
    %c0_167 = arith.constant 0 : index
    %194 = vector.load %arg1[%c1_164, %c0_165, %c0_166, %c0_167] : memref<2x16x16x4xf32, #tpu.memory_space<vmem>>, vector<1x16x16x4xf32>
    %195 = vector.shape_cast %194 : vector<1x16x16x4xf32> to vector<16x16x4xf32>
    %c1_168 = arith.constant 1 : index
    %c0_169 = arith.constant 0 : index
    %c0_170 = arith.constant 0 : index
    %196 = vector.load %arg5[%c1_168, %c0_169, %c0_170] : memref<18x16x4xf32, #tpu.memory_space<vmem>>, vector<16x16x4xf32>
    tpu.vector_store %arg5[%c1_168, %c0_169, %c0_170], %195 {strides = array<i32>} : memref<18x16x4xf32, #tpu.memory_space<vmem>>, vector<16x16x4xf32>,
    %cst_171 = arith.constant 0.000000e+00 : f32
    %197 = vector.broadcast %cst_171 : f32 to vector<256x4xf32>
    %c0_172 = arith.constant 0 : index
    %c0_173 = arith.constant 0 : index
    %c0_174 = arith.constant 0 : index
    %198 = vector.load %arg5[%c0_172, %c0_173, %c0_174] : memref<18x16x4xf32, #tpu.memory_space<vmem>>, vector<16x16x4xf32>
    %199 = vector.shape_cast %198 : vector<16x16x4xf32> to vector<256x4xf32>
    %c1_i32_175 = arith.constant 1 : i32
    %200 = tpu.dynamic_rotate %199 by %c1_i32_175 dim 0 : vector<256x4xf32>, i32 -> vector<256x4xf32>
    %201 = arith.mulf %200, %9 : vector<256x4xf32>
    %c0_176 = arith.constant 0 : index
    %c0_177 = arith.constant 0 : index
    %c0_178 = arith.constant 0 : index
    %202 = vector.load %arg2[%c0_176, %c0_177, %c0_178] : memref<9x4x4xf32, #tpu.memory_space<vmem>>, vector<1x4x4xf32>
    %203 = vector.shape_cast %202 : vector<1x4x4xf32> to vector<4x4xf32>
    %cst_179 = arith.constant dense<0.000000e+00> : vector<256x4xf32>
    %204 = tpu.matmul %201, %203, %cst_179 {dimension_numbers = #tpu.dot_dimension_numbers<[1], [0], [0], [1], [0, 0, 1, 1], [], []>} : vector<256x4xf32>, vector<4x4xf32>, vector<256x4xf32> -> vector<256x4xf32>
    %205 = arith.addf %197, %204 : vector<256x4xf32>
    %c0_180 = arith.constant 0 : index
    %c0_181 = arith.constant 0 : index
    %c0_182 = arith.constant 0 : index
    %206 = vector.load %arg5[%c0_180, %c0_181, %c0_182] : memref<18x16x4xf32, #tpu.memory_space<vmem>>, vector<16x16x4xf32>
    %207 = vector.shape_cast %206 : vector<16x16x4xf32> to vector<256x4xf32>
    %c1_183 = arith.constant 1 : index
    %c0_184 = arith.constant 0 : index
    %c0_185 = arith.constant 0 : index
    %208 = vector.load %arg2[%c1_183, %c0_184, %c0_185] : memref<9x4x4xf32, #tpu.memory_space<vmem>>, vector<1x4x4xf32>
    %209 = vector.shape_cast %208 : vector<1x4x4xf32> to vector<4x4xf32>
    %cst_186 = arith.constant dense<0.000000e+00> : vector<256x4xf32>
    %210 = tpu.matmul %207, %209, %cst_186 {dimension_numbers = #tpu.dot_dimension_numbers<[1], [0], [0], [1], [0, 0, 1, 1], [], []>} : vector<256x4xf32>, vector<4x4xf32>, vector<256x4xf32> -> vector<256x4xf32>
    %211 = arith.addf %205, %210 : vector<256x4xf32>
    %c0_187 = arith.constant 0 : index
    %c0_188 = arith.constant 0 : index
    %c0_189 = arith.constant 0 : index
    %212 = vector.load %arg5[%c0_187, %c0_188, %c0_189] : memref<18x16x4xf32, #tpu.memory_space<vmem>>, vector<16x16x4xf32>
    %213 = vector.shape_cast %212 : vector<16x16x4xf32> to vector<256x4xf32>
    %c255_i32_190 = arith.constant 255 : i32
    %214 = tpu.dynamic_rotate %213 by %c255_i32_190 dim 0 : vector<256x4xf32>, i32 -> vector<256x4xf32>
    %215 = arith.mulf %214, %13 : vector<256x4xf32>
    %c2_191 = arith.constant 2 : index
    %c0_192 = arith.constant 0 : index
    %c0_193 = arith.constant 0 : index
    %216 = vector.load %arg2[%c2_191, %c0_192, %c0_193] : memref<9x4x4xf32, #tpu.memory_space<vmem>>, vector<1x4x4xf32>
    %217 = vector.shape_cast %216 : vector<1x4x4xf32> to vector<4x4xf32>
    %cst_194 = arith.constant dense<0.000000e+00> : vector<256x4xf32>
    %218 = tpu.matmul %215, %217, %cst_194 {dimension_numbers = #tpu.dot_dimension_numbers<[1], [0], [0], [1], [0, 0, 1, 1], [], []>} : vector<256x4xf32>, vector<4x4xf32>, vector<256x4xf32> -> vector<256x4xf32>
    %219 = arith.addf %211, %218 : vector<256x4xf32>
    %c1_195 = arith.constant 1 : index
    %c0_196 = arith.constant 0 : index
    %c0_197 = arith.constant 0 : index
    %220 = vector.load %arg5[%c1_195, %c0_196, %c0_197] : memref<18x16x4xf32, #tpu.memory_space<vmem>>, vector<16x16x4xf32>
    %221 = vector.shape_cast %220 : vector<16x16x4xf32> to vector<256x4xf32>
    %c1_i32_198 = arith.constant 1 : i32
    %222 = tpu.dynamic_rotate %221 by %c1_i32_198 dim 0 : vector<256x4xf32>, i32 -> vector<256x4xf32>
    %223 = arith.mulf %222, %9 : vector<256x4xf32>
    %c3_199 = arith.constant 3 : index
    %c0_200 = arith.constant 0 : index
    %c0_201 = arith.constant 0 : index
    %224 = vector.load %arg2[%c3_199, %c0_200, %c0_201] : memref<9x4x4xf32, #tpu.memory_space<vmem>>, vector<1x4x4xf32>
    %225 = vector.shape_cast %224 : vector<1x4x4xf32> to vector<4x4xf32>
    %cst_202 = arith.constant dense<0.000000e+00> : vector<256x4xf32>
    %226 = tpu.matmul %223, %225, %cst_202 {dimension_numbers = #tpu.dot_dimension_numbers<[1], [0], [0], [1], [0, 0, 1, 1], [], []>} : vector<256x4xf32>, vector<4x4xf32>, vector<256x4xf32> -> vector<256x4xf32>
    %227 = arith.addf %219, %226 : vector<256x4xf32>
    %c1_203 = arith.constant 1 : index
    %c0_204 = arith.constant 0 : index
    %c0_205 = arith.constant 0 : index
    %228 = vector.load %arg5[%c1_203, %c0_204, %c0_205] : memref<18x16x4xf32, #tpu.memory_space<vmem>>, vector<16x16x4xf32>
    %229 = vector.shape_cast %228 : vector<16x16x4xf32> to vector<256x4xf32>
    %c4_206 = arith.constant 4 : index
    %c0_207 = arith.constant 0 : index
    %c0_208 = arith.constant 0 : index
    %230 = vector.load %arg2[%c4_206, %c0_207, %c0_208] : memref<9x4x4xf32, #tpu.memory_space<vmem>>, vector<1x4x4xf32>
    %231 = vector.shape_cast %230 : vector<1x4x4xf32> to vector<4x4xf32>
    %cst_209 = arith.constant dense<0.000000e+00> : vector<256x4xf32>
    %232 = tpu.matmul %229, %231, %cst_209 {dimension_numbers = #tpu.dot_dimension_numbers<[1], [0], [0], [1], [0, 0, 1, 1], [], []>} : vector<256x4xf32>, vector<4x4xf32>, vector<256x4xf32> -> vector<256x4xf32>
    %233 = arith.addf %227, %232 : vector<256x4xf32>
    %c1_210 = arith.constant 1 : index
    %c0_211 = arith.constant 0 : index
    %c0_212 = arith.constant 0 : index
    %234 = vector.load %arg5[%c1_210, %c0_211, %c0_212] : memref<18x16x4xf32, #tpu.memory_space<vmem>>, vector<16x16x4xf32>
    %235 = vector.shape_cast %234 : vector<16x16x4xf32> to vector<256x4xf32>
    %c255_i32_213 = arith.constant 255 : i32
    %236 = tpu.dynamic_rotate %235 by %c255_i32_213 dim 0 : vector<256x4xf32>, i32 -> vector<256x4xf32>
    %237 = arith.mulf %236, %13 : vector<256x4xf32>
    %c5_214 = arith.constant 5 : index
    %c0_215 = arith.constant 0 : index
    %c0_216 = arith.constant 0 : index
    %238 = vector.load %arg2[%c5_214, %c0_215, %c0_216] : memref<9x4x4xf32, #tpu.memory_space<vmem>>, vector<1x4x4xf32>
    %239 = vector.shape_cast %238 : vector<1x4x4xf32> to vector<4x4xf32>
    %cst_217 = arith.constant dense<0.000000e+00> : vector<256x4xf32>
    %240 = tpu.matmul %237, %239, %cst_217 {dimension_numbers = #tpu.dot_dimension_numbers<[1], [0], [0], [1], [0, 0, 1, 1], [], []>} : vector<256x4xf32>, vector<4x4xf32>, vector<256x4xf32> -> vector<256x4xf32>
    %241 = arith.addf %233, %240 : vector<256x4xf32>
    %c2_218 = arith.constant 2 : index
    %c0_219 = arith.constant 0 : index
    %c0_220 = arith.constant 0 : index
    %242 = vector.load %arg5[%c2_218, %c0_219, %c0_220] : memref<18x16x4xf32, #tpu.memory_space<vmem>>, vector<16x16x4xf32>
    %243 = vector.shape_cast %242 : vector<16x16x4xf32> to vector<256x4xf32>
    %c1_i32_221 = arith.constant 1 : i32
    %244 = tpu.dynamic_rotate %243 by %c1_i32_221 dim 0 : vector<256x4xf32>, i32 -> vector<256x4xf32>
    %245 = arith.mulf %244, %9 : vector<256x4xf32>
    %c6_222 = arith.constant 6 : index
    %c0_223 = arith.constant 0 : index
    %c0_224 = arith.constant 0 : index
    %246 = vector.load %arg2[%c6_222, %c0_223, %c0_224] : memref<9x4x4xf32, #tpu.memory_space<vmem>>, vector<1x4x4xf32>
    %247 = vector.shape_cast %246 : vector<1x4x4xf32> to vector<4x4xf32>
    %cst_225 = arith.constant dense<0.000000e+00> : vector<256x4xf32>
    %248 = tpu.matmul %245, %247, %cst_225 {dimension_numbers = #tpu.dot_dimension_numbers<[1], [0], [0], [1], [0, 0, 1, 1], [], []>} : vector<256x4xf32>, vector<4x4xf32>, vector<256x4xf32> -> vector<256x4xf32>
    %249 = arith.addf %241, %248 : vector<256x4xf32>
    %c2_226 = arith.constant 2 : index
    %c0_227 = arith.constant 0 : index
    %c0_228 = arith.constant 0 : index
    %250 = vector.load %arg5[%c2_226, %c0_227, %c0_228] : memref<18x16x4xf32, #tpu.memory_space<vmem>>, vector<16x16x4xf32>
    %251 = vector.shape_cast %250 : vector<16x16x4xf32> to vector<256x4xf32>
    %c7_229 = arith.constant 7 : index
    %c0_230 = arith.constant 0 : index
    %c0_231 = arith.constant 0 : index
    %252 = vector.load %arg2[%c7_229, %c0_230, %c0_231] : memref<9x4x4xf32, #tpu.memory_space<vmem>>, vector<1x4x4xf32>
    %253 = vector.shape_cast %252 : vector<1x4x4xf32> to vector<4x4xf32>
    %cst_232 = arith.constant dense<0.000000e+00> : vector<256x4xf32>
    %254 = tpu.matmul %251, %253, %cst_232 {dimension_numbers = #tpu.dot_dimension_numbers<[1], [0], [0], [1], [0, 0, 1, 1], [], []>} : vector<256x4xf32>, vector<4x4xf32>, vector<256x4xf32> -> vector<256x4xf32>
    %255 = arith.addf %249, %254 : vector<256x4xf32>
    %c2_233 = arith.constant 2 : index
    %c0_234 = arith.constant 0 : index
    %c0_235 = arith.constant 0 : index
    %256 = vector.load %arg5[%c2_233, %c0_234, %c0_235] : memref<18x16x4xf32, #tpu.memory_space<vmem>>, vector<16x16x4xf32>
    %257 = vector.shape_cast %256 : vector<16x16x4xf32> to vector<256x4xf32>
    %c255_i32_236 = arith.constant 255 : i32
    %258 = tpu.dynamic_rotate %257 by %c255_i32_236 dim 0 : vector<256x4xf32>, i32 -> vector<256x4xf32>
    %259 = arith.mulf %258, %13 : vector<256x4xf32>
    %c8_237 = arith.constant 8 : index
    %c0_238 = arith.constant 0 : index
    %c0_239 = arith.constant 0 : index
    %260 = vector.load %arg2[%c8_237, %c0_238, %c0_239] : memref<9x4x4xf32, #tpu.memory_space<vmem>>, vector<1x4x4xf32>
    %261 = vector.shape_cast %260 : vector<1x4x4xf32> to vector<4x4xf32>
    %cst_240 = arith.constant dense<0.000000e+00> : vector<256x4xf32>
    %262 = tpu.matmul %259, %261, %cst_240 {dimension_numbers = #tpu.dot_dimension_numbers<[1], [0], [0], [1], [0, 0, 1, 1], [], []>} : vector<256x4xf32>, vector<4x4xf32>, vector<256x4xf32> -> vector<256x4xf32>
    %263 = arith.addf %255, %262 : vector<256x4xf32>
    %cst_241 = arith.constant dense<0.000000e+00> : vector<4xf32>
    %264 = vector.multi_reduction <add>, %263, %cst_241 [0] : vector<256x4xf32> to vector<4xf32>
    %265 = vector.shape_cast %264 : vector<4xf32> to vector<1x4xf32>
    %cst_242 = arith.constant 2.560000e+02 : f32
    %266 = vector.broadcast %cst_242 : f32 to vector<1x4xf32>
    %267 = arith.divf %265, %266 : vector<1x4xf32>
    %268 = vector.broadcast %267 : vector<1x4xf32> to vector<256x4xf32>
    %269 = arith.subf %263, %268 : vector<256x4xf32>
    %270 = arith.mulf %269, %269 : vector<256x4xf32>
    %cst_243 = arith.constant dense<0.000000e+00> : vector<4xf32>
    %271 = vector.multi_reduction <add>, %270, %cst_243 [0] : vector<256x4xf32> to vector<4xf32>
    %272 = vector.shape_cast %271 : vector<4xf32> to vector<1x4xf32>
    %cst_244 = arith.constant 2.560000e+02 : f32
    %273 = vector.broadcast %cst_244 : f32 to vector<1x4xf32>
    %274 = arith.divf %272, %273 : vector<1x4xf32>
    %cst_245 = arith.constant 9.99999974E-6 : f32
    %275 = vector.broadcast %cst_245 : f32 to vector<1x4xf32>
    %276 = arith.addf %274, %275 : vector<1x4xf32>
    %277 = math.rsqrt %276 : vector<1x4xf32>
    %278 = vector.broadcast %277 : vector<1x4xf32> to vector<256x4xf32>
    %279 = arith.mulf %269, %278 : vector<256x4xf32>
    %cst_246 = arith.constant 0.000000e+00 : f32
    %280 = vector.broadcast %cst_246 : f32 to vector<256x4xf32>
    %281 = arith.maximumf %279, %280 : vector<256x4xf32>
    %282 = vector.shape_cast %281 : vector<256x4xf32> to vector<16x16x4xf32>
    %c1_247 = arith.constant 1 : index
    %c0_248 = arith.constant 0 : index
    %c0_249 = arith.constant 0 : index
    %283 = vector.load %arg5[%c1_247, %c0_248, %c0_249] : memref<18x16x4xf32, #tpu.memory_space<vmem>>, vector<16x16x4xf32>
    tpu.vector_store %arg5[%c1_247, %c0_248, %c0_249], %282 {strides = array<i32>} : memref<18x16x4xf32, #tpu.memory_space<vmem>>, vector<16x16x4xf32>,
    %cst_250 = arith.constant 0.000000e+00 : f32
    %284 = vector.broadcast %cst_250 : f32 to vector<256x4xf32>
    %c0_251 = arith.constant 0 : index
    %c0_252 = arith.constant 0 : index
    %c0_253 = arith.constant 0 : index
    %285 = vector.load %arg5[%c0_251, %c0_252, %c0_253] : memref<18x16x4xf32, #tpu.memory_space<vmem>>, vector<16x16x4xf32>
    %286 = vector.shape_cast %285 : vector<16x16x4xf32> to vector<256x4xf32>
    %c1_i32_254 = arith.constant 1 : i32
    %287 = tpu.dynamic_rotate %286 by %c1_i32_254 dim 0 : vector<256x4xf32>, i32 -> vector<256x4xf32>
    %288 = arith.mulf %287, %9 : vector<256x4xf32>
    %c0_255 = arith.constant 0 : index
    %c0_256 = arith.constant 0 : index
    %c0_257 = arith.constant 0 : index
    %289 = vector.load %arg3[%c0_255, %c0_256, %c0_257] : memref<9x4x4xf32, #tpu.memory_space<vmem>>, vector<1x4x4xf32>
    %290 = vector.shape_cast %289 : vector<1x4x4xf32> to vector<4x4xf32>
    %cst_258 = arith.constant dense<0.000000e+00> : vector<256x4xf32>
    %291 = tpu.matmul %288, %290, %cst_258 {dimension_numbers = #tpu.dot_dimension_numbers<[1], [0], [0], [1], [0, 0, 1, 1], [], []>} : vector<256x4xf32>, vector<4x4xf32>, vector<256x4xf32> -> vector<256x4xf32>
    %292 = arith.addf %284, %291 : vector<256x4xf32>
    %c0_259 = arith.constant 0 : index
    %c0_260 = arith.constant 0 : index
    %c0_261 = arith.constant 0 : index
    %293 = vector.load %arg5[%c0_259, %c0_260, %c0_261] : memref<18x16x4xf32, #tpu.memory_space<vmem>>, vector<16x16x4xf32>
    %294 = vector.shape_cast %293 : vector<16x16x4xf32> to vector<256x4xf32>
    %c1_262 = arith.constant 1 : index
    %c0_263 = arith.constant 0 : index
    %c0_264 = arith.constant 0 : index
    %295 = vector.load %arg3[%c1_262, %c0_263, %c0_264] : memref<9x4x4xf32, #tpu.memory_space<vmem>>, vector<1x4x4xf32>
    %296 = vector.shape_cast %295 : vector<1x4x4xf32> to vector<4x4xf32>
    %cst_265 = arith.constant dense<0.000000e+00> : vector<256x4xf32>
    %297 = tpu.matmul %294, %296, %cst_265 {dimension_numbers = #tpu.dot_dimension_numbers<[1], [0], [0], [1], [0, 0, 1, 1], [], []>} : vector<256x4xf32>, vector<4x4xf32>, vector<256x4xf32> -> vector<256x4xf32>
    %298 = arith.addf %292, %297 : vector<256x4xf32>
    %c0_266 = arith.constant 0 : index
    %c0_267 = arith.constant 0 : index
    %c0_268 = arith.constant 0 : index
    %299 = vector.load %arg5[%c0_266, %c0_267, %c0_268] : memref<18x16x4xf32, #tpu.memory_space<vmem>>, vector<16x16x4xf32>
    %300 = vector.shape_cast %299 : vector<16x16x4xf32> to vector<256x4xf32>
    %c255_i32_269 = arith.constant 255 : i32
    %301 = tpu.dynamic_rotate %300 by %c255_i32_269 dim 0 : vector<256x4xf32>, i32 -> vector<256x4xf32>
    %302 = arith.mulf %301, %13 : vector<256x4xf32>
    %c2_270 = arith.constant 2 : index
    %c0_271 = arith.constant 0 : index
    %c0_272 = arith.constant 0 : index
    %303 = vector.load %arg3[%c2_270, %c0_271, %c0_272] : memref<9x4x4xf32, #tpu.memory_space<vmem>>, vector<1x4x4xf32>
    %304 = vector.shape_cast %303 : vector<1x4x4xf32> to vector<4x4xf32>
    %cst_273 = arith.constant dense<0.000000e+00> : vector<256x4xf32>
    %305 = tpu.matmul %302, %304, %cst_273 {dimension_numbers = #tpu.dot_dimension_numbers<[1], [0], [0], [1], [0, 0, 1, 1], [], []>} : vector<256x4xf32>, vector<4x4xf32>, vector<256x4xf32> -> vector<256x4xf32>
    %306 = arith.addf %298, %305 : vector<256x4xf32>
    %c1_274 = arith.constant 1 : index
    %c0_275 = arith.constant 0 : index
    %c0_276 = arith.constant 0 : index
    %307 = vector.load %arg5[%c1_274, %c0_275, %c0_276] : memref<18x16x4xf32, #tpu.memory_space<vmem>>, vector<16x16x4xf32>
    %308 = vector.shape_cast %307 : vector<16x16x4xf32> to vector<256x4xf32>
    %c1_i32_277 = arith.constant 1 : i32
    %309 = tpu.dynamic_rotate %308 by %c1_i32_277 dim 0 : vector<256x4xf32>, i32 -> vector<256x4xf32>
    %310 = arith.mulf %309, %9 : vector<256x4xf32>
    %c3_278 = arith.constant 3 : index
    %c0_279 = arith.constant 0 : index
    %c0_280 = arith.constant 0 : index
    %311 = vector.load %arg3[%c3_278, %c0_279, %c0_280] : memref<9x4x4xf32, #tpu.memory_space<vmem>>, vector<1x4x4xf32>
    %312 = vector.shape_cast %311 : vector<1x4x4xf32> to vector<4x4xf32>
    %cst_281 = arith.constant dense<0.000000e+00> : vector<256x4xf32>
    %313 = tpu.matmul %310, %312, %cst_281 {dimension_numbers = #tpu.dot_dimension_numbers<[1], [0], [0], [1], [0, 0, 1, 1], [], []>} : vector<256x4xf32>, vector<4x4xf32>, vector<256x4xf32> -> vector<256x4xf32>
    %314 = arith.addf %306, %313 : vector<256x4xf32>
    %c1_282 = arith.constant 1 : index
    %c0_283 = arith.constant 0 : index
    %c0_284 = arith.constant 0 : index
    %315 = vector.load %arg5[%c1_282, %c0_283, %c0_284] : memref<18x16x4xf32, #tpu.memory_space<vmem>>, vector<16x16x4xf32>
    %316 = vector.shape_cast %315 : vector<16x16x4xf32> to vector<256x4xf32>
    %c4_285 = arith.constant 4 : index
    %c0_286 = arith.constant 0 : index
    %c0_287 = arith.constant 0 : index
    %317 = vector.load %arg3[%c4_285, %c0_286, %c0_287] : memref<9x4x4xf32, #tpu.memory_space<vmem>>, vector<1x4x4xf32>
    %318 = vector.shape_cast %317 : vector<1x4x4xf32> to vector<4x4xf32>
    %cst_288 = arith.constant dense<0.000000e+00> : vector<256x4xf32>
    %319 = tpu.matmul %316, %318, %cst_288 {dimension_numbers = #tpu.dot_dimension_numbers<[1], [0], [0], [1], [0, 0, 1, 1], [], []>} : vector<256x4xf32>, vector<4x4xf32>, vector<256x4xf32> -> vector<256x4xf32>
    %320 = arith.addf %314, %319 : vector<256x4xf32>
    %c1_289 = arith.constant 1 : index
    %c0_290 = arith.constant 0 : index
    %c0_291 = arith.constant 0 : index
    %321 = vector.load %arg5[%c1_289, %c0_290, %c0_291] : memref<18x16x4xf32, #tpu.memory_space<vmem>>, vector<16x16x4xf32>
    %322 = vector.shape_cast %321 : vector<16x16x4xf32> to vector<256x4xf32>
    %c255_i32_292 = arith.constant 255 : i32
    %323 = tpu.dynamic_rotate %322 by %c255_i32_292 dim 0 : vector<256x4xf32>, i32 -> vector<256x4xf32>
    %324 = arith.mulf %323, %13 : vector<256x4xf32>
    %c5_293 = arith.constant 5 : index
    %c0_294 = arith.constant 0 : index
    %c0_295 = arith.constant 0 : index
    %325 = vector.load %arg3[%c5_293, %c0_294, %c0_295] : memref<9x4x4xf32, #tpu.memory_space<vmem>>, vector<1x4x4xf32>
    %326 = vector.shape_cast %325 : vector<1x4x4xf32> to vector<4x4xf32>
    %cst_296 = arith.constant dense<0.000000e+00> : vector<256x4xf32>
    %327 = tpu.matmul %324, %326, %cst_296 {dimension_numbers = #tpu.dot_dimension_numbers<[1], [0], [0], [1], [0, 0, 1, 1], [], []>} : vector<256x4xf32>, vector<4x4xf32>, vector<256x4xf32> -> vector<256x4xf32>
    %328 = arith.addf %320, %327 : vector<256x4xf32>
    %c2_297 = arith.constant 2 : index
    %c0_298 = arith.constant 0 : index
    %c0_299 = arith.constant 0 : index
    %329 = vector.load %arg5[%c2_297, %c0_298, %c0_299] : memref<18x16x4xf32, #tpu.memory_space<vmem>>, vector<16x16x4xf32>
    %330 = vector.shape_cast %329 : vector<16x16x4xf32> to vector<256x4xf32>
    %c1_i32_300 = arith.constant 1 : i32
    %331 = tpu.dynamic_rotate %330 by %c1_i32_300 dim 0 : vector<256x4xf32>, i32 -> vector<256x4xf32>
    %332 = arith.mulf %331, %9 : vector<256x4xf32>
    %c6_301 = arith.constant 6 : index
    %c0_302 = arith.constant 0 : index
    %c0_303 = arith.constant 0 : index
    %333 = vector.load %arg3[%c6_301, %c0_302, %c0_303] : memref<9x4x4xf32, #tpu.memory_space<vmem>>, vector<1x4x4xf32>
    %334 = vector.shape_cast %333 : vector<1x4x4xf32> to vector<4x4xf32>
    %cst_304 = arith.constant dense<0.000000e+00> : vector<256x4xf32>
    %335 = tpu.matmul %332, %334, %cst_304 {dimension_numbers = #tpu.dot_dimension_numbers<[1], [0], [0], [1], [0, 0, 1, 1], [], []>} : vector<256x4xf32>, vector<4x4xf32>, vector<256x4xf32> -> vector<256x4xf32>
    %336 = arith.addf %328, %335 : vector<256x4xf32>
    %c2_305 = arith.constant 2 : index
    %c0_306 = arith.constant 0 : index
    %c0_307 = arith.constant 0 : index
    %337 = vector.load %arg5[%c2_305, %c0_306, %c0_307] : memref<18x16x4xf32, #tpu.memory_space<vmem>>, vector<16x16x4xf32>
    %338 = vector.shape_cast %337 : vector<16x16x4xf32> to vector<256x4xf32>
    %c7_308 = arith.constant 7 : index
    %c0_309 = arith.constant 0 : index
    %c0_310 = arith.constant 0 : index
    %339 = vector.load %arg3[%c7_308, %c0_309, %c0_310] : memref<9x4x4xf32, #tpu.memory_space<vmem>>, vector<1x4x4xf32>
    %340 = vector.shape_cast %339 : vector<1x4x4xf32> to vector<4x4xf32>
    %cst_311 = arith.constant dense<0.000000e+00> : vector<256x4xf32>
    %341 = tpu.matmul %338, %340, %cst_311 {dimension_numbers = #tpu.dot_dimension_numbers<[1], [0], [0], [1], [0, 0, 1, 1], [], []>} : vector<256x4xf32>, vector<4x4xf32>, vector<256x4xf32> -> vector<256x4xf32>
    %342 = arith.addf %336, %341 : vector<256x4xf32>
    %c2_312 = arith.constant 2 : index
    %c0_313 = arith.constant 0 : index
    %c0_314 = arith.constant 0 : index
    %343 = vector.load %arg5[%c2_312, %c0_313, %c0_314] : memref<18x16x4xf32, #tpu.memory_space<vmem>>, vector<16x16x4xf32>
    %344 = vector.shape_cast %343 : vector<16x16x4xf32> to vector<256x4xf32>
    %c255_i32_315 = arith.constant 255 : i32
    %345 = tpu.dynamic_rotate %344 by %c255_i32_315 dim 0 : vector<256x4xf32>, i32 -> vector<256x4xf32>
    %346 = arith.mulf %345, %13 : vector<256x4xf32>
    %c8_316 = arith.constant 8 : index
    %c0_317 = arith.constant 0 : index
    %c0_318 = arith.constant 0 : index
    %347 = vector.load %arg3[%c8_316, %c0_317, %c0_318] : memref<9x4x4xf32, #tpu.memory_space<vmem>>, vector<1x4x4xf32>
    %348 = vector.shape_cast %347 : vector<1x4x4xf32> to vector<4x4xf32>
    %cst_319 = arith.constant dense<0.000000e+00> : vector<256x4xf32>
    %349 = tpu.matmul %346, %348, %cst_319 {dimension_numbers = #tpu.dot_dimension_numbers<[1], [0], [0], [1], [0, 0, 1, 1], [], []>} : vector<256x4xf32>, vector<4x4xf32>, vector<256x4xf32> -> vector<256x4xf32>
    %350 = arith.addf %342, %349 : vector<256x4xf32>
    %cst_320 = arith.constant dense<0.000000e+00> : vector<4xf32>
    %351 = vector.multi_reduction <add>, %350, %cst_320 [0] : vector<256x4xf32> to vector<4xf32>
    %352 = vector.shape_cast %351 : vector<4xf32> to vector<1x4xf32>
    %cst_321 = arith.constant 2.560000e+02 : f32
    %353 = vector.broadcast %cst_321 : f32 to vector<1x4xf32>
    %354 = arith.divf %352, %353 : vector<1x4xf32>
    %355 = vector.broadcast %354 : vector<1x4xf32> to vector<256x4xf32>
    %356 = arith.subf %350, %355 : vector<256x4xf32>
    %357 = arith.mulf %356, %356 : vector<256x4xf32>
    %cst_322 = arith.constant dense<0.000000e+00> : vector<4xf32>
    %358 = vector.multi_reduction <add>, %357, %cst_322 [0] : vector<256x4xf32> to vector<4xf32>
    %359 = vector.shape_cast %358 : vector<4xf32> to vector<1x4xf32>
    %cst_323 = arith.constant 2.560000e+02 : f32
    %360 = vector.broadcast %cst_323 : f32 to vector<1x4xf32>
    %361 = arith.divf %359, %360 : vector<1x4xf32>
    %cst_324 = arith.constant 9.99999974E-6 : f32
    %362 = vector.broadcast %cst_324 : f32 to vector<1x4xf32>
    %363 = arith.addf %361, %362 : vector<1x4xf32>
    %364 = math.rsqrt %363 : vector<1x4xf32>
    %365 = vector.broadcast %364 : vector<1x4xf32> to vector<256x4xf32>
    %366 = arith.mulf %356, %365 : vector<256x4xf32>
    %367 = vector.shape_cast %366 : vector<256x4xf32> to vector<16x16x4xf32>
    %c1_325 = arith.constant 1 : index
    %c0_326 = arith.constant 0 : index
    %c0_327 = arith.constant 0 : index
    %c0_328 = arith.constant 0 : index
    %368 = vector.load %arg1[%c1_325, %c0_326, %c0_327, %c0_328] : memref<2x16x16x4xf32, #tpu.memory_space<vmem>>, vector<1x16x16x4xf32>
    %369 = vector.shape_cast %368 : vector<1x16x16x4xf32> to vector<16x16x4xf32>
    %370 = arith.addf %367, %369 : vector<16x16x4xf32>
    %c1_329 = arith.constant 1 : index
    %c0_330 = arith.constant 0 : index
    %c0_331 = arith.constant 0 : index
    %c0_332 = arith.constant 0 : index
    %371 = vector.load %arg4[%c1_329, %c0_330, %c0_331, %c0_332] : memref<2x16x16x4xf32, #tpu.memory_space<vmem>>, vector<1x16x16x4xf32>
    %372 = vector.shape_cast %371 : vector<1x16x16x4xf32> to vector<16x16x4xf32>
    %373 = vector.shape_cast %370 : vector<16x16x4xf32> to vector<1x16x16x4xf32>
    tpu.vector_store %arg4[%c1_329, %c0_330, %c0_331, %c0_332], %373 {strides = array<i32>} : memref<2x16x16x4xf32, #tpu.memory_space<vmem>>, vector<1x16x16x4xf32>,
    return
  }
  func.func @transform_0(%arg0: i32) -> (i32, i32, i32, i32) {
    %c0_i32 = arith.constant 0 : i32
    %c0_i32_0 = arith.constant 0 : i32
    %c0_i32_1 = arith.constant 0 : i32
    %c0_i32_2 = arith.constant 0 : i32
    return %arg0, %c0_i32, %c0_i32_0, %c0_i32_1 : i32, i32, i32, i32
  }
  func.func @transform_1(%arg0: i32) -> (i32, i32, i32) {
    %c0_i32 = arith.constant 0 : i32
    %c0_i32_0 = arith.constant 0 : i32
    %c0_i32_1 = arith.constant 0 : i32
    %c0_i32_2 = arith.constant 0 : i32
    return %c0_i32, %c0_i32_0, %c0_i32_1 : i32, i32, i32
  }
  func.func @transform_2(%arg0: i32) -> (i32, i32, i32) {
    %c0_i32 = arith.constant 0 : i32
    %c0_i32_0 = arith.constant 0 : i32
    %c0_i32_1 = arith.constant 0 : i32
    %c0_i32_2 = arith.constant 0 : i32
    return %c0_i32, %c0_i32_0, %c0_i32_1 : i32, i32, i32
  }
  func.func @transform_3(%arg0: i32) -> (i32, i32, i32, i32) {
    %c0_i32 = arith.constant 0 : i32
    %c0_i32_0 = arith.constant 0 : i32
    %c0_i32_1 = arith.constant 0 : i32
    %c0_i32_2 = arith.constant 0 : i32
    return %arg0, %c0_i32, %c0_i32_0, %c0_i32_1 : i32, i32, i32, i32
  }
}

</mosaic_0001>

<llo_original>
// kernel: residual_block.1
$region0: #{residual_block.1}
  #allocation0 [shape = 'u32[]', space=smem, size = 0x4, offset = 0x4, fixed_abs, tag = 'smem constant byte address 0x4 - core index']
  #allocation1 [shape = 'u32[72,128]{1,0:T(1,128)}', space=vmem, size = 0x9000, scoped, tag = 'internal scratch']
  #allocation2 [shape = 'f32[18,16,4]{2,1,0:T(8,128)}', space=vmem, size = 0x24000, scoped, tag = 'scratch operand']
  %s0 = inlined_call_operand.vmem [shape: f32[2,16,16,4], index: 0, kind: input, shape index: {}]
  %s1 = inlined_call_operand.vmem [shape: f32[9,4,4], index: 1, kind: input, shape index: {}]
  %s2 = inlined_call_operand.vmem [shape: f32[9,4,4], index: 2, kind: input, shape index: {}]
  %s3 = inlined_call_operand.vmem [shape: f32[2,16,16,4], index: 3, kind: output, shape index: {}]
  %s4 = sld [smem:[#allocation0]]
  $region22: #{residual_block.1} parent=0
    _
  %s6 = ssub.s32 1, %s4
  %s7 = scalar_select 0, %s6, %s4
  // Predicated region
  $region2: #{residual_block.1} parent=0 // pred_check
    _
  $region3: #{residual_block.1} parent=0 // pred_check_branch
    %9 = sbr.rel (0) target = $region5
  $region4: #{residual_block.1} parent=0 // pred_region
    _
  $region5: #{residual_block.1} parent=0 // pred_fallthru
    _
  // Predicated region
  $region6: #{residual_block.1} parent=0 // pred_check
    _
  $region7: #{residual_block.1} parent=0 // pred_check_branch
    %11 = sbr.rel (0) target = $region9
  $region8: #{residual_block.1} parent=0 // pred_region
    _
  $region9: #{residual_block.1} parent=0 // pred_fallthru
    _
  // Predicated region
  $region10: #{residual_block.1} parent=0 // pred_check
    _
  $region11: #{residual_block.1} parent=0 // pred_check_branch
    %13 = sbr.rel (0) target = $region13
  $region12: #{residual_block.1} parent=0 // pred_region
    _
  $region13: #{residual_block.1} parent=0 // pred_fallthru
    _
  %vm14 = vcmask 31744
  %15 = vst.msk [vmem:[#allocation2] sm:$0xff] %vm14, 0.0
  %16 = vst.msk [vmem:[#allocation2 + $0x8] sm:$0xff] %vm14, 0.0
  %s17 = scalar_lea.vmem [#allocation2], 272
  %18 = vst.msk [vmem:[%s17] sm:$0xff] %vm14, 0.0
  %19 = vst.msk [vmem:[%s17 + $0x8] sm:$0xff] %vm14, 0.0
  %v20 = vlaneseq
  %v21 = vshrl.u32 %v20, 7
  %v22 = vadd.s32 %v21, 8
  %vm23 = vcmp.ne.s32.totalorder %v21, 0
  %vm24 = vcmp.ne.s32.totalorder %v22, 0
  %v25 = vsel %vm23, 1, 0
  %v26 = vsel %vm24, 1, 0
  %v27 = vcvt.s32.f32 %v25
  %v28 = vcvt.s32.f32 %v26
  %vm29 = vcmp.ne.s32.totalorder %v21, 15
  %vm30 = vcmp.ne.s32.totalorder %v22, 15
  %v31 = vsel %vm29, 1, 0
  %v32 = vsel %vm30, 1, 0
  %v33 = vcvt.s32.f32 %v31
  %v34 = vcvt.s32.f32 %v32
  %v35 = vld [vmem:[%s0] sm:$0xff]
  %v36 = vld [vmem:[%s0 + $0x8] sm:$0xff]
  %v37 = vld [vmem:[%s0 + $0x10] sm:$0xff]
  %v38 = vld [vmem:[%s0 + $0x18] sm:$0xff]
  %v39 = vld [vmem:[%s0 + $0x20] sm:$0xff]
  %v40 = vld [vmem:[%s0 + $0x28] sm:$0xff]
  %v41 = vld [vmem:[%s0 + $0x30] sm:$0xff]
  %v42 = vld [vmem:[%s0 + $0x38] sm:$0xff]
  %v43 = vld [vmem:[%s0 + $0x40] sm:$0xff]
  %v44 = vld [vmem:[%s0 + $0x48] sm:$0xff]
  %v45 = vld [vmem:[%s0 + $0x50] sm:$0xff]
  %v46 = vld [vmem:[%s0 + $0x58] sm:$0xff]
  %v47 = vld [vmem:[%s0 + $0x60] sm:$0xff]
  %v48 = vld [vmem:[%s0 + $0x68] sm:$0xff]
  %v49 = vld [vmem:[%s0 + $0x70] sm:$0xff]
  %v50 = vld [vmem:[%s0 + $0x78] sm:$0xff]
  %v51 = vld [vmem:[%s0 + $0x80] sm:$0xff]
  %v52 = vld [vmem:[%s0 + $0x88] sm:$0xff]
  %v53 = vld [vmem:[%s0 + $0x90] sm:$0xff]
  %v54 = vld [vmem:[%s0 + $0x98] sm:$0xff]
  %v55 = vld [vmem:[%s0 + $0xa0] sm:$0xff]
  %v56 = vld [vmem:[%s0 + $0xa8] sm:$0xff]
  %v57 = vld [vmem:[%s0 + $0xb0] sm:$0xff]
  %v58 = vld [vmem:[%s0 + $0xb8] sm:$0xff]
  %v59 = vld [vmem:[%s0 + $0xc0] sm:$0xff]
  %v60 = vld [vmem:[%s0 + $0xc8] sm:$0xff]
  %v61 = vld [vmem:[%s0 + $0xd0] sm:$0xff]
  %v62 = vld [vmem:[%s0 + $0xd8] sm:$0xff]
  %v63 = vld [vmem:[%s0 + $0xe0] sm:$0xff]
  %v64 = vld [vmem:[%s0 + $0xe8] sm:$0xff]
  %v65 = vld [vmem:[%s0 + $0xf0] sm:$0xff]
  %v66 = vld [vmem:[%s0 + $0xf8] sm:$0xff]
  %s67 = scalar_lea.vmem [#allocation2], 16
  %68 = vst.msk [vmem:[%s67] sm:$0xff] %vm14, %v35
  %69 = vst.msk [vmem:[%s67 + $0x8] sm:$0xff] %vm14, %v36
  %70 = vst.msk [vmem:[%s67 + $0x10] sm:$0xff] %vm14, %v37
  %71 = vst.msk [vmem:[%s67 + $0x18] sm:$0xff] %vm14, %v38
  %72 = vst.msk [vmem:[%s67 + $0x20] sm:$0xff] %vm14, %v39
  %73 = vst.msk [vmem:[%s67 + $0x28] sm:$0xff] %vm14, %v40
  %74 = vst.msk [vmem:[%s67 + $0x30] sm:$0xff] %vm14, %v41
  %75 = vst.msk [vmem:[%s67 + $0x38] sm:$0xff] %vm14, %v42
  %76 = vst.msk [vmem:[%s67 + $0x40] sm:$0xff] %vm14, %v43
  %77 = vst.msk [vmem:[%s67 + $0x48] sm:$0xff] %vm14, %v44
  %78 = vst.msk [vmem:[%s67 + $0x50] sm:$0xff] %vm14, %v45
  %79 = vst.msk [vmem:[%s67 + $0x58] sm:$0xff] %vm14, %v46
  %80 = vst.msk [vmem:[%s67 + $0x60] sm:$0xff] %vm14, %v47
  %81 = vst.msk [vmem:[%s67 + $0x68] sm:$0xff] %vm14, %v48
  %82 = vst.msk [vmem:[%s67 + $0x70] sm:$0xff] %vm14, %v49
  %83 = vst.msk [vmem:[%s67 + $0x78] sm:$0xff] %vm14, %v50
  %84 = vst.msk [vmem:[%s67 + $0x80] sm:$0xff] %vm14, %v51
  %85 = vst.msk [vmem:[%s67 + $0x88] sm:$0xff] %vm14, %v52
  %86 = vst.msk [vmem:[%s67 + $0x90] sm:$0xff] %vm14, %v53
  %87 = vst.msk [vmem:[%s67 + $0x98] sm:$0xff] %vm14, %v54
  %88 = vst.msk [vmem:[%s67 + $0xa0] sm:$0xff] %vm14, %v55
  %89 = vst.msk [vmem:[%s67 + $0xa8] sm:$0xff] %vm14, %v56
  %90 = vst.msk [vmem:[%s67 + $0xb0] sm:$0xff] %vm14, %v57
  %91 = vst.msk [vmem:[%s67 + $0xb8] sm:$0xff] %vm14, %v58
  %92 = vst.msk [vmem:[%s67 + $0xc0] sm:$0xff] %vm14, %v59
  %93 = vst.msk [vmem:[%s67 + $0xc8] sm:$0xff] %vm14, %v60
  %94 = vst.msk [vmem:[%s67 + $0xd0] sm:$0xff] %vm14, %v61
  %95 = vst.msk [vmem:[%s67 + $0xd8] sm:$0xff] %vm14, %v62
  %96 = vst.msk [vmem:[%s67 + $0xe0] sm:$0xff] %vm14, %v63
  %97 = vst.msk [vmem:[%s67 + $0xe8] sm:$0xff] %vm14, %v64
  %98 = vst.msk [vmem:[%s67 + $0xf0] sm:$0xff] %vm14, %v65
  %99 = vst.msk [vmem:[%s67 + $0xf8] sm:$0xff] %vm14, %v66
  %v100 = vld [vmem:[#allocation2] sm:$0xff]
  %v101 = vld [vmem:[#allocation2 + $0x8] sm:$0xff]
  %v102 = vld [vmem:[#allocation2 + $0x10] sm:$0xff]
  %v103 = vld [vmem:[#allocation2 + $0x18] sm:$0xff]
  %v104 = vld [vmem:[#allocation2 + $0x20] sm:$0xff]
  %v105 = vld [vmem:[#allocation2 + $0x28] sm:$0xff]
  %v106 = vld [vmem:[#allocation2 + $0x30] sm:$0xff]
  %v107 = vld [vmem:[#allocation2 + $0x38] sm:$0xff]
  %v108 = vld [vmem:[#allocation2 + $0x40] sm:$0xff]
  %v109 = vld [vmem:[#allocation2 + $0x48] sm:$0xff]
  %v110 = vld [vmem:[#allocation2 + $0x50] sm:$0xff]
  %v111 = vld [vmem:[#allocation2 + $0x58] sm:$0xff]
  %v112 = vld [vmem:[#allocation2 + $0x60] sm:$0xff]
  %v113 = vld [vmem:[#allocation2 + $0x68] sm:$0xff]
  %v114 = vld [vmem:[#allocation2 + $0x70] sm:$0xff]
  %v115 = vld [vmem:[#allocation2 + $0x78] sm:$0xff]
  %v116 = vld [vmem:[#allocation2 + $0x80] sm:$0xff]
  %v117 = vld [vmem:[#allocation2 + $0x88] sm:$0xff]
  %v118 = vld [vmem:[#allocation2 + $0x90] sm:$0xff]
  %v119 = vld [vmem:[#allocation2 + $0x98] sm:$0xff]
  %v120 = vld [vmem:[#allocation2 + $0xa0] sm:$0xff]
  %v121 = vld [vmem:[#allocation2 + $0xa8] sm:$0xff]
  %v122 = vld [vmem:[#allocation2 + $0xb0] sm:$0xff]
  %v123 = vld [vmem:[#allocation2 + $0xb8] sm:$0xff]
  %v124 = vld [vmem:[#allocation2 + $0xc0] sm:$0xff]
  %v125 = vld [vmem:[#allocation2 + $0xc8] sm:$0xff]
  %v126 = vld [vmem:[#allocation2 + $0xd0] sm:$0xff]
  %v127 = vld [vmem:[#allocation2 + $0xd8] sm:$0xff]
  %v128 = vld [vmem:[#allocation2 + $0xe0] sm:$0xff]
  %v129 = vld [vmem:[#allocation2 + $0xe8] sm:$0xff]
  %v130 = vld [vmem:[#allocation2 + $0xf0] sm:$0xff]
  %v131 = vld [vmem:[#allocation2 + $0xf8] sm:$0xff]
  %v132 = vrot.slane %v100, 7
  %v133 = vrot.slane %v101, 7
  %v134 = vrot.slane %v102, 7
  %v135 = vrot.slane %v103, 7
  %v136 = vrot.slane %v104, 7
  %v137 = vrot.slane %v105, 7
  %v138 = vrot.slane %v106, 7
  %v139 = vrot.slane %v107, 7
  %v140 = vrot.slane %v108, 7
  %v141 = vrot.slane %v109, 7
  %v142 = vrot.slane %v110, 7
  %v143 = vrot.slane %v111, 7
  %v144 = vrot.slane %v112, 7
  %v145 = vrot.slane %v113, 7
  %v146 = vrot.slane %v114, 7
  %v147 = vrot.slane %v115, 7
  %v148 = vrot.slane %v116, 7
  %v149 = vrot.slane %v117, 7
  %v150 = vrot.slane %v118, 7
  %v151 = vrot.slane %v119, 7
  %v152 = vrot.slane %v120, 7
  %v153 = vrot.slane %v121, 7
  %v154 = vrot.slane %v122, 7
  %v155 = vrot.slane %v123, 7
  %v156 = vrot.slane %v124, 7
  %v157 = vrot.slane %v125, 7
  %v158 = vrot.slane %v126, 7
  %v159 = vrot.slane %v127, 7
  %v160 = vrot.slane %v128, 7
  %v161 = vrot.slane %v129, 7
  %v162 = vrot.slane %v130, 7
  %v163 = vrot.slane %v131, 7
  %vm164 = vcmp.lt.s32.totalorder %v21, 1
  %v165 = vsel %vm164, %v162, %v163
  %v166 = vsel %vm164, %v161, %v162
  %v167 = vsel %vm164, %v160, %v161
  %v168 = vsel %vm164, %v159, %v160
  %v169 = vsel %vm164, %v158, %v159
  %v170 = vsel %vm164, %v157, %v158
  %v171 = vsel %vm164, %v156, %v157
  %v172 = vsel %vm164, %v155, %v156
  %v173 = vsel %vm164, %v154, %v155
  %v174 = vsel %vm164, %v153, %v154
  %v175 = vsel %vm164, %v152, %v153
  %v176 = vsel %vm164, %v151, %v152
  %v177 = vsel %vm164, %v150, %v151
  %v178 = vsel %vm164, %v149, %v150
  %v179 = vsel %vm164, %v148, %v149
  %v180 = vsel %vm164, %v147, %v148
  %v181 = vsel %vm164, %v146, %v147
  %v182 = vsel %vm164, %v145, %v146
  %v183 = vsel %vm164, %v144, %v145
  %v184 = vsel %vm164, %v143, %v144
  %v185 = vsel %vm164, %v142, %v143
  %v186 = vsel %vm164, %v141, %v142
  %v187 = vsel %vm164, %v140, %v141
  %v188 = vsel %vm164, %v139, %v140
  %v189 = vsel %vm164, %v138, %v139
  %v190 = vsel %vm164, %v137, %v138
  %v191 = vsel %vm164, %v136, %v137
  %v192 = vsel %vm164, %v135, %v136
  %v193 = vsel %vm164, %v134, %v135
  %v194 = vsel %vm164, %v133, %v134
  %v195 = vsel %vm164, %v132, %v133
  %v196 = vsel %vm164, %v163, %v132
  %v197 = vmul.f32 %v196, %v27
  %v198 = vmul.f32 %v195, %v28
  %v199 = vmul.f32 %v194, %v27
  %v200 = vmul.f32 %v193, %v28
  %v201 = vmul.f32 %v192, %v27
  %v202 = vmul.f32 %v191, %v28
  %v203 = vmul.f32 %v190, %v27
  %v204 = vmul.f32 %v189, %v28
  %v205 = vmul.f32 %v188, %v27
  %v206 = vmul.f32 %v187, %v28
  %v207 = vmul.f32 %v186, %v27
  %v208 = vmul.f32 %v185, %v28
  %v209 = vmul.f32 %v184, %v27
  %v210 = vmul.f32 %v183, %v28
  %v211 = vmul.f32 %v182, %v27
  %v212 = vmul.f32 %v181, %v28
  %v213 = vmul.f32 %v180, %v27
  %v214 = vmul.f32 %v179, %v28
  %v215 = vmul.f32 %v178, %v27
  %v216 = vmul.f32 %v177, %v28
  %v217 = vmul.f32 %v176, %v27
  %v218 = vmul.f32 %v175, %v28
  %v219 = vmul.f32 %v174, %v27
  %v220 = vmul.f32 %v173, %v28
  %v221 = vmul.f32 %v172, %v27
  %v222 = vmul.f32 %v171, %v28
  %v223 = vmul.f32 %v170, %v27
  %v224 = vmul.f32 %v169, %v28
  %v225 = vmul.f32 %v168, %v27
  %v226 = vmul.f32 %v167, %v28
  %v227 = vmul.f32 %v166, %v27
  %v228 = vmul.f32 %v165, %v28
  %v229 = vld [vmem:[%s1] sm:$0xf]
  %s230 = scalar_lea.vmem %s1, 4
  %v231 = vld [vmem:[%s230] sm:$0xf]
  %v233 = vsel %vm14, %v100, 0
  %v236 = vsel %vm14, %v101, 0
  %v239 = vsel %vm14, %v102, 0
  %v242 = vsel %vm14, %v103, 0
  %v245 = vsel %vm14, %v104, 0
  %v248 = vsel %vm14, %v105, 0
  %v251 = vsel %vm14, %v106, 0
  %v254 = vsel %vm14, %v107, 0
  %v257 = vsel %vm14, %v108, 0
  %v260 = vsel %vm14, %v109, 0
  %v263 = vsel %vm14, %v110, 0
  %v266 = vsel %vm14, %v111, 0
  %v269 = vsel %vm14, %v112, 0
  %v272 = vsel %vm14, %v113, 0
  %v275 = vsel %vm14, %v114, 0
  %v278 = vsel %vm14, %v115, 0
  %v281 = vsel %vm14, %v116, 0
  %v284 = vsel %vm14, %v117, 0
  %v287 = vsel %vm14, %v118, 0
  %v290 = vsel %vm14, %v119, 0
  %v293 = vsel %vm14, %v120, 0
  %v296 = vsel %vm14, %v121, 0
  %v299 = vsel %vm14, %v122, 0
  %v302 = vsel %vm14, %v123, 0
  %v305 = vsel %vm14, %v124, 0
  %v308 = vsel %vm14, %v125, 0
  %v311 = vsel %vm14, %v126, 0
  %v314 = vsel %vm14, %v127, 0
  %v317 = vsel %vm14, %v128, 0
  %v320 = vsel %vm14, %v129, 0
  %v323 = vsel %vm14, %v130, 0
  %v326 = vsel %vm14, %v131, 0
  %vm328 = vcmask 1043456
  %v330 = vsel %vm328, %v231, 0
  %332 = vmatpush.msra.mxu0 0.0
  %333 = vmatpush.msra.mxu0 0.0
  %334 = vmatpush.msra.mxu0 0.0
  %335 = vmatpush.msra.mxu0 0.0
  %336 = vmatpush.msra.mxu0 0.0
  %337 = vmatpush.msra.mxu0 0.0
  %338 = vmatpush.msra.mxu0 0.0
  %339 = vmatpush.msra.mxu0 0.0
  %340 = vmatpush.msra.mxu0 0.0
  %341 = vmatpush.msra.mxu0 0.0
  %342 = vmatpush.msra.mxu0 0.0
  %343 = vmatpush.msra.mxu0 0.0
  %344 = vmatpush.msra.mxu0 0.0
  %345 = vmatpush.msra.mxu0 0.0
  %346 = vmatpush.msra.mxu0 0.0
  %347 = vmatpush.msra.mxu0 %v330
  %348 = vmatmul.f32.gmra.mxu0 %v233
  %v349 = vpop.f32.mrf.mxu0
  %v350 = vadd.f32 0.0, %v349
  %351 = vmatmul.f32.gmra.mxu0 %v236
  %v352 = vpop.f32.mrf.mxu0
  %v353 = vadd.f32 0.0, %v352
  %354 = vmatmul.f32.gmra.mxu0 %v239
  %v355 = vpop.f32.mrf.mxu0
  %v356 = vadd.f32 0.0, %v355
  %357 = vmatmul.f32.gmra.mxu0 %v242
  %v358 = vpop.f32.mrf.mxu0
  %v359 = vadd.f32 0.0, %v358
  %360 = vmatmul.f32.gmra.mxu0 %v245
  %v361 = vpop.f32.mrf.mxu0
  %v362 = vadd.f32 0.0, %v361
  %363 = vmatmul.f32.gmra.mxu0 %v248
  %v364 = vpop.f32.mrf.mxu0
  %v365 = vadd.f32 0.0, %v364
  %366 = vmatmul.f32.gmra.mxu0 %v251
  %v367 = vpop.f32.mrf.mxu0
  %v368 = vadd.f32 0.0, %v367
  %369 = vmatmul.f32.gmra.mxu0 %v254
  %v370 = vpop.f32.mrf.mxu0
  %v371 = vadd.f32 0.0, %v370
  %372 = vmatmul.f32.gmra.mxu0 %v257
  %v373 = vpop.f32.mrf.mxu0
  %v374 = vadd.f32 0.0, %v373
  %375 = vmatmul.f32.gmra.mxu0 %v260
  %v376 = vpop.f32.mrf.mxu0
  %v377 = vadd.f32 0.0, %v376
  %378 = vmatmul.f32.gmra.mxu0 %v263
  %v379 = vpop.f32.mrf.mxu0
  %v380 = vadd.f32 0.0, %v379
  %381 = vmatmul.f32.gmra.mxu0 %v266
  %v382 = vpop.f32.mrf.mxu0
  %v383 = vadd.f32 0.0, %v382
  %384 = vmatmul.f32.gmra.mxu0 %v269
  %v385 = vpop.f32.mrf.mxu0
  %v386 = vadd.f32 0.0, %v385
  %387 = vmatmul.f32.gmra.mxu0 %v272
  %v388 = vpop.f32.mrf.mxu0
  %v389 = vadd.f32 0.0, %v388
  %390 = vmatmul.f32.gmra.mxu0 %v275
  %v391 = vpop.f32.mrf.mxu0
  %v392 = vadd.f32 0.0, %v391
  %393 = vmatmul.f32.gmra.mxu0 %v278
  %v394 = vpop.f32.mrf.mxu0
  %v395 = vadd.f32 0.0, %v394
  %396 = vmatmul.f32.gmra.mxu0 %v281
  %v397 = vpop.f32.mrf.mxu0
  %v398 = vadd.f32 0.0, %v397
  %399 = vmatmul.f32.gmra.mxu0 %v284
  %v400 = vpop.f32.mrf.mxu0
  %v401 = vadd.f32 0.0, %v400
  %402 = vmatmul.f32.gmra.mxu0 %v287
  %v403 = vpop.f32.mrf.mxu0
  %v404 = vadd.f32 0.0, %v403
  %405 = vmatmul.f32.gmra.mxu0 %v290
  %v406 = vpop.f32.mrf.mxu0
  %v407 = vadd.f32 0.0, %v406
  %408 = vmatmul.f32.gmra.mxu0 %v293
  %v409 = vpop.f32.mrf.mxu0
  %v410 = vadd.f32 0.0, %v409
  %411 = vmatmul.f32.gmra.mxu0 %v296
  %v412 = vpop.f32.mrf.mxu0
  %v413 = vadd.f32 0.0, %v412
  %414 = vmatmul.f32.gmra.mxu0 %v299
  %v415 = vpop.f32.mrf.mxu0
  %v416 = vadd.f32 0.0, %v415
  %417 = vmatmul.f32.gmra.mxu0 %v302
  %v418 = vpop.f32.mrf.mxu0
  %v419 = vadd.f32 0.0, %v418
  %420 = vmatmul.f32.gmra.mxu0 %v305
  %v421 = vpop.f32.mrf.mxu0
  %v422 = vadd.f32 0.0, %v421
  %423 = vmatmul.f32.gmra.mxu0 %v308
  %v424 = vpop.f32.mrf.mxu0
  %v425 = vadd.f32 0.0, %v424
  %426 = vmatmul.f32.gmra.mxu0 %v311
  %v427 = vpop.f32.mrf.mxu0
  %v428 = vadd.f32 0.0, %v427
  %429 = vmatmul.f32.gmra.mxu0 %v314
  %v430 = vpop.f32.mrf.mxu0
  %v431 = vadd.f32 0.0, %v430
  %432 = vmatmul.f32.gmra.mxu0 %v317
  %v433 = vpop.f32.mrf.mxu0
  %v434 = vadd.f32 0.0, %v433
  %435 = vmatmul.f32.gmra.mxu0 %v320
  %v436 = vpop.f32.mrf.mxu0
  %v437 = vadd.f32 0.0, %v436
  %438 = vmatmul.f32.gmra.mxu0 %v323
  %v439 = vpop.f32.mrf.mxu0
  %v440 = vadd.f32 0.0, %v439
  %441 = vmatmul.f32.gmra.mxu0 %v326
  %v442 = vpop.f32.mrf.mxu0
  %v443 = vadd.f32 0.0, %v442
  %444 = vdwg.mxu0
  %v446 = vsel %vm14, %v197, 0
  %v449 = vsel %vm14, %v198, 0
  %v452 = vsel %vm14, %v199, 0
  %v455 = vsel %vm14, %v200, 0
  %v458 = vsel %vm14, %v201, 0
  %v461 = vsel %vm14, %v202, 0
  %v464 = vsel %vm14, %v203, 0
  %v467 = vsel %vm14, %v204, 0
  %v470 = vsel %vm14, %v205, 0
  %v473 = vsel %vm14, %v206, 0
  %v476 = vsel %vm14, %v207, 0
  %v479 = vsel %vm14, %v208, 0
  %v482 = vsel %vm14, %v209, 0
  %v485 = vsel %vm14, %v210, 0
  %v488 = vsel %vm14, %v211, 0
  %v491 = vsel %vm14, %v212, 0
  %v494 = vsel %vm14, %v213, 0
  %v497 = vsel %vm14, %v214, 0
  %v500 = vsel %vm14, %v215, 0
  %v503 = vsel %vm14, %v216, 0
  %v506 = vsel %vm14, %v217, 0
  %v509 = vsel %vm14, %v218, 0
  %v512 = vsel %vm14, %v219, 0
  %v515 = vsel %vm14, %v220, 0
  %v518 = vsel %vm14, %v221, 0
  %v521 = vsel %vm14, %v222, 0
  %v524 = vsel %vm14, %v223, 0
  %v527 = vsel %vm14, %v224, 0
  %v530 = vsel %vm14, %v225, 0
  %v533 = vsel %vm14, %v226, 0
  %v536 = vsel %vm14, %v227, 0
  %v539 = vsel %vm14, %v228, 0
  %v542 = vsel %vm328, %v229, 0
  %544 = vmatpush.msra.mxu0 0.0
  %545 = vmatpush.msra.mxu0 0.0
  %546 = vmatpush.msra.mxu0 0.0
  %547 = vmatpush.msra.mxu0 0.0
  %548 = vmatpush.msra.mxu0 0.0
  %549 = vmatpush.msra.mxu0 0.0
  %550 = vmatpush.msra.mxu0 0.0
  %551 = vmatpush.msra.mxu0 0.0
  %552 = vmatpush.msra.mxu0 0.0
  %553 = vmatpush.msra.mxu0 0.0
  %554 = vmatpush.msra.mxu0 0.0
  %555 = vmatpush.msra.mxu0 0.0
  %556 = vmatpush.msra.mxu0 0.0
  %557 = vmatpush.msra.mxu0 0.0
  %558 = vmatpush.msra.mxu0 0.0
  %559 = vmatpush.msra.mxu0 %v542
  %560 = vmatmul.f32.gmra.mxu0 %v446
  %v561 = vpop.f32.mrf.mxu0
  %v562 = vadd.f32 %v350, %v561
  %563 = vmatmul.f32.gmra.mxu0 %v449
  %v564 = vpop.f32.mrf.mxu0
  %v565 = vadd.f32 %v353, %v564
  %566 = vmatmul.f32.gmra.mxu0 %v452
  %v567 = vpop.f32.mrf.mxu0
  %v568 = vadd.f32 %v356, %v567
  %569 = vmatmul.f32.gmra.mxu0 %v455
  %v570 = vpop.f32.mrf.mxu0
  %v571 = vadd.f32 %v359, %v570
  %572 = vmatmul.f32.gmra.mxu0 %v458
  %v573 = vpop.f32.mrf.mxu0
  %v574 = vadd.f32 %v362, %v573
  %575 = vmatmul.f32.gmra.mxu0 %v461
  %v576 = vpop.f32.mrf.mxu0
  %v577 = vadd.f32 %v365, %v576
  %578 = vmatmul.f32.gmra.mxu0 %v464
  %v579 = vpop.f32.mrf.mxu0
  %v580 = vadd.f32 %v368, %v579
  %581 = vmatmul.f32.gmra.mxu0 %v467
  %v582 = vpop.f32.mrf.mxu0
  %v583 = vadd.f32 %v371, %v582
  %584 = vmatmul.f32.gmra.mxu0 %v470
  %v585 = vpop.f32.mrf.mxu0
  %v586 = vadd.f32 %v374, %v585
  %587 = vmatmul.f32.gmra.mxu0 %v473
  %v588 = vpop.f32.mrf.mxu0
  %v589 = vadd.f32 %v377, %v588
  %590 = vmatmul.f32.gmra.mxu0 %v476
  %v591 = vpop.f32.mrf.mxu0
  %v592 = vadd.f32 %v380, %v591
  %593 = vmatmul.f32.gmra.mxu0 %v479
  %v594 = vpop.f32.mrf.mxu0
  %v595 = vadd.f32 %v383, %v594
  %596 = vmatmul.f32.gmra.mxu0 %v482
  %v597 = vpop.f32.mrf.mxu0
  %v598 = vadd.f32 %v386, %v597
  %599 = vmatmul.f32.gmra.mxu0 %v485
  %v600 = vpop.f32.mrf.mxu0
  %v601 = vadd.f32 %v389, %v600
  %602 = vmatmul.f32.gmra.mxu0 %v488
  %v603 = vpop.f32.mrf.mxu0
  %v604 = vadd.f32 %v392, %v603
  %605 = vmatmul.f32.gmra.mxu0 %v491
  %v606 = vpop.f32.mrf.mxu0
  %v607 = vadd.f32 %v395, %v606
  %608 = vmatmul.f32.gmra.mxu0 %v494
  %v609 = vpop.f32.mrf.mxu0
  %v610 = vadd.f32 %v398, %v609
  %611 = vmatmul.f32.gmra.mxu0 %v497
  %v612 = vpop.f32.mrf.mxu0
  %v613 = vadd.f32 %v401, %v612
  %614 = vmatmul.f32.gmra.mxu0 %v500
  %v615 = vpop.f32.mrf.mxu0
  %v616 = vadd.f32 %v404, %v615
  %617 = vmatmul.f32.gmra.mxu0 %v503
  %v618 = vpop.f32.mrf.mxu0
  %v619 = vadd.f32 %v407, %v618
  %620 = vmatmul.f32.gmra.mxu0 %v506
  %v621 = vpop.f32.mrf.mxu0
  %v622 = vadd.f32 %v410, %v621
  %623 = vmatmul.f32.gmra.mxu0 %v509
  %v624 = vpop.f32.mrf.mxu0
  %v625 = vadd.f32 %v413, %v624
  %626 = vmatmul.f32.gmra.mxu0 %v512
  %v627 = vpop.f32.mrf.mxu0
  %v628 = vadd.f32 %v416, %v627
  %629 = vmatmul.f32.gmra.mxu0 %v515
  %v630 = vpop.f32.mrf.mxu0
  %v631 = vadd.f32 %v419, %v630
  %632 = vmatmul.f32.gmra.mxu0 %v518
  %v633 = vpop.f32.mrf.mxu0
  %v634 = vadd.f32 %v422, %v633
  %635 = vmatmul.f32.gmra.mxu0 %v521
  %v636 = vpop.f32.mrf.mxu0
  %v637 = vadd.f32 %v425, %v636
  %638 = vmatmul.f32.gmra.mxu0 %v524
  %v639 = vpop.f32.mrf.mxu0
  %v640 = vadd.f32 %v428, %v639
  %641 = vmatmul.f32.gmra.mxu0 %v527
  %v642 = vpop.f32.mrf.mxu0
  %v643 = vadd.f32 %v431, %v642
  %644 = vmatmul.f32.gmra.mxu0 %v530
  %v645 = vpop.f32.mrf.mxu0
  %v646 = vadd.f32 %v434, %v645
  %647 = vmatmul.f32.gmra.mxu0 %v533
  %v648 = vpop.f32.mrf.mxu0
  %v649 = vadd.f32 %v437, %v648
  %650 = vmatmul.f32.gmra.mxu0 %v536
  %v651 = vpop.f32.mrf.mxu0
  %v652 = vadd.f32 %v440, %v651
  %653 = vmatmul.f32.gmra.mxu0 %v539
  %v654 = vpop.f32.mrf.mxu0
  %v655 = vadd.f32 %v443, %v654
  %656 = vdwg.mxu0
  %v657 = vrot.slane %v100, 1
  %v658 = vrot.slane %v101, 1
  %v659 = vrot.slane %v102, 1
  %v660 = vrot.slane %v103, 1
  %v661 = vrot.slane %v104, 1
  %v662 = vrot.slane %v105, 1
  %v663 = vrot.slane %v106, 1
  %v664 = vrot.slane %v107, 1
  %v665 = vrot.slane %v108, 1
  %v666 = vrot.slane %v109, 1
  %v667 = vrot.slane %v110, 1
  %v668 = vrot.slane %v111, 1
  %v669 = vrot.slane %v112, 1
  %v670 = vrot.slane %v113, 1
  %v671 = vrot.slane %v114, 1
  %v672 = vrot.slane %v115, 1
  %v673 = vrot.slane %v116, 1
  %v674 = vrot.slane %v117, 1
  %v675 = vrot.slane %v118, 1
  %v676 = vrot.slane %v119, 1
  %v677 = vrot.slane %v120, 1
  %v678 = vrot.slane %v121, 1
  %v679 = vrot.slane %v122, 1
  %v680 = vrot.slane %v123, 1
  %v681 = vrot.slane %v124, 1
  %v682 = vrot.slane %v125, 1
  %v683 = vrot.slane %v126, 1
  %v684 = vrot.slane %v127, 1
  %v685 = vrot.slane %v128, 1
  %v686 = vrot.slane %v129, 1
  %v687 = vrot.slane %v130, 1
  %v688 = vrot.slane %v131, 1
  %vm689 = vcmp.lt.s32.totalorder %v21, 7
  %v690 = vsel %vm689, %v687, %v688
  %v691 = vsel %vm689, %v686, %v687
  %v692 = vsel %vm689, %v685, %v686
  %v693 = vsel %vm689, %v684, %v685
  %v694 = vsel %vm689, %v683, %v684
  %v695 = vsel %vm689, %v682, %v683
  %v696 = vsel %vm689, %v681, %v682
  %v697 = vsel %vm689, %v680, %v681
  %v698 = vsel %vm689, %v679, %v680
  %v699 = vsel %vm689, %v678, %v679
  %v700 = vsel %vm689, %v677, %v678
  %v701 = vsel %vm689, %v676, %v677
  %v702 = vsel %vm689, %v675, %v676
  %v703 = vsel %vm689, %v674, %v675
  %v704 = vsel %vm689, %v673, %v674
  %v705 = vsel %vm689, %v672, %v673
  %v706 = vsel %vm689, %v671, %v672
  %v707 = vsel %vm689, %v670, %v671
  %v708 = vsel %vm689, %v669, %v670
  %v709 = vsel %vm689, %v668, %v669
  %v710 = vsel %vm689, %v667, %v668
  %v711 = vsel %vm689, %v666, %v667
  %v712 = vsel %vm689, %v665, %v666
  %v713 = vsel %vm689, %v664, %v665
  %v714 = vsel %vm689, %v663, %v664
  %v715 = vsel %vm689, %v662, %v663
  %v716 = vsel %vm689, %v661, %v662
  %v717 = vsel %vm689, %v660, %v661
  %v718 = vsel %vm689, %v659, %v660
  %v719 = vsel %vm689, %v658, %v659
  %v720 = vsel %vm689, %v657, %v658
  %v721 = vsel %vm689, %v688, %v657
  %v722 = vmul.f32 %v720, %v33
  %v723 = vmul.f32 %v719, %v34
  %v724 = vmul.f32 %v718, %v33
  %v725 = vmul.f32 %v717, %v34
  %v726 = vmul.f32 %v716, %v33
  %v727 = vmul.f32 %v715, %v34
  %v728 = vmul.f32 %v714, %v33
  %v729 = vmul.f32 %v713, %v34
  %v730 = vmul.f32 %v712, %v33
  %v731 = vmul.f32 %v711, %v34
  %v732 = vmul.f32 %v710, %v33
  %v733 = vmul.f32 %v709, %v34
  %v734 = vmul.f32 %v708, %v33
  %v735 = vmul.f32 %v707, %v34
  %v736 = vmul.f32 %v706, %v33
  %v737 = vmul.f32 %v705, %v34
  %v738 = vmul.f32 %v704, %v33
  %v739 = vmul.f32 %v703, %v34
  %v740 = vmul.f32 %v702, %v33
  %v741 = vmul.f32 %v701, %v34
  %v742 = vmul.f32 %v700, %v33
  %v743 = vmul.f32 %v699, %v34
  %v744 = vmul.f32 %v698, %v33
  %v745 = vmul.f32 %v697, %v34
  %v746 = vmul.f32 %v696, %v33
  %v747 = vmul.f32 %v695, %v34
  %v748 = vmul.f32 %v694, %v33
  %v749 = vmul.f32 %v693, %v34
  %v750 = vmul.f32 %v692, %v33
  %v751 = vmul.f32 %v691, %v34
  %v752 = vmul.f32 %v690, %v33
  %v753 = vmul.f32 %v721, %v34
  %s754 = scalar_lea.vmem %s1, 8
  %v755 = vld [vmem:[%s754] sm:$0xf]
  %v757 = vsel %vm14, %v722, 0
  %v760 = vsel %vm14, %v723, 0
  %v763 = vsel %vm14, %v724, 0
  %v766 = vsel %vm14, %v725, 0
  %v769 = vsel %vm14, %v726, 0
  %v772 = vsel %vm14, %v727, 0
  %v775 = vsel %vm14, %v728, 0
  %v778 = vsel %vm14, %v729, 0
  %v781 = vsel %vm14, %v730, 0
  %v784 = vsel %vm14, %v731, 0
  %v787 = vsel %vm14, %v732, 0
  %v790 = vsel %vm14, %v733, 0
  %v793 = vsel %vm14, %v734, 0
  %v796 = vsel %vm14, %v735, 0
  %v799 = vsel %vm14, %v736, 0
  %v802 = vsel %vm14, %v737, 0
  %v805 = vsel %vm14, %v738, 0
  %v808 = vsel %vm14, %v739, 0
  %v811 = vsel %vm14, %v740, 0
  %v814 = vsel %vm14, %v741, 0
  %v817 = vsel %vm14, %v742, 0
  %v820 = vsel %vm14, %v743, 0
  %v823 = vsel %vm14, %v744, 0
  %v826 = vsel %vm14, %v745, 0
  %v829 = vsel %vm14, %v746, 0
  %v832 = vsel %vm14, %v747, 0
  %v835 = vsel %vm14, %v748, 0
  %v838 = vsel %vm14, %v749, 0
  %v841 = vsel %vm14, %v750, 0
  %v844 = vsel %vm14, %v751, 0
  %v847 = vsel %vm14, %v752, 0
  %v850 = vsel %vm14, %v753, 0
  %v853 = vsel %vm328, %v755, 0
  %855 = vmatpush.msra.mxu0 0.0
  %856 = vmatpush.msra.mxu0 0.0
  %857 = vmatpush.msra.mxu0 0.0
  %858 = vmatpush.msra.mxu0 0.0
  %859 = vmatpush.msra.mxu0 0.0
  %860 = vmatpush.msra.mxu0 0.0
  %861 = vmatpush.msra.mxu0 0.0
  %862 = vmatpush.msra.mxu0 0.0
  %863 = vmatpush.msra.mxu0 0.0
  %864 = vmatpush.msra.mxu0 0.0
  %865 = vmatpush.msra.mxu0 0.0
  %866 = vmatpush.msra.mxu0 0.0
  %867 = vmatpush.msra.mxu0 0.0
  %868 = vmatpush.msra.mxu0 0.0
  %869 = vmatpush.msra.mxu0 0.0
  %870 = vmatpush.msra.mxu0 %v853
  %871 = vmatmul.f32.gmra.mxu0 %v757
  %v872 = vpop.f32.mrf.mxu0
  %v873 = vadd.f32 0.0, %v872
  %874 = vmatmul.f32.gmra.mxu0 %v760
  %v875 = vpop.f32.mrf.mxu0
  %v876 = vadd.f32 0.0, %v875
  %877 = vmatmul.f32.gmra.mxu0 %v763
  %v878 = vpop.f32.mrf.mxu0
  %v879 = vadd.f32 0.0, %v878
  %880 = vmatmul.f32.gmra.mxu0 %v766
  %v881 = vpop.f32.mrf.mxu0
  %v882 = vadd.f32 0.0, %v881
  %883 = vmatmul.f32.gmra.mxu0 %v769
  %v884 = vpop.f32.mrf.mxu0
  %v885 = vadd.f32 0.0, %v884
  %886 = vmatmul.f32.gmra.mxu0 %v772
  %v887 = vpop.f32.mrf.mxu0
  %v888 = vadd.f32 0.0, %v887
  %889 = vmatmul.f32.gmra.mxu0 %v775
  %v890 = vpop.f32.mrf.mxu0
  %v891 = vadd.f32 0.0, %v890
  %892 = vmatmul.f32.gmra.mxu0 %v778
  %v893 = vpop.f32.mrf.mxu0
  %v894 = vadd.f32 0.0, %v893
  %895 = vmatmul.f32.gmra.mxu0 %v781
  %v896 = vpop.f32.mrf.mxu0
  %v897 = vadd.f32 0.0, %v896
  %898 = vmatmul.f32.gmra.mxu0 %v784
  %v899 = vpop.f32.mrf.mxu0
  %v900 = vadd.f32 0.0, %v899
  %901 = vmatmul.f32.gmra.mxu0 %v787
  %v902 = vpop.f32.mrf.mxu0
  %v903 = vadd.f32 0.0, %v902
  %904 = vmatmul.f32.gmra.mxu0 %v790
  %v905 = vpop.f32.mrf.mxu0
  %v906 = vadd.f32 0.0, %v905
  %907 = vmatmul.f32.gmra.mxu0 %v793
  %v908 = vpop.f32.mrf.mxu0
  %v909 = vadd.f32 0.0, %v908
  %910 = vmatmul.f32.gmra.mxu0 %v796
  %v911 = vpop.f32.mrf.mxu0
  %v912 = vadd.f32 0.0, %v911
  %913 = vmatmul.f32.gmra.mxu0 %v799
  %v914 = vpop.f32.mrf.mxu0
  %v915 = vadd.f32 0.0, %v914
  %916 = vmatmul.f32.gmra.mxu0 %v802
  %v917 = vpop.f32.mrf.mxu0
  %v918 = vadd.f32 0.0, %v917
  %919 = vmatmul.f32.gmra.mxu0 %v805
  %v920 = vpop.f32.mrf.mxu0
  %v921 = vadd.f32 0.0, %v920
  %922 = vmatmul.f32.gmra.mxu0 %v808
  %v923 = vpop.f32.mrf.mxu0
  %v924 = vadd.f32 0.0, %v923
  %925 = vmatmul.f32.gmra.mxu0 %v811
  %v926 = vpop.f32.mrf.mxu0
  %v927 = vadd.f32 0.0, %v926
  %928 = vmatmul.f32.gmra.mxu0 %v814
  %v929 = vpop.f32.mrf.mxu0
  %v930 = vadd.f32 0.0, %v929
  %931 = vmatmul.f32.gmra.mxu0 %v817
  %v932 = vpop.f32.mrf.mxu0
  %v933 = vadd.f32 0.0, %v932
  %934 = vmatmul.f32.gmra.mxu0 %v820
  %v935 = vpop.f32.mrf.mxu0
  %v936 = vadd.f32 0.0, %v935
  %937 = vmatmul.f32.gmra.mxu0 %v823
  %v938 = vpop.f32.mrf.mxu0
  %v939 = vadd.f32 0.0, %v938
  %940 = vmatmul.f32.gmra.mxu0 %v826
  %v941 = vpop.f32.mrf.mxu0
  %v942 = vadd.f32 0.0, %v941
  %943 = vmatmul.f32.gmra.mxu0 %v829
  %v944 = vpop.f32.mrf.mxu0
  %v945 = vadd.f32 0.0, %v944
  %946 = vmatmul.f32.gmra.mxu0 %v832
  %v947 = vpop.f32.mrf.mxu0
  %v948 = vadd.f32 0.0, %v947
  %949 = vmatmul.f32.gmra.mxu0 %v835
  %v950 = vpop.f32.mrf.mxu0
  %v951 = vadd.f32 0.0, %v950
  %952 = vmatmul.f32.gmra.mxu0 %v838
  %v953 = vpop.f32.mrf.mxu0
  %v954 = vadd.f32 0.0, %v953
  %955 = vmatmul.f32.gmra.mxu0 %v841
  %v956 = vpop.f32.mrf.mxu0
  %v957 = vadd.f32 0.0, %v956
  %958 = vmatmul.f32.gmra.mxu0 %v844
  %v959 = vpop.f32.mrf.mxu0
  %v960 = vadd.f32 0.0, %v959
  %961 = vmatmul.f32.gmra.mxu0 %v847
  %v962 = vpop.f32.mrf.mxu0
  %v963 = vadd.f32 0.0, %v962
  %964 = vmatmul.f32.gmra.mxu0 %v850
  %v965 = vpop.f32.mrf.mxu0
  %v966 = vadd.f32 0.0, %v965
  %967 = vdwg.mxu0
  %v968 = vadd.f32 %v562, %v873
  %v969 = vadd.f32 %v565, %v876
  %v970 = vadd.f32 %v568, %v879
  %v971 = vadd.f32 %v571, %v882
  %v972 = vadd.f32 %v574, %v885
  %v973 = vadd.f32 %v577, %v888
  %v974 = vadd.f32 %v580, %v891
  %v975 = vadd.f32 %v583, %v894
  %v976 = vadd.f32 %v586, %v897
  %v977 = vadd.f32 %v589, %v900
  %v978 = vadd.f32 %v592, %v903
  %v979 = vadd.f32 %v595, %v906
  %v980 = vadd.f32 %v598, %v909
  %v981 = vadd.f32 %v601, %v912
  %v982 = vadd.f32 %v604, %v915
  %v983 = vadd.f32 %v607, %v918
  %v984 = vadd.f32 %v610, %v921
  %v985 = vadd.f32 %v613, %v924
  %v986 = vadd.f32 %v616, %v927
  %v987 = vadd.f32 %v619, %v930
  %v988 = vadd.f32 %v622, %v933
  %v989 = vadd.f32 %v625, %v936
  %v990 = vadd.f32 %v628, %v939
  %v991 = vadd.f32 %v631, %v942
  %v992 = vadd.f32 %v634, %v945
  %v993 = vadd.f32 %v637, %v948
  %v994 = vadd.f32 %v640, %v951
  %v995 = vadd.f32 %v643, %v954
  %v996 = vadd.f32 %v646, %v957
  %v997 = vadd.f32 %v649, %v960
  %v998 = vadd.f32 %v652, %v963
  %v999 = vadd.f32 %v655, %v966
  %v1000 = vld [vmem:[%s67] sm:$0xff]
  %v1001 = vld [vmem:[%s67 + $0x8] sm:$0xff]
  %v1002 = vld [vmem:[%s67 + $0x10] sm:$0xff]
  %v1003 = vld [vmem:[%s67 + $0x18] sm:$0xff]
  %v1004 = vld [vmem:[%s67 + $0x20] sm:$0xff]
  %v1005 = vld [vmem:[%s67 + $0x28] sm:$0xff]
  %v1006 = vld [vmem:[%s67 + $0x30] sm:$0xff]
  %v1007 = vld [vmem:[%s67 + $0x38] sm:$0xff]
  %v1008 = vld [vmem:[%s67 + $0x40] sm:$0xff]
  %v1009 = vld [vmem:[%s67 + $0x48] sm:$0xff]
  %v1010 = vld [vmem:[%s67 + $0x50] sm:$0xff]
  %v1011 = vld [vmem:[%s67 + $0x58] sm:$0xff]
  %v1012 = vld [vmem:[%s67 + $0x60] sm:$0xff]
  %v1013 = vld [vmem:[%s67 + $0x68] sm:$0xff]
  %v1014 = vld [vmem:[%s67 + $0x70] sm:$0xff]
  %v1015 = vld [vmem:[%s67 + $0x78] sm:$0xff]
  %v1016 = vld [vmem:[%s67 + $0x80] sm:$0xff]
  %v1017 = vld [vmem:[%s67 + $0x88] sm:$0xff]
  %v1018 = vld [vmem:[%s67 + $0x90] sm:$0xff]
  %v1019 = vld [vmem:[%s67 + $0x98] sm:$0xff]
  %v1020 = vld [vmem:[%s67 + $0xa0] sm:$0xff]
  %v1021 = vld [vmem:[%s67 + $0xa8] sm:$0xff]
  %v1022 = vld [vmem:[%s67 + $0xb0] sm:$0xff]
  %v1023 = vld [vmem:[%s67 + $0xb8] sm:$0xff]
  %v1024 = vld [vmem:[%s67 + $0xc0] sm:$0xff]
  %v1025 = vld [vmem:[%s67 + $0xc8] sm:$0xff]
  %v1026 = vld [vmem:[%s67 + $0xd0] sm:$0xff]
  %v1027 = vld [vmem:[%s67 + $0xd8] sm:$0xff]
  %v1028 = vld [vmem:[%s67 + $0xe0] sm:$0xff]
  %v1029 = vld [vmem:[%s67 + $0xe8] sm:$0xff]
  %v1030 = vld [vmem:[%s67 + $0xf0] sm:$0xff]
  %v1031 = vld [vmem:[%s67 + $0xf8] sm:$0xff]
  %v1032 = vrot.slane %v1000, 7
  %v1033 = vrot.slane %v1001, 7
  %v1034 = vrot.slane %v1002, 7
  %v1035 = vrot.slane %v1003, 7
  %v1036 = vrot.slane %v1004, 7
  %v1037 = vrot.slane %v1005, 7
  %v1038 = vrot.slane %v1006, 7
  %v1039 = vrot.slane %v1007, 7
  %v1040 = vrot.slane %v1008, 7
  %v1041 = vrot.slane %v1009, 7
  %v1042 = vrot.slane %v1010, 7
  %v1043 = vrot.slane %v1011, 7
  %v1044 = vrot.slane %v1012, 7
  %v1045 = vrot.slane %v1013, 7
  %v1046 = vrot.slane %v1014, 7
  %v1047 = vrot.slane %v1015, 7
  %v1048 = vrot.slane %v1016, 7
  %v1049 = vrot.slane %v1017, 7
  %v1050 = vrot.slane %v1018, 7
  %v1051 = vrot.slane %v1019, 7
  %v1052 = vrot.slane %v1020, 7
  %v1053 = vrot.slane %v1021, 7
  %v1054 = vrot.slane %v1022, 7
  %v1055 = vrot.slane %v1023, 7
  %v1056 = vrot.slane %v1024, 7
  %v1057 = vrot.slane %v1025, 7
  %v1058 = vrot.slane %v1026, 7
  %v1059 = vrot.slane %v1027, 7
  %v1060 = vrot.slane %v1028, 7
  %v1061 = vrot.slane %v1029, 7
  %v1062 = vrot.slane %v1030, 7
  %v1063 = vrot.slane %v1031, 7
  %v1064 = vsel %vm164, %v1062, %v1063
  %v1065 = vsel %vm164, %v1061, %v1062
  %v1066 = vsel %vm164, %v1060, %v1061
  %v1067 = vsel %vm164, %v1059, %v1060
  %v1068 = vsel %vm164, %v1058, %v1059
  %v1069 = vsel %vm164, %v1057, %v1058
  %v1070 = vsel %vm164, %v1056, %v1057
  %v1071 = vsel %vm164, %v1055, %v1056
  %v1072 = vsel %vm164, %v1054, %v1055
  %v1073 = vsel %vm164, %v1053, %v1054
  %v1074 = vsel %vm164, %v1052, %v1053
  %v1075 = vsel %vm164, %v1051, %v1052
  %v1076 = vsel %vm164, %v1050, %v1051
  %v1077 = vsel %vm164, %v1049, %v1050
  %v1078 = vsel %vm164, %v1048, %v1049
  %v1079 = vsel %vm164, %v1047, %v1048
  %v1080 = vsel %vm164, %v1046, %v1047
  %v1081 = vsel %vm164, %v1045, %v1046
  %v1082 = vsel %vm164, %v1044, %v1045
  %v1083 = vsel %vm164, %v1043, %v1044
  %v1084 = vsel %vm164, %v1042, %v1043
  %v1085 = vsel %vm164, %v1041, %v1042
  %v1086 = vsel %vm164, %v1040, %v1041
  %v1087 = vsel %vm164, %v1039, %v1040
  %v1088 = vsel %vm164, %v1038, %v1039
  %v1089 = vsel %vm164, %v1037, %v1038
  %v1090 = vsel %vm164, %v1036, %v1037
  %v1091 = vsel %vm164, %v1035, %v1036
  %v1092 = vsel %vm164, %v1034, %v1035
  %v1093 = vsel %vm164, %v1033, %v1034
  %v1094 = vsel %vm164, %v1032, %v1033
  %v1095 = vsel %vm164, %v1063, %v1032
  %v1096 = vmul.f32 %v1095, %v27
  %v1097 = vmul.f32 %v1094, %v28
  %v1098 = vmul.f32 %v1093, %v27
  %v1099 = vmul.f32 %v1092, %v28
  %v1100 = vmul.f32 %v1091, %v27
  %v1101 = vmul.f32 %v1090, %v28
  %v1102 = vmul.f32 %v1089, %v27
  %v1103 = vmul.f32 %v1088, %v28
  %v1104 = vmul.f32 %v1087, %v27
  %v1105 = vmul.f32 %v1086, %v28
  %v1106 = vmul.f32 %v1085, %v27
  %v1107 = vmul.f32 %v1084, %v28
  %v1108 = vmul.f32 %v1083, %v27
  %v1109 = vmul.f32 %v1082, %v28
  %v1110 = vmul.f32 %v1081, %v27
  %v1111 = vmul.f32 %v1080, %v28
  %v1112 = vmul.f32 %v1079, %v27
  %v1113 = vmul.f32 %v1078, %v28
  %v1114 = vmul.f32 %v1077, %v27
  %v1115 = vmul.f32 %v1076, %v28
  %v1116 = vmul.f32 %v1075, %v27
  %v1117 = vmul.f32 %v1074, %v28
  %v1118 = vmul.f32 %v1073, %v27
  %v1119 = vmul.f32 %v1072, %v28
  %v1120 = vmul.f32 %v1071, %v27
  %v1121 = vmul.f32 %v1070, %v28
  %v1122 = vmul.f32 %v1069, %v27
  %v1123 = vmul.f32 %v1068, %v28
  %v1124 = vmul.f32 %v1067, %v27
  %v1125 = vmul.f32 %v1066, %v28
  %v1126 = vmul.f32 %v1065, %v27
  %v1127 = vmul.f32 %v1064, %v28
  %s1128 = scalar_lea.vmem %s1, 12
  %v1129 = vld [vmem:[%s1128] sm:$0xf]
  %v1131 = vsel %vm14, %v1096, 0
  %v1134 = vsel %vm14, %v1097, 0
  %v1137 = vsel %vm14, %v1098, 0
  %v1140 = vsel %vm14, %v1099, 0
  %v1143 = vsel %vm14, %v1100, 0
  %v1146 = vsel %vm14, %v1101, 0
  %v1149 = vsel %vm14, %v1102, 0
  %v1152 = vsel %vm14, %v1103, 0
  %v1155 = vsel %vm14, %v1104, 0
  %v1158 = vsel %vm14, %v1105, 0
  %v1161 = vsel %vm14, %v1106, 0
  %v1164 = vsel %vm14, %v1107, 0
  %v1167 = vsel %vm14, %v1108, 0
  %v1170 = vsel %vm14, %v1109, 0
  %v1173 = vsel %vm14, %v1110, 0
  %v1176 = vsel %vm14, %v1111, 0
  %v1179 = vsel %vm14, %v1112, 0
  %v1182 = vsel %vm14, %v1113, 0
  %v1185 = vsel %vm14, %v1114, 0
  %v1188 = vsel %vm14, %v1115, 0
  %v1191 = vsel %vm14, %v1116, 0
  %v1194 = vsel %vm14, %v1117, 0
  %v1197 = vsel %vm14, %v1118, 0
  %v1200 = vsel %vm14, %v1119, 0
  %v1203 = vsel %vm14, %v1120, 0
  %v1206 = vsel %vm14, %v1121, 0
  %v1209 = vsel %vm14, %v1122, 0
  %v1212 = vsel %vm14, %v1123, 0
  %v1215 = vsel %vm14, %v1124, 0
  %v1218 = vsel %vm14, %v1125, 0
  %v1221 = vsel %vm14, %v1126, 0
  %v1224 = vsel %vm14, %v1127, 0
  %v1227 = vsel %vm328, %v1129, 0
  %1229 = vmatpush.msra.mxu0 0.0
  %1230 = vmatpush.msra.mxu0 0.0
  %1231 = vmatpush.msra.mxu0 0.0
  %1232 = vmatpush.msra.mxu0 0.0
  %1233 = vmatpush.msra.mxu0 0.0
  %1234 = vmatpush.msra.mxu0 0.0
  %1235 = vmatpush.msra.mxu0 0.0
  %1236 = vmatpush.msra.mxu0 0.0
  %1237 = vmatpush.msra.mxu0 0.0
  %1238 = vmatpush.msra.mxu0 0.0
  %1239 = vmatpush.msra.mxu0 0.0
  %1240 = vmatpush.msra.mxu0 0.0
  %1241 = vmatpush.msra.mxu0 0.0
  %1242 = vmatpush.msra.mxu0 0.0
  %1243 = vmatpush.msra.mxu0 0.0
  %1244 = vmatpush.msra.mxu0 %v1227
  %1245 = vmatmul.f32.gmra.mxu0 %v1131
  %v1246 = vpop.f32.mrf.mxu0
  %v1247 = vadd.f32 0.0, %v1246
  %1248 = vmatmul.f32.gmra.mxu0 %v1134
  %v1249 = vpop.f32.mrf.mxu0
  %v1250 = vadd.f32 0.0, %v1249
  %1251 = vmatmul.f32.gmra.mxu0 %v1137
  %v1252 = vpop.f32.mrf.mxu0
  %v1253 = vadd.f32 0.0, %v1252
  %1254 = vmatmul.f32.gmra.mxu0 %v1140
  %v1255 = vpop.f32.mrf.mxu0
  %v1256 = vadd.f32 0.0, %v1255
  %1257 = vmatmul.f32.gmra.mxu0 %v1143
  %v1258 = vpop.f32.mrf.mxu0
  %v1259 = vadd.f32 0.0, %v1258
  %1260 = vmatmul.f32.gmra.mxu0 %v1146
  %v1261 = vpop.f32.mrf.mxu0
  %v1262 = vadd.f32 0.0, %v1261
  %1263 = vmatmul.f32.gmra.mxu0 %v1149
  %v1264 = vpop.f32.mrf.mxu0
  %v1265 = vadd.f32 0.0, %v1264
  %1266 = vmatmul.f32.gmra.mxu0 %v1152
  %v1267 = vpop.f32.mrf.mxu0
  %v1268 = vadd.f32 0.0, %v1267
  %1269 = vmatmul.f32.gmra.mxu0 %v1155
  %v1270 = vpop.f32.mrf.mxu0
  %v1271 = vadd.f32 0.0, %v1270
  %1272 = vmatmul.f32.gmra.mxu0 %v1158
  %v1273 = vpop.f32.mrf.mxu0
  %v1274 = vadd.f32 0.0, %v1273
  %1275 = vmatmul.f32.gmra.mxu0 %v1161
  %v1276 = vpop.f32.mrf.mxu0
  %v1277 = vadd.f32 0.0, %v1276
  %1278 = vmatmul.f32.gmra.mxu0 %v1164
  %v1279 = vpop.f32.mrf.mxu0
  %v1280 = vadd.f32 0.0, %v1279
  %1281 = vmatmul.f32.gmra.mxu0 %v1167
  %v1282 = vpop.f32.mrf.mxu0
  %v1283 = vadd.f32 0.0, %v1282
  %1284 = vmatmul.f32.gmra.mxu0 %v1170
  %v1285 = vpop.f32.mrf.mxu0
  %v1286 = vadd.f32 0.0, %v1285
  %1287 = vmatmul.f32.gmra.mxu0 %v1173
  %v1288 = vpop.f32.mrf.mxu0
  %v1289 = vadd.f32 0.0, %v1288
  %1290 = vmatmul.f32.gmra.mxu0 %v1176
  %v1291 = vpop.f32.mrf.mxu0
  %v1292 = vadd.f32 0.0, %v1291
  %1293 = vmatmul.f32.gmra.mxu0 %v1179
  %v1294 = vpop.f32.mrf.mxu0
  %v1295 = vadd.f32 0.0, %v1294
  %1296 = vmatmul.f32.gmra.mxu0 %v1182
  %v1297 = vpop.f32.mrf.mxu0
  %v1298 = vadd.f32 0.0, %v1297
  %1299 = vmatmul.f32.gmra.mxu0 %v1185
  %v1300 = vpop.f32.mrf.mxu0
  %v1301 = vadd.f32 0.0, %v1300
  %1302 = vmatmul.f32.gmra.mxu0 %v1188
  %v1303 = vpop.f32.mrf.mxu0
  %v1304 = vadd.f32 0.0, %v1303
  %1305 = vmatmul.f32.gmra.mxu0 %v1191
  %v1306 = vpop.f32.mrf.mxu0
  %v1307 = vadd.f32 0.0, %v1306
  %1308 = vmatmul.f32.gmra.mxu0 %v1194
  %v1309 = vpop.f32.mrf.mxu0
  %v1310 = vadd.f32 0.0, %v1309
  %1311 = vmatmul.f32.gmra.mxu0 %v1197
  %v1312 = vpop.f32.mrf.mxu0
  %v1313 = vadd.f32 0.0, %v1312
  %1314 = vmatmul.f32.gmra.mxu0 %v1200
  %v1315 = vpop.f32.mrf.mxu0
  %v1316 = vadd.f32 0.0, %v1315
  %1317 = vmatmul.f32.gmra.mxu0 %v1203
  %v1318 = vpop.f32.mrf.mxu0
  %v1319 = vadd.f32 0.0, %v1318
  %1320 = vmatmul.f32.gmra.mxu0 %v1206
  %v1321 = vpop.f32.mrf.mxu0
  %v1322 = vadd.f32 0.0, %v1321
  %1323 = vmatmul.f32.gmra.mxu0 %v1209
  %v1324 = vpop.f32.mrf.mxu0
  %v1325 = vadd.f32 0.0, %v1324
  %1326 = vmatmul.f32.gmra.mxu0 %v1212
  %v1327 = vpop.f32.mrf.mxu0
  %v1328 = vadd.f32 0.0, %v1327
  %1329 = vmatmul.f32.gmra.mxu0 %v1215
  %v1330 = vpop.f32.mrf.mxu0
  %v1331 = vadd.f32 0.0, %v1330
  %1332 = vmatmul.f32.gmra.mxu0 %v1218
  %v1333 = vpop.f32.mrf.mxu0
  %v1334 = vadd.f32 0.0, %v1333
  %1335 = vmatmul.f32.gmra.mxu0 %v1221
  %v1336 = vpop.f32.mrf.mxu0
  %v1337 = vadd.f32 0.0, %v1336
  %1338 = vmatmul.f32.gmra.mxu0 %v1224
  %v1339 = vpop.f32.mrf.mxu0
  %v1340 = vadd.f32 0.0, %v1339
  %1341 = vdwg.mxu0
  %v1342 = vadd.f32 %v968, %v1247
  %v1343 = vadd.f32 %v969, %v1250
  %v1344 = vadd.f32 %v970, %v1253
  %v1345 = vadd.f32 %v971, %v1256
  %v1346 = vadd.f32 %v972, %v1259
  %v1347 = vadd.f32 %v973, %v1262
  %v1348 = vadd.f32 %v974, %v1265
  %v1349 = vadd.f32 %v975, %v1268
  %v1350 = vadd.f32 %v976, %v1271
  %v1351 = vadd.f32 %v977, %v1274
  %v1352 = vadd.f32 %v978, %v1277
  %v1353 = vadd.f32 %v979, %v1280
  %v1354 = vadd.f32 %v980, %v1283
  %v1355 = vadd.f32 %v981, %v1286
  %v1356 = vadd.f32 %v982, %v1289
  %v1357 = vadd.f32 %v983, %v1292
  %v1358 = vadd.f32 %v984, %v1295
  %v1359 = vadd.f32 %v985, %v1298
  %v1360 = vadd.f32 %v986, %v1301
  %v1361 = vadd.f32 %v987, %v1304
  %v1362 = vadd.f32 %v988, %v1307
  %v1363 = vadd.f32 %v989, %v1310
  %v1364 = vadd.f32 %v990, %v1313
  %v1365 = vadd.f32 %v991, %v1316
  %v1366 = vadd.f32 %v992, %v1319
  %v1367 = vadd.f32 %v993, %v1322
  %v1368 = vadd.f32 %v994, %v1325
  %v1369 = vadd.f32 %v995, %v1328
  %v1370 = vadd.f32 %v996, %v1331
  %v1371 = vadd.f32 %v997, %v1334
  %v1372 = vadd.f32 %v998, %v1337
  %v1373 = vadd.f32 %v999, %v1340
  %s1374 = scalar_lea.vmem %s1, 16
  %v1375 = vld [vmem:[%s1374] sm:$0xf]
  %v1377 = vsel %vm14, %v1000, 0
  %v1380 = vsel %vm14, %v1001, 0
  %v1383 = vsel %vm14, %v1002, 0
  %v1386 = vsel %vm14, %v1003, 0
  %v1389 = vsel %vm14, %v1004, 0
  %v1392 = vsel %vm14, %v1005, 0
  %v1395 = vsel %vm14, %v1006, 0
  %v1398 = vsel %vm14, %v1007, 0
  %v1401 = vsel %vm14, %v1008, 0
  %v1404 = vsel %vm14, %v1009, 0
  %v1407 = vsel %vm14, %v1010, 0
  %v1410 = vsel %vm14, %v1011, 0
  %v1413 = vsel %vm14, %v1012, 0
  %v1416 = vsel %vm14, %v1013, 0
  %v1419 = vsel %vm14, %v1014, 0
  %v1422 = vsel %vm14, %v1015, 0
  %v1425 = vsel %vm14, %v1016, 0
  %v1428 = vsel %vm14, %v1017, 0
  %v1431 = vsel %vm14, %v1018, 0
  %v1434 = vsel %vm14, %v1019, 0
  %v1437 = vsel %vm14, %v1020, 0
  %v1440 = vsel %vm14, %v1021, 0
  %v1443 = vsel %vm14, %v1022, 0
  %v1446 = vsel %vm14, %v1023, 0
  %v1449 = vsel %vm14, %v1024, 0
  %v1452 = vsel %vm14, %v1025, 0
  %v1455 = vsel %vm14, %v1026, 0
  %v1458 = vsel %vm14, %v1027, 0
  %v1461 = vsel %vm14, %v1028, 0
  %v1464 = vsel %vm14, %v1029, 0
  %v1467 = vsel %vm14, %v1030, 0
  %v1470 = vsel %vm14, %v1031, 0
  %v1473 = vsel %vm328, %v1375, 0
  %1475 = vmatpush.msra.mxu0 0.0
  %1476 = vmatpush.msra.mxu0 0.0
  %1477 = vmatpush.msra.mxu0 0.0
  %1478 = vmatpush.msra.mxu0 0.0
  %1479 = vmatpush.msra.mxu0 0.0
  %1480 = vmatpush.msra.mxu0 0.0
  %1481 = vmatpush.msra.mxu0 0.0
  %1482 = vmatpush.msra.mxu0 0.0
  %1483 = vmatpush.msra.mxu0 0.0
  %1484 = vmatpush.msra.mxu0 0.0
  %1485 = vmatpush.msra.mxu0 0.0
  %1486 = vmatpush.msra.mxu0 0.0
  %1487 = vmatpush.msra.mxu0 0.0
  %1488 = vmatpush.msra.mxu0 0.0
  %1489 = vmatpush.msra.mxu0 0.0
  %1490 = vmatpush.msra.mxu0 %v1473
  %1491 = vmatmul.f32.gmra.mxu0 %v1377
  %v1492 = vpop.f32.mrf.mxu0
  %v1493 = vadd.f32 0.0, %v1492
  %1494 = vmatmul.f32.gmra.mxu0 %v1380
  %v1495 = vpop.f32.mrf.mxu0
  %v1496 = vadd.f32 0.0, %v1495
  %1497 = vmatmul.f32.gmra.mxu0 %v1383
  %v1498 = vpop.f32.mrf.mxu0
  %v1499 = vadd.f32 0.0, %v1498
  %1500 = vmatmul.f32.gmra.mxu0 %v1386
  %v1501 = vpop.f32.mrf.mxu0
  %v1502 = vadd.f32 0.0, %v1501
  %1503 = vmatmul.f32.gmra.mxu0 %v1389
  %v1504 = vpop.f32.mrf.mxu0
  %v1505 = vadd.f32 0.0, %v1504
  %1506 = vmatmul.f32.gmra.mxu0 %v1392
  %v1507 = vpop.f32.mrf.mxu0
  %v1508 = vadd.f32 0.0, %v1507
  %1509 = vmatmul.f32.gmra.mxu0 %v1395
  %v1510 = vpop.f32.mrf.mxu0
  %v1511 = vadd.f32 0.0, %v1510
  %1512 = vmatmul.f32.gmra.mxu0 %v1398
  %v1513 = vpop.f32.mrf.mxu0
  %v1514 = vadd.f32 0.0, %v1513
  %1515 = vmatmul.f32.gmra.mxu0 %v1401
  %v1516 = vpop.f32.mrf.mxu0
  %v1517 = vadd.f32 0.0, %v1516
  %1518 = vmatmul.f32.gmra.mxu0 %v1404
  %v1519 = vpop.f32.mrf.mxu0
  %v1520 = vadd.f32 0.0, %v1519
  %1521 = vmatmul.f32.gmra.mxu0 %v1407
  %v1522 = vpop.f32.mrf.mxu0
  %v1523 = vadd.f32 0.0, %v1522
  %1524 = vmatmul.f32.gmra.mxu0 %v1410
  %v1525 = vpop.f32.mrf.mxu0
  %v1526 = vadd.f32 0.0, %v1525
  %1527 = vmatmul.f32.gmra.mxu0 %v1413
  %v1528 = vpop.f32.mrf.mxu0
  %v1529 = vadd.f32 0.0, %v1528
  %1530 = vmatmul.f32.gmra.mxu0 %v1416
  %v1531 = vpop.f32.mrf.mxu0
  %v1532 = vadd.f32 0.0, %v1531
  %1533 = vmatmul.f32.gmra.mxu0 %v1419
  %v1534 = vpop.f32.mrf.mxu0
  %v1535 = vadd.f32 0.0, %v1534
  %1536 = vmatmul.f32.gmra.mxu0 %v1422
  %v1537 = vpop.f32.mrf.mxu0
  %v1538 = vadd.f32 0.0, %v1537
  %1539 = vmatmul.f32.gmra.mxu0 %v1425
  %v1540 = vpop.f32.mrf.mxu0
  %v1541 = vadd.f32 0.0, %v1540
  %1542 = vmatmul.f32.gmra.mxu0 %v1428
  %v1543 = vpop.f32.mrf.mxu0
  %v1544 = vadd.f32 0.0, %v1543
  %1545 = vmatmul.f32.gmra.mxu0 %v1431
  %v1546 = vpop.f32.mrf.mxu0
  %v1547 = vadd.f32 0.0, %v1546
  %1548 = vmatmul.f32.gmra.mxu0 %v1434
  %v1549 = vpop.f32.mrf.mxu0
  %v1550 = vadd.f32 0.0, %v1549
  %1551 = vmatmul.f32.gmra.mxu0 %v1437
  %v1552 = vpop.f32.mrf.mxu0
  %v1553 = vadd.f32 0.0, %v1552
  %1554 = vmatmul.f32.gmra.mxu0 %v1440
  %v1555 = vpop.f32.mrf.mxu0
  %v1556 = vadd.f32 0.0, %v1555
  %1557 = vmatmul.f32.gmra.mxu0 %v1443
  %v1558 = vpop.f32.mrf.mxu0
  %v1559 = vadd.f32 0.0, %v1558
  %1560 = vmatmul.f32.gmra.mxu0 %v1446
  %v1561 = vpop.f32.mrf.mxu0
  %v1562 = vadd.f32 0.0, %v1561
  %1563 = vmatmul.f32.gmra.mxu0 %v1449
  %v1564 = vpop.f32.mrf.mxu0
  %v1565 = vadd.f32 0.0, %v1564
  %1566 = vmatmul.f32.gmra.mxu0 %v1452
  %v1567 = vpop.f32.mrf.mxu0
  %v1568 = vadd.f32 0.0, %v1567
  %1569 = vmatmul.f32.gmra.mxu0 %v1455
  %v1570 = vpop.f32.mrf.mxu0
  %v1571 = vadd.f32 0.0, %v1570
  %1572 = vmatmul.f32.gmra.mxu0 %v1458
  %v1573 = vpop.f32.mrf.mxu0
  %v1574 = vadd.f32 0.0, %v1573
  %1575 = vmatmul.f32.gmra.mxu0 %v1461
  %v1576 = vpop.f32.mrf.mxu0
  %v1577 = vadd.f32 0.0, %v1576
  %1578 = vmatmul.f32.gmra.mxu0 %v1464
  %v1579 = vpop.f32.mrf.mxu0
  %v1580 = vadd.f32 0.0, %v1579
  %1581 = vmatmul.f32.gmra.mxu0 %v1467
  %v1582 = vpop.f32.mrf.mxu0
  %v1583 = vadd.f32 0.0, %v1582
  %1584 = vmatmul.f32.gmra.mxu0 %v1470
  %v1585 = vpop.f32.mrf.mxu0
  %v1586 = vadd.f32 0.0, %v1585
  %1587 = vdwg.mxu0
  %v1588 = vadd.f32 %v1342, %v1493
  %v1589 = vadd.f32 %v1343, %v1496
  %v1590 = vadd.f32 %v1344, %v1499
  %v1591 = vadd.f32 %v1345, %v1502
  %v1592 = vadd.f32 %v1346, %v1505
  %v1593 = vadd.f32 %v1347, %v1508
  %v1594 = vadd.f32 %v1348, %v1511
  %v1595 = vadd.f32 %v1349, %v1514
  %v1596 = vadd.f32 %v1350, %v1517
  %v1597 = vadd.f32 %v1351, %v1520
  %v1598 = vadd.f32 %v1352, %v1523
  %v1599 = vadd.f32 %v1353, %v1526
  %v1600 = vadd.f32 %v1354, %v1529
  %v1601 = vadd.f32 %v1355, %v1532
  %v1602 = vadd.f32 %v1356, %v1535
  %v1603 = vadd.f32 %v1357, %v1538
  %v1604 = vadd.f32 %v1358, %v1541
  %v1605 = vadd.f32 %v1359, %v1544
  %v1606 = vadd.f32 %v1360, %v1547
  %v1607 = vadd.f32 %v1361, %v1550
  %v1608 = vadd.f32 %v1362, %v1553
  %v1609 = vadd.f32 %v1363, %v1556
  %v1610 = vadd.f32 %v1364, %v1559
  %v1611 = vadd.f32 %v1365, %v1562
  %v1612 = vadd.f32 %v1366, %v1565
  %v1613 = vadd.f32 %v1367, %v1568
  %v1614 = vadd.f32 %v1368, %v1571
  %v1615 = vadd.f32 %v1369, %v1574
  %v1616 = vadd.f32 %v1370, %v1577
  %v1617 = vadd.f32 %v1371, %v1580
  %v1618 = vadd.f32 %v1372, %v1583
  %v1619 = vadd.f32 %v1373, %v1586
  %v1620 = vrot.slane %v1000, 1
  %v1621 = vrot.slane %v1001, 1
  %v1622 = vrot.slane %v1002, 1
  %v1623 = vrot.slane %v1003, 1
  %v1624 = vrot.slane %v1004, 1
  %v1625 = vrot.slane %v1005, 1
  %v1626 = vrot.slane %v1006, 1
  %v1627 = vrot.slane %v1007, 1
  %v1628 = vrot.slane %v1008, 1
  %v1629 = vrot.slane %v1009, 1
  %v1630 = vrot.slane %v1010, 1
  %v1631 = vrot.slane %v1011, 1
  %v1632 = vrot.slane %v1012, 1
  %v1633 = vrot.slane %v1013, 1
  %v1634 = vrot.slane %v1014, 1
  %v1635 = vrot.slane %v1015, 1
  %v1636 = vrot.slane %v1016, 1
  %v1637 = vrot.slane %v1017, 1
  %v1638 = vrot.slane %v1018, 1
  %v1639 = vrot.slane %v1019, 1
  %v1640 = vrot.slane %v1020, 1
  %v1641 = vrot.slane %v1021, 1
  %v1642 = vrot.slane %v1022, 1
  %v1643 = vrot.slane %v1023, 1
  %v1644 = vrot.slane %v1024, 1
  %v1645 = vrot.slane %v1025, 1
  %v1646 = vrot.slane %v1026, 1
  %v1647 = vrot.slane %v1027, 1
  %v1648 = vrot.slane %v1028, 1
  %v1649 = vrot.slane %v1029, 1
  %v1650 = vrot.slane %v1030, 1
  %v1651 = vrot.slane %v1031, 1
  %v1652 = vsel %vm689, %v1650, %v1651
  %v1653 = vsel %vm689, %v1649, %v1650
  %v1654 = vsel %vm689, %v1648, %v1649
  %v1655 = vsel %vm689, %v1647, %v1648
  %v1656 = vsel %vm689, %v1646, %v1647
  %v1657 = vsel %vm689, %v1645, %v1646
  %v1658 = vsel %vm689, %v1644, %v1645
  %v1659 = vsel %vm689, %v1643, %v1644
  %v1660 = vsel %vm689, %v1642, %v1643
  %v1661 = vsel %vm689, %v1641, %v1642
  %v1662 = vsel %vm689, %v1640, %v1641
  %v1663 = vsel %vm689, %v1639, %v1640
  %v1664 = vsel %vm689, %v1638, %v1639
  %v1665 = vsel %vm689, %v1637, %v1638
  %v1666 = vsel %vm689, %v1636, %v1637
  %v1667 = vsel %vm689, %v1635, %v1636
  %v1668 = vsel %vm689, %v1634, %v1635
  %v1669 = vsel %vm689, %v1633, %v1634
  %v1670 = vsel %vm689, %v1632, %v1633
  %v1671 = vsel %vm689, %v1631, %v1632
  %v1672 = vsel %vm689, %v1630, %v1631
  %v1673 = vsel %vm689, %v1629, %v1630
  %v1674 = vsel %vm689, %v1628, %v1629
  %v1675 = vsel %vm689, %v1627, %v1628
  %v1676 = vsel %vm689, %v1626, %v1627
  %v1677 = vsel %vm689, %v1625, %v1626
  %v1678 = vsel %vm689, %v1624, %v1625
  %v1679 = vsel %vm689, %v1623, %v1624
  %v1680 = vsel %vm689, %v1622, %v1623
  %v1681 = vsel %vm689, %v1621, %v1622
  %v1682 = vsel %vm689, %v1620, %v1621
  %v1683 = vsel %vm689, %v1651, %v1620
  %v1684 = vmul.f32 %v1682, %v33
  %v1685 = vmul.f32 %v1681, %v34
  %v1686 = vmul.f32 %v1680, %v33
  %v1687 = vmul.f32 %v1679, %v34
  %v1688 = vmul.f32 %v1678, %v33
  %v1689 = vmul.f32 %v1677, %v34
  %v1690 = vmul.f32 %v1676, %v33
  %v1691 = vmul.f32 %v1675, %v34
  %v1692 = vmul.f32 %v1674, %v33
  %v1693 = vmul.f32 %v1673, %v34
  %v1694 = vmul.f32 %v1672, %v33
  %v1695 = vmul.f32 %v1671, %v34
  %v1696 = vmul.f32 %v1670, %v33
  %v1697 = vmul.f32 %v1669, %v34
  %v1698 = vmul.f32 %v1668, %v33
  %v1699 = vmul.f32 %v1667, %v34
  %v1700 = vmul.f32 %v1666, %v33
  %v1701 = vmul.f32 %v1665, %v34
  %v1702 = vmul.f32 %v1664, %v33
  %v1703 = vmul.f32 %v1663, %v34
  %v1704 = vmul.f32 %v1662, %v33
  %v1705 = vmul.f32 %v1661, %v34
  %v1706 = vmul.f32 %v1660, %v33
  %v1707 = vmul.f32 %v1659, %v34
  %v1708 = vmul.f32 %v1658, %v33
  %v1709 = vmul.f32 %v1657, %v34
  %v1710 = vmul.f32 %v1656, %v33
  %v1711 = vmul.f32 %v1655, %v34
  %v1712 = vmul.f32 %v1654, %v33
  %v1713 = vmul.f32 %v1653, %v34
  %v1714 = vmul.f32 %v1652, %v33
  %v1715 = vmul.f32 %v1683, %v34
  %s1716 = scalar_lea.vmem %s1, 20
  %v1717 = vld [vmem:[%s1716] sm:$0xf]
  %v1719 = vsel %vm14, %v1684, 0
  %v1722 = vsel %vm14, %v1685, 0
  %v1725 = vsel %vm14, %v1686, 0
  %v1728 = vsel %vm14, %v1687, 0
  %v1731 = vsel %vm14, %v1688, 0
  %v1734 = vsel %vm14, %v1689, 0
  %v1737 = vsel %vm14, %v1690, 0
  %v1740 = vsel %vm14, %v1691, 0
  %v1743 = vsel %vm14, %v1692, 0
  %v1746 = vsel %vm14, %v1693, 0
  %v1749 = vsel %vm14, %v1694, 0
  %v1752 = vsel %vm14, %v1695, 0
  %v1755 = vsel %vm14, %v1696, 0
  %v1758 = vsel %vm14, %v1697, 0
  %v1761 = vsel %vm14, %v1698, 0
  %v1764 = vsel %vm14, %v1699, 0
  %v1767 = vsel %vm14, %v1700, 0
  %v1770 = vsel %vm14, %v1701, 0
  %v1773 = vsel %vm14, %v1702, 0
  %v1776 = vsel %vm14, %v1703, 0
  %v1779 = vsel %vm14, %v1704, 0
  %v1782 = vsel %vm14, %v1705, 0
  %v1785 = vsel %vm14, %v1706, 0
  %v1788 = vsel %vm14, %v1707, 0
  %v1791 = vsel %vm14, %v1708, 0
  %v1794 = vsel %vm14, %v1709, 0
  %v1797 = vsel %vm14, %v1710, 0
  %v1800 = vsel %vm14, %v1711, 0
  %v1803 = vsel %vm14, %v1712, 0
  %v1806 = vsel %vm14, %v1713, 0
  %v1809 = vsel %vm14, %v1714, 0
  %v1812 = vsel %vm14, %v1715, 0
  %v1815 = vsel %vm328, %v1717, 0
  %1817 = vmatpush.msra.mxu0 0.0
  %1818 = vmatpush.msra.mxu0 0.0
  %1819 = vmatpush.msra.mxu0 0.0
  %1820 = vmatpush.msra.mxu0 0.0
  %1821 = vmatpush.msra.mxu0 0.0
  %1822 = vmatpush.msra.mxu0 0.0
  %1823 = vmatpush.msra.mxu0 0.0
  %1824 = vmatpush.msra.mxu0 0.0
  %1825 = vmatpush.msra.mxu0 0.0
  %1826 = vmatpush.msra.mxu0 0.0
  %1827 = vmatpush.msra.mxu0 0.0
  %1828 = vmatpush.msra.mxu0 0.0
  %1829 = vmatpush.msra.mxu0 0.0
  %1830 = vmatpush.msra.mxu0 0.0
  %1831 = vmatpush.msra.mxu0 0.0
  %1832 = vmatpush.msra.mxu0 %v1815
  %1833 = vmatmul.f32.gmra.mxu0 %v1719
  %v1834 = vpop.f32.mrf.mxu0
  %v1835 = vadd.f32 0.0, %v1834
  %1836 = vmatmul.f32.gmra.mxu0 %v1722
  %v1837 = vpop.f32.mrf.mxu0
  %v1838 = vadd.f32 0.0, %v1837
  %1839 = vmatmul.f32.gmra.mxu0 %v1725
  %v1840 = vpop.f32.mrf.mxu0
  %v1841 = vadd.f32 0.0, %v1840
  %1842 = vmatmul.f32.gmra.mxu0 %v1728
  %v1843 = vpop.f32.mrf.mxu0
  %v1844 = vadd.f32 0.0, %v1843
  %1845 = vmatmul.f32.gmra.mxu0 %v1731
  %v1846 = vpop.f32.mrf.mxu0
  %v1847 = vadd.f32 0.0, %v1846
  %1848 = vmatmul.f32.gmra.mxu0 %v1734
  %v1849 = vpop.f32.mrf.mxu0
  %v1850 = vadd.f32 0.0, %v1849
  %1851 = vmatmul.f32.gmra.mxu0 %v1737
  %v1852 = vpop.f32.mrf.mxu0
  %v1853 = vadd.f32 0.0, %v1852
  %1854 = vmatmul.f32.gmra.mxu0 %v1740
  %v1855 = vpop.f32.mrf.mxu0
  %v1856 = vadd.f32 0.0, %v1855
  %1857 = vmatmul.f32.gmra.mxu0 %v1743
  %v1858 = vpop.f32.mrf.mxu0
  %v1859 = vadd.f32 0.0, %v1858
  %1860 = vmatmul.f32.gmra.mxu0 %v1746
  %v1861 = vpop.f32.mrf.mxu0
  %v1862 = vadd.f32 0.0, %v1861
  %1863 = vmatmul.f32.gmra.mxu0 %v1749
  %v1864 = vpop.f32.mrf.mxu0
  %v1865 = vadd.f32 0.0, %v1864
  %1866 = vmatmul.f32.gmra.mxu0 %v1752
  %v1867 = vpop.f32.mrf.mxu0
  %v1868 = vadd.f32 0.0, %v1867
  %1869 = vmatmul.f32.gmra.mxu0 %v1755
  %v1870 = vpop.f32.mrf.mxu0
  %v1871 = vadd.f32 0.0, %v1870
  %1872 = vmatmul.f32.gmra.mxu0 %v1758
  %v1873 = vpop.f32.mrf.mxu0
  %v1874 = vadd.f32 0.0, %v1873
  %1875 = vmatmul.f32.gmra.mxu0 %v1761
  %v1876 = vpop.f32.mrf.mxu0
  %v1877 = vadd.f32 0.0, %v1876
  %1878 = vmatmul.f32.gmra.mxu0 %v1764
  %v1879 = vpop.f32.mrf.mxu0
  %v1880 = vadd.f32 0.0, %v1879
  %1881 = vmatmul.f32.gmra.mxu0 %v1767
  %v1882 = vpop.f32.mrf.mxu0
  %v1883 = vadd.f32 0.0, %v1882
  %1884 = vmatmul.f32.gmra.mxu0 %v1770
  %v1885 = vpop.f32.mrf.mxu0
  %v1886 = vadd.f32 0.0, %v1885
  %1887 = vmatmul.f32.gmra.mxu0 %v1773
  %v1888 = vpop.f32.mrf.mxu0
  %v1889 = vadd.f32 0.0, %v1888
  %1890 = vmatmul.f32.gmra.mxu0 %v1776
  %v1891 = vpop.f32.mrf.mxu0
  %v1892 = vadd.f32 0.0, %v1891
  %1893 = vmatmul.f32.gmra.mxu0 %v1779
  %v1894 = vpop.f32.mrf.mxu0
  %v1895 = vadd.f32 0.0, %v1894
  %1896 = vmatmul.f32.gmra.mxu0 %v1782
  %v1897 = vpop.f32.mrf.mxu0
  %v1898 = vadd.f32 0.0, %v1897
  %1899 = vmatmul.f32.gmra.mxu0 %v1785
  %v1900 = vpop.f32.mrf.mxu0
  %v1901 = vadd.f32 0.0, %v1900
  %1902 = vmatmul.f32.gmra.mxu0 %v1788
  %v1903 = vpop.f32.mrf.mxu0
  %v1904 = vadd.f32 0.0, %v1903
  %1905 = vmatmul.f32.gmra.mxu0 %v1791
  %v1906 = vpop.f32.mrf.mxu0
  %v1907 = vadd.f32 0.0, %v1906
  %1908 = vmatmul.f32.gmra.mxu0 %v1794
  %v1909 = vpop.f32.mrf.mxu0
  %v1910 = vadd.f32 0.0, %v1909
  %1911 = vmatmul.f32.gmra.mxu0 %v1797
  %v1912 = vpop.f32.mrf.mxu0
  %v1913 = vadd.f32 0.0, %v1912
  %1914 = vmatmul.f32.gmra.mxu0 %v1800
  %v1915 = vpop.f32.mrf.mxu0
  %v1916 = vadd.f32 0.0, %v1915
  %1917 = vmatmul.f32.gmra.mxu0 %v1803
  %v1918 = vpop.f32.mrf.mxu0
  %v1919 = vadd.f32 0.0, %v1918
  %1920 = vmatmul.f32.gmra.mxu0 %v1806
  %v1921 = vpop.f32.mrf.mxu0
  %v1922 = vadd.f32 0.0, %v1921
  %1923 = vmatmul.f32.gmra.mxu0 %v1809
  %v1924 = vpop.f32.mrf.mxu0
  %v1925 = vadd.f32 0.0, %v1924
  %1926 = vmatmul.f32.gmra.mxu0 %v1812
  %v1927 = vpop.f32.mrf.mxu0
  %v1928 = vadd.f32 0.0, %v1927
  %1929 = vdwg.mxu0
  %v1930 = vadd.f32 %v1588, %v1835
  %v1931 = vadd.f32 %v1589, %v1838
  %v1932 = vadd.f32 %v1590, %v1841
  %v1933 = vadd.f32 %v1591, %v1844
  %v1934 = vadd.f32 %v1592, %v1847
  %v1935 = vadd.f32 %v1593, %v1850
  %v1936 = vadd.f32 %v1594, %v1853
  %v1937 = vadd.f32 %v1595, %v1856
  %v1938 = vadd.f32 %v1596, %v1859
  %v1939 = vadd.f32 %v1597, %v1862
  %v1940 = vadd.f32 %v1598, %v1865
  %v1941 = vadd.f32 %v1599, %v1868
  %v1942 = vadd.f32 %v1600, %v1871
  %v1943 = vadd.f32 %v1601, %v1874
  %v1944 = vadd.f32 %v1602, %v1877
  %v1945 = vadd.f32 %v1603, %v1880
  %v1946 = vadd.f32 %v1604, %v1883
  %v1947 = vadd.f32 %v1605, %v1886
  %v1948 = vadd.f32 %v1606, %v1889
  %v1949 = vadd.f32 %v1607, %v1892
  %v1950 = vadd.f32 %v1608, %v1895
  %v1951 = vadd.f32 %v1609, %v1898
  %v1952 = vadd.f32 %v1610, %v1901
  %v1953 = vadd.f32 %v1611, %v1904
  %v1954 = vadd.f32 %v1612, %v1907
  %v1955 = vadd.f32 %v1613, %v1910
  %v1956 = vadd.f32 %v1614, %v1913
  %v1957 = vadd.f32 %v1615, %v1916
  %v1958 = vadd.f32 %v1616, %v1919
  %v1959 = vadd.f32 %v1617, %v1922
  %v1960 = vadd.f32 %v1618, %v1925
  %v1961 = vadd.f32 %v1619, %v1928
  %s1962 = scalar_lea.vmem [#allocation2], 32
  %v1963 = vld [vmem:[%s1962] sm:$0xff]
  %v1964 = vld [vmem:[%s1962 + $0x8] sm:$0xff]
  %v1965 = vld [vmem:[%s1962 + $0x10] sm:$0xff]
  %v1966 = vld [vmem:[%s1962 + $0x18] sm:$0xff]
  %v1967 = vld [vmem:[%s1962 + $0x20] sm:$0xff]
  %v1968 = vld [vmem:[%s1962 + $0x28] sm:$0xff]
  %v1969 = vld [vmem:[%s1962 + $0x30] sm:$0xff]
  %v1970 = vld [vmem:[%s1962 + $0x38] sm:$0xff]
  %v1971 = vld [vmem:[%s1962 + $0x40] sm:$0xff]
  %v1972 = vld [vmem:[%s1962 + $0x48] sm:$0xff]
  %v1973 = vld [vmem:[%s1962 + $0x50] sm:$0xff]
  %v1974 = vld [vmem:[%s1962 + $0x58] sm:$0xff]
  %v1975 = vld [vmem:[%s1962 + $0x60] sm:$0xff]
  %v1976 = vld [vmem:[%s1962 + $0x68] sm:$0xff]
  %v1977 = vld [vmem:[%s1962 + $0x70] sm:$0xff]
  %v1978 = vld [vmem:[%s1962 + $0x78] sm:$0xff]
  %v1979 = vld [vmem:[%s1962 + $0x80] sm:$0xff]
  %v1980 = vld [vmem:[%s1962 + $0x88] sm:$0xff]
  %v1981 = vld [vmem:[%s1962 + $0x90] sm:$0xff]
  %v1982 = vld [vmem:[%s1962 + $0x98] sm:$0xff]
  %v1983 = vld [vmem:[%s1962 + $0xa0] sm:$0xff]
  %v1984 = vld [vmem:[%s1962 + $0xa8] sm:$0xff]
  %v1985 = vld [vmem:[%s1962 + $0xb0] sm:$0xff]
  %v1986 = vld [vmem:[%s1962 + $0xb8] sm:$0xff]
  %v1987 = vld [vmem:[%s1962 + $0xc0] sm:$0xff]
  %v1988 = vld [vmem:[%s1962 + $0xc8] sm:$0xff]
  %v1989 = vld [vmem:[%s1962 + $0xd0] sm:$0xff]
  %v1990 = vld [vmem:[%s1962 + $0xd8] sm:$0xff]
  %v1991 = vld [vmem:[%s1962 + $0xe0] sm:$0xff]
  %v1992 = vld [vmem:[%s1962 + $0xe8] sm:$0xff]
  %v1993 = vld [vmem:[%s1962 + $0xf0] sm:$0xff]
  %v1994 = vld [vmem:[%s1962 + $0xf8] sm:$0xff]
  %v1995 = vrot.slane %v1963, 7
  %v1996 = vrot.slane %v1964, 7
  %v1997 = vrot.slane %v1965, 7
  %v1998 = vrot.slane %v1966, 7
  %v1999 = vrot.slane %v1967, 7
  %v2000 = vrot.slane %v1968, 7
  %v2001 = vrot.slane %v1969, 7
  %v2002 = vrot.slane %v1970, 7
  %v2003 = vrot.slane %v1971, 7
  %v2004 = vrot.slane %v1972, 7
  %v2005 = vrot.slane %v1973, 7
  %v2006 = vrot.slane %v1974, 7
  %v2007 = vrot.slane %v1975, 7
  %v2008 = vrot.slane %v1976, 7
  %v2009 = vrot.slane %v1977, 7
  %v2010 = vrot.slane %v1978, 7
  %v2011 = vrot.slane %v1979, 7
  %v2012 = vrot.slane %v1980, 7
  %v2013 = vrot.slane %v1981, 7
  %v2014 = vrot.slane %v1982, 7
  %v2015 = vrot.slane %v1983, 7
  %v2016 = vrot.slane %v1984, 7
  %v2017 = vrot.slane %v1985, 7
  %v2018 = vrot.slane %v1986, 7
  %v2019 = vrot.slane %v1987, 7
  %v2020 = vrot.slane %v1988, 7
  %v2021 = vrot.slane %v1989, 7
  %v2022 = vrot.slane %v1990, 7
  %v2023 = vrot.slane %v1991, 7
  %v2024 = vrot.slane %v1992, 7
  %v2025 = vrot.slane %v1993, 7
  %v2026 = vrot.slane %v1994, 7
  %v2027 = vsel %vm164, %v2025, %v2026
  %v2028 = vsel %vm164, %v2024, %v2025
  %v2029 = vsel %vm164, %v2023, %v2024
  %v2030 = vsel %vm164, %v2022, %v2023
  %v2031 = vsel %vm164, %v2021, %v2022
  %v2032 = vsel %vm164, %v2020, %v2021
  %v2033 = vsel %vm164, %v2019, %v2020
  %v2034 = vsel %vm164, %v2018, %v2019
  %v2035 = vsel %vm164, %v2017, %v2018
  %v2036 = vsel %vm164, %v2016, %v2017
  %v2037 = vsel %vm164, %v2015, %v2016
  %v2038 = vsel %vm164, %v2014, %v2015
  %v2039 = vsel %vm164, %v2013, %v2014
  %v2040 = vsel %vm164, %v2012, %v2013
  %v2041 = vsel %vm164, %v2011, %v2012
  %v2042 = vsel %vm164, %v2010, %v2011
  %v2043 = vsel %vm164, %v2009, %v2010
  %v2044 = vsel %vm164, %v2008, %v2009
  %v2045 = vsel %vm164, %v2007, %v2008
  %v2046 = vsel %vm164, %v2006, %v2007
  %v2047 = vsel %vm164, %v2005, %v2006
  %v2048 = vsel %vm164, %v2004, %v2005
  %v2049 = vsel %vm164, %v2003, %v2004
  %v2050 = vsel %vm164, %v2002, %v2003
  %v2051 = vsel %vm164, %v2001, %v2002
  %v2052 = vsel %vm164, %v2000, %v2001
  %v2053 = vsel %vm164, %v1999, %v2000
  %v2054 = vsel %vm164, %v1998, %v1999
  %v2055 = vsel %vm164, %v1997, %v1998
  %v2056 = vsel %vm164, %v1996, %v1997
  %v2057 = vsel %vm164, %v1995, %v1996
  %v2058 = vsel %vm164, %v2026, %v1995
  %v2059 = vmul.f32 %v2058, %v27
  %v2060 = vmul.f32 %v2057, %v28
  %v2061 = vmul.f32 %v2056, %v27
  %v2062 = vmul.f32 %v2055, %v28
  %v2063 = vmul.f32 %v2054, %v27
  %v2064 = vmul.f32 %v2053, %v28
  %v2065 = vmul.f32 %v2052, %v27
  %v2066 = vmul.f32 %v2051, %v28
  %v2067 = vmul.f32 %v2050, %v27
  %v2068 = vmul.f32 %v2049, %v28
  %v2069 = vmul.f32 %v2048, %v27
  %v2070 = vmul.f32 %v2047, %v28
  %v2071 = vmul.f32 %v2046, %v27
  %v2072 = vmul.f32 %v2045, %v28
  %v2073 = vmul.f32 %v2044, %v27
  %v2074 = vmul.f32 %v2043, %v28
  %v2075 = vmul.f32 %v2042, %v27
  %v2076 = vmul.f32 %v2041, %v28
  %v2077 = vmul.f32 %v2040, %v27
  %v2078 = vmul.f32 %v2039, %v28
  %v2079 = vmul.f32 %v2038, %v27
  %v2080 = vmul.f32 %v2037, %v28
  %v2081 = vmul.f32 %v2036, %v27
  %v2082 = vmul.f32 %v2035, %v28
  %v2083 = vmul.f32 %v2034, %v27
  %v2084 = vmul.f32 %v2033, %v28
  %v2085 = vmul.f32 %v2032, %v27
  %v2086 = vmul.f32 %v2031, %v28
  %v2087 = vmul.f32 %v2030, %v27
  %v2088 = vmul.f32 %v2029, %v28
  %v2089 = vmul.f32 %v2028, %v27
  %v2090 = vmul.f32 %v2027, %v28
  %s2091 = scalar_lea.vmem %s1, 24
  %v2092 = vld [vmem:[%s2091] sm:$0xf]
  %v2094 = vsel %vm14, %v2059, 0
  %v2097 = vsel %vm14, %v2060, 0
  %v2100 = vsel %vm14, %v2061, 0
  %v2103 = vsel %vm14, %v2062, 0
  %v2106 = vsel %vm14, %v2063, 0
  %v2109 = vsel %vm14, %v2064, 0
  %v2112 = vsel %vm14, %v2065, 0
  %v2115 = vsel %vm14, %v2066, 0
  %v2118 = vsel %vm14, %v2067, 0
  %v2121 = vsel %vm14, %v2068, 0
  %v2124 = vsel %vm14, %v2069, 0
  %v2127 = vsel %vm14, %v2070, 0
  %v2130 = vsel %vm14, %v2071, 0
  %v2133 = vsel %vm14, %v2072, 0
  %v2136 = vsel %vm14, %v2073, 0
  %v2139 = vsel %vm14, %v2074, 0
  %v2142 = vsel %vm14, %v2075, 0
  %v2145 = vsel %vm14, %v2076, 0
  %v2148 = vsel %vm14, %v2077, 0
  %v2151 = vsel %vm14, %v2078, 0
  %v2154 = vsel %vm14, %v2079, 0
  %v2157 = vsel %vm14, %v2080, 0
  %v2160 = vsel %vm14, %v2081, 0
  %v2163 = vsel %vm14, %v2082, 0
  %v2166 = vsel %vm14, %v2083, 0
  %v2169 = vsel %vm14, %v2084, 0
  %v2172 = vsel %vm14, %v2085, 0
  %v2175 = vsel %vm14, %v2086, 0
  %v2178 = vsel %vm14, %v2087, 0
  %v2181 = vsel %vm14, %v2088, 0
  %v2184 = vsel %vm14, %v2089, 0
  %v2187 = vsel %vm14, %v2090, 0
  %v2190 = vsel %vm328, %v2092, 0
  %2192 = vmatpush.msra.mxu0 0.0
  %2193 = vmatpush.msra.mxu0 0.0
  %2194 = vmatpush.msra.mxu0 0.0
  %2195 = vmatpush.msra.mxu0 0.0
  %2196 = vmatpush.msra.mxu0 0.0
  %2197 = vmatpush.msra.mxu0 0.0
  %2198 = vmatpush.msra.mxu0 0.0
  %2199 = vmatpush.msra.mxu0 0.0
  %2200 = vmatpush.msra.mxu0 0.0
  %2201 = vmatpush.msra.mxu0 0.0
  %2202 = vmatpush.msra.mxu0 0.0
  %2203 = vmatpush.msra.mxu0 0.0
  %2204 = vmatpush.msra.mxu0 0.0
  %2205 = vmatpush.msra.mxu0 0.0
  %2206 = vmatpush.msra.mxu0 0.0
  %2207 = vmatpush.msra.mxu0 %v2190
  %2208 = vmatmul.f32.gmra.mxu0 %v2094
  %v2209 = vpop.f32.mrf.mxu0
  %v2210 = vadd.f32 0.0, %v2209
  %2211 = vmatmul.f32.gmra.mxu0 %v2097
  %v2212 = vpop.f32.mrf.mxu0
  %v2213 = vadd.f32 0.0, %v2212
  %2214 = vmatmul.f32.gmra.mxu0 %v2100
  %v2215 = vpop.f32.mrf.mxu0
  %v2216 = vadd.f32 0.0, %v2215
  %2217 = vmatmul.f32.gmra.mxu0 %v2103
  %v2218 = vpop.f32.mrf.mxu0
  %v2219 = vadd.f32 0.0, %v2218
  %2220 = vmatmul.f32.gmra.mxu0 %v2106
  %v2221 = vpop.f32.mrf.mxu0
  %v2222 = vadd.f32 0.0, %v2221
  %2223 = vmatmul.f32.gmra.mxu0 %v2109
  %v2224 = vpop.f32.mrf.mxu0
  %v2225 = vadd.f32 0.0, %v2224
  %2226 = vmatmul.f32.gmra.mxu0 %v2112
  %v2227 = vpop.f32.mrf.mxu0
  %v2228 = vadd.f32 0.0, %v2227
  %2229 = vmatmul.f32.gmra.mxu0 %v2115
  %v2230 = vpop.f32.mrf.mxu0
  %v2231 = vadd.f32 0.0, %v2230
  %2232 = vmatmul.f32.gmra.mxu0 %v2118
  %v2233 = vpop.f32.mrf.mxu0
  %v2234 = vadd.f32 0.0, %v2233
  %2235 = vmatmul.f32.gmra.mxu0 %v2121
  %v2236 = vpop.f32.mrf.mxu0
  %v2237 = vadd.f32 0.0, %v2236
  %2238 = vmatmul.f32.gmra.mxu0 %v2124
  %v2239 = vpop.f32.mrf.mxu0
  %v2240 = vadd.f32 0.0, %v2239
  %2241 = vmatmul.f32.gmra.mxu0 %v2127
  %v2242 = vpop.f32.mrf.mxu0
  %v2243 = vadd.f32 0.0, %v2242
  %2244 = vmatmul.f32.gmra.mxu0 %v2130
  %v2245 = vpop.f32.mrf.mxu0
  %v2246 = vadd.f32 0.0, %v2245
  %2247 = vmatmul.f32.gmra.mxu0 %v2133
  %v2248 = vpop.f32.mrf.mxu0
  %v2249 = vadd.f32 0.0, %v2248
  %2250 = vmatmul.f32.gmra.mxu0 %v2136
  %v2251 = vpop.f32.mrf.mxu0
  %v2252 = vadd.f32 0.0, %v2251
  %2253 = vmatmul.f32.gmra.mxu0 %v2139
  %v2254 = vpop.f32.mrf.mxu0
  %v2255 = vadd.f32 0.0, %v2254
  %2256 = vmatmul.f32.gmra.mxu0 %v2142
  %v2257 = vpop.f32.mrf.mxu0
  %v2258 = vadd.f32 0.0, %v2257
  %2259 = vmatmul.f32.gmra.mxu0 %v2145
  %v2260 = vpop.f32.mrf.mxu0
  %v2261 = vadd.f32 0.0, %v2260
  %2262 = vmatmul.f32.gmra.mxu0 %v2148
  %v2263 = vpop.f32.mrf.mxu0
  %v2264 = vadd.f32 0.0, %v2263
  %2265 = vmatmul.f32.gmra.mxu0 %v2151
  %v2266 = vpop.f32.mrf.mxu0
  %v2267 = vadd.f32 0.0, %v2266
  %2268 = vmatmul.f32.gmra.mxu0 %v2154
  %v2269 = vpop.f32.mrf.mxu0
  %v2270 = vadd.f32 0.0, %v2269
  %2271 = vmatmul.f32.gmra.mxu0 %v2157
  %v2272 = vpop.f32.mrf.mxu0
  %v2273 = vadd.f32 0.0, %v2272
  %2274 = vmatmul.f32.gmra.mxu0 %v2160
  %v2275 = vpop.f32.mrf.mxu0
  %v2276 = vadd.f32 0.0, %v2275
  %2277 = vmatmul.f32.gmra.mxu0 %v2163
  %v2278 = vpop.f32.mrf.mxu0
  %v2279 = vadd.f32 0.0, %v2278
  %2280 = vmatmul.f32.gmra.mxu0 %v2166
  %v2281 = vpop.f32.mrf.mxu0
  %v2282 = vadd.f32 0.0, %v2281
  %2283 = vmatmul.f32.gmra.mxu0 %v2169
  %v2284 = vpop.f32.mrf.mxu0
  %v2285 = vadd.f32 0.0, %v2284
  %2286 = vmatmul.f32.gmra.mxu0 %v2172
  %v2287 = vpop.f32.mrf.mxu0
  %v2288 = vadd.f32 0.0, %v2287
  %2289 = vmatmul.f32.gmra.mxu0 %v2175
  %v2290 = vpop.f32.mrf.mxu0
  %v2291 = vadd.f32 0.0, %v2290
  %2292 = vmatmul.f32.gmra.mxu0 %v2178
  %v2293 = vpop.f32.mrf.mxu0
  %v2294 = vadd.f32 0.0, %v2293
  %2295 = vmatmul.f32.gmra.mxu0 %v2181
  %v2296 = vpop.f32.mrf.mxu0
  %v2297 = vadd.f32 0.0, %v2296
  %2298 = vmatmul.f32.gmra.mxu0 %v2184
  %v2299 = vpop.f32.mrf.mxu0
  %v2300 = vadd.f32 0.0, %v2299
  %2301 = vmatmul.f32.gmra.mxu0 %v2187
  %v2302 = vpop.f32.mrf.mxu0
  %v2303 = vadd.f32 0.0, %v2302
  %2304 = vdwg.mxu0
  %v2305 = vadd.f32 %v1930, %v2210
  %v2306 = vadd.f32 %v1931, %v2213
  %v2307 = vadd.f32 %v1932, %v2216
  %v2308 = vadd.f32 %v1933, %v2219
  %v2309 = vadd.f32 %v1934, %v2222
  %v2310 = vadd.f32 %v1935, %v2225
  %v2311 = vadd.f32 %v1936, %v2228
  %v2312 = vadd.f32 %v1937, %v2231
  %v2313 = vadd.f32 %v1938, %v2234
  %v2314 = vadd.f32 %v1939, %v2237
  %v2315 = vadd.f32 %v1940, %v2240
  %v2316 = vadd.f32 %v1941, %v2243
  %v2317 = vadd.f32 %v1942, %v2246
  %v2318 = vadd.f32 %v1943, %v2249
  %v2319 = vadd.f32 %v1944, %v2252
  %v2320 = vadd.f32 %v1945, %v2255
  %v2321 = vadd.f32 %v1946, %v2258
  %v2322 = vadd.f32 %v1947, %v2261
  %v2323 = vadd.f32 %v1948, %v2264
  %v2324 = vadd.f32 %v1949, %v2267
  %v2325 = vadd.f32 %v1950, %v2270
  %v2326 = vadd.f32 %v1951, %v2273
  %v2327 = vadd.f32 %v1952, %v2276
  %v2328 = vadd.f32 %v1953, %v2279
  %v2329 = vadd.f32 %v1954, %v2282
  %v2330 = vadd.f32 %v1955, %v2285
  %v2331 = vadd.f32 %v1956, %v2288
  %v2332 = vadd.f32 %v1957, %v2291
  %v2333 = vadd.f32 %v1958, %v2294
  %v2334 = vadd.f32 %v1959, %v2297
  %v2335 = vadd.f32 %v1960, %v2300
  %v2336 = vadd.f32 %v1961, %v2303
  %s2337 = scalar_lea.vmem %s1, 28
  %v2338 = vld [vmem:[%s2337] sm:$0xf]
  %v2340 = vsel %vm14, %v1963, 0
  %v2343 = vsel %vm14, %v1964, 0
  %v2346 = vsel %vm14, %v1965, 0
  %v2349 = vsel %vm14, %v1966, 0
  %v2352 = vsel %vm14, %v1967, 0
  %v2355 = vsel %vm14, %v1968, 0
  %v2358 = vsel %vm14, %v1969, 0
  %v2361 = vsel %vm14, %v1970, 0
  %v2364 = vsel %vm14, %v1971, 0
  %v2367 = vsel %vm14, %v1972, 0
  %v2370 = vsel %vm14, %v1973, 0
  %v2373 = vsel %vm14, %v1974, 0
  %v2376 = vsel %vm14, %v1975, 0
  %v2379 = vsel %vm14, %v1976, 0
  %v2382 = vsel %vm14, %v1977, 0
  %v2385 = vsel %vm14, %v1978, 0
  %v2388 = vsel %vm14, %v1979, 0
  %v2391 = vsel %vm14, %v1980, 0
  %v2394 = vsel %vm14, %v1981, 0
  %v2397 = vsel %vm14, %v1982, 0
  %v2400 = vsel %vm14, %v1983, 0
  %v2403 = vsel %vm14, %v1984, 0
  %v2406 = vsel %vm14, %v1985, 0
  %v2409 = vsel %vm14, %v1986, 0
  %v2412 = vsel %vm14, %v1987, 0
  %v2415 = vsel %vm14, %v1988, 0
  %v2418 = vsel %vm14, %v1989, 0
  %v2421 = vsel %vm14, %v1990, 0
  %v2424 = vsel %vm14, %v1991, 0
  %v2427 = vsel %vm14, %v1992, 0
  %v2430 = vsel %vm14, %v1993, 0
  %v2433 = vsel %vm14, %v1994, 0
  %v2436 = vsel %vm328, %v2338, 0
  %2438 = vmatpush.msra.mxu0 0.0
  %2439 = vmatpush.msra.mxu0 0.0
  %2440 = vmatpush.msra.mxu0 0.0
  %2441 = vmatpush.msra.mxu0 0.0
  %2442 = vmatpush.msra.mxu0 0.0
  %2443 = vmatpush.msra.mxu0 0.0
  %2444 = vmatpush.msra.mxu0 0.0
  %2445 = vmatpush.msra.mxu0 0.0
  %2446 = vmatpush.msra.mxu0 0.0
  %2447 = vmatpush.msra.mxu0 0.0
  %2448 = vmatpush.msra.mxu0 0.0
  %2449 = vmatpush.msra.mxu0 0.0
  %2450 = vmatpush.msra.mxu0 0.0
  %2451 = vmatpush.msra.mxu0 0.0
  %2452 = vmatpush.msra.mxu0 0.0
  %2453 = vmatpush.msra.mxu0 %v2436
  %2454 = vmatmul.f32.gmra.mxu0 %v2340
  %v2455 = vpop.f32.mrf.mxu0
  %v2456 = vadd.f32 0.0, %v2455
  %2457 = vmatmul.f32.gmra.mxu0 %v2343
  %v2458 = vpop.f32.mrf.mxu0
  %v2459 = vadd.f32 0.0, %v2458
  %2460 = vmatmul.f32.gmra.mxu0 %v2346
  %v2461 = vpop.f32.mrf.mxu0
  %v2462 = vadd.f32 0.0, %v2461
  %2463 = vmatmul.f32.gmra.mxu0 %v2349
  %v2464 = vpop.f32.mrf.mxu0
  %v2465 = vadd.f32 0.0, %v2464
  %2466 = vmatmul.f32.gmra.mxu0 %v2352
  %v2467 = vpop.f32.mrf.mxu0
  %v2468 = vadd.f32 0.0, %v2467
  %2469 = vmatmul.f32.gmra.mxu0 %v2355
  %v2470 = vpop.f32.mrf.mxu0
  %v2471 = vadd.f32 0.0, %v2470
  %2472 = vmatmul.f32.gmra.mxu0 %v2358
  %v2473 = vpop.f32.mrf.mxu0
  %v2474 = vadd.f32 0.0, %v2473
  %2475 = vmatmul.f32.gmra.mxu0 %v2361
  %v2476 = vpop.f32.mrf.mxu0
  %v2477 = vadd.f32 0.0, %v2476
  %2478 = vmatmul.f32.gmra.mxu0 %v2364
  %v2479 = vpop.f32.mrf.mxu0
  %v2480 = vadd.f32 0.0, %v2479
  %2481 = vmatmul.f32.gmra.mxu0 %v2367
  %v2482 = vpop.f32.mrf.mxu0
  %v2483 = vadd.f32 0.0, %v2482
  %2484 = vmatmul.f32.gmra.mxu0 %v2370
  %v2485 = vpop.f32.mrf.mxu0
  %v2486 = vadd.f32 0.0, %v2485
  %2487 = vmatmul.f32.gmra.mxu0 %v2373
  %v2488 = vpop.f32.mrf.mxu0
  %v2489 = vadd.f32 0.0, %v2488
  %2490 = vmatmul.f32.gmra.mxu0 %v2376
  %v2491 = vpop.f32.mrf.mxu0
  %v2492 = vadd.f32 0.0, %v2491
  %2493 = vmatmul.f32.gmra.mxu0 %v2379
  %v2494 = vpop.f32.mrf.mxu0
  %v2495 = vadd.f32 0.0, %v2494
  %2496 = vmatmul.f32.gmra.mxu0 %v2382
  %v2497 = vpop.f32.mrf.mxu0
  %v2498 = vadd.f32 0.0, %v2497
  %2499 = vmatmul.f32.gmra.mxu0 %v2385
  %v2500 = vpop.f32.mrf.mxu0
  %v2501 = vadd.f32 0.0, %v2500
  %2502 = vmatmul.f32.gmra.mxu0 %v2388
  %v2503 = vpop.f32.mrf.mxu0
  %v2504 = vadd.f32 0.0, %v2503
  %2505 = vmatmul.f32.gmra.mxu0 %v2391
  %v2506 = vpop.f32.mrf.mxu0
  %v2507 = vadd.f32 0.0, %v2506
  %2508 = vmatmul.f32.gmra.mxu0 %v2394
  %v2509 = vpop.f32.mrf.mxu0
  %v2510 = vadd.f32 0.0, %v2509
  %2511 = vmatmul.f32.gmra.mxu0 %v2397
  %v2512 = vpop.f32.mrf.mxu0
  %v2513 = vadd.f32 0.0, %v2512
  %2514 = vmatmul.f32.gmra.mxu0 %v2400
  %v2515 = vpop.f32.mrf.mxu0
  %v2516 = vadd.f32 0.0, %v2515
  %2517 = vmatmul.f32.gmra.mxu0 %v2403
  %v2518 = vpop.f32.mrf.mxu0
  %v2519 = vadd.f32 0.0, %v2518
  %2520 = vmatmul.f32.gmra.mxu0 %v2406
  %v2521 = vpop.f32.mrf.mxu0
  %v2522 = vadd.f32 0.0, %v2521
  %2523 = vmatmul.f32.gmra.mxu0 %v2409
  %v2524 = vpop.f32.mrf.mxu0
  %v2525 = vadd.f32 0.0, %v2524
  %2526 = vmatmul.f32.gmra.mxu0 %v2412
  %v2527 = vpop.f32.mrf.mxu0
  %v2528 = vadd.f32 0.0, %v2527
  %2529 = vmatmul.f32.gmra.mxu0 %v2415
  %v2530 = vpop.f32.mrf.mxu0
  %v2531 = vadd.f32 0.0, %v2530
  %2532 = vmatmul.f32.gmra.mxu0 %v2418
  %v2533 = vpop.f32.mrf.mxu0
  %v2534 = vadd.f32 0.0, %v2533
  %2535 = vmatmul.f32.gmra.mxu0 %v2421
  %v2536 = vpop.f32.mrf.mxu0
  %v2537 = vadd.f32 0.0, %v2536
  %2538 = vmatmul.f32.gmra.mxu0 %v2424
  %v2539 = vpop.f32.mrf.mxu0
  %v2540 = vadd.f32 0.0, %v2539
  %2541 = vmatmul.f32.gmra.mxu0 %v2427
  %v2542 = vpop.f32.mrf.mxu0
  %v2543 = vadd.f32 0.0, %v2542
  %2544 = vmatmul.f32.gmra.mxu0 %v2430
  %v2545 = vpop.f32.mrf.mxu0
  %v2546 = vadd.f32 0.0, %v2545
  %2547 = vmatmul.f32.gmra.mxu0 %v2433
  %v2548 = vpop.f32.mrf.mxu0
  %v2549 = vadd.f32 0.0, %v2548
  %2550 = vdwg.mxu0
  %v2551 = vadd.f32 %v2305, %v2456
  %v2552 = vadd.f32 %v2306, %v2459
  %v2553 = vadd.f32 %v2307, %v2462
  %v2554 = vadd.f32 %v2308, %v2465
  %v2555 = vadd.f32 %v2309, %v2468
  %v2556 = vadd.f32 %v2310, %v2471
  %v2557 = vadd.f32 %v2311, %v2474
  %v2558 = vadd.f32 %v2312, %v2477
  %v2559 = vadd.f32 %v2313, %v2480
  %v2560 = vadd.f32 %v2314, %v2483
  %v2561 = vadd.f32 %v2315, %v2486
  %v2562 = vadd.f32 %v2316, %v2489
  %v2563 = vadd.f32 %v2317, %v2492
  %v2564 = vadd.f32 %v2318, %v2495
  %v2565 = vadd.f32 %v2319, %v2498
  %v2566 = vadd.f32 %v2320, %v2501
  %v2567 = vadd.f32 %v2321, %v2504
  %v2568 = vadd.f32 %v2322, %v2507
  %v2569 = vadd.f32 %v2323, %v2510
  %v2570 = vadd.f32 %v2324, %v2513
  %v2571 = vadd.f32 %v2325, %v2516
  %v2572 = vadd.f32 %v2326, %v2519
  %v2573 = vadd.f32 %v2327, %v2522
  %v2574 = vadd.f32 %v2328, %v2525
  %v2575 = vadd.f32 %v2329, %v2528
  %v2576 = vadd.f32 %v2330, %v2531
  %v2577 = vadd.f32 %v2331, %v2534
  %v2578 = vadd.f32 %v2332, %v2537
  %v2579 = vadd.f32 %v2333, %v2540
  %v2580 = vadd.f32 %v2334, %v2543
  %v2581 = vadd.f32 %v2335, %v2546
  %v2582 = vadd.f32 %v2336, %v2549
  %v2583 = vrot.slane %v1963, 1
  %v2584 = vrot.slane %v1964, 1
  %v2585 = vrot.slane %v1965, 1
  %v2586 = vrot.slane %v1966, 1
  %v2587 = vrot.slane %v1967, 1
  %v2588 = vrot.slane %v1968, 1
  %v2589 = vrot.slane %v1969, 1
  %v2590 = vrot.slane %v1970, 1
  %v2591 = vrot.slane %v1971, 1
  %v2592 = vrot.slane %v1972, 1
  %v2593 = vrot.slane %v1973, 1
  %v2594 = vrot.slane %v1974, 1
  %v2595 = vrot.slane %v1975, 1
  %v2596 = vrot.slane %v1976, 1
  %v2597 = vrot.slane %v1977, 1
  %v2598 = vrot.slane %v1978, 1
  %v2599 = vrot.slane %v1979, 1
  %v2600 = vrot.slane %v1980, 1
  %v2601 = vrot.slane %v1981, 1
  %v2602 = vrot.slane %v1982, 1
  %v2603 = vrot.slane %v1983, 1
  %v2604 = vrot.slane %v1984, 1
  %v2605 = vrot.slane %v1985, 1
  %v2606 = vrot.slane %v1986, 1
  %v2607 = vrot.slane %v1987, 1
  %v2608 = vrot.slane %v1988, 1
  %v2609 = vrot.slane %v1989, 1
  %v2610 = vrot.slane %v1990, 1
  %v2611 = vrot.slane %v1991, 1
  %v2612 = vrot.slane %v1992, 1
  %v2613 = vrot.slane %v1993, 1
  %v2614 = vrot.slane %v1994, 1
  %v2615 = vsel %vm689, %v2613, %v2614
  %v2616 = vsel %vm689, %v2612, %v2613
  %v2617 = vsel %vm689, %v2611, %v2612
  %v2618 = vsel %vm689, %v2610, %v2611
  %v2619 = vsel %vm689, %v2609, %v2610
  %v2620 = vsel %vm689, %v2608, %v2609
  %v2621 = vsel %vm689, %v2607, %v2608
  %v2622 = vsel %vm689, %v2606, %v2607
  %v2623 = vsel %vm689, %v2605, %v2606
  %v2624 = vsel %vm689, %v2604, %v2605
  %v2625 = vsel %vm689, %v2603, %v2604
  %v2626 = vsel %vm689, %v2602, %v2603
  %v2627 = vsel %vm689, %v2601, %v2602
  %v2628 = vsel %vm689, %v2600, %v2601
  %v2629 = vsel %vm689, %v2599, %v2600
  %v2630 = vsel %vm689, %v2598, %v2599
  %v2631 = vsel %vm689, %v2597, %v2598
  %v2632 = vsel %vm689, %v2596, %v2597
  %v2633 = vsel %vm689, %v2595, %v2596
  %v2634 = vsel %vm689, %v2594, %v2595
  %v2635 = vsel %vm689, %v2593, %v2594
  %v2636 = vsel %vm689, %v2592, %v2593
  %v2637 = vsel %vm689, %v2591, %v2592
  %v2638 = vsel %vm689, %v2590, %v2591
  %v2639 = vsel %vm689, %v2589, %v2590
  %v2640 = vsel %vm689, %v2588, %v2589
  %v2641 = vsel %vm689, %v2587, %v2588
  %v2642 = vsel %vm689, %v2586, %v2587
  %v2643 = vsel %vm689, %v2585, %v2586
  %v2644 = vsel %vm689, %v2584, %v2585
  %v2645 = vsel %vm689, %v2583, %v2584
  %v2646 = vsel %vm689, %v2614, %v2583
  %v2647 = vmul.f32 %v2645, %v33
  %v2648 = vmul.f32 %v2644, %v34
  %v2649 = vmul.f32 %v2643, %v33
  %v2650 = vmul.f32 %v2642, %v34
  %v2651 = vmul.f32 %v2641, %v33
  %v2652 = vmul.f32 %v2640, %v34
  %v2653 = vmul.f32 %v2639, %v33
  %v2654 = vmul.f32 %v2638, %v34
  %v2655 = vmul.f32 %v2637, %v33
  %v2656 = vmul.f32 %v2636, %v34
  %v2657 = vmul.f32 %v2635, %v33
  %v2658 = vmul.f32 %v2634, %v34
  %v2659 = vmul.f32 %v2633, %v33
  %v2660 = vmul.f32 %v2632, %v34
  %v2661 = vmul.f32 %v2631, %v33
  %v2662 = vmul.f32 %v2630, %v34
  %v2663 = vmul.f32 %v2629, %v33
  %v2664 = vmul.f32 %v2628, %v34
  %v2665 = vmul.f32 %v2627, %v33
  %v2666 = vmul.f32 %v2626, %v34
  %v2667 = vmul.f32 %v2625, %v33
  %v2668 = vmul.f32 %v2624, %v34
  %v2669 = vmul.f32 %v2623, %v33
  %v2670 = vmul.f32 %v2622, %v34
  %v2671 = vmul.f32 %v2621, %v33
  %v2672 = vmul.f32 %v2620, %v34
  %v2673 = vmul.f32 %v2619, %v33
  %v2674 = vmul.f32 %v2618, %v34
  %v2675 = vmul.f32 %v2617, %v33
  %v2676 = vmul.f32 %v2616, %v34
  %v2677 = vmul.f32 %v2615, %v33
  %v2678 = vmul.f32 %v2646, %v34
  %s2679 = scalar_lea.vmem %s1, 32
  %v2680 = vld [vmem:[%s2679] sm:$0xf]
  %v2682 = vsel %vm14, %v2647, 0
  %v2685 = vsel %vm14, %v2648, 0
  %v2688 = vsel %vm14, %v2649, 0
  %v2691 = vsel %vm14, %v2650, 0
  %v2694 = vsel %vm14, %v2651, 0
  %v2697 = vsel %vm14, %v2652, 0
  %v2700 = vsel %vm14, %v2653, 0
  %v2703 = vsel %vm14, %v2654, 0
  %v2706 = vsel %vm14, %v2655, 0
  %v2709 = vsel %vm14, %v2656, 0
  %v2712 = vsel %vm14, %v2657, 0
  %v2715 = vsel %vm14, %v2658, 0
  %v2718 = vsel %vm14, %v2659, 0
  %v2721 = vsel %vm14, %v2660, 0
  %v2724 = vsel %vm14, %v2661, 0
  %v2727 = vsel %vm14, %v2662, 0
  %v2730 = vsel %vm14, %v2663, 0
  %v2733 = vsel %vm14, %v2664, 0
  %v2736 = vsel %vm14, %v2665, 0
  %v2739 = vsel %vm14, %v2666, 0
  %v2742 = vsel %vm14, %v2667, 0
  %v2745 = vsel %vm14, %v2668, 0
  %v2748 = vsel %vm14, %v2669, 0
  %v2751 = vsel %vm14, %v2670, 0
  %v2754 = vsel %vm14, %v2671, 0
  %v2757 = vsel %vm14, %v2672, 0
  %v2760 = vsel %vm14, %v2673, 0
  %v2763 = vsel %vm14, %v2674, 0
  %v2766 = vsel %vm14, %v2675, 0
  %v2769 = vsel %vm14, %v2676, 0
  %v2772 = vsel %vm14, %v2677, 0
  %v2775 = vsel %vm14, %v2678, 0
  %v2778 = vsel %vm328, %v2680, 0
  %2780 = vmatpush.msra.mxu0 0.0
  %2781 = vmatpush.msra.mxu0 0.0
  %2782 = vmatpush.msra.mxu0 0.0
  %2783 = vmatpush.msra.mxu0 0.0
  %2784 = vmatpush.msra.mxu0 0.0
  %2785 = vmatpush.msra.mxu0 0.0
  %2786 = vmatpush.msra.mxu0 0.0
  %2787 = vmatpush.msra.mxu0 0.0
  %2788 = vmatpush.msra.mxu0 0.0
  %2789 = vmatpush.msra.mxu0 0.0
  %2790 = vmatpush.msra.mxu0 0.0
  %2791 = vmatpush.msra.mxu0 0.0
  %2792 = vmatpush.msra.mxu0 0.0
  %2793 = vmatpush.msra.mxu0 0.0
  %2794 = vmatpush.msra.mxu0 0.0
  %2795 = vmatpush.msra.mxu0 %v2778
  %2796 = vmatmul.f32.gmra.mxu0 %v2682
  %v2797 = vpop.f32.mrf.mxu0
  %v2798 = vadd.f32 0.0, %v2797
  %2799 = vmatmul.f32.gmra.mxu0 %v2685
  %v2800 = vpop.f32.mrf.mxu0
  %v2801 = vadd.f32 0.0, %v2800
  %2802 = vmatmul.f32.gmra.mxu0 %v2688
  %v2803 = vpop.f32.mrf.mxu0
  %v2804 = vadd.f32 0.0, %v2803
  %2805 = vmatmul.f32.gmra.mxu0 %v2691
  %v2806 = vpop.f32.mrf.mxu0
  %v2807 = vadd.f32 0.0, %v2806
  %2808 = vmatmul.f32.gmra.mxu0 %v2694
  %v2809 = vpop.f32.mrf.mxu0
  %v2810 = vadd.f32 0.0, %v2809
  %2811 = vmatmul.f32.gmra.mxu0 %v2697
  %v2812 = vpop.f32.mrf.mxu0
  %v2813 = vadd.f32 0.0, %v2812
  %2814 = vmatmul.f32.gmra.mxu0 %v2700
  %v2815 = vpop.f32.mrf.mxu0
  %v2816 = vadd.f32 0.0, %v2815
  %2817 = vmatmul.f32.gmra.mxu0 %v2703
  %v2818 = vpop.f32.mrf.mxu0
  %v2819 = vadd.f32 0.0, %v2818
  %2820 = vmatmul.f32.gmra.mxu0 %v2706
  %v2821 = vpop.f32.mrf.mxu0
  %v2822 = vadd.f32 0.0, %v2821
  %2823 = vmatmul.f32.gmra.mxu0 %v2709
  %v2824 = vpop.f32.mrf.mxu0
  %v2825 = vadd.f32 0.0, %v2824
  %2826 = vmatmul.f32.gmra.mxu0 %v2712
  %v2827 = vpop.f32.mrf.mxu0
  %v2828 = vadd.f32 0.0, %v2827
  %2829 = vmatmul.f32.gmra.mxu0 %v2715
  %v2830 = vpop.f32.mrf.mxu0
  %v2831 = vadd.f32 0.0, %v2830
  %2832 = vmatmul.f32.gmra.mxu0 %v2718
  %v2833 = vpop.f32.mrf.mxu0
  %v2834 = vadd.f32 0.0, %v2833
  %2835 = vmatmul.f32.gmra.mxu0 %v2721
  %v2836 = vpop.f32.mrf.mxu0
  %v2837 = vadd.f32 0.0, %v2836
  %2838 = vmatmul.f32.gmra.mxu0 %v2724
  %v2839 = vpop.f32.mrf.mxu0
  %v2840 = vadd.f32 0.0, %v2839
  %2841 = vmatmul.f32.gmra.mxu0 %v2727
  %v2842 = vpop.f32.mrf.mxu0
  %v2843 = vadd.f32 0.0, %v2842
  %2844 = vmatmul.f32.gmra.mxu0 %v2730
  %v2845 = vpop.f32.mrf.mxu0
  %v2846 = vadd.f32 0.0, %v2845
  %2847 = vmatmul.f32.gmra.mxu0 %v2733
  %v2848 = vpop.f32.mrf.mxu0
  %v2849 = vadd.f32 0.0, %v2848
  %2850 = vmatmul.f32.gmra.mxu0 %v2736
  %v2851 = vpop.f32.mrf.mxu0
  %v2852 = vadd.f32 0.0, %v2851
  %2853 = vmatmul.f32.gmra.mxu0 %v2739
  %v2854 = vpop.f32.mrf.mxu0
  %v2855 = vadd.f32 0.0, %v2854
  %2856 = vmatmul.f32.gmra.mxu0 %v2742
  %v2857 = vpop.f32.mrf.mxu0
  %v2858 = vadd.f32 0.0, %v2857
  %2859 = vmatmul.f32.gmra.mxu0 %v2745
  %v2860 = vpop.f32.mrf.mxu0
  %v2861 = vadd.f32 0.0, %v2860
  %2862 = vmatmul.f32.gmra.mxu0 %v2748
  %v2863 = vpop.f32.mrf.mxu0
  %v2864 = vadd.f32 0.0, %v2863
  %2865 = vmatmul.f32.gmra.mxu0 %v2751
  %v2866 = vpop.f32.mrf.mxu0
  %v2867 = vadd.f32 0.0, %v2866
  %2868 = vmatmul.f32.gmra.mxu0 %v2754
  %v2869 = vpop.f32.mrf.mxu0
  %v2870 = vadd.f32 0.0, %v2869
  %2871 = vmatmul.f32.gmra.mxu0 %v2757
  %v2872 = vpop.f32.mrf.mxu0
  %v2873 = vadd.f32 0.0, %v2872
  %2874 = vmatmul.f32.gmra.mxu0 %v2760
  %v2875 = vpop.f32.mrf.mxu0
  %v2876 = vadd.f32 0.0, %v2875
  %2877 = vmatmul.f32.gmra.mxu0 %v2763
  %v2878 = vpop.f32.mrf.mxu0
  %v2879 = vadd.f32 0.0, %v2878
  %2880 = vmatmul.f32.gmra.mxu0 %v2766
  %v2881 = vpop.f32.mrf.mxu0
  %v2882 = vadd.f32 0.0, %v2881
  %2883 = vmatmul.f32.gmra.mxu0 %v2769
  %v2884 = vpop.f32.mrf.mxu0
  %v2885 = vadd.f32 0.0, %v2884
  %2886 = vmatmul.f32.gmra.mxu0 %v2772
  %v2887 = vpop.f32.mrf.mxu0
  %v2888 = vadd.f32 0.0, %v2887
  %2889 = vmatmul.f32.gmra.mxu0 %v2775
  %v2890 = vpop.f32.mrf.mxu0
  %v2891 = vadd.f32 0.0, %v2890
  %2892 = vdwg.mxu0
  %v2893 = vadd.f32 %v2551, %v2798
  %v2894 = vadd.f32 %v2552, %v2801
  %v2895 = vadd.f32 %v2553, %v2804
  %v2896 = vadd.f32 %v2554, %v2807
  %v2897 = vadd.f32 %v2555, %v2810
  %v2898 = vadd.f32 %v2556, %v2813
  %v2899 = vadd.f32 %v2557, %v2816
  %v2900 = vadd.f32 %v2558, %v2819
  %v2901 = vadd.f32 %v2559, %v2822
  %v2902 = vadd.f32 %v2560, %v2825
  %v2903 = vadd.f32 %v2561, %v2828
  %v2904 = vadd.f32 %v2562, %v2831
  %v2905 = vadd.f32 %v2563, %v2834
  %v2906 = vadd.f32 %v2564, %v2837
  %v2907 = vadd.f32 %v2565, %v2840
  %v2908 = vadd.f32 %v2566, %v2843
  %v2909 = vadd.f32 %v2567, %v2846
  %v2910 = vadd.f32 %v2568, %v2849
  %v2911 = vadd.f32 %v2569, %v2852
  %v2912 = vadd.f32 %v2570, %v2855
  %v2913 = vadd.f32 %v2571, %v2858
  %v2914 = vadd.f32 %v2572, %v2861
  %v2915 = vadd.f32 %v2573, %v2864
  %v2916 = vadd.f32 %v2574, %v2867
  %v2917 = vadd.f32 %v2575, %v2870
  %v2918 = vadd.f32 %v2576, %v2873
  %v2919 = vadd.f32 %v2577, %v2876
  %v2920 = vadd.f32 %v2578, %v2879
  %v2921 = vadd.f32 %v2579, %v2882
  %v2922 = vadd.f32 %v2580, %v2885
  %v2923 = vadd.f32 %v2581, %v2888
  %v2924 = vadd.f32 %v2582, %v2891
  %v2925 = vsel %vm14, %v2893, 0.0
  %v2926 = vsel %vm14, %v2894, 0.0
  %v2927 = vadd.f32 %v2925, %v2926
  %v2928 = vsel %vm14, %v2895, 0.0
  %v2929 = vadd.f32 %v2927, %v2928
  %v2930 = vsel %vm14, %v2896, 0.0
  %v2931 = vadd.f32 %v2929, %v2930
  %v2932 = vsel %vm14, %v2897, 0.0
  %v2933 = vadd.f32 %v2931, %v2932
  %v2934 = vsel %vm14, %v2898, 0.0
  %v2935 = vadd.f32 %v2933, %v2934
  %v2936 = vsel %vm14, %v2899, 0.0
  %v2937 = vadd.f32 %v2935, %v2936
  %v2938 = vsel %vm14, %v2900, 0.0
  %v2939 = vadd.f32 %v2937, %v2938
  %v2940 = vsel %vm14, %v2901, 0.0
  %v2941 = vadd.f32 %v2939, %v2940
  %v2942 = vsel %vm14, %v2902, 0.0
  %v2943 = vadd.f32 %v2941, %v2942
  %v2944 = vsel %vm14, %v2903, 0.0
  %v2945 = vadd.f32 %v2943, %v2944
  %v2946 = vsel %vm14, %v2904, 0.0
  %v2947 = vadd.f32 %v2945, %v2946
  %v2948 = vsel %vm14, %v2905, 0.0
  %v2949 = vadd.f32 %v2947, %v2948
  %v2950 = vsel %vm14, %v2906, 0.0
  %v2951 = vadd.f32 %v2949, %v2950
  %v2952 = vsel %vm14, %v2907, 0.0
  %v2953 = vadd.f32 %v2951, %v2952
  %v2954 = vsel %vm14, %v2908, 0.0
  %v2955 = vadd.f32 %v2953, %v2954
  %v2956 = vsel %vm14, %v2909, 0.0
  %v2957 = vadd.f32 %v2955, %v2956
  %v2958 = vsel %vm14, %v2910, 0.0
  %v2959 = vadd.f32 %v2957, %v2958
  %v2960 = vsel %vm14, %v2911, 0.0
  %v2961 = vadd.f32 %v2959, %v2960
  %v2962 = vsel %vm14, %v2912, 0.0
  %v2963 = vadd.f32 %v2961, %v2962
  %v2964 = vsel %vm14, %v2913, 0.0
  %v2965 = vadd.f32 %v2963, %v2964
  %v2966 = vsel %vm14, %v2914, 0.0
  %v2967 = vadd.f32 %v2965, %v2966
  %v2968 = vsel %vm14, %v2915, 0.0
  %v2969 = vadd.f32 %v2967, %v2968
  %v2970 = vsel %vm14, %v2916, 0.0
  %v2971 = vadd.f32 %v2969, %v2970
  %v2972 = vsel %vm14, %v2917, 0.0
  %v2973 = vadd.f32 %v2971, %v2972
  %v2974 = vsel %vm14, %v2918, 0.0
  %v2975 = vadd.f32 %v2973, %v2974
  %v2976 = vsel %vm14, %v2919, 0.0
  %v2977 = vadd.f32 %v2975, %v2976
  %v2978 = vsel %vm14, %v2920, 0.0
  %v2979 = vadd.f32 %v2977, %v2978
  %v2980 = vsel %vm14, %v2921, 0.0
  %v2981 = vadd.f32 %v2979, %v2980
  %v2982 = vsel %vm14, %v2922, 0.0
  %v2983 = vadd.f32 %v2981, %v2982
  %v2984 = vsel %vm14, %v2923, 0.0
  %v2985 = vadd.f32 %v2983, %v2984
  %v2986 = vsel %vm14, %v2924, 0.0
  %v2987 = vadd.f32 %v2985, %v2986
  %v2988 = vrot.slane %v2987, 4
  %v2989 = vadd.f32 %v2987, %v2988
  %v2990 = vrot.slane %v2989, 2
  %v2991 = vadd.f32 %v2989, %v2990
  %v2992 = vrot.slane %v2991, 1
  %v2993 = vadd.f32 %v2991, %v2992
  %v2994 = vrcp.pop 256.0
  %v2995 = vmul.f32 256.0, %v2994
  %v2996 = vsub.f32 1.0, %v2995
  %v2997 = vmul.f32 %v2994, %v2996
  %v2998 = vadd.f32 %v2994, %v2997
  %vm2999 = vweird.f32 %v2994
  %v3000 = vsel %vm2999, %v2994, %v2998
  %v3001 = vmul.f32 %v2993, %v3000
  %v3002 = vsub.f32 %v2893, %v3001
  %v3003 = vsub.f32 %v2894, %v3001
  %v3004 = vsub.f32 %v2895, %v3001
  %v3005 = vsub.f32 %v2896, %v3001
  %v3006 = vsub.f32 %v2897, %v3001
  %v3007 = vsub.f32 %v2898, %v3001
  %v3008 = vsub.f32 %v2899, %v3001
  %v3009 = vsub.f32 %v2900, %v3001
  %v3010 = vsub.f32 %v2901, %v3001
  %v3011 = vsub.f32 %v2902, %v3001
  %v3012 = vsub.f32 %v2903, %v3001
  %v3013 = vsub.f32 %v2904, %v3001
  %v3014 = vsub.f32 %v2905, %v3001
  %v3015 = vsub.f32 %v2906, %v3001
  %v3016 = vsub.f32 %v2907, %v3001
  %v3017 = vsub.f32 %v2908, %v3001
  %v3018 = vsub.f32 %v2909, %v3001
  %v3019 = vsub.f32 %v2910, %v3001
  %v3020 = vsub.f32 %v2911, %v3001
  %v3021 = vsub.f32 %v2912, %v3001
  %v3022 = vsub.f32 %v2913, %v3001
  %v3023 = vsub.f32 %v2914, %v3001
  %v3024 = vsub.f32 %v2915, %v3001
  %v3025 = vsub.f32 %v2916, %v3001
  %v3026 = vsub.f32 %v2917, %v3001
  %v3027 = vsub.f32 %v2918, %v3001
  %v3028 = vsub.f32 %v2919, %v3001
  %v3029 = vsub.f32 %v2920, %v3001
  %v3030 = vsub.f32 %v2921, %v3001
  %v3031 = vsub.f32 %v2922, %v3001
  %v3032 = vsub.f32 %v2923, %v3001
  %v3033 = vsub.f32 %v2924, %v3001
  %v3034 = vmul.f32 %v3002, %v3002
  %v3035 = vmul.f32 %v3003, %v3003
  %v3036 = vmul.f32 %v3004, %v3004
  %v3037 = vmul.f32 %v3005, %v3005
  %v3038 = vmul.f32 %v3006, %v3006
  %v3039 = vmul.f32 %v3007, %v3007
  %v3040 = vmul.f32 %v3008, %v3008
  %v3041 = vmul.f32 %v3009, %v3009
  %v3042 = vmul.f32 %v3010, %v3010
  %v3043 = vmul.f32 %v3011, %v3011
  %v3044 = vmul.f32 %v3012, %v3012
  %v3045 = vmul.f32 %v3013, %v3013
  %v3046 = vmul.f32 %v3014, %v3014
  %v3047 = vmul.f32 %v3015, %v3015
  %v3048 = vmul.f32 %v3016, %v3016
  %v3049 = vmul.f32 %v3017, %v3017
  %v3050 = vmul.f32 %v3018, %v3018
  %v3051 = vmul.f32 %v3019, %v3019
  %v3052 = vmul.f32 %v3020, %v3020
  %v3053 = vmul.f32 %v3021, %v3021
  %v3054 = vmul.f32 %v3022, %v3022
  %v3055 = vmul.f32 %v3023, %v3023
  %v3056 = vmul.f32 %v3024, %v3024
  %v3057 = vmul.f32 %v3025, %v3025
  %v3058 = vmul.f32 %v3026, %v3026
  %v3059 = vmul.f32 %v3027, %v3027
  %v3060 = vmul.f32 %v3028, %v3028
  %v3061 = vmul.f32 %v3029, %v3029
  %v3062 = vmul.f32 %v3030, %v3030
  %v3063 = vmul.f32 %v3031, %v3031
  %v3064 = vmul.f32 %v3032, %v3032
  %v3065 = vmul.f32 %v3033, %v3033
  %v3066 = vsel %vm14, %v3034, 0.0
  %v3067 = vsel %vm14, %v3035, 0.0
  %v3068 = vadd.f32 %v3066, %v3067
  %v3069 = vsel %vm14, %v3036, 0.0
  %v3070 = vadd.f32 %v3068, %v3069
  %v3071 = vsel %vm14, %v3037, 0.0
  %v3072 = vadd.f32 %v3070, %v3071
  %v3073 = vsel %vm14, %v3038, 0.0
  %v3074 = vadd.f32 %v3072, %v3073
  %v3075 = vsel %vm14, %v3039, 0.0
  %v3076 = vadd.f32 %v3074, %v3075
  %v3077 = vsel %vm14, %v3040, 0.0
  %v3078 = vadd.f32 %v3076, %v3077
  %v3079 = vsel %vm14, %v3041, 0.0
  %v3080 = vadd.f32 %v3078, %v3079
  %v3081 = vsel %vm14, %v3042, 0.0
  %v3082 = vadd.f32 %v3080, %v3081
  %v3083 = vsel %vm14, %v3043, 0.0
  %v3084 = vadd.f32 %v3082, %v3083
  %v3085 = vsel %vm14, %v3044, 0.0
  %v3086 = vadd.f32 %v3084, %v3085
  %v3087 = vsel %vm14, %v3045, 0.0
  %v3088 = vadd.f32 %v3086, %v3087
  %v3089 = vsel %vm14, %v3046, 0.0
  %v3090 = vadd.f32 %v3088, %v3089
  %v3091 = vsel %vm14, %v3047, 0.0
  %v3092 = vadd.f32 %v3090, %v3091
  %v3093 = vsel %vm14, %v3048, 0.0
  %v3094 = vadd.f32 %v3092, %v3093
  %v3095 = vsel %vm14, %v3049, 0.0
  %v3096 = vadd.f32 %v3094, %v3095
  %v3097 = vsel %vm14, %v3050, 0.0
  %v3098 = vadd.f32 %v3096, %v3097
  %v3099 = vsel %vm14, %v3051, 0.0
  %v3100 = vadd.f32 %v3098, %v3099
  %v3101 = vsel %vm14, %v3052, 0.0
  %v3102 = vadd.f32 %v3100, %v3101
  %v3103 = vsel %vm14, %v3053, 0.0
  %v3104 = vadd.f32 %v3102, %v3103
  %v3105 = vsel %vm14, %v3054, 0.0
  %v3106 = vadd.f32 %v3104, %v3105
  %v3107 = vsel %vm14, %v3055, 0.0
  %v3108 = vadd.f32 %v3106, %v3107
  %v3109 = vsel %vm14, %v3056, 0.0
  %v3110 = vadd.f32 %v3108, %v3109
  %v3111 = vsel %vm14, %v3057, 0.0
  %v3112 = vadd.f32 %v3110, %v3111
  %v3113 = vsel %vm14, %v3058, 0.0
  %v3114 = vadd.f32 %v3112, %v3113
  %v3115 = vsel %vm14, %v3059, 0.0
  %v3116 = vadd.f32 %v3114, %v3115
  %v3117 = vsel %vm14, %v3060, 0.0
  %v3118 = vadd.f32 %v3116, %v3117
  %v3119 = vsel %vm14, %v3061, 0.0
  %v3120 = vadd.f32 %v3118, %v3119
  %v3121 = vsel %vm14, %v3062, 0.0
  %v3122 = vadd.f32 %v3120, %v3121
  %v3123 = vsel %vm14, %v3063, 0.0
  %v3124 = vadd.f32 %v3122, %v3123
  %v3125 = vsel %vm14, %v3064, 0.0
  %v3126 = vadd.f32 %v3124, %v3125
  %v3127 = vsel %vm14, %v3065, 0.0
  %v3128 = vadd.f32 %v3126, %v3127
  %v3129 = vrot.slane %v3128, 4
  %v3130 = vadd.f32 %v3128, %v3129
  %v3131 = vrot.slane %v3130, 2
  %v3132 = vadd.f32 %v3130, %v3131
  %v3133 = vrot.slane %v3132, 1
  %v3134 = vadd.f32 %v3132, %v3133
  %v3135 = vmul.f32 %v3134, %v3000
  %v3136 = vadd.f32 %v3135, 1e-05
  %v3137 = vrsqrt.pop %v3136
  %v3138 = vmul.f32 %v3137, %v3136
  %v3139 = vmul.f32 %v3138, %v3137
  %v3140 = vmul.f32 0.5, %v3139
  %v3141 = vsub.f32 1.5, %v3140
  %v3142 = vmul.f32 %v3137, %v3141
  %vm3143 = vweird.f32 %v3136
  %vm3144 = vweird.f32 %v3137
  %vm3145 = vmor %vm3143, %vm3144
  %v3146 = vsel %vm3145, %v3137, %v3142
  %v3147 = vmul.f32 %v3002, %v3146
  %v3148 = vmul.f32 %v3003, %v3146
  %v3149 = vmul.f32 %v3004, %v3146
  %v3150 = vmul.f32 %v3005, %v3146
  %v3151 = vmul.f32 %v3006, %v3146
  %v3152 = vmul.f32 %v3007, %v3146
  %v3153 = vmul.f32 %v3008, %v3146
  %v3154 = vmul.f32 %v3009, %v3146
  %v3155 = vmul.f32 %v3010, %v3146
  %v3156 = vmul.f32 %v3011, %v3146
  %v3157 = vmul.f32 %v3012, %v3146
  %v3158 = vmul.f32 %v3013, %v3146
  %v3159 = vmul.f32 %v3014, %v3146
  %v3160 = vmul.f32 %v3015, %v3146
  %v3161 = vmul.f32 %v3016, %v3146
  %v3162 = vmul.f32 %v3017, %v3146
  %v3163 = vmul.f32 %v3018, %v3146
  %v3164 = vmul.f32 %v3019, %v3146
  %v3165 = vmul.f32 %v3020, %v3146
  %v3166 = vmul.f32 %v3021, %v3146
  %v3167 = vmul.f32 %v3022, %v3146
  %v3168 = vmul.f32 %v3023, %v3146
  %v3169 = vmul.f32 %v3024, %v3146
  %v3170 = vmul.f32 %v3025, %v3146
  %v3171 = vmul.f32 %v3026, %v3146
  %v3172 = vmul.f32 %v3027, %v3146
  %v3173 = vmul.f32 %v3028, %v3146
  %v3174 = vmul.f32 %v3029, %v3146
  %v3175 = vmul.f32 %v3030, %v3146
  %v3176 = vmul.f32 %v3031, %v3146
  %v3177 = vmul.f32 %v3032, %v3146
  %v3178 = vmul.f32 %v3033, %v3146
  %v3179 = vmax.f32 %v3147, 0.0
  %v3180 = vmax.f32 %v3148, 0.0
  %v3181 = vmax.f32 %v3149, 0.0
  %v3182 = vmax.f32 %v3150, 0.0
  %v3183 = vmax.f32 %v3151, 0.0
  %v3184 = vmax.f32 %v3152, 0.0
  %v3185 = vmax.f32 %v3153, 0.0
  %v3186 = vmax.f32 %v3154, 0.0
  %v3187 = vmax.f32 %v3155, 0.0
  %v3188 = vmax.f32 %v3156, 0.0
  %v3189 = vmax.f32 %v3157, 0.0
  %v3190 = vmax.f32 %v3158, 0.0
  %v3191 = vmax.f32 %v3159, 0.0
  %v3192 = vmax.f32 %v3160, 0.0
  %v3193 = vmax.f32 %v3161, 0.0
  %v3194 = vmax.f32 %v3162, 0.0
  %v3195 = vmax.f32 %v3163, 0.0
  %v3196 = vmax.f32 %v3164, 0.0
  %v3197 = vmax.f32 %v3165, 0.0
  %v3198 = vmax.f32 %v3166, 0.0
  %v3199 = vmax.f32 %v3167, 0.0
  %v3200 = vmax.f32 %v3168, 0.0
  %v3201 = vmax.f32 %v3169, 0.0
  %v3202 = vmax.f32 %v3170, 0.0
  %v3203 = vmax.f32 %v3171, 0.0
  %v3204 = vmax.f32 %v3172, 0.0
  %v3205 = vmax.f32 %v3173, 0.0
  %v3206 = vmax.f32 %v3174, 0.0
  %v3207 = vmax.f32 %v3175, 0.0
  %v3208 = vmax.f32 %v3176, 0.0
  %v3209 = vmax.f32 %v3177, 0.0
  %v3210 = vmax.f32 %v3178, 0.0
  %3211 = vst.msk [vmem:[%s67] sm:$0xff] %vm14, %v3179
  %3212 = vst.msk [vmem:[%s67 + $0x8] sm:$0xff] %vm14, %v3180
  %3213 = vst.msk [vmem:[%s67 + $0x10] sm:$0xff] %vm14, %v3181
  %3214 = vst.msk [vmem:[%s67 + $0x18] sm:$0xff] %vm14, %v3182
  %3215 = vst.msk [vmem:[%s67 + $0x20] sm:$0xff] %vm14, %v3183
  %3216 = vst.msk [vmem:[%s67 + $0x28] sm:$0xff] %vm14, %v3184
  %3217 = vst.msk [vmem:[%s67 + $0x30] sm:$0xff] %vm14, %v3185
  %3218 = vst.msk [vmem:[%s67 + $0x38] sm:$0xff] %vm14, %v3186
  %3219 = vst.msk [vmem:[%s67 + $0x40] sm:$0xff] %vm14, %v3187
  %3220 = vst.msk [vmem:[%s67 + $0x48] sm:$0xff] %vm14, %v3188
  %3221 = vst.msk [vmem:[%s67 + $0x50] sm:$0xff] %vm14, %v3189
  %3222 = vst.msk [vmem:[%s67 + $0x58] sm:$0xff] %vm14, %v3190
  %3223 = vst.msk [vmem:[%s67 + $0x60] sm:$0xff] %vm14, %v3191
  %3224 = vst.msk [vmem:[%s67 + $0x68] sm:$0xff] %vm14, %v3192
  %3225 = vst.msk [vmem:[%s67 + $0x70] sm:$0xff] %vm14, %v3193
  %3226 = vst.msk [vmem:[%s67 + $0x78] sm:$0xff] %vm14, %v3194
  %3227 = vst.msk [vmem:[%s67 + $0x80] sm:$0xff] %vm14, %v3195
  %3228 = vst.msk [vmem:[%s67 + $0x88] sm:$0xff] %vm14, %v3196
  %3229 = vst.msk [vmem:[%s67 + $0x90] sm:$0xff] %vm14, %v3197
  %3230 = vst.msk [vmem:[%s67 + $0x98] sm:$0xff] %vm14, %v3198
  %3231 = vst.msk [vmem:[%s67 + $0xa0] sm:$0xff] %vm14, %v3199
  %3232 = vst.msk [vmem:[%s67 + $0xa8] sm:$0xff] %vm14, %v3200
  %3233 = vst.msk [vmem:[%s67 + $0xb0] sm:$0xff] %vm14, %v3201
  %3234 = vst.msk [vmem:[%s67 + $0xb8] sm:$0xff] %vm14, %v3202
  %3235 = vst.msk [vmem:[%s67 + $0xc0] sm:$0xff] %vm14, %v3203
  %3236 = vst.msk [vmem:[%s67 + $0xc8] sm:$0xff] %vm14, %v3204
  %3237 = vst.msk [vmem:[%s67 + $0xd0] sm:$0xff] %vm14, %v3205
  %3238 = vst.msk [vmem:[%s67 + $0xd8] sm:$0xff] %vm14, %v3206
  %3239 = vst.msk [vmem:[%s67 + $0xe0] sm:$0xff] %vm14, %v3207
  %3240 = vst.msk [vmem:[%s67 + $0xe8] sm:$0xff] %vm14, %v3208
  %3241 = vst.msk [vmem:[%s67 + $0xf0] sm:$0xff] %vm14, %v3209
  %3242 = vst.msk [vmem:[%s67 + $0xf8] sm:$0xff] %vm14, %v3210
  %v3243 = vld [vmem:[#allocation2] sm:$0xff]
  %v3244 = vld [vmem:[#allocation2 + $0x8] sm:$0xff]
  %v3245 = vld [vmem:[#allocation2 + $0x10] sm:$0xff]
  %v3246 = vld [vmem:[#allocation2 + $0x18] sm:$0xff]
  %v3247 = vld [vmem:[#allocation2 + $0x20] sm:$0xff]
  %v3248 = vld [vmem:[#allocation2 + $0x28] sm:$0xff]
  %v3249 = vld [vmem:[#allocation2 + $0x30] sm:$0xff]
  %v3250 = vld [vmem:[#allocation2 + $0x38] sm:$0xff]
  %v3251 = vld [vmem:[#allocation2 + $0x40] sm:$0xff]
  %v3252 = vld [vmem:[#allocation2 + $0x48] sm:$0xff]
  %v3253 = vld [vmem:[#allocation2 + $0x50] sm:$0xff]
  %v3254 = vld [vmem:[#allocation2 + $0x58] sm:$0xff]
  %v3255 = vld [vmem:[#allocation2 + $0x60] sm:$0xff]
  %v3256 = vld [vmem:[#allocation2 + $0x68] sm:$0xff]
  %v3257 = vld [vmem:[#allocation2 + $0x70] sm:$0xff]
  %v3258 = vld [vmem:[#allocation2 + $0x78] sm:$0xff]
  %v3259 = vld [vmem:[#allocation2 + $0x80] sm:$0xff]
  %v3260 = vld [vmem:[#allocation2 + $0x88] sm:$0xff]
  %v3261 = vld [vmem:[#allocation2 + $0x90] sm:$0xff]
  %v3262 = vld [vmem:[#allocation2 + $0x98] sm:$0xff]
  %v3263 = vld [vmem:[#allocation2 + $0xa0] sm:$0xff]
  %v3264 = vld [vmem:[#allocation2 + $0xa8] sm:$0xff]
  %v3265 = vld [vmem:[#allocation2 + $0xb0] sm:$0xff]
  %v3266 = vld [vmem:[#allocation2 + $0xb8] sm:$0xff]
  %v3267 = vld [vmem:[#allocation2 + $0xc0] sm:$0xff]
  %v3268 = vld [vmem:[#allocation2 + $0xc8] sm:$0xff]
  %v3269 = vld [vmem:[#allocation2 + $0xd0] sm:$0xff]
  %v3270 = vld [vmem:[#allocation2 + $0xd8] sm:$0xff]
  %v3271 = vld [vmem:[#allocation2 + $0xe0] sm:$0xff]
  %v3272 = vld [vmem:[#allocation2 + $0xe8] sm:$0xff]
  %v3273 = vld [vmem:[#allocation2 + $0xf0] sm:$0xff]
  %v3274 = vld [vmem:[#allocation2 + $0xf8] sm:$0xff]
  %v3275 = vrot.slane %v3243, 7
  %v3276 = vrot.slane %v3244, 7
  %v3277 = vrot.slane %v3245, 7
  %v3278 = vrot.slane %v3246, 7
  %v3279 = vrot.slane %v3247, 7
  %v3280 = vrot.slane %v3248, 7
  %v3281 = vrot.slane %v3249, 7
  %v3282 = vrot.slane %v3250, 7
  %v3283 = vrot.slane %v3251, 7
  %v3284 = vrot.slane %v3252, 7
  %v3285 = vrot.slane %v3253, 7
  %v3286 = vrot.slane %v3254, 7
  %v3287 = vrot.slane %v3255, 7
  %v3288 = vrot.slane %v3256, 7
  %v3289 = vrot.slane %v3257, 7
  %v3290 = vrot.slane %v3258, 7
  %v3291 = vrot.slane %v3259, 7
  %v3292 = vrot.slane %v3260, 7
  %v3293 = vrot.slane %v3261, 7
  %v3294 = vrot.slane %v3262, 7
  %v3295 = vrot.slane %v3263, 7
  %v3296 = vrot.slane %v3264, 7
  %v3297 = vrot.slane %v3265, 7
  %v3298 = vrot.slane %v3266, 7
  %v3299 = vrot.slane %v3267, 7
  %v3300 = vrot.slane %v3268, 7
  %v3301 = vrot.slane %v3269, 7
  %v3302 = vrot.slane %v3270, 7
  %v3303 = vrot.slane %v3271, 7
  %v3304 = vrot.slane %v3272, 7
  %v3305 = vrot.slane %v3273, 7
  %v3306 = vrot.slane %v3274, 7
  %v3307 = vsel %vm164, %v3305, %v3306
  %v3308 = vsel %vm164, %v3304, %v3305
  %v3309 = vsel %vm164, %v3303, %v3304
  %v3310 = vsel %vm164, %v3302, %v3303
  %v3311 = vsel %vm164, %v3301, %v3302
  %v3312 = vsel %vm164, %v3300, %v3301
  %v3313 = vsel %vm164, %v3299, %v3300
  %v3314 = vsel %vm164, %v3298, %v3299
  %v3315 = vsel %vm164, %v3297, %v3298
  %v3316 = vsel %vm164, %v3296, %v3297
  %v3317 = vsel %vm164, %v3295, %v3296
  %v3318 = vsel %vm164, %v3294, %v3295
  %v3319 = vsel %vm164, %v3293, %v3294
  %v3320 = vsel %vm164, %v3292, %v3293
  %v3321 = vsel %vm164, %v3291, %v3292
  %v3322 = vsel %vm164, %v3290, %v3291
  %v3323 = vsel %vm164, %v3289, %v3290
  %v3324 = vsel %vm164, %v3288, %v3289
  %v3325 = vsel %vm164, %v3287, %v3288
  %v3326 = vsel %vm164, %v3286, %v3287
  %v3327 = vsel %vm164, %v3285, %v3286
  %v3328 = vsel %vm164, %v3284, %v3285
  %v3329 = vsel %vm164, %v3283, %v3284
  %v3330 = vsel %vm164, %v3282, %v3283
  %v3331 = vsel %vm164, %v3281, %v3282
  %v3332 = vsel %vm164, %v3280, %v3281
  %v3333 = vsel %vm164, %v3279, %v3280
  %v3334 = vsel %vm164, %v3278, %v3279
  %v3335 = vsel %vm164, %v3277, %v3278
  %v3336 = vsel %vm164, %v3276, %v3277
  %v3337 = vsel %vm164, %v3275, %v3276
  %v3338 = vsel %vm164, %v3306, %v3275
  %v3339 = vmul.f32 %v3338, %v27
  %v3340 = vmul.f32 %v3337, %v28
  %v3341 = vmul.f32 %v3336, %v27
  %v3342 = vmul.f32 %v3335, %v28
  %v3343 = vmul.f32 %v3334, %v27
  %v3344 = vmul.f32 %v3333, %v28
  %v3345 = vmul.f32 %v3332, %v27
  %v3346 = vmul.f32 %v3331, %v28
  %v3347 = vmul.f32 %v3330, %v27
  %v3348 = vmul.f32 %v3329, %v28
  %v3349 = vmul.f32 %v3328, %v27
  %v3350 = vmul.f32 %v3327, %v28
  %v3351 = vmul.f32 %v3326, %v27
  %v3352 = vmul.f32 %v3325, %v28
  %v3353 = vmul.f32 %v3324, %v27
  %v3354 = vmul.f32 %v3323, %v28
  %v3355 = vmul.f32 %v3322, %v27
  %v3356 = vmul.f32 %v3321, %v28
  %v3357 = vmul.f32 %v3320, %v27
  %v3358 = vmul.f32 %v3319, %v28
  %v3359 = vmul.f32 %v3318, %v27
  %v3360 = vmul.f32 %v3317, %v28
  %v3361 = vmul.f32 %v3316, %v27
  %v3362 = vmul.f32 %v3315, %v28
  %v3363 = vmul.f32 %v3314, %v27
  %v3364 = vmul.f32 %v3313, %v28
  %v3365 = vmul.f32 %v3312, %v27
  %v3366 = vmul.f32 %v3311, %v28
  %v3367 = vmul.f32 %v3310, %v27
  %v3368 = vmul.f32 %v3309, %v28
  %v3369 = vmul.f32 %v3308, %v27
  %v3370 = vmul.f32 %v3307, %v28
  %v3371 = vld [vmem:[%s2] sm:$0xf]
  %s3372 = scalar_lea.vmem %s2, 4
  %v3373 = vld [vmem:[%s3372] sm:$0xf]
  %v3375 = vsel %vm14, %v3243, 0
  %v3378 = vsel %vm14, %v3244, 0
  %v3381 = vsel %vm14, %v3245, 0
  %v3384 = vsel %vm14, %v3246, 0
  %v3387 = vsel %vm14, %v3247, 0
  %v3390 = vsel %vm14, %v3248, 0
  %v3393 = vsel %vm14, %v3249, 0
  %v3396 = vsel %vm14, %v3250, 0
  %v3399 = vsel %vm14, %v3251, 0
  %v3402 = vsel %vm14, %v3252, 0
  %v3405 = vsel %vm14, %v3253, 0
  %v3408 = vsel %vm14, %v3254, 0
  %v3411 = vsel %vm14, %v3255, 0
  %v3414 = vsel %vm14, %v3256, 0
  %v3417 = vsel %vm14, %v3257, 0
  %v3420 = vsel %vm14, %v3258, 0
  %v3423 = vsel %vm14, %v3259, 0
  %v3426 = vsel %vm14, %v3260, 0
  %v3429 = vsel %vm14, %v3261, 0
  %v3432 = vsel %vm14, %v3262, 0
  %v3435 = vsel %vm14, %v3263, 0
  %v3438 = vsel %vm14, %v3264, 0
  %v3441 = vsel %vm14, %v3265, 0
  %v3444 = vsel %vm14, %v3266, 0
  %v3447 = vsel %vm14, %v3267, 0
  %v3450 = vsel %vm14, %v3268, 0
  %v3453 = vsel %vm14, %v3269, 0
  %v3456 = vsel %vm14, %v3270, 0
  %v3459 = vsel %vm14, %v3271, 0
  %v3462 = vsel %vm14, %v3272, 0
  %v3465 = vsel %vm14, %v3273, 0
  %v3468 = vsel %vm14, %v3274, 0
  %v3471 = vsel %vm328, %v3373, 0
  %3473 = vmatpush.msra.mxu0 0.0
  %3474 = vmatpush.msra.mxu0 0.0
  %3475 = vmatpush.msra.mxu0 0.0
  %3476 = vmatpush.msra.mxu0 0.0
  %3477 = vmatpush.msra.mxu0 0.0
  %3478 = vmatpush.msra.mxu0 0.0
  %3479 = vmatpush.msra.mxu0 0.0
  %3480 = vmatpush.msra.mxu0 0.0
  %3481 = vmatpush.msra.mxu0 0.0
  %3482 = vmatpush.msra.mxu0 0.0
  %3483 = vmatpush.msra.mxu0 0.0
  %3484 = vmatpush.msra.mxu0 0.0
  %3485 = vmatpush.msra.mxu0 0.0
  %3486 = vmatpush.msra.mxu0 0.0
  %3487 = vmatpush.msra.mxu0 0.0
  %3488 = vmatpush.msra.mxu0 %v3471
  %3489 = vmatmul.f32.gmra.mxu0 %v3375
  %v3490 = vpop.f32.mrf.mxu0
  %v3491 = vadd.f32 0.0, %v3490
  %3492 = vmatmul.f32.gmra.mxu0 %v3378
  %v3493 = vpop.f32.mrf.mxu0
  %v3494 = vadd.f32 0.0, %v3493
  %3495 = vmatmul.f32.gmra.mxu0 %v3381
  %v3496 = vpop.f32.mrf.mxu0
  %v3497 = vadd.f32 0.0, %v3496
  %3498 = vmatmul.f32.gmra.mxu0 %v3384
  %v3499 = vpop.f32.mrf.mxu0
  %v3500 = vadd.f32 0.0, %v3499
  %3501 = vmatmul.f32.gmra.mxu0 %v3387
  %v3502 = vpop.f32.mrf.mxu0
  %v3503 = vadd.f32 0.0, %v3502
  %3504 = vmatmul.f32.gmra.mxu0 %v3390
  %v3505 = vpop.f32.mrf.mxu0
  %v3506 = vadd.f32 0.0, %v3505
  %3507 = vmatmul.f32.gmra.mxu0 %v3393
  %v3508 = vpop.f32.mrf.mxu0
  %v3509 = vadd.f32 0.0, %v3508
  %3510 = vmatmul.f32.gmra.mxu0 %v3396
  %v3511 = vpop.f32.mrf.mxu0
  %v3512 = vadd.f32 0.0, %v3511
  %3513 = vmatmul.f32.gmra.mxu0 %v3399
  %v3514 = vpop.f32.mrf.mxu0
  %v3515 = vadd.f32 0.0, %v3514
  %3516 = vmatmul.f32.gmra.mxu0 %v3402
  %v3517 = vpop.f32.mrf.mxu0
  %v3518 = vadd.f32 0.0, %v3517
  %3519 = vmatmul.f32.gmra.mxu0 %v3405
  %v3520 = vpop.f32.mrf.mxu0
  %v3521 = vadd.f32 0.0, %v3520
  %3522 = vmatmul.f32.gmra.mxu0 %v3408
  %v3523 = vpop.f32.mrf.mxu0
  %v3524 = vadd.f32 0.0, %v3523
  %3525 = vmatmul.f32.gmra.mxu0 %v3411
  %v3526 = vpop.f32.mrf.mxu0
  %v3527 = vadd.f32 0.0, %v3526
  %3528 = vmatmul.f32.gmra.mxu0 %v3414
  %v3529 = vpop.f32.mrf.mxu0
  %v3530 = vadd.f32 0.0, %v3529
  %3531 = vmatmul.f32.gmra.mxu0 %v3417
  %v3532 = vpop.f32.mrf.mxu0
  %v3533 = vadd.f32 0.0, %v3532
  %3534 = vmatmul.f32.gmra.mxu0 %v3420
  %v3535 = vpop.f32.mrf.mxu0
  %v3536 = vadd.f32 0.0, %v3535
  %3537 = vmatmul.f32.gmra.mxu0 %v3423
  %v3538 = vpop.f32.mrf.mxu0
  %v3539 = vadd.f32 0.0, %v3538
  %3540 = vmatmul.f32.gmra.mxu0 %v3426
  %v3541 = vpop.f32.mrf.mxu0
  %v3542 = vadd.f32 0.0, %v3541
  %3543 = vmatmul.f32.gmra.mxu0 %v3429
  %v3544 = vpop.f32.mrf.mxu0
  %v3545 = vadd.f32 0.0, %v3544
  %3546 = vmatmul.f32.gmra.mxu0 %v3432
  %v3547 = vpop.f32.mrf.mxu0
  %v3548 = vadd.f32 0.0, %v3547
  %3549 = vmatmul.f32.gmra.mxu0 %v3435
  %v3550 = vpop.f32.mrf.mxu0
  %v3551 = vadd.f32 0.0, %v3550
  %3552 = vmatmul.f32.gmra.mxu0 %v3438
  %v3553 = vpop.f32.mrf.mxu0
  %v3554 = vadd.f32 0.0, %v3553
  %3555 = vmatmul.f32.gmra.mxu0 %v3441
  %v3556 = vpop.f32.mrf.mxu0
  %v3557 = vadd.f32 0.0, %v3556
  %3558 = vmatmul.f32.gmra.mxu0 %v3444
  %v3559 = vpop.f32.mrf.mxu0
  %v3560 = vadd.f32 0.0, %v3559
  %3561 = vmatmul.f32.gmra.mxu0 %v3447
  %v3562 = vpop.f32.mrf.mxu0
  %v3563 = vadd.f32 0.0, %v3562
  %3564 = vmatmul.f32.gmra.mxu0 %v3450
  %v3565 = vpop.f32.mrf.mxu0
  %v3566 = vadd.f32 0.0, %v3565
  %3567 = vmatmul.f32.gmra.mxu0 %v3453
  %v3568 = vpop.f32.mrf.mxu0
  %v3569 = vadd.f32 0.0, %v3568
  %3570 = vmatmul.f32.gmra.mxu0 %v3456
  %v3571 = vpop.f32.mrf.mxu0
  %v3572 = vadd.f32 0.0, %v3571
  %3573 = vmatmul.f32.gmra.mxu0 %v3459
  %v3574 = vpop.f32.mrf.mxu0
  %v3575 = vadd.f32 0.0, %v3574
  %3576 = vmatmul.f32.gmra.mxu0 %v3462
  %v3577 = vpop.f32.mrf.mxu0
  %v3578 = vadd.f32 0.0, %v3577
  %3579 = vmatmul.f32.gmra.mxu0 %v3465
  %v3580 = vpop.f32.mrf.mxu0
  %v3581 = vadd.f32 0.0, %v3580
  %3582 = vmatmul.f32.gmra.mxu0 %v3468
  %v3583 = vpop.f32.mrf.mxu0
  %v3584 = vadd.f32 0.0, %v3583
  %3585 = vdwg.mxu0
  %v3587 = vsel %vm14, %v3339, 0
  %v3590 = vsel %vm14, %v3340, 0
  %v3593 = vsel %vm14, %v3341, 0
  %v3596 = vsel %vm14, %v3342, 0
  %v3599 = vsel %vm14, %v3343, 0
  %v3602 = vsel %vm14, %v3344, 0
  %v3605 = vsel %vm14, %v3345, 0
  %v3608 = vsel %vm14, %v3346, 0
  %v3611 = vsel %vm14, %v3347, 0
  %v3614 = vsel %vm14, %v3348, 0
  %v3617 = vsel %vm14, %v3349, 0
  %v3620 = vsel %vm14, %v3350, 0
  %v3623 = vsel %vm14, %v3351, 0
  %v3626 = vsel %vm14, %v3352, 0
  %v3629 = vsel %vm14, %v3353, 0
  %v3632 = vsel %vm14, %v3354, 0
  %v3635 = vsel %vm14, %v3355, 0
  %v3638 = vsel %vm14, %v3356, 0
  %v3641 = vsel %vm14, %v3357, 0
  %v3644 = vsel %vm14, %v3358, 0
  %v3647 = vsel %vm14, %v3359, 0
  %v3650 = vsel %vm14, %v3360, 0
  %v3653 = vsel %vm14, %v3361, 0
  %v3656 = vsel %vm14, %v3362, 0
  %v3659 = vsel %vm14, %v3363, 0
  %v3662 = vsel %vm14, %v3364, 0
  %v3665 = vsel %vm14, %v3365, 0
  %v3668 = vsel %vm14, %v3366, 0
  %v3671 = vsel %vm14, %v3367, 0
  %v3674 = vsel %vm14, %v3368, 0
  %v3677 = vsel %vm14, %v3369, 0
  %v3680 = vsel %vm14, %v3370, 0
  %v3683 = vsel %vm328, %v3371, 0
  %3685 = vmatpush.msra.mxu0 0.0
  %3686 = vmatpush.msra.mxu0 0.0
  %3687 = vmatpush.msra.mxu0 0.0
  %3688 = vmatpush.msra.mxu0 0.0
  %3689 = vmatpush.msra.mxu0 0.0
  %3690 = vmatpush.msra.mxu0 0.0
  %3691 = vmatpush.msra.mxu0 0.0
  %3692 = vmatpush.msra.mxu0 0.0
  %3693 = vmatpush.msra.mxu0 0.0
  %3694 = vmatpush.msra.mxu0 0.0
  %3695 = vmatpush.msra.mxu0 0.0
  %3696 = vmatpush.msra.mxu0 0.0
  %3697 = vmatpush.msra.mxu0 0.0
  %3698 = vmatpush.msra.mxu0 0.0
  %3699 = vmatpush.msra.mxu0 0.0
  %3700 = vmatpush.msra.mxu0 %v3683
  %3701 = vmatmul.f32.gmra.mxu0 %v3587
  %v3702 = vpop.f32.mrf.mxu0
  %v3703 = vadd.f32 %v3491, %v3702
  %3704 = vmatmul.f32.gmra.mxu0 %v3590
  %v3705 = vpop.f32.mrf.mxu0
  %v3706 = vadd.f32 %v3494, %v3705
  %3707 = vmatmul.f32.gmra.mxu0 %v3593
  %v3708 = vpop.f32.mrf.mxu0
  %v3709 = vadd.f32 %v3497, %v3708
  %3710 = vmatmul.f32.gmra.mxu0 %v3596
  %v3711 = vpop.f32.mrf.mxu0
  %v3712 = vadd.f32 %v3500, %v3711
  %3713 = vmatmul.f32.gmra.mxu0 %v3599
  %v3714 = vpop.f32.mrf.mxu0
  %v3715 = vadd.f32 %v3503, %v3714
  %3716 = vmatmul.f32.gmra.mxu0 %v3602
  %v3717 = vpop.f32.mrf.mxu0
  %v3718 = vadd.f32 %v3506, %v3717
  %3719 = vmatmul.f32.gmra.mxu0 %v3605
  %v3720 = vpop.f32.mrf.mxu0
  %v3721 = vadd.f32 %v3509, %v3720
  %3722 = vmatmul.f32.gmra.mxu0 %v3608
  %v3723 = vpop.f32.mrf.mxu0
  %v3724 = vadd.f32 %v3512, %v3723
  %3725 = vmatmul.f32.gmra.mxu0 %v3611
  %v3726 = vpop.f32.mrf.mxu0
  %v3727 = vadd.f32 %v3515, %v3726
  %3728 = vmatmul.f32.gmra.mxu0 %v3614
  %v3729 = vpop.f32.mrf.mxu0
  %v3730 = vadd.f32 %v3518, %v3729
  %3731 = vmatmul.f32.gmra.mxu0 %v3617
  %v3732 = vpop.f32.mrf.mxu0
  %v3733 = vadd.f32 %v3521, %v3732
  %3734 = vmatmul.f32.gmra.mxu0 %v3620
  %v3735 = vpop.f32.mrf.mxu0
  %v3736 = vadd.f32 %v3524, %v3735
  %3737 = vmatmul.f32.gmra.mxu0 %v3623
  %v3738 = vpop.f32.mrf.mxu0
  %v3739 = vadd.f32 %v3527, %v3738
  %3740 = vmatmul.f32.gmra.mxu0 %v3626
  %v3741 = vpop.f32.mrf.mxu0
  %v3742 = vadd.f32 %v3530, %v3741
  %3743 = vmatmul.f32.gmra.mxu0 %v3629
  %v3744 = vpop.f32.mrf.mxu0
  %v3745 = vadd.f32 %v3533, %v3744
  %3746 = vmatmul.f32.gmra.mxu0 %v3632
  %v3747 = vpop.f32.mrf.mxu0
  %v3748 = vadd.f32 %v3536, %v3747
  %3749 = vmatmul.f32.gmra.mxu0 %v3635
  %v3750 = vpop.f32.mrf.mxu0
  %v3751 = vadd.f32 %v3539, %v3750
  %3752 = vmatmul.f32.gmra.mxu0 %v3638
  %v3753 = vpop.f32.mrf.mxu0
  %v3754 = vadd.f32 %v3542, %v3753
  %3755 = vmatmul.f32.gmra.mxu0 %v3641
  %v3756 = vpop.f32.mrf.mxu0
  %v3757 = vadd.f32 %v3545, %v3756
  %3758 = vmatmul.f32.gmra.mxu0 %v3644
  %v3759 = vpop.f32.mrf.mxu0
  %v3760 = vadd.f32 %v3548, %v3759
  %3761 = vmatmul.f32.gmra.mxu0 %v3647
  %v3762 = vpop.f32.mrf.mxu0
  %v3763 = vadd.f32 %v3551, %v3762
  %3764 = vmatmul.f32.gmra.mxu0 %v3650
  %v3765 = vpop.f32.mrf.mxu0
  %v3766 = vadd.f32 %v3554, %v3765
  %3767 = vmatmul.f32.gmra.mxu0 %v3653
  %v3768 = vpop.f32.mrf.mxu0
  %v3769 = vadd.f32 %v3557, %v3768
  %3770 = vmatmul.f32.gmra.mxu0 %v3656
  %v3771 = vpop.f32.mrf.mxu0
  %v3772 = vadd.f32 %v3560, %v3771
  %3773 = vmatmul.f32.gmra.mxu0 %v3659
  %v3774 = vpop.f32.mrf.mxu0
  %v3775 = vadd.f32 %v3563, %v3774
  %3776 = vmatmul.f32.gmra.mxu0 %v3662
  %v3777 = vpop.f32.mrf.mxu0
  %v3778 = vadd.f32 %v3566, %v3777
  %3779 = vmatmul.f32.gmra.mxu0 %v3665
  %v3780 = vpop.f32.mrf.mxu0
  %v3781 = vadd.f32 %v3569, %v3780
  %3782 = vmatmul.f32.gmra.mxu0 %v3668
  %v3783 = vpop.f32.mrf.mxu0
  %v3784 = vadd.f32 %v3572, %v3783
  %3785 = vmatmul.f32.gmra.mxu0 %v3671
  %v3786 = vpop.f32.mrf.mxu0
  %v3787 = vadd.f32 %v3575, %v3786
  %3788 = vmatmul.f32.gmra.mxu0 %v3674
  %v3789 = vpop.f32.mrf.mxu0
  %v3790 = vadd.f32 %v3578, %v3789
  %3791 = vmatmul.f32.gmra.mxu0 %v3677
  %v3792 = vpop.f32.mrf.mxu0
  %v3793 = vadd.f32 %v3581, %v3792
  %3794 = vmatmul.f32.gmra.mxu0 %v3680
  %v3795 = vpop.f32.mrf.mxu0
  %v3796 = vadd.f32 %v3584, %v3795
  %3797 = vdwg.mxu0
  %v3798 = vrot.slane %v3243, 1
  %v3799 = vrot.slane %v3244, 1
  %v3800 = vrot.slane %v3245, 1
  %v3801 = vrot.slane %v3246, 1
  %v3802 = vrot.slane %v3247, 1
  %v3803 = vrot.slane %v3248, 1
  %v3804 = vrot.slane %v3249, 1
  %v3805 = vrot.slane %v3250, 1
  %v3806 = vrot.slane %v3251, 1
  %v3807 = vrot.slane %v3252, 1
  %v3808 = vrot.slane %v3253, 1
  %v3809 = vrot.slane %v3254, 1
  %v3810 = vrot.slane %v3255, 1
  %v3811 = vrot.slane %v3256, 1
  %v3812 = vrot.slane %v3257, 1
  %v3813 = vrot.slane %v3258, 1
  %v3814 = vrot.slane %v3259, 1
  %v3815 = vrot.slane %v3260, 1
  %v3816 = vrot.slane %v3261, 1
  %v3817 = vrot.slane %v3262, 1
  %v3818 = vrot.slane %v3263, 1
  %v3819 = vrot.slane %v3264, 1
  %v3820 = vrot.slane %v3265, 1
  %v3821 = vrot.slane %v3266, 1
  %v3822 = vrot.slane %v3267, 1
  %v3823 = vrot.slane %v3268, 1
  %v3824 = vrot.slane %v3269, 1
  %v3825 = vrot.slane %v3270, 1
  %v3826 = vrot.slane %v3271, 1
  %v3827 = vrot.slane %v3272, 1
  %v3828 = vrot.slane %v3273, 1
  %v3829 = vrot.slane %v3274, 1
  %v3830 = vsel %vm689, %v3828, %v3829
  %v3831 = vsel %vm689, %v3827, %v3828
  %v3832 = vsel %vm689, %v3826, %v3827
  %v3833 = vsel %vm689, %v3825, %v3826
  %v3834 = vsel %vm689, %v3824, %v3825
  %v3835 = vsel %vm689, %v3823, %v3824
  %v3836 = vsel %vm689, %v3822, %v3823
  %v3837 = vsel %vm689, %v3821, %v3822
  %v3838 = vsel %vm689, %v3820, %v3821
  %v3839 = vsel %vm689, %v3819, %v3820
  %v3840 = vsel %vm689, %v3818, %v3819
  %v3841 = vsel %vm689, %v3817, %v3818
  %v3842 = vsel %vm689, %v3816, %v3817
  %v3843 = vsel %vm689, %v3815, %v3816
  %v3844 = vsel %vm689, %v3814, %v3815
  %v3845 = vsel %vm689, %v3813, %v3814
  %v3846 = vsel %vm689, %v3812, %v3813
  %v3847 = vsel %vm689, %v3811, %v3812
  %v3848 = vsel %vm689, %v3810, %v3811
  %v3849 = vsel %vm689, %v3809, %v3810
  %v3850 = vsel %vm689, %v3808, %v3809
  %v3851 = vsel %vm689, %v3807, %v3808
  %v3852 = vsel %vm689, %v3806, %v3807
  %v3853 = vsel %vm689, %v3805, %v3806
  %v3854 = vsel %vm689, %v3804, %v3805
  %v3855 = vsel %vm689, %v3803, %v3804
  %v3856 = vsel %vm689, %v3802, %v3803
  %v3857 = vsel %vm689, %v3801, %v3802
  %v3858 = vsel %vm689, %v3800, %v3801
  %v3859 = vsel %vm689, %v3799, %v3800
  %v3860 = vsel %vm689, %v3798, %v3799
  %v3861 = vsel %vm689, %v3829, %v3798
  %v3862 = vmul.f32 %v3860, %v33
  %v3863 = vmul.f32 %v3859, %v34
  %v3864 = vmul.f32 %v3858, %v33
  %v3865 = vmul.f32 %v3857, %v34
  %v3866 = vmul.f32 %v3856, %v33
  %v3867 = vmul.f32 %v3855, %v34
  %v3868 = vmul.f32 %v3854, %v33
  %v3869 = vmul.f32 %v3853, %v34
  %v3870 = vmul.f32 %v3852, %v33
  %v3871 = vmul.f32 %v3851, %v34
  %v3872 = vmul.f32 %v3850, %v33
  %v3873 = vmul.f32 %v3849, %v34
  %v3874 = vmul.f32 %v3848, %v33
  %v3875 = vmul.f32 %v3847, %v34
  %v3876 = vmul.f32 %v3846, %v33
  %v3877 = vmul.f32 %v3845, %v34
  %v3878 = vmul.f32 %v3844, %v33
  %v3879 = vmul.f32 %v3843, %v34
  %v3880 = vmul.f32 %v3842, %v33
  %v3881 = vmul.f32 %v3841, %v34
  %v3882 = vmul.f32 %v3840, %v33
  %v3883 = vmul.f32 %v3839, %v34
  %v3884 = vmul.f32 %v3838, %v33
  %v3885 = vmul.f32 %v3837, %v34
  %v3886 = vmul.f32 %v3836, %v33
  %v3887 = vmul.f32 %v3835, %v34
  %v3888 = vmul.f32 %v3834, %v33
  %v3889 = vmul.f32 %v3833, %v34
  %v3890 = vmul.f32 %v3832, %v33
  %v3891 = vmul.f32 %v3831, %v34
  %v3892 = vmul.f32 %v3830, %v33
  %v3893 = vmul.f32 %v3861, %v34
  %s3894 = scalar_lea.vmem %s2, 8
  %v3895 = vld [vmem:[%s3894] sm:$0xf]
  %v3897 = vsel %vm14, %v3862, 0
  %v3900 = vsel %vm14, %v3863, 0
  %v3903 = vsel %vm14, %v3864, 0
  %v3906 = vsel %vm14, %v3865, 0
  %v3909 = vsel %vm14, %v3866, 0
  %v3912 = vsel %vm14, %v3867, 0
  %v3915 = vsel %vm14, %v3868, 0
  %v3918 = vsel %vm14, %v3869, 0
  %v3921 = vsel %vm14, %v3870, 0
  %v3924 = vsel %vm14, %v3871, 0
  %v3927 = vsel %vm14, %v3872, 0
  %v3930 = vsel %vm14, %v3873, 0
  %v3933 = vsel %vm14, %v3874, 0
  %v3936 = vsel %vm14, %v3875, 0
  %v3939 = vsel %vm14, %v3876, 0
  %v3942 = vsel %vm14, %v3877, 0
  %v3945 = vsel %vm14, %v3878, 0
  %v3948 = vsel %vm14, %v3879, 0
  %v3951 = vsel %vm14, %v3880, 0
  %v3954 = vsel %vm14, %v3881, 0
  %v3957 = vsel %vm14, %v3882, 0
  %v3960 = vsel %vm14, %v3883, 0
  %v3963 = vsel %vm14, %v3884, 0
  %v3966 = vsel %vm14, %v3885, 0
  %v3969 = vsel %vm14, %v3886, 0
  %v3972 = vsel %vm14, %v3887, 0
  %v3975 = vsel %vm14, %v3888, 0
  %v3978 = vsel %vm14, %v3889, 0
  %v3981 = vsel %vm14, %v3890, 0
  %v3984 = vsel %vm14, %v3891, 0
  %v3987 = vsel %vm14, %v3892, 0
  %v3990 = vsel %vm14, %v3893, 0
  %v3993 = vsel %vm328, %v3895, 0
  %3995 = vmatpush.msra.mxu0 0.0
  %3996 = vmatpush.msra.mxu0 0.0
  %3997 = vmatpush.msra.mxu0 0.0
  %3998 = vmatpush.msra.mxu0 0.0
  %3999 = vmatpush.msra.mxu0 0.0
  %4000 = vmatpush.msra.mxu0 0.0
  %4001 = vmatpush.msra.mxu0 0.0
  %4002 = vmatpush.msra.mxu0 0.0
  %4003 = vmatpush.msra.mxu0 0.0
  %4004 = vmatpush.msra.mxu0 0.0
  %4005 = vmatpush.msra.mxu0 0.0
  %4006 = vmatpush.msra.mxu0 0.0
  %4007 = vmatpush.msra.mxu0 0.0
  %4008 = vmatpush.msra.mxu0 0.0
  %4009 = vmatpush.msra.mxu0 0.0
  %4010 = vmatpush.msra.mxu0 %v3993
  %4011 = vmatmul.f32.gmra.mxu0 %v3897
  %v4012 = vpop.f32.mrf.mxu0
  %v4013 = vadd.f32 0.0, %v4012
  %4014 = vmatmul.f32.gmra.mxu0 %v3900
  %v4015 = vpop.f32.mrf.mxu0
  %v4016 = vadd.f32 0.0, %v4015
  %4017 = vmatmul.f32.gmra.mxu0 %v3903
  %v4018 = vpop.f32.mrf.mxu0
  %v4019 = vadd.f32 0.0, %v4018
  %4020 = vmatmul.f32.gmra.mxu0 %v3906
  %v4021 = vpop.f32.mrf.mxu0
  %v4022 = vadd.f32 0.0, %v4021
  %4023 = vmatmul.f32.gmra.mxu0 %v3909
  %v4024 = vpop.f32.mrf.mxu0
  %v4025 = vadd.f32 0.0, %v4024
  %4026 = vmatmul.f32.gmra.mxu0 %v3912
  %v4027 = vpop.f32.mrf.mxu0
  %v4028 = vadd.f32 0.0, %v4027
  %4029 = vmatmul.f32.gmra.mxu0 %v3915
  %v4030 = vpop.f32.mrf.mxu0
  %v4031 = vadd.f32 0.0, %v4030
  %4032 = vmatmul.f32.gmra.mxu0 %v3918
  %v4033 = vpop.f32.mrf.mxu0
  %v4034 = vadd.f32 0.0, %v4033
  %4035 = vmatmul.f32.gmra.mxu0 %v3921
  %v4036 = vpop.f32.mrf.mxu0
  %v4037 = vadd.f32 0.0, %v4036
  %4038 = vmatmul.f32.gmra.mxu0 %v3924
  %v4039 = vpop.f32.mrf.mxu0
  %v4040 = vadd.f32 0.0, %v4039
  %4041 = vmatmul.f32.gmra.mxu0 %v3927
  %v4042 = vpop.f32.mrf.mxu0
  %v4043 = vadd.f32 0.0, %v4042
  %4044 = vmatmul.f32.gmra.mxu0 %v3930
  %v4045 = vpop.f32.mrf.mxu0
  %v4046 = vadd.f32 0.0, %v4045
  %4047 = vmatmul.f32.gmra.mxu0 %v3933
  %v4048 = vpop.f32.mrf.mxu0
  %v4049 = vadd.f32 0.0, %v4048
  %4050 = vmatmul.f32.gmra.mxu0 %v3936
  %v4051 = vpop.f32.mrf.mxu0
  %v4052 = vadd.f32 0.0, %v4051
  %4053 = vmatmul.f32.gmra.mxu0 %v3939
  %v4054 = vpop.f32.mrf.mxu0
  %v4055 = vadd.f32 0.0, %v4054
  %4056 = vmatmul.f32.gmra.mxu0 %v3942
  %v4057 = vpop.f32.mrf.mxu0
  %v4058 = vadd.f32 0.0, %v4057
  %4059 = vmatmul.f32.gmra.mxu0 %v3945
  %v4060 = vpop.f32.mrf.mxu0
  %v4061 = vadd.f32 0.0, %v4060
  %4062 = vmatmul.f32.gmra.mxu0 %v3948
  %v4063 = vpop.f32.mrf.mxu0
  %v4064 = vadd.f32 0.0, %v4063
  %4065 = vmatmul.f32.gmra.mxu0 %v3951
  %v4066 = vpop.f32.mrf.mxu0
  %v4067 = vadd.f32 0.0, %v4066
  %4068 = vmatmul.f32.gmra.mxu0 %v3954
  %v4069 = vpop.f32.mrf.mxu0
  %v4070 = vadd.f32 0.0, %v4069
  %4071 = vmatmul.f32.gmra.mxu0 %v3957
  %v4072 = vpop.f32.mrf.mxu0
  %v4073 = vadd.f32 0.0, %v4072
  %4074 = vmatmul.f32.gmra.mxu0 %v3960
  %v4075 = vpop.f32.mrf.mxu0
  %v4076 = vadd.f32 0.0, %v4075
  %4077 = vmatmul.f32.gmra.mxu0 %v3963
  %v4078 = vpop.f32.mrf.mxu0
  %v4079 = vadd.f32 0.0, %v4078
  %4080 = vmatmul.f32.gmra.mxu0 %v3966
  %v4081 = vpop.f32.mrf.mxu0
  %v4082 = vadd.f32 0.0, %v4081
  %4083 = vmatmul.f32.gmra.mxu0 %v3969
  %v4084 = vpop.f32.mrf.mxu0
  %v4085 = vadd.f32 0.0, %v4084
  %4086 = vmatmul.f32.gmra.mxu0 %v3972
  %v4087 = vpop.f32.mrf.mxu0
  %v4088 = vadd.f32 0.0, %v4087
  %4089 = vmatmul.f32.gmra.mxu0 %v3975
  %v4090 = vpop.f32.mrf.mxu0
  %v4091 = vadd.f32 0.0, %v4090
  %4092 = vmatmul.f32.gmra.mxu0 %v3978
  %v4093 = vpop.f32.mrf.mxu0
  %v4094 = vadd.f32 0.0, %v4093
  %4095 = vmatmul.f32.gmra.mxu0 %v3981
  %v4096 = vpop.f32.mrf.mxu0
  %v4097 = vadd.f32 0.0, %v4096
  %4098 = vmatmul.f32.gmra.mxu0 %v3984
  %v4099 = vpop.f32.mrf.mxu0
  %v4100 = vadd.f32 0.0, %v4099
  %4101 = vmatmul.f32.gmra.mxu0 %v3987
  %v4102 = vpop.f32.mrf.mxu0
  %v4103 = vadd.f32 0.0, %v4102
  %4104 = vmatmul.f32.gmra.mxu0 %v3990
  %v4105 = vpop.f32.mrf.mxu0
  %v4106 = vadd.f32 0.0, %v4105
  %4107 = vdwg.mxu0
  %v4108 = vadd.f32 %v3703, %v4013
  %v4109 = vadd.f32 %v3706, %v4016
  %v4110 = vadd.f32 %v3709, %v4019
  %v4111 = vadd.f32 %v3712, %v4022
  %v4112 = vadd.f32 %v3715, %v4025
  %v4113 = vadd.f32 %v3718, %v4028
  %v4114 = vadd.f32 %v3721, %v4031
  %v4115 = vadd.f32 %v3724, %v4034
  %v4116 = vadd.f32 %v3727, %v4037
  %v4117 = vadd.f32 %v3730, %v4040
  %v4118 = vadd.f32 %v3733, %v4043
  %v4119 = vadd.f32 %v3736, %v4046
  %v4120 = vadd.f32 %v3739, %v4049
  %v4121 = vadd.f32 %v3742, %v4052
  %v4122 = vadd.f32 %v3745, %v4055
  %v4123 = vadd.f32 %v3748, %v4058
  %v4124 = vadd.f32 %v3751, %v4061
  %v4125 = vadd.f32 %v3754, %v4064
  %v4126 = vadd.f32 %v3757, %v4067
  %v4127 = vadd.f32 %v3760, %v4070
  %v4128 = vadd.f32 %v3763, %v4073
  %v4129 = vadd.f32 %v3766, %v4076
  %v4130 = vadd.f32 %v3769, %v4079
  %v4131 = vadd.f32 %v3772, %v4082
  %v4132 = vadd.f32 %v3775, %v4085
  %v4133 = vadd.f32 %v3778, %v4088
  %v4134 = vadd.f32 %v3781, %v4091
  %v4135 = vadd.f32 %v3784, %v4094
  %v4136 = vadd.f32 %v3787, %v4097
  %v4137 = vadd.f32 %v3790, %v4100
  %v4138 = vadd.f32 %v3793, %v4103
  %v4139 = vadd.f32 %v3796, %v4106
  %v4140 = vld [vmem:[%s67] sm:$0xff]
  %v4141 = vld [vmem:[%s67 + $0x8] sm:$0xff]
  %v4142 = vld [vmem:[%s67 + $0x10] sm:$0xff]
  %v4143 = vld [vmem:[%s67 + $0x18] sm:$0xff]
  %v4144 = vld [vmem:[%s67 + $0x20] sm:$0xff]
  %v4145 = vld [vmem:[%s67 + $0x28] sm:$0xff]
  %v4146 = vld [vmem:[%s67 + $0x30] sm:$0xff]
  %v4147 = vld [vmem:[%s67 + $0x38] sm:$0xff]
  %v4148 = vld [vmem:[%s67 + $0x40] sm:$0xff]
  %v4149 = vld [vmem:[%s67 + $0x48] sm:$0xff]
  %v4150 = vld [vmem:[%s67 + $0x50] sm:$0xff]
  %v4151 = vld [vmem:[%s67 + $0x58] sm:$0xff]
  %v4152 = vld [vmem:[%s67 + $0x60] sm:$0xff]
  %v4153 = vld [vmem:[%s67 + $0x68] sm:$0xff]
  %v4154 = vld [vmem:[%s67 + $0x70] sm:$0xff]
  %v4155 = vld [vmem:[%s67 + $0x78] sm:$0xff]
  %v4156 = vld [vmem:[%s67 + $0x80] sm:$0xff]
  %v4157 = vld [vmem:[%s67 + $0x88] sm:$0xff]
  %v4158 = vld [vmem:[%s67 + $0x90] sm:$0xff]
  %v4159 = vld [vmem:[%s67 + $0x98] sm:$0xff]
  %v4160 = vld [vmem:[%s67 + $0xa0] sm:$0xff]
  %v4161 = vld [vmem:[%s67 + $0xa8] sm:$0xff]
  %v4162 = vld [vmem:[%s67 + $0xb0] sm:$0xff]
  %v4163 = vld [vmem:[%s67 + $0xb8] sm:$0xff]
  %v4164 = vld [vmem:[%s67 + $0xc0] sm:$0xff]
  %v4165 = vld [vmem:[%s67 + $0xc8] sm:$0xff]
  %v4166 = vld [vmem:[%s67 + $0xd0] sm:$0xff]
  %v4167 = vld [vmem:[%s67 + $0xd8] sm:$0xff]
  %v4168 = vld [vmem:[%s67 + $0xe0] sm:$0xff]
  %v4169 = vld [vmem:[%s67 + $0xe8] sm:$0xff]
  %v4170 = vld [vmem:[%s67 + $0xf0] sm:$0xff]
  %v4171 = vld [vmem:[%s67 + $0xf8] sm:$0xff]
  %v4172 = vrot.slane %v4140, 7
  %v4173 = vrot.slane %v4141, 7
  %v4174 = vrot.slane %v4142, 7
  %v4175 = vrot.slane %v4143, 7
  %v4176 = vrot.slane %v4144, 7
  %v4177 = vrot.slane %v4145, 7
  %v4178 = vrot.slane %v4146, 7
  %v4179 = vrot.slane %v4147, 7
  %v4180 = vrot.slane %v4148, 7
  %v4181 = vrot.slane %v4149, 7
  %v4182 = vrot.slane %v4150, 7
  %v4183 = vrot.slane %v4151, 7
  %v4184 = vrot.slane %v4152, 7
  %v4185 = vrot.slane %v4153, 7
  %v4186 = vrot.slane %v4154, 7
  %v4187 = vrot.slane %v4155, 7
  %v4188 = vrot.slane %v4156, 7
  %v4189 = vrot.slane %v4157, 7
  %v4190 = vrot.slane %v4158, 7
  %v4191 = vrot.slane %v4159, 7
  %v4192 = vrot.slane %v4160, 7
  %v4193 = vrot.slane %v4161, 7
  %v4194 = vrot.slane %v4162, 7
  %v4195 = vrot.slane %v4163, 7
  %v4196 = vrot.slane %v4164, 7
  %v4197 = vrot.slane %v4165, 7
  %v4198 = vrot.slane %v4166, 7
  %v4199 = vrot.slane %v4167, 7
  %v4200 = vrot.slane %v4168, 7
  %v4201 = vrot.slane %v4169, 7
  %v4202 = vrot.slane %v4170, 7
  %v4203 = vrot.slane %v4171, 7
  %v4204 = vsel %vm164, %v4202, %v4203
  %v4205 = vsel %vm164, %v4201, %v4202
  %v4206 = vsel %vm164, %v4200, %v4201
  %v4207 = vsel %vm164, %v4199, %v4200
  %v4208 = vsel %vm164, %v4198, %v4199
  %v4209 = vsel %vm164, %v4197, %v4198
  %v4210 = vsel %vm164, %v4196, %v4197
  %v4211 = vsel %vm164, %v4195, %v4196
  %v4212 = vsel %vm164, %v4194, %v4195
  %v4213 = vsel %vm164, %v4193, %v4194
  %v4214 = vsel %vm164, %v4192, %v4193
  %v4215 = vsel %vm164, %v4191, %v4192
  %v4216 = vsel %vm164, %v4190, %v4191
  %v4217 = vsel %vm164, %v4189, %v4190
  %v4218 = vsel %vm164, %v4188, %v4189
  %v4219 = vsel %vm164, %v4187, %v4188
  %v4220 = vsel %vm164, %v4186, %v4187
  %v4221 = vsel %vm164, %v4185, %v4186
  %v4222 = vsel %vm164, %v4184, %v4185
  %v4223 = vsel %vm164, %v4183, %v4184
  %v4224 = vsel %vm164, %v4182, %v4183
  %v4225 = vsel %vm164, %v4181, %v4182
  %v4226 = vsel %vm164, %v4180, %v4181
  %v4227 = vsel %vm164, %v4179, %v4180
  %v4228 = vsel %vm164, %v4178, %v4179
  %v4229 = vsel %vm164, %v4177, %v4178
  %v4230 = vsel %vm164, %v4176, %v4177
  %v4231 = vsel %vm164, %v4175, %v4176
  %v4232 = vsel %vm164, %v4174, %v4175
  %v4233 = vsel %vm164, %v4173, %v4174
  %v4234 = vsel %vm164, %v4172, %v4173
  %v4235 = vsel %vm164, %v4203, %v4172
  %v4236 = vmul.f32 %v4235, %v27
  %v4237 = vmul.f32 %v4234, %v28
  %v4238 = vmul.f32 %v4233, %v27
  %v4239 = vmul.f32 %v4232, %v28
  %v4240 = vmul.f32 %v4231, %v27
  %v4241 = vmul.f32 %v4230, %v28
  %v4242 = vmul.f32 %v4229, %v27
  %v4243 = vmul.f32 %v4228, %v28
  %v4244 = vmul.f32 %v4227, %v27
  %v4245 = vmul.f32 %v4226, %v28
  %v4246 = vmul.f32 %v4225, %v27
  %v4247 = vmul.f32 %v4224, %v28
  %v4248 = vmul.f32 %v4223, %v27
  %v4249 = vmul.f32 %v4222, %v28
  %v4250 = vmul.f32 %v4221, %v27
  %v4251 = vmul.f32 %v4220, %v28
  %v4252 = vmul.f32 %v4219, %v27
  %v4253 = vmul.f32 %v4218, %v28
  %v4254 = vmul.f32 %v4217, %v27
  %v4255 = vmul.f32 %v4216, %v28
  %v4256 = vmul.f32 %v4215, %v27
  %v4257 = vmul.f32 %v4214, %v28
  %v4258 = vmul.f32 %v4213, %v27
  %v4259 = vmul.f32 %v4212, %v28
  %v4260 = vmul.f32 %v4211, %v27
  %v4261 = vmul.f32 %v4210, %v28
  %v4262 = vmul.f32 %v4209, %v27
  %v4263 = vmul.f32 %v4208, %v28
  %v4264 = vmul.f32 %v4207, %v27
  %v4265 = vmul.f32 %v4206, %v28
  %v4266 = vmul.f32 %v4205, %v27
  %v4267 = vmul.f32 %v4204, %v28
  %s4268 = scalar_lea.vmem %s2, 12
  %v4269 = vld [vmem:[%s4268] sm:$0xf]
  %v4271 = vsel %vm14, %v4236, 0
  %v4274 = vsel %vm14, %v4237, 0
  %v4277 = vsel %vm14, %v4238, 0
  %v4280 = vsel %vm14, %v4239, 0
  %v4283 = vsel %vm14, %v4240, 0
  %v4286 = vsel %vm14, %v4241, 0
  %v4289 = vsel %vm14, %v4242, 0
  %v4292 = vsel %vm14, %v4243, 0
  %v4295 = vsel %vm14, %v4244, 0
  %v4298 = vsel %vm14, %v4245, 0
  %v4301 = vsel %vm14, %v4246, 0
  %v4304 = vsel %vm14, %v4247, 0
  %v4307 = vsel %vm14, %v4248, 0
  %v4310 = vsel %vm14, %v4249, 0
  %v4313 = vsel %vm14, %v4250, 0
  %v4316 = vsel %vm14, %v4251, 0
  %v4319 = vsel %vm14, %v4252, 0
  %v4322 = vsel %vm14, %v4253, 0
  %v4325 = vsel %vm14, %v4254, 0
  %v4328 = vsel %vm14, %v4255, 0
  %v4331 = vsel %vm14, %v4256, 0
  %v4334 = vsel %vm14, %v4257, 0
  %v4337 = vsel %vm14, %v4258, 0
  %v4340 = vsel %vm14, %v4259, 0
  %v4343 = vsel %vm14, %v4260, 0
  %v4346 = vsel %vm14, %v4261, 0
  %v4349 = vsel %vm14, %v4262, 0
  %v4352 = vsel %vm14, %v4263, 0
  %v4355 = vsel %vm14, %v4264, 0
  %v4358 = vsel %vm14, %v4265, 0
  %v4361 = vsel %vm14, %v4266, 0
  %v4364 = vsel %vm14, %v4267, 0
  %v4367 = vsel %vm328, %v4269, 0
  %4369 = vmatpush.msra.mxu0 0.0
  %4370 = vmatpush.msra.mxu0 0.0
  %4371 = vmatpush.msra.mxu0 0.0
  %4372 = vmatpush.msra.mxu0 0.0
  %4373 = vmatpush.msra.mxu0 0.0
  %4374 = vmatpush.msra.mxu0 0.0
  %4375 = vmatpush.msra.mxu0 0.0
  %4376 = vmatpush.msra.mxu0 0.0
  %4377 = vmatpush.msra.mxu0 0.0
  %4378 = vmatpush.msra.mxu0 0.0
  %4379 = vmatpush.msra.mxu0 0.0
  %4380 = vmatpush.msra.mxu0 0.0
  %4381 = vmatpush.msra.mxu0 0.0
  %4382 = vmatpush.msra.mxu0 0.0
  %4383 = vmatpush.msra.mxu0 0.0
  %4384 = vmatpush.msra.mxu0 %v4367
  %4385 = vmatmul.f32.gmra.mxu0 %v4271
  %v4386 = vpop.f32.mrf.mxu0
  %v4387 = vadd.f32 0.0, %v4386
  %4388 = vmatmul.f32.gmra.mxu0 %v4274
  %v4389 = vpop.f32.mrf.mxu0
  %v4390 = vadd.f32 0.0, %v4389
  %4391 = vmatmul.f32.gmra.mxu0 %v4277
  %v4392 = vpop.f32.mrf.mxu0
  %v4393 = vadd.f32 0.0, %v4392
  %4394 = vmatmul.f32.gmra.mxu0 %v4280
  %v4395 = vpop.f32.mrf.mxu0
  %v4396 = vadd.f32 0.0, %v4395
  %4397 = vmatmul.f32.gmra.mxu0 %v4283
  %v4398 = vpop.f32.mrf.mxu0
  %v4399 = vadd.f32 0.0, %v4398
  %4400 = vmatmul.f32.gmra.mxu0 %v4286
  %v4401 = vpop.f32.mrf.mxu0
  %v4402 = vadd.f32 0.0, %v4401
  %4403 = vmatmul.f32.gmra.mxu0 %v4289
  %v4404 = vpop.f32.mrf.mxu0
  %v4405 = vadd.f32 0.0, %v4404
  %4406 = vmatmul.f32.gmra.mxu0 %v4292
  %v4407 = vpop.f32.mrf.mxu0
  %v4408 = vadd.f32 0.0, %v4407
  %4409 = vmatmul.f32.gmra.mxu0 %v4295
  %v4410 = vpop.f32.mrf.mxu0
  %v4411 = vadd.f32 0.0, %v4410
  %4412 = vmatmul.f32.gmra.mxu0 %v4298
  %v4413 = vpop.f32.mrf.mxu0
  %v4414 = vadd.f32 0.0, %v4413
  %4415 = vmatmul.f32.gmra.mxu0 %v4301
  %v4416 = vpop.f32.mrf.mxu0
  %v4417 = vadd.f32 0.0, %v4416
  %4418 = vmatmul.f32.gmra.mxu0 %v4304
  %v4419 = vpop.f32.mrf.mxu0
  %v4420 = vadd.f32 0.0, %v4419
  %4421 = vmatmul.f32.gmra.mxu0 %v4307
  %v4422 = vpop.f32.mrf.mxu0
  %v4423 = vadd.f32 0.0, %v4422
  %4424 = vmatmul.f32.gmra.mxu0 %v4310
  %v4425 = vpop.f32.mrf.mxu0
  %v4426 = vadd.f32 0.0, %v4425
  %4427 = vmatmul.f32.gmra.mxu0 %v4313
  %v4428 = vpop.f32.mrf.mxu0
  %v4429 = vadd.f32 0.0, %v4428
  %4430 = vmatmul.f32.gmra.mxu0 %v4316
  %v4431 = vpop.f32.mrf.mxu0
  %v4432 = vadd.f32 0.0, %v4431
  %4433 = vmatmul.f32.gmra.mxu0 %v4319
  %v4434 = vpop.f32.mrf.mxu0
  %v4435 = vadd.f32 0.0, %v4434
  %4436 = vmatmul.f32.gmra.mxu0 %v4322
  %v4437 = vpop.f32.mrf.mxu0
  %v4438 = vadd.f32 0.0, %v4437
  %4439 = vmatmul.f32.gmra.mxu0 %v4325
  %v4440 = vpop.f32.mrf.mxu0
  %v4441 = vadd.f32 0.0, %v4440
  %4442 = vmatmul.f32.gmra.mxu0 %v4328
  %v4443 = vpop.f32.mrf.mxu0
  %v4444 = vadd.f32 0.0, %v4443
  %4445 = vmatmul.f32.gmra.mxu0 %v4331
  %v4446 = vpop.f32.mrf.mxu0
  %v4447 = vadd.f32 0.0, %v4446
  %4448 = vmatmul.f32.gmra.mxu0 %v4334
  %v4449 = vpop.f32.mrf.mxu0
  %v4450 = vadd.f32 0.0, %v4449
  %4451 = vmatmul.f32.gmra.mxu0 %v4337
  %v4452 = vpop.f32.mrf.mxu0
  %v4453 = vadd.f32 0.0, %v4452
  %4454 = vmatmul.f32.gmra.mxu0 %v4340
  %v4455 = vpop.f32.mrf.mxu0
  %v4456 = vadd.f32 0.0, %v4455
  %4457 = vmatmul.f32.gmra.mxu0 %v4343
  %v4458 = vpop.f32.mrf.mxu0
  %v4459 = vadd.f32 0.0, %v4458
  %4460 = vmatmul.f32.gmra.mxu0 %v4346
  %v4461 = vpop.f32.mrf.mxu0
  %v4462 = vadd.f32 0.0, %v4461
  %4463 = vmatmul.f32.gmra.mxu0 %v4349
  %v4464 = vpop.f32.mrf.mxu0
  %v4465 = vadd.f32 0.0, %v4464
  %4466 = vmatmul.f32.gmra.mxu0 %v4352
  %v4467 = vpop.f32.mrf.mxu0
  %v4468 = vadd.f32 0.0, %v4467
  %4469 = vmatmul.f32.gmra.mxu0 %v4355
  %v4470 = vpop.f32.mrf.mxu0
  %v4471 = vadd.f32 0.0, %v4470
  %4472 = vmatmul.f32.gmra.mxu0 %v4358
  %v4473 = vpop.f32.mrf.mxu0
  %v4474 = vadd.f32 0.0, %v4473
  %4475 = vmatmul.f32.gmra.mxu0 %v4361
  %v4476 = vpop.f32.mrf.mxu0
  %v4477 = vadd.f32 0.0, %v4476
  %4478 = vmatmul.f32.gmra.mxu0 %v4364
  %v4479 = vpop.f32.mrf.mxu0
  %v4480 = vadd.f32 0.0, %v4479
  %4481 = vdwg.mxu0
  %v4482 = vadd.f32 %v4108, %v4387
  %v4483 = vadd.f32 %v4109, %v4390
  %v4484 = vadd.f32 %v4110, %v4393
  %v4485 = vadd.f32 %v4111, %v4396
  %v4486 = vadd.f32 %v4112, %v4399
  %v4487 = vadd.f32 %v4113, %v4402
  %v4488 = vadd.f32 %v4114, %v4405
  %v4489 = vadd.f32 %v4115, %v4408
  %v4490 = vadd.f32 %v4116, %v4411
  %v4491 = vadd.f32 %v4117, %v4414
  %v4492 = vadd.f32 %v4118, %v4417
  %v4493 = vadd.f32 %v4119, %v4420
  %v4494 = vadd.f32 %v4120, %v4423
  %v4495 = vadd.f32 %v4121, %v4426
  %v4496 = vadd.f32 %v4122, %v4429
  %v4497 = vadd.f32 %v4123, %v4432
  %v4498 = vadd.f32 %v4124, %v4435
  %v4499 = vadd.f32 %v4125, %v4438
  %v4500 = vadd.f32 %v4126, %v4441
  %v4501 = vadd.f32 %v4127, %v4444
  %v4502 = vadd.f32 %v4128, %v4447
  %v4503 = vadd.f32 %v4129, %v4450
  %v4504 = vadd.f32 %v4130, %v4453
  %v4505 = vadd.f32 %v4131, %v4456
  %v4506 = vadd.f32 %v4132, %v4459
  %v4507 = vadd.f32 %v4133, %v4462
  %v4508 = vadd.f32 %v4134, %v4465
  %v4509 = vadd.f32 %v4135, %v4468
  %v4510 = vadd.f32 %v4136, %v4471
  %v4511 = vadd.f32 %v4137, %v4474
  %v4512 = vadd.f32 %v4138, %v4477
  %v4513 = vadd.f32 %v4139, %v4480
  %s4514 = scalar_lea.vmem %s2, 16
  %v4515 = vld [vmem:[%s4514] sm:$0xf]
  %v4517 = vsel %vm14, %v4140, 0
  %v4520 = vsel %vm14, %v4141, 0
  %v4523 = vsel %vm14, %v4142, 0
  %v4526 = vsel %vm14, %v4143, 0
  %v4529 = vsel %vm14, %v4144, 0
  %v4532 = vsel %vm14, %v4145, 0
  %v4535 = vsel %vm14, %v4146, 0
  %v4538 = vsel %vm14, %v4147, 0
  %v4541 = vsel %vm14, %v4148, 0
  %v4544 = vsel %vm14, %v4149, 0
  %v4547 = vsel %vm14, %v4150, 0
  %v4550 = vsel %vm14, %v4151, 0
  %v4553 = vsel %vm14, %v4152, 0
  %v4556 = vsel %vm14, %v4153, 0
  %v4559 = vsel %vm14, %v4154, 0
  %v4562 = vsel %vm14, %v4155, 0
  %v4565 = vsel %vm14, %v4156, 0
  %v4568 = vsel %vm14, %v4157, 0
  %v4571 = vsel %vm14, %v4158, 0
  %v4574 = vsel %vm14, %v4159, 0
  %v4577 = vsel %vm14, %v4160, 0
  %v4580 = vsel %vm14, %v4161, 0
  %v4583 = vsel %vm14, %v4162, 0
  %v4586 = vsel %vm14, %v4163, 0
  %v4589 = vsel %vm14, %v4164, 0
  %v4592 = vsel %vm14, %v4165, 0
  %v4595 = vsel %vm14, %v4166, 0
  %v4598 = vsel %vm14, %v4167, 0
  %v4601 = vsel %vm14, %v4168, 0
  %v4604 = vsel %vm14, %v4169, 0
  %v4607 = vsel %vm14, %v4170, 0
  %v4610 = vsel %vm14, %v4171, 0
  %v4613 = vsel %vm328, %v4515, 0
  %4615 = vmatpush.msra.mxu0 0.0
  %4616 = vmatpush.msra.mxu0 0.0
  %4617 = vmatpush.msra.mxu0 0.0
  %4618 = vmatpush.msra.mxu0 0.0
  %4619 = vmatpush.msra.mxu0 0.0
  %4620 = vmatpush.msra.mxu0 0.0
  %4621 = vmatpush.msra.mxu0 0.0
  %4622 = vmatpush.msra.mxu0 0.0
  %4623 = vmatpush.msra.mxu0 0.0
  %4624 = vmatpush.msra.mxu0 0.0
  %4625 = vmatpush.msra.mxu0 0.0
  %4626 = vmatpush.msra.mxu0 0.0
  %4627 = vmatpush.msra.mxu0 0.0
  %4628 = vmatpush.msra.mxu0 0.0
  %4629 = vmatpush.msra.mxu0 0.0
  %4630 = vmatpush.msra.mxu0 %v4613
  %4631 = vmatmul.f32.gmra.mxu0 %v4517
  %v4632 = vpop.f32.mrf.mxu0
  %v4633 = vadd.f32 0.0, %v4632
  %4634 = vmatmul.f32.gmra.mxu0 %v4520
  %v4635 = vpop.f32.mrf.mxu0
  %v4636 = vadd.f32 0.0, %v4635
  %4637 = vmatmul.f32.gmra.mxu0 %v4523
  %v4638 = vpop.f32.mrf.mxu0
  %v4639 = vadd.f32 0.0, %v4638
  %4640 = vmatmul.f32.gmra.mxu0 %v4526
  %v4641 = vpop.f32.mrf.mxu0
  %v4642 = vadd.f32 0.0, %v4641
  %4643 = vmatmul.f32.gmra.mxu0 %v4529
  %v4644 = vpop.f32.mrf.mxu0
  %v4645 = vadd.f32 0.0, %v4644
  %4646 = vmatmul.f32.gmra.mxu0 %v4532
  %v4647 = vpop.f32.mrf.mxu0
  %v4648 = vadd.f32 0.0, %v4647
  %4649 = vmatmul.f32.gmra.mxu0 %v4535
  %v4650 = vpop.f32.mrf.mxu0
  %v4651 = vadd.f32 0.0, %v4650
  %4652 = vmatmul.f32.gmra.mxu0 %v4538
  %v4653 = vpop.f32.mrf.mxu0
  %v4654 = vadd.f32 0.0, %v4653
  %4655 = vmatmul.f32.gmra.mxu0 %v4541
  %v4656 = vpop.f32.mrf.mxu0
  %v4657 = vadd.f32 0.0, %v4656
  %4658 = vmatmul.f32.gmra.mxu0 %v4544
  %v4659 = vpop.f32.mrf.mxu0
  %v4660 = vadd.f32 0.0, %v4659
  %4661 = vmatmul.f32.gmra.mxu0 %v4547
  %v4662 = vpop.f32.mrf.mxu0
  %v4663 = vadd.f32 0.0, %v4662
  %4664 = vmatmul.f32.gmra.mxu0 %v4550
  %v4665 = vpop.f32.mrf.mxu0
  %v4666 = vadd.f32 0.0, %v4665
  %4667 = vmatmul.f32.gmra.mxu0 %v4553
  %v4668 = vpop.f32.mrf.mxu0
  %v4669 = vadd.f32 0.0, %v4668
  %4670 = vmatmul.f32.gmra.mxu0 %v4556
  %v4671 = vpop.f32.mrf.mxu0
  %v4672 = vadd.f32 0.0, %v4671
  %4673 = vmatmul.f32.gmra.mxu0 %v4559
  %v4674 = vpop.f32.mrf.mxu0
  %v4675 = vadd.f32 0.0, %v4674
  %4676 = vmatmul.f32.gmra.mxu0 %v4562
  %v4677 = vpop.f32.mrf.mxu0
  %v4678 = vadd.f32 0.0, %v4677
  %4679 = vmatmul.f32.gmra.mxu0 %v4565
  %v4680 = vpop.f32.mrf.mxu0
  %v4681 = vadd.f32 0.0, %v4680
  %4682 = vmatmul.f32.gmra.mxu0 %v4568
  %v4683 = vpop.f32.mrf.mxu0
  %v4684 = vadd.f32 0.0, %v4683
  %4685 = vmatmul.f32.gmra.mxu0 %v4571
  %v4686 = vpop.f32.mrf.mxu0
  %v4687 = vadd.f32 0.0, %v4686
  %4688 = vmatmul.f32.gmra.mxu0 %v4574
  %v4689 = vpop.f32.mrf.mxu0
  %v4690 = vadd.f32 0.0, %v4689
  %4691 = vmatmul.f32.gmra.mxu0 %v4577
  %v4692 = vpop.f32.mrf.mxu0
  %v4693 = vadd.f32 0.0, %v4692
  %4694 = vmatmul.f32.gmra.mxu0 %v4580
  %v4695 = vpop.f32.mrf.mxu0
  %v4696 = vadd.f32 0.0, %v4695
  %4697 = vmatmul.f32.gmra.mxu0 %v4583
  %v4698 = vpop.f32.mrf.mxu0
  %v4699 = vadd.f32 0.0, %v4698
  %4700 = vmatmul.f32.gmra.mxu0 %v4586
  %v4701 = vpop.f32.mrf.mxu0
  %v4702 = vadd.f32 0.0, %v4701
  %4703 = vmatmul.f32.gmra.mxu0 %v4589
  %v4704 = vpop.f32.mrf.mxu0
  %v4705 = vadd.f32 0.0, %v4704
  %4706 = vmatmul.f32.gmra.mxu0 %v4592
  %v4707 = vpop.f32.mrf.mxu0
  %v4708 = vadd.f32 0.0, %v4707
  %4709 = vmatmul.f32.gmra.mxu0 %v4595
  %v4710 = vpop.f32.mrf.mxu0
  %v4711 = vadd.f32 0.0, %v4710
  %4712 = vmatmul.f32.gmra.mxu0 %v4598
  %v4713 = vpop.f32.mrf.mxu0
  %v4714 = vadd.f32 0.0, %v4713
  %4715 = vmatmul.f32.gmra.mxu0 %v4601
  %v4716 = vpop.f32.mrf.mxu0
  %v4717 = vadd.f32 0.0, %v4716
  %4718 = vmatmul.f32.gmra.mxu0 %v4604
  %v4719 = vpop.f32.mrf.mxu0
  %v4720 = vadd.f32 0.0, %v4719
  %4721 = vmatmul.f32.gmra.mxu0 %v4607
  %v4722 = vpop.f32.mrf.mxu0
  %v4723 = vadd.f32 0.0, %v4722
  %4724 = vmatmul.f32.gmra.mxu0 %v4610
  %v4725 = vpop.f32.mrf.mxu0
  %v4726 = vadd.f32 0.0, %v4725
  %4727 = vdwg.mxu0
  %v4728 = vadd.f32 %v4482, %v4633
  %v4729 = vadd.f32 %v4483, %v4636
  %v4730 = vadd.f32 %v4484, %v4639
  %v4731 = vadd.f32 %v4485, %v4642
  %v4732 = vadd.f32 %v4486, %v4645
  %v4733 = vadd.f32 %v4487, %v4648
  %v4734 = vadd.f32 %v4488, %v4651
  %v4735 = vadd.f32 %v4489, %v4654
  %v4736 = vadd.f32 %v4490, %v4657
  %v4737 = vadd.f32 %v4491, %v4660
  %v4738 = vadd.f32 %v4492, %v4663
  %v4739 = vadd.f32 %v4493, %v4666
  %v4740 = vadd.f32 %v4494, %v4669
  %v4741 = vadd.f32 %v4495, %v4672
  %v4742 = vadd.f32 %v4496, %v4675
  %v4743 = vadd.f32 %v4497, %v4678
  %v4744 = vadd.f32 %v4498, %v4681
  %v4745 = vadd.f32 %v4499, %v4684
  %v4746 = vadd.f32 %v4500, %v4687
  %v4747 = vadd.f32 %v4501, %v4690
  %v4748 = vadd.f32 %v4502, %v4693
  %v4749 = vadd.f32 %v4503, %v4696
  %v4750 = vadd.f32 %v4504, %v4699
  %v4751 = vadd.f32 %v4505, %v4702
  %v4752 = vadd.f32 %v4506, %v4705
  %v4753 = vadd.f32 %v4507, %v4708
  %v4754 = vadd.f32 %v4508, %v4711
  %v4755 = vadd.f32 %v4509, %v4714
  %v4756 = vadd.f32 %v4510, %v4717
  %v4757 = vadd.f32 %v4511, %v4720
  %v4758 = vadd.f32 %v4512, %v4723
  %v4759 = vadd.f32 %v4513, %v4726
  %v4760 = vrot.slane %v4140, 1
  %v4761 = vrot.slane %v4141, 1
  %v4762 = vrot.slane %v4142, 1
  %v4763 = vrot.slane %v4143, 1
  %v4764 = vrot.slane %v4144, 1
  %v4765 = vrot.slane %v4145, 1
  %v4766 = vrot.slane %v4146, 1
  %v4767 = vrot.slane %v4147, 1
  %v4768 = vrot.slane %v4148, 1
  %v4769 = vrot.slane %v4149, 1
  %v4770 = vrot.slane %v4150, 1
  %v4771 = vrot.slane %v4151, 1
  %v4772 = vrot.slane %v4152, 1
  %v4773 = vrot.slane %v4153, 1
  %v4774 = vrot.slane %v4154, 1
  %v4775 = vrot.slane %v4155, 1
  %v4776 = vrot.slane %v4156, 1
  %v4777 = vrot.slane %v4157, 1
  %v4778 = vrot.slane %v4158, 1
  %v4779 = vrot.slane %v4159, 1
  %v4780 = vrot.slane %v4160, 1
  %v4781 = vrot.slane %v4161, 1
  %v4782 = vrot.slane %v4162, 1
  %v4783 = vrot.slane %v4163, 1
  %v4784 = vrot.slane %v4164, 1
  %v4785 = vrot.slane %v4165, 1
  %v4786 = vrot.slane %v4166, 1
  %v4787 = vrot.slane %v4167, 1
  %v4788 = vrot.slane %v4168, 1
  %v4789 = vrot.slane %v4169, 1
  %v4790 = vrot.slane %v4170, 1
  %v4791 = vrot.slane %v4171, 1
  %v4792 = vsel %vm689, %v4790, %v4791
  %v4793 = vsel %vm689, %v4789, %v4790
  %v4794 = vsel %vm689, %v4788, %v4789
  %v4795 = vsel %vm689, %v4787, %v4788
  %v4796 = vsel %vm689, %v4786, %v4787
  %v4797 = vsel %vm689, %v4785, %v4786
  %v4798 = vsel %vm689, %v4784, %v4785
  %v4799 = vsel %vm689, %v4783, %v4784
  %v4800 = vsel %vm689, %v4782, %v4783
  %v4801 = vsel %vm689, %v4781, %v4782
  %v4802 = vsel %vm689, %v4780, %v4781
  %v4803 = vsel %vm689, %v4779, %v4780
  %v4804 = vsel %vm689, %v4778, %v4779
  %v4805 = vsel %vm689, %v4777, %v4778
  %v4806 = vsel %vm689, %v4776, %v4777
  %v4807 = vsel %vm689, %v4775, %v4776
  %v4808 = vsel %vm689, %v4774, %v4775
  %v4809 = vsel %vm689, %v4773, %v4774
  %v4810 = vsel %vm689, %v4772, %v4773
  %v4811 = vsel %vm689, %v4771, %v4772
  %v4812 = vsel %vm689, %v4770, %v4771
  %v4813 = vsel %vm689, %v4769, %v4770
  %v4814 = vsel %vm689, %v4768, %v4769
  %v4815 = vsel %vm689, %v4767, %v4768
  %v4816 = vsel %vm689, %v4766, %v4767
  %v4817 = vsel %vm689, %v4765, %v4766
  %v4818 = vsel %vm689, %v4764, %v4765
  %v4819 = vsel %vm689, %v4763, %v4764
  %v4820 = vsel %vm689, %v4762, %v4763
  %v4821 = vsel %vm689, %v4761, %v4762
  %v4822 = vsel %vm689, %v4760, %v4761
  %v4823 = vsel %vm689, %v4791, %v4760
  %v4824 = vmul.f32 %v4822, %v33
  %v4825 = vmul.f32 %v4821, %v34
  %v4826 = vmul.f32 %v4820, %v33
  %v4827 = vmul.f32 %v4819, %v34
  %v4828 = vmul.f32 %v4818, %v33
  %v4829 = vmul.f32 %v4817, %v34
  %v4830 = vmul.f32 %v4816, %v33
  %v4831 = vmul.f32 %v4815, %v34
  %v4832 = vmul.f32 %v4814, %v33
  %v4833 = vmul.f32 %v4813, %v34
  %v4834 = vmul.f32 %v4812, %v33
  %v4835 = vmul.f32 %v4811, %v34
  %v4836 = vmul.f32 %v4810, %v33
  %v4837 = vmul.f32 %v4809, %v34
  %v4838 = vmul.f32 %v4808, %v33
  %v4839 = vmul.f32 %v4807, %v34
  %v4840 = vmul.f32 %v4806, %v33
  %v4841 = vmul.f32 %v4805, %v34
  %v4842 = vmul.f32 %v4804, %v33
  %v4843 = vmul.f32 %v4803, %v34
  %v4844 = vmul.f32 %v4802, %v33
  %v4845 = vmul.f32 %v4801, %v34
  %v4846 = vmul.f32 %v4800, %v33
  %v4847 = vmul.f32 %v4799, %v34
  %v4848 = vmul.f32 %v4798, %v33
  %v4849 = vmul.f32 %v4797, %v34
  %v4850 = vmul.f32 %v4796, %v33
  %v4851 = vmul.f32 %v4795, %v34
  %v4852 = vmul.f32 %v4794, %v33
  %v4853 = vmul.f32 %v4793, %v34
  %v4854 = vmul.f32 %v4792, %v33
  %v4855 = vmul.f32 %v4823, %v34
  %s4856 = scalar_lea.vmem %s2, 20
  %v4857 = vld [vmem:[%s4856] sm:$0xf]
  %v4859 = vsel %vm14, %v4824, 0
  %v4862 = vsel %vm14, %v4825, 0
  %v4865 = vsel %vm14, %v4826, 0
  %v4868 = vsel %vm14, %v4827, 0
  %v4871 = vsel %vm14, %v4828, 0
  %v4874 = vsel %vm14, %v4829, 0
  %v4877 = vsel %vm14, %v4830, 0
  %v4880 = vsel %vm14, %v4831, 0
  %v4883 = vsel %vm14, %v4832, 0
  %v4886 = vsel %vm14, %v4833, 0
  %v4889 = vsel %vm14, %v4834, 0
  %v4892 = vsel %vm14, %v4835, 0
  %v4895 = vsel %vm14, %v4836, 0
  %v4898 = vsel %vm14, %v4837, 0
  %v4901 = vsel %vm14, %v4838, 0
  %v4904 = vsel %vm14, %v4839, 0
  %v4907 = vsel %vm14, %v4840, 0
  %v4910 = vsel %vm14, %v4841, 0
  %v4913 = vsel %vm14, %v4842, 0
  %v4916 = vsel %vm14, %v4843, 0
  %v4919 = vsel %vm14, %v4844, 0
  %v4922 = vsel %vm14, %v4845, 0
  %v4925 = vsel %vm14, %v4846, 0
  %v4928 = vsel %vm14, %v4847, 0
  %v4931 = vsel %vm14, %v4848, 0
  %v4934 = vsel %vm14, %v4849, 0
  %v4937 = vsel %vm14, %v4850, 0
  %v4940 = vsel %vm14, %v4851, 0
  %v4943 = vsel %vm14, %v4852, 0
  %v4946 = vsel %vm14, %v4853, 0
  %v4949 = vsel %vm14, %v4854, 0
  %v4952 = vsel %vm14, %v4855, 0
  %v4955 = vsel %vm328, %v4857, 0
  %4957 = vmatpush.msra.mxu0 0.0
  %4958 = vmatpush.msra.mxu0 0.0
  %4959 = vmatpush.msra.mxu0 0.0
  %4960 = vmatpush.msra.mxu0 0.0
  %4961 = vmatpush.msra.mxu0 0.0
  %4962 = vmatpush.msra.mxu0 0.0
  %4963 = vmatpush.msra.mxu0 0.0
  %4964 = vmatpush.msra.mxu0 0.0
  %4965 = vmatpush.msra.mxu0 0.0
  %4966 = vmatpush.msra.mxu0 0.0
  %4967 = vmatpush.msra.mxu0 0.0
  %4968 = vmatpush.msra.mxu0 0.0
  %4969 = vmatpush.msra.mxu0 0.0
  %4970 = vmatpush.msra.mxu0 0.0
  %4971 = vmatpush.msra.mxu0 0.0
  %4972 = vmatpush.msra.mxu0 %v4955
  %4973 = vmatmul.f32.gmra.mxu0 %v4859
  %v4974 = vpop.f32.mrf.mxu0
  %v4975 = vadd.f32 0.0, %v4974
  %4976 = vmatmul.f32.gmra.mxu0 %v4862
  %v4977 = vpop.f32.mrf.mxu0
  %v4978 = vadd.f32 0.0, %v4977
  %4979 = vmatmul.f32.gmra.mxu0 %v4865
  %v4980 = vpop.f32.mrf.mxu0
  %v4981 = vadd.f32 0.0, %v4980
  %4982 = vmatmul.f32.gmra.mxu0 %v4868
  %v4983 = vpop.f32.mrf.mxu0
  %v4984 = vadd.f32 0.0, %v4983
  %4985 = vmatmul.f32.gmra.mxu0 %v4871
  %v4986 = vpop.f32.mrf.mxu0
  %v4987 = vadd.f32 0.0, %v4986
  %4988 = vmatmul.f32.gmra.mxu0 %v4874
  %v4989 = vpop.f32.mrf.mxu0
  %v4990 = vadd.f32 0.0, %v4989
  %4991 = vmatmul.f32.gmra.mxu0 %v4877
  %v4992 = vpop.f32.mrf.mxu0
  %v4993 = vadd.f32 0.0, %v4992
  %4994 = vmatmul.f32.gmra.mxu0 %v4880
  %v4995 = vpop.f32.mrf.mxu0
  %v4996 = vadd.f32 0.0, %v4995
  %4997 = vmatmul.f32.gmra.mxu0 %v4883
  %v4998 = vpop.f32.mrf.mxu0
  %v4999 = vadd.f32 0.0, %v4998
  %5000 = vmatmul.f32.gmra.mxu0 %v4886
  %v5001 = vpop.f32.mrf.mxu0
  %v5002 = vadd.f32 0.0, %v5001
  %5003 = vmatmul.f32.gmra.mxu0 %v4889
  %v5004 = vpop.f32.mrf.mxu0
  %v5005 = vadd.f32 0.0, %v5004
  %5006 = vmatmul.f32.gmra.mxu0 %v4892
  %v5007 = vpop.f32.mrf.mxu0
  %v5008 = vadd.f32 0.0, %v5007
  %5009 = vmatmul.f32.gmra.mxu0 %v4895
  %v5010 = vpop.f32.mrf.mxu0
  %v5011 = vadd.f32 0.0, %v5010
  %5012 = vmatmul.f32.gmra.mxu0 %v4898
  %v5013 = vpop.f32.mrf.mxu0
  %v5014 = vadd.f32 0.0, %v5013
  %5015 = vmatmul.f32.gmra.mxu0 %v4901
  %v5016 = vpop.f32.mrf.mxu0
  %v5017 = vadd.f32 0.0, %v5016
  %5018 = vmatmul.f32.gmra.mxu0 %v4904
  %v5019 = vpop.f32.mrf.mxu0
  %v5020 = vadd.f32 0.0, %v5019
  %5021 = vmatmul.f32.gmra.mxu0 %v4907
  %v5022 = vpop.f32.mrf.mxu0
  %v5023 = vadd.f32 0.0, %v5022
  %5024 = vmatmul.f32.gmra.mxu0 %v4910
  %v5025 = vpop.f32.mrf.mxu0
  %v5026 = vadd.f32 0.0, %v5025
  %5027 = vmatmul.f32.gmra.mxu0 %v4913
  %v5028 = vpop.f32.mrf.mxu0
  %v5029 = vadd.f32 0.0, %v5028
  %5030 = vmatmul.f32.gmra.mxu0 %v4916
  %v5031 = vpop.f32.mrf.mxu0
  %v5032 = vadd.f32 0.0, %v5031
  %5033 = vmatmul.f32.gmra.mxu0 %v4919
  %v5034 = vpop.f32.mrf.mxu0
  %v5035 = vadd.f32 0.0, %v5034
  %5036 = vmatmul.f32.gmra.mxu0 %v4922
  %v5037 = vpop.f32.mrf.mxu0
  %v5038 = vadd.f32 0.0, %v5037
  %5039 = vmatmul.f32.gmra.mxu0 %v4925
  %v5040 = vpop.f32.mrf.mxu0
  %v5041 = vadd.f32 0.0, %v5040
  %5042 = vmatmul.f32.gmra.mxu0 %v4928
  %v5043 = vpop.f32.mrf.mxu0
  %v5044 = vadd.f32 0.0, %v5043
  %5045 = vmatmul.f32.gmra.mxu0 %v4931
  %v5046 = vpop.f32.mrf.mxu0
  %v5047 = vadd.f32 0.0, %v5046
  %5048 = vmatmul.f32.gmra.mxu0 %v4934
  %v5049 = vpop.f32.mrf.mxu0
  %v5050 = vadd.f32 0.0, %v5049
  %5051 = vmatmul.f32.gmra.mxu0 %v4937
  %v5052 = vpop.f32.mrf.mxu0
  %v5053 = vadd.f32 0.0, %v5052
  %5054 = vmatmul.f32.gmra.mxu0 %v4940
  %v5055 = vpop.f32.mrf.mxu0
  %v5056 = vadd.f32 0.0, %v5055
  %5057 = vmatmul.f32.gmra.mxu0 %v4943
  %v5058 = vpop.f32.mrf.mxu0
  %v5059 = vadd.f32 0.0, %v5058
  %5060 = vmatmul.f32.gmra.mxu0 %v4946
  %v5061 = vpop.f32.mrf.mxu0
  %v5062 = vadd.f32 0.0, %v5061
  %5063 = vmatmul.f32.gmra.mxu0 %v4949
  %v5064 = vpop.f32.mrf.mxu0
  %v5065 = vadd.f32 0.0, %v5064
  %5066 = vmatmul.f32.gmra.mxu0 %v4952
  %v5067 = vpop.f32.mrf.mxu0
  %v5068 = vadd.f32 0.0, %v5067
  %5069 = vdwg.mxu0
  %v5070 = vadd.f32 %v4728, %v4975
  %v5071 = vadd.f32 %v4729, %v4978
  %v5072 = vadd.f32 %v4730, %v4981
  %v5073 = vadd.f32 %v4731, %v4984
  %v5074 = vadd.f32 %v4732, %v4987
  %v5075 = vadd.f32 %v4733, %v4990
  %v5076 = vadd.f32 %v4734, %v4993
  %v5077 = vadd.f32 %v4735, %v4996
  %v5078 = vadd.f32 %v4736, %v4999
  %v5079 = vadd.f32 %v4737, %v5002
  %v5080 = vadd.f32 %v4738, %v5005
  %v5081 = vadd.f32 %v4739, %v5008
  %v5082 = vadd.f32 %v4740, %v5011
  %v5083 = vadd.f32 %v4741, %v5014
  %v5084 = vadd.f32 %v4742, %v5017
  %v5085 = vadd.f32 %v4743, %v5020
  %v5086 = vadd.f32 %v4744, %v5023
  %v5087 = vadd.f32 %v4745, %v5026
  %v5088 = vadd.f32 %v4746, %v5029
  %v5089 = vadd.f32 %v4747, %v5032
  %v5090 = vadd.f32 %v4748, %v5035
  %v5091 = vadd.f32 %v4749, %v5038
  %v5092 = vadd.f32 %v4750, %v5041
  %v5093 = vadd.f32 %v4751, %v5044
  %v5094 = vadd.f32 %v4752, %v5047
  %v5095 = vadd.f32 %v4753, %v5050
  %v5096 = vadd.f32 %v4754, %v5053
  %v5097 = vadd.f32 %v4755, %v5056
  %v5098 = vadd.f32 %v4756, %v5059
  %v5099 = vadd.f32 %v4757, %v5062
  %v5100 = vadd.f32 %v4758, %v5065
  %v5101 = vadd.f32 %v4759, %v5068
  %v5102 = vld [vmem:[%s1962] sm:$0xff]
  %v5103 = vld [vmem:[%s1962 + $0x8] sm:$0xff]
  %v5104 = vld [vmem:[%s1962 + $0x10] sm:$0xff]
  %v5105 = vld [vmem:[%s1962 + $0x18] sm:$0xff]
  %v5106 = vld [vmem:[%s1962 + $0x20] sm:$0xff]
  %v5107 = vld [vmem:[%s1962 + $0x28] sm:$0xff]
  %v5108 = vld [vmem:[%s1962 + $0x30] sm:$0xff]
  %v5109 = vld [vmem:[%s1962 + $0x38] sm:$0xff]
  %v5110 = vld [vmem:[%s1962 + $0x40] sm:$0xff]
  %v5111 = vld [vmem:[%s1962 + $0x48] sm:$0xff]
  %v5112 = vld [vmem:[%s1962 + $0x50] sm:$0xff]
  %v5113 = vld [vmem:[%s1962 + $0x58] sm:$0xff]
  %v5114 = vld [vmem:[%s1962 + $0x60] sm:$0xff]
  %v5115 = vld [vmem:[%s1962 + $0x68] sm:$0xff]
  %v5116 = vld [vmem:[%s1962 + $0x70] sm:$0xff]
  %v5117 = vld [vmem:[%s1962 + $0x78] sm:$0xff]
  %v5118 = vld [vmem:[%s1962 + $0x80] sm:$0xff]
  %v5119 = vld [vmem:[%s1962 + $0x88] sm:$0xff]
  %v5120 = vld [vmem:[%s1962 + $0x90] sm:$0xff]
  %v5121 = vld [vmem:[%s1962 + $0x98] sm:$0xff]
  %v5122 = vld [vmem:[%s1962 + $0xa0] sm:$0xff]
  %v5123 = vld [vmem:[%s1962 + $0xa8] sm:$0xff]
  %v5124 = vld [vmem:[%s1962 + $0xb0] sm:$0xff]
  %v5125 = vld [vmem:[%s1962 + $0xb8] sm:$0xff]
  %v5126 = vld [vmem:[%s1962 + $0xc0] sm:$0xff]
  %v5127 = vld [vmem:[%s1962 + $0xc8] sm:$0xff]
  %v5128 = vld [vmem:[%s1962 + $0xd0] sm:$0xff]
  %v5129 = vld [vmem:[%s1962 + $0xd8] sm:$0xff]
  %v5130 = vld [vmem:[%s1962 + $0xe0] sm:$0xff]
  %v5131 = vld [vmem:[%s1962 + $0xe8] sm:$0xff]
  %v5132 = vld [vmem:[%s1962 + $0xf0] sm:$0xff]
  %v5133 = vld [vmem:[%s1962 + $0xf8] sm:$0xff]
  %v5134 = vrot.slane %v5102, 7
  %v5135 = vrot.slane %v5103, 7
  %v5136 = vrot.slane %v5104, 7
  %v5137 = vrot.slane %v5105, 7
  %v5138 = vrot.slane %v5106, 7
  %v5139 = vrot.slane %v5107, 7
  %v5140 = vrot.slane %v5108, 7
  %v5141 = vrot.slane %v5109, 7
  %v5142 = vrot.slane %v5110, 7
  %v5143 = vrot.slane %v5111, 7
  %v5144 = vrot.slane %v5112, 7
  %v5145 = vrot.slane %v5113, 7
  %v5146 = vrot.slane %v5114, 7
  %v5147 = vrot.slane %v5115, 7
  %v5148 = vrot.slane %v5116, 7
  %v5149 = vrot.slane %v5117, 7
  %v5150 = vrot.slane %v5118, 7
  %v5151 = vrot.slane %v5119, 7
  %v5152 = vrot.slane %v5120, 7
  %v5153 = vrot.slane %v5121, 7
  %v5154 = vrot.slane %v5122, 7
  %v5155 = vrot.slane %v5123, 7
  %v5156 = vrot.slane %v5124, 7
  %v5157 = vrot.slane %v5125, 7
  %v5158 = vrot.slane %v5126, 7
  %v5159 = vrot.slane %v5127, 7
  %v5160 = vrot.slane %v5128, 7
  %v5161 = vrot.slane %v5129, 7
  %v5162 = vrot.slane %v5130, 7
  %v5163 = vrot.slane %v5131, 7
  %v5164 = vrot.slane %v5132, 7
  %v5165 = vrot.slane %v5133, 7
  %v5166 = vsel %vm164, %v5164, %v5165
  %v5167 = vsel %vm164, %v5163, %v5164
  %v5168 = vsel %vm164, %v5162, %v5163
  %v5169 = vsel %vm164, %v5161, %v5162
  %v5170 = vsel %vm164, %v5160, %v5161
  %v5171 = vsel %vm164, %v5159, %v5160
  %v5172 = vsel %vm164, %v5158, %v5159
  %v5173 = vsel %vm164, %v5157, %v5158
  %v5174 = vsel %vm164, %v5156, %v5157
  %v5175 = vsel %vm164, %v5155, %v5156
  %v5176 = vsel %vm164, %v5154, %v5155
  %v5177 = vsel %vm164, %v5153, %v5154
  %v5178 = vsel %vm164, %v5152, %v5153
  %v5179 = vsel %vm164, %v5151, %v5152
  %v5180 = vsel %vm164, %v5150, %v5151
  %v5181 = vsel %vm164, %v5149, %v5150
  %v5182 = vsel %vm164, %v5148, %v5149
  %v5183 = vsel %vm164, %v5147, %v5148
  %v5184 = vsel %vm164, %v5146, %v5147
  %v5185 = vsel %vm164, %v5145, %v5146
  %v5186 = vsel %vm164, %v5144, %v5145
  %v5187 = vsel %vm164, %v5143, %v5144
  %v5188 = vsel %vm164, %v5142, %v5143
  %v5189 = vsel %vm164, %v5141, %v5142
  %v5190 = vsel %vm164, %v5140, %v5141
  %v5191 = vsel %vm164, %v5139, %v5140
  %v5192 = vsel %vm164, %v5138, %v5139
  %v5193 = vsel %vm164, %v5137, %v5138
  %v5194 = vsel %vm164, %v5136, %v5137
  %v5195 = vsel %vm164, %v5135, %v5136
  %v5196 = vsel %vm164, %v5134, %v5135
  %v5197 = vsel %vm164, %v5165, %v5134
  %v5198 = vmul.f32 %v5197, %v27
  %v5199 = vmul.f32 %v5196, %v28
  %v5200 = vmul.f32 %v5195, %v27
  %v5201 = vmul.f32 %v5194, %v28
  %v5202 = vmul.f32 %v5193, %v27
  %v5203 = vmul.f32 %v5192, %v28
  %v5204 = vmul.f32 %v5191, %v27
  %v5205 = vmul.f32 %v5190, %v28
  %v5206 = vmul.f32 %v5189, %v27
  %v5207 = vmul.f32 %v5188, %v28
  %v5208 = vmul.f32 %v5187, %v27
  %v5209 = vmul.f32 %v5186, %v28
  %v5210 = vmul.f32 %v5185, %v27
  %v5211 = vmul.f32 %v5184, %v28
  %v5212 = vmul.f32 %v5183, %v27
  %v5213 = vmul.f32 %v5182, %v28
  %v5214 = vmul.f32 %v5181, %v27
  %v5215 = vmul.f32 %v5180, %v28
  %v5216 = vmul.f32 %v5179, %v27
  %v5217 = vmul.f32 %v5178, %v28
  %v5218 = vmul.f32 %v5177, %v27
  %v5219 = vmul.f32 %v5176, %v28
  %v5220 = vmul.f32 %v5175, %v27
  %v5221 = vmul.f32 %v5174, %v28
  %v5222 = vmul.f32 %v5173, %v27
  %v5223 = vmul.f32 %v5172, %v28
  %v5224 = vmul.f32 %v5171, %v27
  %v5225 = vmul.f32 %v5170, %v28
  %v5226 = vmul.f32 %v5169, %v27
  %v5227 = vmul.f32 %v5168, %v28
  %v5228 = vmul.f32 %v5167, %v27
  %v5229 = vmul.f32 %v5166, %v28
  %s5230 = scalar_lea.vmem %s2, 24
  %v5231 = vld [vmem:[%s5230] sm:$0xf]
  %v5233 = vsel %vm14, %v5198, 0
  %v5236 = vsel %vm14, %v5199, 0
  %v5239 = vsel %vm14, %v5200, 0
  %v5242 = vsel %vm14, %v5201, 0
  %v5245 = vsel %vm14, %v5202, 0
  %v5248 = vsel %vm14, %v5203, 0
  %v5251 = vsel %vm14, %v5204, 0
  %v5254 = vsel %vm14, %v5205, 0
  %v5257 = vsel %vm14, %v5206, 0
  %v5260 = vsel %vm14, %v5207, 0
  %v5263 = vsel %vm14, %v5208, 0
  %v5266 = vsel %vm14, %v5209, 0
  %v5269 = vsel %vm14, %v5210, 0
  %v5272 = vsel %vm14, %v5211, 0
  %v5275 = vsel %vm14, %v5212, 0
  %v5278 = vsel %vm14, %v5213, 0
  %v5281 = vsel %vm14, %v5214, 0
  %v5284 = vsel %vm14, %v5215, 0
  %v5287 = vsel %vm14, %v5216, 0
  %v5290 = vsel %vm14, %v5217, 0
  %v5293 = vsel %vm14, %v5218, 0
  %v5296 = vsel %vm14, %v5219, 0
  %v5299 = vsel %vm14, %v5220, 0
  %v5302 = vsel %vm14, %v5221, 0
  %v5305 = vsel %vm14, %v5222, 0
  %v5308 = vsel %vm14, %v5223, 0
  %v5311 = vsel %vm14, %v5224, 0
  %v5314 = vsel %vm14, %v5225, 0
  %v5317 = vsel %vm14, %v5226, 0
  %v5320 = vsel %vm14, %v5227, 0
  %v5323 = vsel %vm14, %v5228, 0
  %v5326 = vsel %vm14, %v5229, 0
  %v5329 = vsel %vm328, %v5231, 0
  %5331 = vmatpush.msra.mxu0 0.0
  %5332 = vmatpush.msra.mxu0 0.0
  %5333 = vmatpush.msra.mxu0 0.0
  %5334 = vmatpush.msra.mxu0 0.0
  %5335 = vmatpush.msra.mxu0 0.0
  %5336 = vmatpush.msra.mxu0 0.0
  %5337 = vmatpush.msra.mxu0 0.0
  %5338 = vmatpush.msra.mxu0 0.0
  %5339 = vmatpush.msra.mxu0 0.0
  %5340 = vmatpush.msra.mxu0 0.0
  %5341 = vmatpush.msra.mxu0 0.0
  %5342 = vmatpush.msra.mxu0 0.0
  %5343 = vmatpush.msra.mxu0 0.0
  %5344 = vmatpush.msra.mxu0 0.0
  %5345 = vmatpush.msra.mxu0 0.0
  %5346 = vmatpush.msra.mxu0 %v5329
  %5347 = vmatmul.f32.gmra.mxu0 %v5233
  %v5348 = vpop.f32.mrf.mxu0
  %v5349 = vadd.f32 0.0, %v5348
  %5350 = vmatmul.f32.gmra.mxu0 %v5236
  %v5351 = vpop.f32.mrf.mxu0
  %v5352 = vadd.f32 0.0, %v5351
  %5353 = vmatmul.f32.gmra.mxu0 %v5239
  %v5354 = vpop.f32.mrf.mxu0
  %v5355 = vadd.f32 0.0, %v5354
  %5356 = vmatmul.f32.gmra.mxu0 %v5242
  %v5357 = vpop.f32.mrf.mxu0
  %v5358 = vadd.f32 0.0, %v5357
  %5359 = vmatmul.f32.gmra.mxu0 %v5245
  %v5360 = vpop.f32.mrf.mxu0
  %v5361 = vadd.f32 0.0, %v5360
  %5362 = vmatmul.f32.gmra.mxu0 %v5248
  %v5363 = vpop.f32.mrf.mxu0
  %v5364 = vadd.f32 0.0, %v5363
  %5365 = vmatmul.f32.gmra.mxu0 %v5251
  %v5366 = vpop.f32.mrf.mxu0
  %v5367 = vadd.f32 0.0, %v5366
  %5368 = vmatmul.f32.gmra.mxu0 %v5254
  %v5369 = vpop.f32.mrf.mxu0
  %v5370 = vadd.f32 0.0, %v5369
  %5371 = vmatmul.f32.gmra.mxu0 %v5257
  %v5372 = vpop.f32.mrf.mxu0
  %v5373 = vadd.f32 0.0, %v5372
  %5374 = vmatmul.f32.gmra.mxu0 %v5260
  %v5375 = vpop.f32.mrf.mxu0
  %v5376 = vadd.f32 0.0, %v5375
  %5377 = vmatmul.f32.gmra.mxu0 %v5263
  %v5378 = vpop.f32.mrf.mxu0
  %v5379 = vadd.f32 0.0, %v5378
  %5380 = vmatmul.f32.gmra.mxu0 %v5266
  %v5381 = vpop.f32.mrf.mxu0
  %v5382 = vadd.f32 0.0, %v5381
  %5383 = vmatmul.f32.gmra.mxu0 %v5269
  %v5384 = vpop.f32.mrf.mxu0
  %v5385 = vadd.f32 0.0, %v5384
  %5386 = vmatmul.f32.gmra.mxu0 %v5272
  %v5387 = vpop.f32.mrf.mxu0
  %v5388 = vadd.f32 0.0, %v5387
  %5389 = vmatmul.f32.gmra.mxu0 %v5275
  %v5390 = vpop.f32.mrf.mxu0
  %v5391 = vadd.f32 0.0, %v5390
  %5392 = vmatmul.f32.gmra.mxu0 %v5278
  %v5393 = vpop.f32.mrf.mxu0
  %v5394 = vadd.f32 0.0, %v5393
  %5395 = vmatmul.f32.gmra.mxu0 %v5281
  %v5396 = vpop.f32.mrf.mxu0
  %v5397 = vadd.f32 0.0, %v5396
  %5398 = vmatmul.f32.gmra.mxu0 %v5284
  %v5399 = vpop.f32.mrf.mxu0
  %v5400 = vadd.f32 0.0, %v5399
  %5401 = vmatmul.f32.gmra.mxu0 %v5287
  %v5402 = vpop.f32.mrf.mxu0
  %v5403 = vadd.f32 0.0, %v5402
  %5404 = vmatmul.f32.gmra.mxu0 %v5290
  %v5405 = vpop.f32.mrf.mxu0
  %v5406 = vadd.f32 0.0, %v5405
  %5407 = vmatmul.f32.gmra.mxu0 %v5293
  %v5408 = vpop.f32.mrf.mxu0
  %v5409 = vadd.f32 0.0, %v5408
  %5410 = vmatmul.f32.gmra.mxu0 %v5296
  %v5411 = vpop.f32.mrf.mxu0
  %v5412 = vadd.f32 0.0, %v5411
  %5413 = vmatmul.f32.gmra.mxu0 %v5299
  %v5414 = vpop.f32.mrf.mxu0
  %v5415 = vadd.f32 0.0, %v5414
  %5416 = vmatmul.f32.gmra.mxu0 %v5302
  %v5417 = vpop.f32.mrf.mxu0
  %v5418 = vadd.f32 0.0, %v5417
  %5419 = vmatmul.f32.gmra.mxu0 %v5305
  %v5420 = vpop.f32.mrf.mxu0
  %v5421 = vadd.f32 0.0, %v5420
  %5422 = vmatmul.f32.gmra.mxu0 %v5308
  %v5423 = vpop.f32.mrf.mxu0
  %v5424 = vadd.f32 0.0, %v5423
  %5425 = vmatmul.f32.gmra.mxu0 %v5311
  %v5426 = vpop.f32.mrf.mxu0
  %v5427 = vadd.f32 0.0, %v5426
  %5428 = vmatmul.f32.gmra.mxu0 %v5314
  %v5429 = vpop.f32.mrf.mxu0
  %v5430 = vadd.f32 0.0, %v5429
  %5431 = vmatmul.f32.gmra.mxu0 %v5317
  %v5432 = vpop.f32.mrf.mxu0
  %v5433 = vadd.f32 0.0, %v5432
  %5434 = vmatmul.f32.gmra.mxu0 %v5320
  %v5435 = vpop.f32.mrf.mxu0
  %v5436 = vadd.f32 0.0, %v5435
  %5437 = vmatmul.f32.gmra.mxu0 %v5323
  %v5438 = vpop.f32.mrf.mxu0
  %v5439 = vadd.f32 0.0, %v5438
  %5440 = vmatmul.f32.gmra.mxu0 %v5326
  %v5441 = vpop.f32.mrf.mxu0
  %v5442 = vadd.f32 0.0, %v5441
  %5443 = vdwg.mxu0
  %v5444 = vadd.f32 %v5070, %v5349
  %v5445 = vadd.f32 %v5071, %v5352
  %v5446 = vadd.f32 %v5072, %v5355
  %v5447 = vadd.f32 %v5073, %v5358
  %v5448 = vadd.f32 %v5074, %v5361
  %v5449 = vadd.f32 %v5075, %v5364
  %v5450 = vadd.f32 %v5076, %v5367
  %v5451 = vadd.f32 %v5077, %v5370
  %v5452 = vadd.f32 %v5078, %v5373
  %v5453 = vadd.f32 %v5079, %v5376
  %v5454 = vadd.f32 %v5080, %v5379
  %v5455 = vadd.f32 %v5081, %v5382
  %v5456 = vadd.f32 %v5082, %v5385
  %v5457 = vadd.f32 %v5083, %v5388
  %v5458 = vadd.f32 %v5084, %v5391
  %v5459 = vadd.f32 %v5085, %v5394
  %v5460 = vadd.f32 %v5086, %v5397
  %v5461 = vadd.f32 %v5087, %v5400
  %v5462 = vadd.f32 %v5088, %v5403
  %v5463 = vadd.f32 %v5089, %v5406
  %v5464 = vadd.f32 %v5090, %v5409
  %v5465 = vadd.f32 %v5091, %v5412
  %v5466 = vadd.f32 %v5092, %v5415
  %v5467 = vadd.f32 %v5093, %v5418
  %v5468 = vadd.f32 %v5094, %v5421
  %v5469 = vadd.f32 %v5095, %v5424
  %v5470 = vadd.f32 %v5096, %v5427
  %v5471 = vadd.f32 %v5097, %v5430
  %v5472 = vadd.f32 %v5098, %v5433
  %v5473 = vadd.f32 %v5099, %v5436
  %v5474 = vadd.f32 %v5100, %v5439
  %v5475 = vadd.f32 %v5101, %v5442
  %s5476 = scalar_lea.vmem %s2, 28
  %v5477 = vld [vmem:[%s5476] sm:$0xf]
  %v5479 = vsel %vm14, %v5102, 0
  %v5482 = vsel %vm14, %v5103, 0
  %v5485 = vsel %vm14, %v5104, 0
  %v5488 = vsel %vm14, %v5105, 0
  %v5491 = vsel %vm14, %v5106, 0
  %v5494 = vsel %vm14, %v5107, 0
  %v5497 = vsel %vm14, %v5108, 0
  %v5500 = vsel %vm14, %v5109, 0
  %v5503 = vsel %vm14, %v5110, 0
  %v5506 = vsel %vm14, %v5111, 0
  %v5509 = vsel %vm14, %v5112, 0
  %v5512 = vsel %vm14, %v5113, 0
  %v5515 = vsel %vm14, %v5114, 0
  %v5518 = vsel %vm14, %v5115, 0
  %v5521 = vsel %vm14, %v5116, 0
  %v5524 = vsel %vm14, %v5117, 0
  %v5527 = vsel %vm14, %v5118, 0
  %v5530 = vsel %vm14, %v5119, 0
  %v5533 = vsel %vm14, %v5120, 0
  %v5536 = vsel %vm14, %v5121, 0
  %v5539 = vsel %vm14, %v5122, 0
  %v5542 = vsel %vm14, %v5123, 0
  %v5545 = vsel %vm14, %v5124, 0
  %v5548 = vsel %vm14, %v5125, 0
  %v5551 = vsel %vm14, %v5126, 0
  %v5554 = vsel %vm14, %v5127, 0
  %v5557 = vsel %vm14, %v5128, 0
  %v5560 = vsel %vm14, %v5129, 0
  %v5563 = vsel %vm14, %v5130, 0
  %v5566 = vsel %vm14, %v5131, 0
  %v5569 = vsel %vm14, %v5132, 0
  %v5572 = vsel %vm14, %v5133, 0
  %v5575 = vsel %vm328, %v5477, 0
  %5577 = vmatpush.msra.mxu0 0.0
  %5578 = vmatpush.msra.mxu0 0.0
  %5579 = vmatpush.msra.mxu0 0.0
  %5580 = vmatpush.msra.mxu0 0.0
  %5581 = vmatpush.msra.mxu0 0.0
  %5582 = vmatpush.msra.mxu0 0.0
  %5583 = vmatpush.msra.mxu0 0.0
  %5584 = vmatpush.msra.mxu0 0.0
  %5585 = vmatpush.msra.mxu0 0.0
  %5586 = vmatpush.msra.mxu0 0.0
  %5587 = vmatpush.msra.mxu0 0.0
  %5588 = vmatpush.msra.mxu0 0.0
  %5589 = vmatpush.msra.mxu0 0.0
  %5590 = vmatpush.msra.mxu0 0.0
  %5591 = vmatpush.msra.mxu0 0.0
  %5592 = vmatpush.msra.mxu0 %v5575
  %5593 = vmatmul.f32.gmra.mxu0 %v5479
  %v5594 = vpop.f32.mrf.mxu0
  %v5595 = vadd.f32 0.0, %v5594
  %5596 = vmatmul.f32.gmra.mxu0 %v5482
  %v5597 = vpop.f32.mrf.mxu0
  %v5598 = vadd.f32 0.0, %v5597
  %5599 = vmatmul.f32.gmra.mxu0 %v5485
  %v5600 = vpop.f32.mrf.mxu0
  %v5601 = vadd.f32 0.0, %v5600
  %5602 = vmatmul.f32.gmra.mxu0 %v5488
  %v5603 = vpop.f32.mrf.mxu0
  %v5604 = vadd.f32 0.0, %v5603
  %5605 = vmatmul.f32.gmra.mxu0 %v5491
  %v5606 = vpop.f32.mrf.mxu0
  %v5607 = vadd.f32 0.0, %v5606
  %5608 = vmatmul.f32.gmra.mxu0 %v5494
  %v5609 = vpop.f32.mrf.mxu0
  %v5610 = vadd.f32 0.0, %v5609
  %5611 = vmatmul.f32.gmra.mxu0 %v5497
  %v5612 = vpop.f32.mrf.mxu0
  %v5613 = vadd.f32 0.0, %v5612
  %5614 = vmatmul.f32.gmra.mxu0 %v5500
  %v5615 = vpop.f32.mrf.mxu0
  %v5616 = vadd.f32 0.0, %v5615
  %5617 = vmatmul.f32.gmra.mxu0 %v5503
  %v5618 = vpop.f32.mrf.mxu0
  %v5619 = vadd.f32 0.0, %v5618
  %5620 = vmatmul.f32.gmra.mxu0 %v5506
  %v5621 = vpop.f32.mrf.mxu0
  %v5622 = vadd.f32 0.0, %v5621
  %5623 = vmatmul.f32.gmra.mxu0 %v5509
  %v5624 = vpop.f32.mrf.mxu0
  %v5625 = vadd.f32 0.0, %v5624
  %5626 = vmatmul.f32.gmra.mxu0 %v5512
  %v5627 = vpop.f32.mrf.mxu0
  %v5628 = vadd.f32 0.0, %v5627
  %5629 = vmatmul.f32.gmra.mxu0 %v5515
  %v5630 = vpop.f32.mrf.mxu0
  %v5631 = vadd.f32 0.0, %v5630
  %5632 = vmatmul.f32.gmra.mxu0 %v5518
  %v5633 = vpop.f32.mrf.mxu0
  %v5634 = vadd.f32 0.0, %v5633
  %5635 = vmatmul.f32.gmra.mxu0 %v5521
  %v5636 = vpop.f32.mrf.mxu0
  %v5637 = vadd.f32 0.0, %v5636
  %5638 = vmatmul.f32.gmra.mxu0 %v5524
  %v5639 = vpop.f32.mrf.mxu0
  %v5640 = vadd.f32 0.0, %v5639
  %5641 = vmatmul.f32.gmra.mxu0 %v5527
  %v5642 = vpop.f32.mrf.mxu0
  %v5643 = vadd.f32 0.0, %v5642
  %5644 = vmatmul.f32.gmra.mxu0 %v5530
  %v5645 = vpop.f32.mrf.mxu0
  %v5646 = vadd.f32 0.0, %v5645
  %5647 = vmatmul.f32.gmra.mxu0 %v5533
  %v5648 = vpop.f32.mrf.mxu0
  %v5649 = vadd.f32 0.0, %v5648
  %5650 = vmatmul.f32.gmra.mxu0 %v5536
  %v5651 = vpop.f32.mrf.mxu0
  %v5652 = vadd.f32 0.0, %v5651
  %5653 = vmatmul.f32.gmra.mxu0 %v5539
  %v5654 = vpop.f32.mrf.mxu0
  %v5655 = vadd.f32 0.0, %v5654
  %5656 = vmatmul.f32.gmra.mxu0 %v5542
  %v5657 = vpop.f32.mrf.mxu0
  %v5658 = vadd.f32 0.0, %v5657
  %5659 = vmatmul.f32.gmra.mxu0 %v5545
  %v5660 = vpop.f32.mrf.mxu0
  %v5661 = vadd.f32 0.0, %v5660
  %5662 = vmatmul.f32.gmra.mxu0 %v5548
  %v5663 = vpop.f32.mrf.mxu0
  %v5664 = vadd.f32 0.0, %v5663
  %5665 = vmatmul.f32.gmra.mxu0 %v5551
  %v5666 = vpop.f32.mrf.mxu0
  %v5667 = vadd.f32 0.0, %v5666
  %5668 = vmatmul.f32.gmra.mxu0 %v5554
  %v5669 = vpop.f32.mrf.mxu0
  %v5670 = vadd.f32 0.0, %v5669
  %5671 = vmatmul.f32.gmra.mxu0 %v5557
  %v5672 = vpop.f32.mrf.mxu0
  %v5673 = vadd.f32 0.0, %v5672
  %5674 = vmatmul.f32.gmra.mxu0 %v5560
  %v5675 = vpop.f32.mrf.mxu0
  %v5676 = vadd.f32 0.0, %v5675
  %5677 = vmatmul.f32.gmra.mxu0 %v5563
  %v5678 = vpop.f32.mrf.mxu0
  %v5679 = vadd.f32 0.0, %v5678
  %5680 = vmatmul.f32.gmra.mxu0 %v5566
  %v5681 = vpop.f32.mrf.mxu0
  %v5682 = vadd.f32 0.0, %v5681
  %5683 = vmatmul.f32.gmra.mxu0 %v5569
  %v5684 = vpop.f32.mrf.mxu0
  %v5685 = vadd.f32 0.0, %v5684
  %5686 = vmatmul.f32.gmra.mxu0 %v5572
  %v5687 = vpop.f32.mrf.mxu0
  %v5688 = vadd.f32 0.0, %v5687
  %5689 = vdwg.mxu0
  %v5690 = vadd.f32 %v5444, %v5595
  %v5691 = vadd.f32 %v5445, %v5598
  %v5692 = vadd.f32 %v5446, %v5601
  %v5693 = vadd.f32 %v5447, %v5604
  %v5694 = vadd.f32 %v5448, %v5607
  %v5695 = vadd.f32 %v5449, %v5610
  %v5696 = vadd.f32 %v5450, %v5613
  %v5697 = vadd.f32 %v5451, %v5616
  %v5698 = vadd.f32 %v5452, %v5619
  %v5699 = vadd.f32 %v5453, %v5622
  %v5700 = vadd.f32 %v5454, %v5625
  %v5701 = vadd.f32 %v5455, %v5628
  %v5702 = vadd.f32 %v5456, %v5631
  %v5703 = vadd.f32 %v5457, %v5634
  %v5704 = vadd.f32 %v5458, %v5637
  %v5705 = vadd.f32 %v5459, %v5640
  %v5706 = vadd.f32 %v5460, %v5643
  %v5707 = vadd.f32 %v5461, %v5646
  %v5708 = vadd.f32 %v5462, %v5649
  %v5709 = vadd.f32 %v5463, %v5652
  %v5710 = vadd.f32 %v5464, %v5655
  %v5711 = vadd.f32 %v5465, %v5658
  %v5712 = vadd.f32 %v5466, %v5661
  %v5713 = vadd.f32 %v5467, %v5664
  %v5714 = vadd.f32 %v5468, %v5667
  %v5715 = vadd.f32 %v5469, %v5670
  %v5716 = vadd.f32 %v5470, %v5673
  %v5717 = vadd.f32 %v5471, %v5676
  %v5718 = vadd.f32 %v5472, %v5679
  %v5719 = vadd.f32 %v5473, %v5682
  %v5720 = vadd.f32 %v5474, %v5685
  %v5721 = vadd.f32 %v5475, %v5688
  %v5722 = vrot.slane %v5102, 1
  %v5723 = vrot.slane %v5103, 1
  %v5724 = vrot.slane %v5104, 1
  %v5725 = vrot.slane %v5105, 1
  %v5726 = vrot.slane %v5106, 1
  %v5727 = vrot.slane %v5107, 1
  %v5728 = vrot.slane %v5108, 1
  %v5729 = vrot.slane %v5109, 1
  %v5730 = vrot.slane %v5110, 1
  %v5731 = vrot.slane %v5111, 1
  %v5732 = vrot.slane %v5112, 1
  %v5733 = vrot.slane %v5113, 1
  %v5734 = vrot.slane %v5114, 1
  %v5735 = vrot.slane %v5115, 1
  %v5736 = vrot.slane %v5116, 1
  %v5737 = vrot.slane %v5117, 1
  %v5738 = vrot.slane %v5118, 1
  %v5739 = vrot.slane %v5119, 1
  %v5740 = vrot.slane %v5120, 1
  %v5741 = vrot.slane %v5121, 1
  %v5742 = vrot.slane %v5122, 1
  %v5743 = vrot.slane %v5123, 1
  %v5744 = vrot.slane %v5124, 1
  %v5745 = vrot.slane %v5125, 1
  %v5746 = vrot.slane %v5126, 1
  %v5747 = vrot.slane %v5127, 1
  %v5748 = vrot.slane %v5128, 1
  %v5749 = vrot.slane %v5129, 1
  %v5750 = vrot.slane %v5130, 1
  %v5751 = vrot.slane %v5131, 1
  %v5752 = vrot.slane %v5132, 1
  %v5753 = vrot.slane %v5133, 1
  %v5754 = vsel %vm689, %v5752, %v5753
  %v5755 = vsel %vm689, %v5751, %v5752
  %v5756 = vsel %vm689, %v5750, %v5751
  %v5757 = vsel %vm689, %v5749, %v5750
  %v5758 = vsel %vm689, %v5748, %v5749
  %v5759 = vsel %vm689, %v5747, %v5748
  %v5760 = vsel %vm689, %v5746, %v5747
  %v5761 = vsel %vm689, %v5745, %v5746
  %v5762 = vsel %vm689, %v5744, %v5745
  %v5763 = vsel %vm689, %v5743, %v5744
  %v5764 = vsel %vm689, %v5742, %v5743
  %v5765 = vsel %vm689, %v5741, %v5742
  %v5766 = vsel %vm689, %v5740, %v5741
  %v5767 = vsel %vm689, %v5739, %v5740
  %v5768 = vsel %vm689, %v5738, %v5739
  %v5769 = vsel %vm689, %v5737, %v5738
  %v5770 = vsel %vm689, %v5736, %v5737
  %v5771 = vsel %vm689, %v5735, %v5736
  %v5772 = vsel %vm689, %v5734, %v5735
  %v5773 = vsel %vm689, %v5733, %v5734
  %v5774 = vsel %vm689, %v5732, %v5733
  %v5775 = vsel %vm689, %v5731, %v5732
  %v5776 = vsel %vm689, %v5730, %v5731
  %v5777 = vsel %vm689, %v5729, %v5730
  %v5778 = vsel %vm689, %v5728, %v5729
  %v5779 = vsel %vm689, %v5727, %v5728
  %v5780 = vsel %vm689, %v5726, %v5727
  %v5781 = vsel %vm689, %v5725, %v5726
  %v5782 = vsel %vm689, %v5724, %v5725
  %v5783 = vsel %vm689, %v5723, %v5724
  %v5784 = vsel %vm689, %v5722, %v5723
  %v5785 = vsel %vm689, %v5753, %v5722
  %v5786 = vmul.f32 %v5784, %v33
  %v5787 = vmul.f32 %v5783, %v34
  %v5788 = vmul.f32 %v5782, %v33
  %v5789 = vmul.f32 %v5781, %v34
  %v5790 = vmul.f32 %v5780, %v33
  %v5791 = vmul.f32 %v5779, %v34
  %v5792 = vmul.f32 %v5778, %v33
  %v5793 = vmul.f32 %v5777, %v34
  %v5794 = vmul.f32 %v5776, %v33
  %v5795 = vmul.f32 %v5775, %v34
  %v5796 = vmul.f32 %v5774, %v33
  %v5797 = vmul.f32 %v5773, %v34
  %v5798 = vmul.f32 %v5772, %v33
  %v5799 = vmul.f32 %v5771, %v34
  %v5800 = vmul.f32 %v5770, %v33
  %v5801 = vmul.f32 %v5769, %v34
  %v5802 = vmul.f32 %v5768, %v33
  %v5803 = vmul.f32 %v5767, %v34
  %v5804 = vmul.f32 %v5766, %v33
  %v5805 = vmul.f32 %v5765, %v34
  %v5806 = vmul.f32 %v5764, %v33
  %v5807 = vmul.f32 %v5763, %v34
  %v5808 = vmul.f32 %v5762, %v33
  %v5809 = vmul.f32 %v5761, %v34
  %v5810 = vmul.f32 %v5760, %v33
  %v5811 = vmul.f32 %v5759, %v34
  %v5812 = vmul.f32 %v5758, %v33
  %v5813 = vmul.f32 %v5757, %v34
  %v5814 = vmul.f32 %v5756, %v33
  %v5815 = vmul.f32 %v5755, %v34
  %v5816 = vmul.f32 %v5754, %v33
  %v5817 = vmul.f32 %v5785, %v34
  %s5818 = scalar_lea.vmem %s2, 32
  %v5819 = vld [vmem:[%s5818] sm:$0xf]
  %v5821 = vsel %vm14, %v5786, 0
  %v5824 = vsel %vm14, %v5787, 0
  %v5827 = vsel %vm14, %v5788, 0
  %v5830 = vsel %vm14, %v5789, 0
  %v5833 = vsel %vm14, %v5790, 0
  %v5836 = vsel %vm14, %v5791, 0
  %v5839 = vsel %vm14, %v5792, 0
  %v5842 = vsel %vm14, %v5793, 0
  %v5845 = vsel %vm14, %v5794, 0
  %v5848 = vsel %vm14, %v5795, 0
  %v5851 = vsel %vm14, %v5796, 0
  %v5854 = vsel %vm14, %v5797, 0
  %v5857 = vsel %vm14, %v5798, 0
  %v5860 = vsel %vm14, %v5799, 0
  %v5863 = vsel %vm14, %v5800, 0
  %v5866 = vsel %vm14, %v5801, 0
  %v5869 = vsel %vm14, %v5802, 0
  %v5872 = vsel %vm14, %v5803, 0
  %v5875 = vsel %vm14, %v5804, 0
  %v5878 = vsel %vm14, %v5805, 0
  %v5881 = vsel %vm14, %v5806, 0
  %v5884 = vsel %vm14, %v5807, 0
  %v5887 = vsel %vm14, %v5808, 0
  %v5890 = vsel %vm14, %v5809, 0
  %v5893 = vsel %vm14, %v5810, 0
  %v5896 = vsel %vm14, %v5811, 0
  %v5899 = vsel %vm14, %v5812, 0
  %v5902 = vsel %vm14, %v5813, 0
  %v5905 = vsel %vm14, %v5814, 0
  %v5908 = vsel %vm14, %v5815, 0
  %v5911 = vsel %vm14, %v5816, 0
  %v5914 = vsel %vm14, %v5817, 0
  %v5917 = vsel %vm328, %v5819, 0
  %5919 = vmatpush.msra.mxu0 0.0
  %5920 = vmatpush.msra.mxu0 0.0
  %5921 = vmatpush.msra.mxu0 0.0
  %5922 = vmatpush.msra.mxu0 0.0
  %5923 = vmatpush.msra.mxu0 0.0
  %5924 = vmatpush.msra.mxu0 0.0
  %5925 = vmatpush.msra.mxu0 0.0
  %5926 = vmatpush.msra.mxu0 0.0
  %5927 = vmatpush.msra.mxu0 0.0
  %5928 = vmatpush.msra.mxu0 0.0
  %5929 = vmatpush.msra.mxu0 0.0
  %5930 = vmatpush.msra.mxu0 0.0
  %5931 = vmatpush.msra.mxu0 0.0
  %5932 = vmatpush.msra.mxu0 0.0
  %5933 = vmatpush.msra.mxu0 0.0
  %5934 = vmatpush.msra.mxu0 %v5917
  %5935 = vmatmul.f32.gmra.mxu0 %v5821
  %v5936 = vpop.f32.mrf.mxu0
  %v5937 = vadd.f32 0.0, %v5936
  %5938 = vmatmul.f32.gmra.mxu0 %v5824
  %v5939 = vpop.f32.mrf.mxu0
  %v5940 = vadd.f32 0.0, %v5939
  %5941 = vmatmul.f32.gmra.mxu0 %v5827
  %v5942 = vpop.f32.mrf.mxu0
  %v5943 = vadd.f32 0.0, %v5942
  %5944 = vmatmul.f32.gmra.mxu0 %v5830
  %v5945 = vpop.f32.mrf.mxu0
  %v5946 = vadd.f32 0.0, %v5945
  %5947 = vmatmul.f32.gmra.mxu0 %v5833
  %v5948 = vpop.f32.mrf.mxu0
  %v5949 = vadd.f32 0.0, %v5948
  %5950 = vmatmul.f32.gmra.mxu0 %v5836
  %v5951 = vpop.f32.mrf.mxu0
  %v5952 = vadd.f32 0.0, %v5951
  %5953 = vmatmul.f32.gmra.mxu0 %v5839
  %v5954 = vpop.f32.mrf.mxu0
  %v5955 = vadd.f32 0.0, %v5954
  %5956 = vmatmul.f32.gmra.mxu0 %v5842
  %v5957 = vpop.f32.mrf.mxu0
  %v5958 = vadd.f32 0.0, %v5957
  %5959 = vmatmul.f32.gmra.mxu0 %v5845
  %v5960 = vpop.f32.mrf.mxu0
  %v5961 = vadd.f32 0.0, %v5960
  %5962 = vmatmul.f32.gmra.mxu0 %v5848
  %v5963 = vpop.f32.mrf.mxu0
  %v5964 = vadd.f32 0.0, %v5963
  %5965 = vmatmul.f32.gmra.mxu0 %v5851
  %v5966 = vpop.f32.mrf.mxu0
  %v5967 = vadd.f32 0.0, %v5966
  %5968 = vmatmul.f32.gmra.mxu0 %v5854
  %v5969 = vpop.f32.mrf.mxu0
  %v5970 = vadd.f32 0.0, %v5969
  %5971 = vmatmul.f32.gmra.mxu0 %v5857
  %v5972 = vpop.f32.mrf.mxu0
  %v5973 = vadd.f32 0.0, %v5972
  %5974 = vmatmul.f32.gmra.mxu0 %v5860
  %v5975 = vpop.f32.mrf.mxu0
  %v5976 = vadd.f32 0.0, %v5975
  %5977 = vmatmul.f32.gmra.mxu0 %v5863
  %v5978 = vpop.f32.mrf.mxu0
  %v5979 = vadd.f32 0.0, %v5978
  %5980 = vmatmul.f32.gmra.mxu0 %v5866
  %v5981 = vpop.f32.mrf.mxu0
  %v5982 = vadd.f32 0.0, %v5981
  %5983 = vmatmul.f32.gmra.mxu0 %v5869
  %v5984 = vpop.f32.mrf.mxu0
  %v5985 = vadd.f32 0.0, %v5984
  %5986 = vmatmul.f32.gmra.mxu0 %v5872
  %v5987 = vpop.f32.mrf.mxu0
  %v5988 = vadd.f32 0.0, %v5987
  %5989 = vmatmul.f32.gmra.mxu0 %v5875
  %v5990 = vpop.f32.mrf.mxu0
  %v5991 = vadd.f32 0.0, %v5990
  %5992 = vmatmul.f32.gmra.mxu0 %v5878
  %v5993 = vpop.f32.mrf.mxu0
  %v5994 = vadd.f32 0.0, %v5993
  %5995 = vmatmul.f32.gmra.mxu0 %v5881
  %v5996 = vpop.f32.mrf.mxu0
  %v5997 = vadd.f32 0.0, %v5996
  %5998 = vmatmul.f32.gmra.mxu0 %v5884
  %v5999 = vpop.f32.mrf.mxu0
  %v6000 = vadd.f32 0.0, %v5999
  %6001 = vmatmul.f32.gmra.mxu0 %v5887
  %v6002 = vpop.f32.mrf.mxu0
  %v6003 = vadd.f32 0.0, %v6002
  %6004 = vmatmul.f32.gmra.mxu0 %v5890
  %v6005 = vpop.f32.mrf.mxu0
  %v6006 = vadd.f32 0.0, %v6005
  %6007 = vmatmul.f32.gmra.mxu0 %v5893
  %v6008 = vpop.f32.mrf.mxu0
  %v6009 = vadd.f32 0.0, %v6008
  %6010 = vmatmul.f32.gmra.mxu0 %v5896
  %v6011 = vpop.f32.mrf.mxu0
  %v6012 = vadd.f32 0.0, %v6011
  %6013 = vmatmul.f32.gmra.mxu0 %v5899
  %v6014 = vpop.f32.mrf.mxu0
  %v6015 = vadd.f32 0.0, %v6014
  %6016 = vmatmul.f32.gmra.mxu0 %v5902
  %v6017 = vpop.f32.mrf.mxu0
  %v6018 = vadd.f32 0.0, %v6017
  %6019 = vmatmul.f32.gmra.mxu0 %v5905
  %v6020 = vpop.f32.mrf.mxu0
  %v6021 = vadd.f32 0.0, %v6020
  %6022 = vmatmul.f32.gmra.mxu0 %v5908
  %v6023 = vpop.f32.mrf.mxu0
  %v6024 = vadd.f32 0.0, %v6023
  %6025 = vmatmul.f32.gmra.mxu0 %v5911
  %v6026 = vpop.f32.mrf.mxu0
  %v6027 = vadd.f32 0.0, %v6026
  %6028 = vmatmul.f32.gmra.mxu0 %v5914
  %v6029 = vpop.f32.mrf.mxu0
  %v6030 = vadd.f32 0.0, %v6029
  %6031 = vdwg.mxu0
  %v6032 = vadd.f32 %v5690, %v5937
  %v6033 = vadd.f32 %v5691, %v5940
  %v6034 = vadd.f32 %v5692, %v5943
  %v6035 = vadd.f32 %v5693, %v5946
  %v6036 = vadd.f32 %v5694, %v5949
  %v6037 = vadd.f32 %v5695, %v5952
  %v6038 = vadd.f32 %v5696, %v5955
  %v6039 = vadd.f32 %v5697, %v5958
  %v6040 = vadd.f32 %v5698, %v5961
  %v6041 = vadd.f32 %v5699, %v5964
  %v6042 = vadd.f32 %v5700, %v5967
  %v6043 = vadd.f32 %v5701, %v5970
  %v6044 = vadd.f32 %v5702, %v5973
  %v6045 = vadd.f32 %v5703, %v5976
  %v6046 = vadd.f32 %v5704, %v5979
  %v6047 = vadd.f32 %v5705, %v5982
  %v6048 = vadd.f32 %v5706, %v5985
  %v6049 = vadd.f32 %v5707, %v5988
  %v6050 = vadd.f32 %v5708, %v5991
  %v6051 = vadd.f32 %v5709, %v5994
  %v6052 = vadd.f32 %v5710, %v5997
  %v6053 = vadd.f32 %v5711, %v6000
  %v6054 = vadd.f32 %v5712, %v6003
  %v6055 = vadd.f32 %v5713, %v6006
  %v6056 = vadd.f32 %v5714, %v6009
  %v6057 = vadd.f32 %v5715, %v6012
  %v6058 = vadd.f32 %v5716, %v6015
  %v6059 = vadd.f32 %v5717, %v6018
  %v6060 = vadd.f32 %v5718, %v6021
  %v6061 = vadd.f32 %v5719, %v6024
  %v6062 = vadd.f32 %v5720, %v6027
  %v6063 = vadd.f32 %v5721, %v6030
  %v6064 = vsel %vm14, %v6032, 0.0
  %v6065 = vsel %vm14, %v6033, 0.0
  %v6066 = vadd.f32 %v6064, %v6065
  %v6067 = vsel %vm14, %v6034, 0.0
  %v6068 = vadd.f32 %v6066, %v6067
  %v6069 = vsel %vm14, %v6035, 0.0
  %v6070 = vadd.f32 %v6068, %v6069
  %v6071 = vsel %vm14, %v6036, 0.0
  %v6072 = vadd.f32 %v6070, %v6071
  %v6073 = vsel %vm14, %v6037, 0.0
  %v6074 = vadd.f32 %v6072, %v6073
  %v6075 = vsel %vm14, %v6038, 0.0
  %v6076 = vadd.f32 %v6074, %v6075
  %v6077 = vsel %vm14, %v6039, 0.0
  %v6078 = vadd.f32 %v6076, %v6077
  %v6079 = vsel %vm14, %v6040, 0.0
  %v6080 = vadd.f32 %v6078, %v6079
  %v6081 = vsel %vm14, %v6041, 0.0
  %v6082 = vadd.f32 %v6080, %v6081
  %v6083 = vsel %vm14, %v6042, 0.0
  %v6084 = vadd.f32 %v6082, %v6083
  %v6085 = vsel %vm14, %v6043, 0.0
  %v6086 = vadd.f32 %v6084, %v6085
  %v6087 = vsel %vm14, %v6044, 0.0
  %v6088 = vadd.f32 %v6086, %v6087
  %v6089 = vsel %vm14, %v6045, 0.0
  %v6090 = vadd.f32 %v6088, %v6089
  %v6091 = vsel %vm14, %v6046, 0.0
  %v6092 = vadd.f32 %v6090, %v6091
  %v6093 = vsel %vm14, %v6047, 0.0
  %v6094 = vadd.f32 %v6092, %v6093
  %v6095 = vsel %vm14, %v6048, 0.0
  %v6096 = vadd.f32 %v6094, %v6095
  %v6097 = vsel %vm14, %v6049, 0.0
  %v6098 = vadd.f32 %v6096, %v6097
  %v6099 = vsel %vm14, %v6050, 0.0
  %v6100 = vadd.f32 %v6098, %v6099
  %v6101 = vsel %vm14, %v6051, 0.0
  %v6102 = vadd.f32 %v6100, %v6101
  %v6103 = vsel %vm14, %v6052, 0.0
  %v6104 = vadd.f32 %v6102, %v6103
  %v6105 = vsel %vm14, %v6053, 0.0
  %v6106 = vadd.f32 %v6104, %v6105
  %v6107 = vsel %vm14, %v6054, 0.0
  %v6108 = vadd.f32 %v6106, %v6107
  %v6109 = vsel %vm14, %v6055, 0.0
  %v6110 = vadd.f32 %v6108, %v6109
  %v6111 = vsel %vm14, %v6056, 0.0
  %v6112 = vadd.f32 %v6110, %v6111
  %v6113 = vsel %vm14, %v6057, 0.0
  %v6114 = vadd.f32 %v6112, %v6113
  %v6115 = vsel %vm14, %v6058, 0.0
  %v6116 = vadd.f32 %v6114, %v6115
  %v6117 = vsel %vm14, %v6059, 0.0
  %v6118 = vadd.f32 %v6116, %v6117
  %v6119 = vsel %vm14, %v6060, 0.0
  %v6120 = vadd.f32 %v6118, %v6119
  %v6121 = vsel %vm14, %v6061, 0.0
  %v6122 = vadd.f32 %v6120, %v6121
  %v6123 = vsel %vm14, %v6062, 0.0
  %v6124 = vadd.f32 %v6122, %v6123
  %v6125 = vsel %vm14, %v6063, 0.0
  %v6126 = vadd.f32 %v6124, %v6125
  %v6127 = vrot.slane %v6126, 4
  %v6128 = vadd.f32 %v6126, %v6127
  %v6129 = vrot.slane %v6128, 2
  %v6130 = vadd.f32 %v6128, %v6129
  %v6131 = vrot.slane %v6130, 1
  %v6132 = vadd.f32 %v6130, %v6131
  %v6133 = vmul.f32 %v6132, %v3000
  %v6134 = vsub.f32 %v6032, %v6133
  %v6135 = vsub.f32 %v6033, %v6133
  %v6136 = vsub.f32 %v6034, %v6133
  %v6137 = vsub.f32 %v6035, %v6133
  %v6138 = vsub.f32 %v6036, %v6133
  %v6139 = vsub.f32 %v6037, %v6133
  %v6140 = vsub.f32 %v6038, %v6133
  %v6141 = vsub.f32 %v6039, %v6133
  %v6142 = vsub.f32 %v6040, %v6133
  %v6143 = vsub.f32 %v6041, %v6133
  %v6144 = vsub.f32 %v6042, %v6133
  %v6145 = vsub.f32 %v6043, %v6133
  %v6146 = vsub.f32 %v6044, %v6133
  %v6147 = vsub.f32 %v6045, %v6133
  %v6148 = vsub.f32 %v6046, %v6133
  %v6149 = vsub.f32 %v6047, %v6133
  %v6150 = vsub.f32 %v6048, %v6133
  %v6151 = vsub.f32 %v6049, %v6133
  %v6152 = vsub.f32 %v6050, %v6133
  %v6153 = vsub.f32 %v6051, %v6133
  %v6154 = vsub.f32 %v6052, %v6133
  %v6155 = vsub.f32 %v6053, %v6133
  %v6156 = vsub.f32 %v6054, %v6133
  %v6157 = vsub.f32 %v6055, %v6133
  %v6158 = vsub.f32 %v6056, %v6133
  %v6159 = vsub.f32 %v6057, %v6133
  %v6160 = vsub.f32 %v6058, %v6133
  %v6161 = vsub.f32 %v6059, %v6133
  %v6162 = vsub.f32 %v6060, %v6133
  %v6163 = vsub.f32 %v6061, %v6133
  %v6164 = vsub.f32 %v6062, %v6133
  %v6165 = vsub.f32 %v6063, %v6133
  %v6166 = vmul.f32 %v6134, %v6134
  %v6167 = vmul.f32 %v6135, %v6135
  %v6168 = vmul.f32 %v6136, %v6136
  %v6169 = vmul.f32 %v6137, %v6137
  %v6170 = vmul.f32 %v6138, %v6138
  %v6171 = vmul.f32 %v6139, %v6139
  %v6172 = vmul.f32 %v6140, %v6140
  %v6173 = vmul.f32 %v6141, %v6141
  %v6174 = vmul.f32 %v6142, %v6142
  %v6175 = vmul.f32 %v6143, %v6143
  %v6176 = vmul.f32 %v6144, %v6144
  %v6177 = vmul.f32 %v6145, %v6145
  %v6178 = vmul.f32 %v6146, %v6146
  %v6179 = vmul.f32 %v6147, %v6147
  %v6180 = vmul.f32 %v6148, %v6148
  %v6181 = vmul.f32 %v6149, %v6149
  %v6182 = vmul.f32 %v6150, %v6150
  %v6183 = vmul.f32 %v6151, %v6151
  %v6184 = vmul.f32 %v6152, %v6152
  %v6185 = vmul.f32 %v6153, %v6153
  %v6186 = vmul.f32 %v6154, %v6154
  %v6187 = vmul.f32 %v6155, %v6155
  %v6188 = vmul.f32 %v6156, %v6156
  %v6189 = vmul.f32 %v6157, %v6157
  %v6190 = vmul.f32 %v6158, %v6158
  %v6191 = vmul.f32 %v6159, %v6159
  %v6192 = vmul.f32 %v6160, %v6160
  %v6193 = vmul.f32 %v6161, %v6161
  %v6194 = vmul.f32 %v6162, %v6162
  %v6195 = vmul.f32 %v6163, %v6163
  %v6196 = vmul.f32 %v6164, %v6164
  %v6197 = vmul.f32 %v6165, %v6165
  %v6198 = vsel %vm14, %v6166, 0.0
  %v6199 = vsel %vm14, %v6167, 0.0
  %v6200 = vadd.f32 %v6198, %v6199
  %v6201 = vsel %vm14, %v6168, 0.0
  %v6202 = vadd.f32 %v6200, %v6201
  %v6203 = vsel %vm14, %v6169, 0.0
  %v6204 = vadd.f32 %v6202, %v6203
  %v6205 = vsel %vm14, %v6170, 0.0
  %v6206 = vadd.f32 %v6204, %v6205
  %v6207 = vsel %vm14, %v6171, 0.0
  %v6208 = vadd.f32 %v6206, %v6207
  %v6209 = vsel %vm14, %v6172, 0.0
  %v6210 = vadd.f32 %v6208, %v6209
  %v6211 = vsel %vm14, %v6173, 0.0
  %v6212 = vadd.f32 %v6210, %v6211
  %v6213 = vsel %vm14, %v6174, 0.0
  %v6214 = vadd.f32 %v6212, %v6213
  %v6215 = vsel %vm14, %v6175, 0.0
  %v6216 = vadd.f32 %v6214, %v6215
  %v6217 = vsel %vm14, %v6176, 0.0
  %v6218 = vadd.f32 %v6216, %v6217
  %v6219 = vsel %vm14, %v6177, 0.0
  %v6220 = vadd.f32 %v6218, %v6219
  %v6221 = vsel %vm14, %v6178, 0.0
  %v6222 = vadd.f32 %v6220, %v6221
  %v6223 = vsel %vm14, %v6179, 0.0
  %v6224 = vadd.f32 %v6222, %v6223
  %v6225 = vsel %vm14, %v6180, 0.0
  %v6226 = vadd.f32 %v6224, %v6225
  %v6227 = vsel %vm14, %v6181, 0.0
  %v6228 = vadd.f32 %v6226, %v6227
  %v6229 = vsel %vm14, %v6182, 0.0
  %v6230 = vadd.f32 %v6228, %v6229
  %v6231 = vsel %vm14, %v6183, 0.0
  %v6232 = vadd.f32 %v6230, %v6231
  %v6233 = vsel %vm14, %v6184, 0.0
  %v6234 = vadd.f32 %v6232, %v6233
  %v6235 = vsel %vm14, %v6185, 0.0
  %v6236 = vadd.f32 %v6234, %v6235
  %v6237 = vsel %vm14, %v6186, 0.0
  %v6238 = vadd.f32 %v6236, %v6237
  %v6239 = vsel %vm14, %v6187, 0.0
  %v6240 = vadd.f32 %v6238, %v6239
  %v6241 = vsel %vm14, %v6188, 0.0
  %v6242 = vadd.f32 %v6240, %v6241
  %v6243 = vsel %vm14, %v6189, 0.0
  %v6244 = vadd.f32 %v6242, %v6243
  %v6245 = vsel %vm14, %v6190, 0.0
  %v6246 = vadd.f32 %v6244, %v6245
  %v6247 = vsel %vm14, %v6191, 0.0
  %v6248 = vadd.f32 %v6246, %v6247
  %v6249 = vsel %vm14, %v6192, 0.0
  %v6250 = vadd.f32 %v6248, %v6249
  %v6251 = vsel %vm14, %v6193, 0.0
  %v6252 = vadd.f32 %v6250, %v6251
  %v6253 = vsel %vm14, %v6194, 0.0
  %v6254 = vadd.f32 %v6252, %v6253
  %v6255 = vsel %vm14, %v6195, 0.0
  %v6256 = vadd.f32 %v6254, %v6255
  %v6257 = vsel %vm14, %v6196, 0.0
  %v6258 = vadd.f32 %v6256, %v6257
  %v6259 = vsel %vm14, %v6197, 0.0
  %v6260 = vadd.f32 %v6258, %v6259
  %v6261 = vrot.slane %v6260, 4
  %v6262 = vadd.f32 %v6260, %v6261
  %v6263 = vrot.slane %v6262, 2
  %v6264 = vadd.f32 %v6262, %v6263
  %v6265 = vrot.slane %v6264, 1
  %v6266 = vadd.f32 %v6264, %v6265
  %v6267 = vmul.f32 %v6266, %v3000
  %v6268 = vadd.f32 %v6267, 1e-05
  %v6269 = vrsqrt.pop %v6268
  %v6270 = vmul.f32 %v6269, %v6268
  %v6271 = vmul.f32 %v6270, %v6269
  %v6272 = vmul.f32 0.5, %v6271
  %v6273 = vsub.f32 1.5, %v6272
  %v6274 = vmul.f32 %v6269, %v6273
  %vm6275 = vweird.f32 %v6268
  %vm6276 = vweird.f32 %v6269
  %vm6277 = vmor %vm6275, %vm6276
  %v6278 = vsel %vm6277, %v6269, %v6274
  %v6279 = vmul.f32 %v6134, %v6278
  %v6280 = vmul.f32 %v6135, %v6278
  %v6281 = vmul.f32 %v6136, %v6278
  %v6282 = vmul.f32 %v6137, %v6278
  %v6283 = vmul.f32 %v6138, %v6278
  %v6284 = vmul.f32 %v6139, %v6278
  %v6285 = vmul.f32 %v6140, %v6278
  %v6286 = vmul.f32 %v6141, %v6278
  %v6287 = vmul.f32 %v6142, %v6278
  %v6288 = vmul.f32 %v6143, %v6278
  %v6289 = vmul.f32 %v6144, %v6278
  %v6290 = vmul.f32 %v6145, %v6278
  %v6291 = vmul.f32 %v6146, %v6278
  %v6292 = vmul.f32 %v6147, %v6278
  %v6293 = vmul.f32 %v6148, %v6278
  %v6294 = vmul.f32 %v6149, %v6278
  %v6295 = vmul.f32 %v6150, %v6278
  %v6296 = vmul.f32 %v6151, %v6278
  %v6297 = vmul.f32 %v6152, %v6278
  %v6298 = vmul.f32 %v6153, %v6278
  %v6299 = vmul.f32 %v6154, %v6278
  %v6300 = vmul.f32 %v6155, %v6278
  %v6301 = vmul.f32 %v6156, %v6278
  %v6302 = vmul.f32 %v6157, %v6278
  %v6303 = vmul.f32 %v6158, %v6278
  %v6304 = vmul.f32 %v6159, %v6278
  %v6305 = vmul.f32 %v6160, %v6278
  %v6306 = vmul.f32 %v6161, %v6278
  %v6307 = vmul.f32 %v6162, %v6278
  %v6308 = vmul.f32 %v6163, %v6278
  %v6309 = vmul.f32 %v6164, %v6278
  %v6310 = vmul.f32 %v6165, %v6278
  %v6311 = vld [vmem:[%s0] sm:$0xff]
  %v6312 = vld [vmem:[%s0 + $0x8] sm:$0xff]
  %v6313 = vld [vmem:[%s0 + $0x10] sm:$0xff]
  %v6314 = vld [vmem:[%s0 + $0x18] sm:$0xff]
  %v6315 = vld [vmem:[%s0 + $0x20] sm:$0xff]
  %v6316 = vld [vmem:[%s0 + $0x28] sm:$0xff]
  %v6317 = vld [vmem:[%s0 + $0x30] sm:$0xff]
  %v6318 = vld [vmem:[%s0 + $0x38] sm:$0xff]
  %v6319 = vld [vmem:[%s0 + $0x40] sm:$0xff]
  %v6320 = vld [vmem:[%s0 + $0x48] sm:$0xff]
  %v6321 = vld [vmem:[%s0 + $0x50] sm:$0xff]
  %v6322 = vld [vmem:[%s0 + $0x58] sm:$0xff]
  %v6323 = vld [vmem:[%s0 + $0x60] sm:$0xff]
  %v6324 = vld [vmem:[%s0 + $0x68] sm:$0xff]
  %v6325 = vld [vmem:[%s0 + $0x70] sm:$0xff]
  %v6326 = vld [vmem:[%s0 + $0x78] sm:$0xff]
  %v6327 = vld [vmem:[%s0 + $0x80] sm:$0xff]
  %v6328 = vld [vmem:[%s0 + $0x88] sm:$0xff]
  %v6329 = vld [vmem:[%s0 + $0x90] sm:$0xff]
  %v6330 = vld [vmem:[%s0 + $0x98] sm:$0xff]
  %v6331 = vld [vmem:[%s0 + $0xa0] sm:$0xff]
  %v6332 = vld [vmem:[%s0 + $0xa8] sm:$0xff]
  %v6333 = vld [vmem:[%s0 + $0xb0] sm:$0xff]
  %v6334 = vld [vmem:[%s0 + $0xb8] sm:$0xff]
  %v6335 = vld [vmem:[%s0 + $0xc0] sm:$0xff]
  %v6336 = vld [vmem:[%s0 + $0xc8] sm:$0xff]
  %v6337 = vld [vmem:[%s0 + $0xd0] sm:$0xff]
  %v6338 = vld [vmem:[%s0 + $0xd8] sm:$0xff]
  %v6339 = vld [vmem:[%s0 + $0xe0] sm:$0xff]
  %v6340 = vld [vmem:[%s0 + $0xe8] sm:$0xff]
  %v6341 = vld [vmem:[%s0 + $0xf0] sm:$0xff]
  %v6342 = vld [vmem:[%s0 + $0xf8] sm:$0xff]
  %v6343 = vadd.f32 %v6279, %v6311
  %v6344 = vadd.f32 %v6280, %v6312
  %v6345 = vadd.f32 %v6281, %v6313
  %v6346 = vadd.f32 %v6282, %v6314
  %v6347 = vadd.f32 %v6283, %v6315
  %v6348 = vadd.f32 %v6284, %v6316
  %v6349 = vadd.f32 %v6285, %v6317
  %v6350 = vadd.f32 %v6286, %v6318
  %v6351 = vadd.f32 %v6287, %v6319
  %v6352 = vadd.f32 %v6288, %v6320
  %v6353 = vadd.f32 %v6289, %v6321
  %v6354 = vadd.f32 %v6290, %v6322
  %v6355 = vadd.f32 %v6291, %v6323
  %v6356 = vadd.f32 %v6292, %v6324
  %v6357 = vadd.f32 %v6293, %v6325
  %v6358 = vadd.f32 %v6294, %v6326
  %v6359 = vadd.f32 %v6295, %v6327
  %v6360 = vadd.f32 %v6296, %v6328
  %v6361 = vadd.f32 %v6297, %v6329
  %v6362 = vadd.f32 %v6298, %v6330
  %v6363 = vadd.f32 %v6299, %v6331
  %v6364 = vadd.f32 %v6300, %v6332
  %v6365 = vadd.f32 %v6301, %v6333
  %v6366 = vadd.f32 %v6302, %v6334
  %v6367 = vadd.f32 %v6303, %v6335
  %v6368 = vadd.f32 %v6304, %v6336
  %v6369 = vadd.f32 %v6305, %v6337
  %v6370 = vadd.f32 %v6306, %v6338
  %v6371 = vadd.f32 %v6307, %v6339
  %v6372 = vadd.f32 %v6308, %v6340
  %v6373 = vadd.f32 %v6309, %v6341
  %v6374 = vadd.f32 %v6310, %v6342
  %6375 = vst.msk [vmem:[%s3] sm:$0xff] %vm14, %v6343
  %6376 = vst.msk [vmem:[%s3 + $0x8] sm:$0xff] %vm14, %v6344
  %6377 = vst.msk [vmem:[%s3 + $0x10] sm:$0xff] %vm14, %v6345
  %6378 = vst.msk [vmem:[%s3 + $0x18] sm:$0xff] %vm14, %v6346
  %6379 = vst.msk [vmem:[%s3 + $0x20] sm:$0xff] %vm14, %v6347
  %6380 = vst.msk [vmem:[%s3 + $0x28] sm:$0xff] %vm14, %v6348
  %6381 = vst.msk [vmem:[%s3 + $0x30] sm:$0xff] %vm14, %v6349
  %6382 = vst.msk [vmem:[%s3 + $0x38] sm:$0xff] %vm14, %v6350
  %6383 = vst.msk [vmem:[%s3 + $0x40] sm:$0xff] %vm14, %v6351
  %6384 = vst.msk [vmem:[%s3 + $0x48] sm:$0xff] %vm14, %v6352
  %6385 = vst.msk [vmem:[%s3 + $0x50] sm:$0xff] %vm14, %v6353
  %6386 = vst.msk [vmem:[%s3 + $0x58] sm:$0xff] %vm14, %v6354
  %6387 = vst.msk [vmem:[%s3 + $0x60] sm:$0xff] %vm14, %v6355
  %6388 = vst.msk [vmem:[%s3 + $0x68] sm:$0xff] %vm14, %v6356
  %6389 = vst.msk [vmem:[%s3 + $0x70] sm:$0xff] %vm14, %v6357
  %6390 = vst.msk [vmem:[%s3 + $0x78] sm:$0xff] %vm14, %v6358
  %6391 = vst.msk [vmem:[%s3 + $0x80] sm:$0xff] %vm14, %v6359
  %6392 = vst.msk [vmem:[%s3 + $0x88] sm:$0xff] %vm14, %v6360
  %6393 = vst.msk [vmem:[%s3 + $0x90] sm:$0xff] %vm14, %v6361
  %6394 = vst.msk [vmem:[%s3 + $0x98] sm:$0xff] %vm14, %v6362
  %6395 = vst.msk [vmem:[%s3 + $0xa0] sm:$0xff] %vm14, %v6363
  %6396 = vst.msk [vmem:[%s3 + $0xa8] sm:$0xff] %vm14, %v6364
  %6397 = vst.msk [vmem:[%s3 + $0xb0] sm:$0xff] %vm14, %v6365
  %6398 = vst.msk [vmem:[%s3 + $0xb8] sm:$0xff] %vm14, %v6366
  %6399 = vst.msk [vmem:[%s3 + $0xc0] sm:$0xff] %vm14, %v6367
  %6400 = vst.msk [vmem:[%s3 + $0xc8] sm:$0xff] %vm14, %v6368
  %6401 = vst.msk [vmem:[%s3 + $0xd0] sm:$0xff] %vm14, %v6369
  %6402 = vst.msk [vmem:[%s3 + $0xd8] sm:$0xff] %vm14, %v6370
  %6403 = vst.msk [vmem:[%s3 + $0xe0] sm:$0xff] %vm14, %v6371
  %6404 = vst.msk [vmem:[%s3 + $0xe8] sm:$0xff] %vm14, %v6372
  %6405 = vst.msk [vmem:[%s3 + $0xf0] sm:$0xff] %vm14, %v6373
  %6406 = vst.msk [vmem:[%s3 + $0xf8] sm:$0xff] %vm14, %v6374
  %s6407 = scalar_lea.vmem %s0, 256
  %v6408 = vld [vmem:[%s6407] sm:$0xff]
  %v6409 = vld [vmem:[%s6407 + $0x8] sm:$0xff]
  %v6410 = vld [vmem:[%s6407 + $0x10] sm:$0xff]
  %v6411 = vld [vmem:[%s6407 + $0x18] sm:$0xff]
  %v6412 = vld [vmem:[%s6407 + $0x20] sm:$0xff]
  %v6413 = vld [vmem:[%s6407 + $0x28] sm:$0xff]
  %v6414 = vld [vmem:[%s6407 + $0x30] sm:$0xff]
  %v6415 = vld [vmem:[%s6407 + $0x38] sm:$0xff]
  %v6416 = vld [vmem:[%s6407 + $0x40] sm:$0xff]
  %v6417 = vld [vmem:[%s6407 + $0x48] sm:$0xff]
  %v6418 = vld [vmem:[%s6407 + $0x50] sm:$0xff]
  %v6419 = vld [vmem:[%s6407 + $0x58] sm:$0xff]
  %v6420 = vld [vmem:[%s6407 + $0x60] sm:$0xff]
  %v6421 = vld [vmem:[%s6407 + $0x68] sm:$0xff]
  %v6422 = vld [vmem:[%s6407 + $0x70] sm:$0xff]
  %v6423 = vld [vmem:[%s6407 + $0x78] sm:$0xff]
  %v6424 = vld [vmem:[%s6407 + $0x80] sm:$0xff]
  %v6425 = vld [vmem:[%s6407 + $0x88] sm:$0xff]
  %v6426 = vld [vmem:[%s6407 + $0x90] sm:$0xff]
  %v6427 = vld [vmem:[%s6407 + $0x98] sm:$0xff]
  %v6428 = vld [vmem:[%s6407 + $0xa0] sm:$0xff]
  %v6429 = vld [vmem:[%s6407 + $0xa8] sm:$0xff]
  %v6430 = vld [vmem:[%s6407 + $0xb0] sm:$0xff]
  %v6431 = vld [vmem:[%s6407 + $0xb8] sm:$0xff]
  %v6432 = vld [vmem:[%s6407 + $0xc0] sm:$0xff]
  %v6433 = vld [vmem:[%s6407 + $0xc8] sm:$0xff]
  %v6434 = vld [vmem:[%s6407 + $0xd0] sm:$0xff]
  %v6435 = vld [vmem:[%s6407 + $0xd8] sm:$0xff]
  %v6436 = vld [vmem:[%s6407 + $0xe0] sm:$0xff]
  %v6437 = vld [vmem:[%s6407 + $0xe8] sm:$0xff]
  %v6438 = vld [vmem:[%s6407 + $0xf0] sm:$0xff]
  %v6439 = vld [vmem:[%s6407 + $0xf8] sm:$0xff]
  %6440 = vst.msk [vmem:[%s67] sm:$0xff] %vm14, %v6408
  %6441 = vst.msk [vmem:[%s67 + $0x8] sm:$0xff] %vm14, %v6409
  %6442 = vst.msk [vmem:[%s67 + $0x10] sm:$0xff] %vm14, %v6410
  %6443 = vst.msk [vmem:[%s67 + $0x18] sm:$0xff] %vm14, %v6411
  %6444 = vst.msk [vmem:[%s67 + $0x20] sm:$0xff] %vm14, %v6412
  %6445 = vst.msk [vmem:[%s67 + $0x28] sm:$0xff] %vm14, %v6413
  %6446 = vst.msk [vmem:[%s67 + $0x30] sm:$0xff] %vm14, %v6414
  %6447 = vst.msk [vmem:[%s67 + $0x38] sm:$0xff] %vm14, %v6415
  %6448 = vst.msk [vmem:[%s67 + $0x40] sm:$0xff] %vm14, %v6416
  %6449 = vst.msk [vmem:[%s67 + $0x48] sm:$0xff] %vm14, %v6417
  %6450 = vst.msk [vmem:[%s67 + $0x50] sm:$0xff] %vm14, %v6418
  %6451 = vst.msk [vmem:[%s67 + $0x58] sm:$0xff] %vm14, %v6419
  %6452 = vst.msk [vmem:[%s67 + $0x60] sm:$0xff] %vm14, %v6420
  %6453 = vst.msk [vmem:[%s67 + $0x68] sm:$0xff] %vm14, %v6421
  %6454 = vst.msk [vmem:[%s67 + $0x70] sm:$0xff] %vm14, %v6422
  %6455 = vst.msk [vmem:[%s67 + $0x78] sm:$0xff] %vm14, %v6423
  %6456 = vst.msk [vmem:[%s67 + $0x80] sm:$0xff] %vm14, %v6424
  %6457 = vst.msk [vmem:[%s67 + $0x88] sm:$0xff] %vm14, %v6425
  %6458 = vst.msk [vmem:[%s67 + $0x90] sm:$0xff] %vm14, %v6426
  %6459 = vst.msk [vmem:[%s67 + $0x98] sm:$0xff] %vm14, %v6427
  %6460 = vst.msk [vmem:[%s67 + $0xa0] sm:$0xff] %vm14, %v6428
  %6461 = vst.msk [vmem:[%s67 + $0xa8] sm:$0xff] %vm14, %v6429
  %6462 = vst.msk [vmem:[%s67 + $0xb0] sm:$0xff] %vm14, %v6430
  %6463 = vst.msk [vmem:[%s67 + $0xb8] sm:$0xff] %vm14, %v6431
  %6464 = vst.msk [vmem:[%s67 + $0xc0] sm:$0xff] %vm14, %v6432
  %6465 = vst.msk [vmem:[%s67 + $0xc8] sm:$0xff] %vm14, %v6433
  %6466 = vst.msk [vmem:[%s67 + $0xd0] sm:$0xff] %vm14, %v6434
  %6467 = vst.msk [vmem:[%s67 + $0xd8] sm:$0xff] %vm14, %v6435
  %6468 = vst.msk [vmem:[%s67 + $0xe0] sm:$0xff] %vm14, %v6436
  %6469 = vst.msk [vmem:[%s67 + $0xe8] sm:$0xff] %vm14, %v6437
  %6470 = vst.msk [vmem:[%s67 + $0xf0] sm:$0xff] %vm14, %v6438
  %6471 = vst.msk [vmem:[%s67 + $0xf8] sm:$0xff] %vm14, %v6439
  %v6472 = vld [vmem:[#allocation2] sm:$0xff]
  %v6473 = vld [vmem:[#allocation2 + $0x8] sm:$0xff]
  %v6474 = vld [vmem:[#allocation2 + $0x10] sm:$0xff]
  %v6475 = vld [vmem:[#allocation2 + $0x18] sm:$0xff]
  %v6476 = vld [vmem:[#allocation2 + $0x20] sm:$0xff]
  %v6477 = vld [vmem:[#allocation2 + $0x28] sm:$0xff]
  %v6478 = vld [vmem:[#allocation2 + $0x30] sm:$0xff]
  %v6479 = vld [vmem:[#allocation2 + $0x38] sm:$0xff]
  %v6480 = vld [vmem:[#allocation2 + $0x40] sm:$0xff]
  %v6481 = vld [vmem:[#allocation2 + $0x48] sm:$0xff]
  %v6482 = vld [vmem:[#allocation2 + $0x50] sm:$0xff]
  %v6483 = vld [vmem:[#allocation2 + $0x58] sm:$0xff]
  %v6484 = vld [vmem:[#allocation2 + $0x60] sm:$0xff]
  %v6485 = vld [vmem:[#allocation2 + $0x68] sm:$0xff]
  %v6486 = vld [vmem:[#allocation2 + $0x70] sm:$0xff]
  %v6487 = vld [vmem:[#allocation2 + $0x78] sm:$0xff]
  %v6488 = vld [vmem:[#allocation2 + $0x80] sm:$0xff]
  %v6489 = vld [vmem:[#allocation2 + $0x88] sm:$0xff]
  %v6490 = vld [vmem:[#allocation2 + $0x90] sm:$0xff]
  %v6491 = vld [vmem:[#allocation2 + $0x98] sm:$0xff]
  %v6492 = vld [vmem:[#allocation2 + $0xa0] sm:$0xff]
  %v6493 = vld [vmem:[#allocation2 + $0xa8] sm:$0xff]
  %v6494 = vld [vmem:[#allocation2 + $0xb0] sm:$0xff]
  %v6495 = vld [vmem:[#allocation2 + $0xb8] sm:$0xff]
  %v6496 = vld [vmem:[#allocation2 + $0xc0] sm:$0xff]
  %v6497 = vld [vmem:[#allocation2 + $0xc8] sm:$0xff]
  %v6498 = vld [vmem:[#allocation2 + $0xd0] sm:$0xff]
  %v6499 = vld [vmem:[#allocation2 + $0xd8] sm:$0xff]
  %v6500 = vld [vmem:[#allocation2 + $0xe0] sm:$0xff]
  %v6501 = vld [vmem:[#allocation2 + $0xe8] sm:$0xff]
  %v6502 = vld [vmem:[#allocation2 + $0xf0] sm:$0xff]
  %v6503 = vld [vmem:[#allocation2 + $0xf8] sm:$0xff]
  %v6504 = vrot.slane %v6472, 7
  %v6505 = vrot.slane %v6473, 7
  %v6506 = vrot.slane %v6474, 7
  %v6507 = vrot.slane %v6475, 7
  %v6508 = vrot.slane %v6476, 7
  %v6509 = vrot.slane %v6477, 7
  %v6510 = vrot.slane %v6478, 7
  %v6511 = vrot.slane %v6479, 7
  %v6512 = vrot.slane %v6480, 7
  %v6513 = vrot.slane %v6481, 7
  %v6514 = vrot.slane %v6482, 7
  %v6515 = vrot.slane %v6483, 7
  %v6516 = vrot.slane %v6484, 7
  %v6517 = vrot.slane %v6485, 7
  %v6518 = vrot.slane %v6486, 7
  %v6519 = vrot.slane %v6487, 7
  %v6520 = vrot.slane %v6488, 7
  %v6521 = vrot.slane %v6489, 7
  %v6522 = vrot.slane %v6490, 7
  %v6523 = vrot.slane %v6491, 7
  %v6524 = vrot.slane %v6492, 7
  %v6525 = vrot.slane %v6493, 7
  %v6526 = vrot.slane %v6494, 7
  %v6527 = vrot.slane %v6495, 7
  %v6528 = vrot.slane %v6496, 7
  %v6529 = vrot.slane %v6497, 7
  %v6530 = vrot.slane %v6498, 7
  %v6531 = vrot.slane %v6499, 7
  %v6532 = vrot.slane %v6500, 7
  %v6533 = vrot.slane %v6501, 7
  %v6534 = vrot.slane %v6502, 7
  %v6535 = vrot.slane %v6503, 7
  %v6536 = vsel %vm164, %v6534, %v6535
  %v6537 = vsel %vm164, %v6533, %v6534
  %v6538 = vsel %vm164, %v6532, %v6533
  %v6539 = vsel %vm164, %v6531, %v6532
  %v6540 = vsel %vm164, %v6530, %v6531
  %v6541 = vsel %vm164, %v6529, %v6530
  %v6542 = vsel %vm164, %v6528, %v6529
  %v6543 = vsel %vm164, %v6527, %v6528
  %v6544 = vsel %vm164, %v6526, %v6527
  %v6545 = vsel %vm164, %v6525, %v6526
  %v6546 = vsel %vm164, %v6524, %v6525
  %v6547 = vsel %vm164, %v6523, %v6524
  %v6548 = vsel %vm164, %v6522, %v6523
  %v6549 = vsel %vm164, %v6521, %v6522
  %v6550 = vsel %vm164, %v6520, %v6521
  %v6551 = vsel %vm164, %v6519, %v6520
  %v6552 = vsel %vm164, %v6518, %v6519
  %v6553 = vsel %vm164, %v6517, %v6518
  %v6554 = vsel %vm164, %v6516, %v6517
  %v6555 = vsel %vm164, %v6515, %v6516
  %v6556 = vsel %vm164, %v6514, %v6515
  %v6557 = vsel %vm164, %v6513, %v6514
  %v6558 = vsel %vm164, %v6512, %v6513
  %v6559 = vsel %vm164, %v6511, %v6512
  %v6560 = vsel %vm164, %v6510, %v6511
  %v6561 = vsel %vm164, %v6509, %v6510
  %v6562 = vsel %vm164, %v6508, %v6509
  %v6563 = vsel %vm164, %v6507, %v6508
  %v6564 = vsel %vm164, %v6506, %v6507
  %v6565 = vsel %vm164, %v6505, %v6506
  %v6566 = vsel %vm164, %v6504, %v6505
  %v6567 = vsel %vm164, %v6535, %v6504
  %v6568 = vmul.f32 %v6567, %v27
  %v6569 = vmul.f32 %v6566, %v28
  %v6570 = vmul.f32 %v6565, %v27
  %v6571 = vmul.f32 %v6564, %v28
  %v6572 = vmul.f32 %v6563, %v27
  %v6573 = vmul.f32 %v6562, %v28
  %v6574 = vmul.f32 %v6561, %v27
  %v6575 = vmul.f32 %v6560, %v28
  %v6576 = vmul.f32 %v6559, %v27
  %v6577 = vmul.f32 %v6558, %v28
  %v6578 = vmul.f32 %v6557, %v27
  %v6579 = vmul.f32 %v6556, %v28
  %v6580 = vmul.f32 %v6555, %v27
  %v6581 = vmul.f32 %v6554, %v28
  %v6582 = vmul.f32 %v6553, %v27
  %v6583 = vmul.f32 %v6552, %v28
  %v6584 = vmul.f32 %v6551, %v27
  %v6585 = vmul.f32 %v6550, %v28
  %v6586 = vmul.f32 %v6549, %v27
  %v6587 = vmul.f32 %v6548, %v28
  %v6588 = vmul.f32 %v6547, %v27
  %v6589 = vmul.f32 %v6546, %v28
  %v6590 = vmul.f32 %v6545, %v27
  %v6591 = vmul.f32 %v6544, %v28
  %v6592 = vmul.f32 %v6543, %v27
  %v6593 = vmul.f32 %v6542, %v28
  %v6594 = vmul.f32 %v6541, %v27
  %v6595 = vmul.f32 %v6540, %v28
  %v6596 = vmul.f32 %v6539, %v27
  %v6597 = vmul.f32 %v6538, %v28
  %v6598 = vmul.f32 %v6537, %v27
  %v6599 = vmul.f32 %v6536, %v28
  %v6600 = vld [vmem:[%s1] sm:$0xf]
  %v6601 = vld [vmem:[%s230] sm:$0xf]
  %v6603 = vsel %vm14, %v6472, 0
  %v6606 = vsel %vm14, %v6473, 0
  %v6609 = vsel %vm14, %v6474, 0
  %v6612 = vsel %vm14, %v6475, 0
  %v6615 = vsel %vm14, %v6476, 0
  %v6618 = vsel %vm14, %v6477, 0
  %v6621 = vsel %vm14, %v6478, 0
  %v6624 = vsel %vm14, %v6479, 0
  %v6627 = vsel %vm14, %v6480, 0
  %v6630 = vsel %vm14, %v6481, 0
  %v6633 = vsel %vm14, %v6482, 0
  %v6636 = vsel %vm14, %v6483, 0
  %v6639 = vsel %vm14, %v6484, 0
  %v6642 = vsel %vm14, %v6485, 0
  %v6645 = vsel %vm14, %v6486, 0
  %v6648 = vsel %vm14, %v6487, 0
  %v6651 = vsel %vm14, %v6488, 0
  %v6654 = vsel %vm14, %v6489, 0
  %v6657 = vsel %vm14, %v6490, 0
  %v6660 = vsel %vm14, %v6491, 0
  %v6663 = vsel %vm14, %v6492, 0
  %v6666 = vsel %vm14, %v6493, 0
  %v6669 = vsel %vm14, %v6494, 0
  %v6672 = vsel %vm14, %v6495, 0
  %v6675 = vsel %vm14, %v6496, 0
  %v6678 = vsel %vm14, %v6497, 0
  %v6681 = vsel %vm14, %v6498, 0
  %v6684 = vsel %vm14, %v6499, 0
  %v6687 = vsel %vm14, %v6500, 0
  %v6690 = vsel %vm14, %v6501, 0
  %v6693 = vsel %vm14, %v6502, 0
  %v6696 = vsel %vm14, %v6503, 0
  %v6699 = vsel %vm328, %v6601, 0
  %6701 = vmatpush.msra.mxu0 0.0
  %6702 = vmatpush.msra.mxu0 0.0
  %6703 = vmatpush.msra.mxu0 0.0
  %6704 = vmatpush.msra.mxu0 0.0
  %6705 = vmatpush.msra.mxu0 0.0
  %6706 = vmatpush.msra.mxu0 0.0
  %6707 = vmatpush.msra.mxu0 0.0
  %6708 = vmatpush.msra.mxu0 0.0
  %6709 = vmatpush.msra.mxu0 0.0
  %6710 = vmatpush.msra.mxu0 0.0
  %6711 = vmatpush.msra.mxu0 0.0
  %6712 = vmatpush.msra.mxu0 0.0
  %6713 = vmatpush.msra.mxu0 0.0
  %6714 = vmatpush.msra.mxu0 0.0
  %6715 = vmatpush.msra.mxu0 0.0
  %6716 = vmatpush.msra.mxu0 %v6699
  %6717 = vmatmul.f32.gmra.mxu0 %v6603
  %v6718 = vpop.f32.mrf.mxu0
  %v6719 = vadd.f32 0.0, %v6718
  %6720 = vmatmul.f32.gmra.mxu0 %v6606
  %v6721 = vpop.f32.mrf.mxu0
  %v6722 = vadd.f32 0.0, %v6721
  %6723 = vmatmul.f32.gmra.mxu0 %v6609
  %v6724 = vpop.f32.mrf.mxu0
  %v6725 = vadd.f32 0.0, %v6724
  %6726 = vmatmul.f32.gmra.mxu0 %v6612
  %v6727 = vpop.f32.mrf.mxu0
  %v6728 = vadd.f32 0.0, %v6727
  %6729 = vmatmul.f32.gmra.mxu0 %v6615
  %v6730 = vpop.f32.mrf.mxu0
  %v6731 = vadd.f32 0.0, %v6730
  %6732 = vmatmul.f32.gmra.mxu0 %v6618
  %v6733 = vpop.f32.mrf.mxu0
  %v6734 = vadd.f32 0.0, %v6733
  %6735 = vmatmul.f32.gmra.mxu0 %v6621
  %v6736 = vpop.f32.mrf.mxu0
  %v6737 = vadd.f32 0.0, %v6736
  %6738 = vmatmul.f32.gmra.mxu0 %v6624
  %v6739 = vpop.f32.mrf.mxu0
  %v6740 = vadd.f32 0.0, %v6739
  %6741 = vmatmul.f32.gmra.mxu0 %v6627
  %v6742 = vpop.f32.mrf.mxu0
  %v6743 = vadd.f32 0.0, %v6742
  %6744 = vmatmul.f32.gmra.mxu0 %v6630
  %v6745 = vpop.f32.mrf.mxu0
  %v6746 = vadd.f32 0.0, %v6745
  %6747 = vmatmul.f32.gmra.mxu0 %v6633
  %v6748 = vpop.f32.mrf.mxu0
  %v6749 = vadd.f32 0.0, %v6748
  %6750 = vmatmul.f32.gmra.mxu0 %v6636
  %v6751 = vpop.f32.mrf.mxu0
  %v6752 = vadd.f32 0.0, %v6751
  %6753 = vmatmul.f32.gmra.mxu0 %v6639
  %v6754 = vpop.f32.mrf.mxu0
  %v6755 = vadd.f32 0.0, %v6754
  %6756 = vmatmul.f32.gmra.mxu0 %v6642
  %v6757 = vpop.f32.mrf.mxu0
  %v6758 = vadd.f32 0.0, %v6757
  %6759 = vmatmul.f32.gmra.mxu0 %v6645
  %v6760 = vpop.f32.mrf.mxu0
  %v6761 = vadd.f32 0.0, %v6760
  %6762 = vmatmul.f32.gmra.mxu0 %v6648
  %v6763 = vpop.f32.mrf.mxu0
  %v6764 = vadd.f32 0.0, %v6763
  %6765 = vmatmul.f32.gmra.mxu0 %v6651
  %v6766 = vpop.f32.mrf.mxu0
  %v6767 = vadd.f32 0.0, %v6766
  %6768 = vmatmul.f32.gmra.mxu0 %v6654
  %v6769 = vpop.f32.mrf.mxu0
  %v6770 = vadd.f32 0.0, %v6769
  %6771 = vmatmul.f32.gmra.mxu0 %v6657
  %v6772 = vpop.f32.mrf.mxu0
  %v6773 = vadd.f32 0.0, %v6772
  %6774 = vmatmul.f32.gmra.mxu0 %v6660
  %v6775 = vpop.f32.mrf.mxu0
  %v6776 = vadd.f32 0.0, %v6775
  %6777 = vmatmul.f32.gmra.mxu0 %v6663
  %v6778 = vpop.f32.mrf.mxu0
  %v6779 = vadd.f32 0.0, %v6778
  %6780 = vmatmul.f32.gmra.mxu0 %v6666
  %v6781 = vpop.f32.mrf.mxu0
  %v6782 = vadd.f32 0.0, %v6781
  %6783 = vmatmul.f32.gmra.mxu0 %v6669
  %v6784 = vpop.f32.mrf.mxu0
  %v6785 = vadd.f32 0.0, %v6784
  %6786 = vmatmul.f32.gmra.mxu0 %v6672
  %v6787 = vpop.f32.mrf.mxu0
  %v6788 = vadd.f32 0.0, %v6787
  %6789 = vmatmul.f32.gmra.mxu0 %v6675
  %v6790 = vpop.f32.mrf.mxu0
  %v6791 = vadd.f32 0.0, %v6790
  %6792 = vmatmul.f32.gmra.mxu0 %v6678
  %v6793 = vpop.f32.mrf.mxu0
  %v6794 = vadd.f32 0.0, %v6793
  %6795 = vmatmul.f32.gmra.mxu0 %v6681
  %v6796 = vpop.f32.mrf.mxu0
  %v6797 = vadd.f32 0.0, %v6796
  %6798 = vmatmul.f32.gmra.mxu0 %v6684
  %v6799 = vpop.f32.mrf.mxu0
  %v6800 = vadd.f32 0.0, %v6799
  %6801 = vmatmul.f32.gmra.mxu0 %v6687
  %v6802 = vpop.f32.mrf.mxu0
  %v6803 = vadd.f32 0.0, %v6802
  %6804 = vmatmul.f32.gmra.mxu0 %v6690
  %v6805 = vpop.f32.mrf.mxu0
  %v6806 = vadd.f32 0.0, %v6805
  %6807 = vmatmul.f32.gmra.mxu0 %v6693
  %v6808 = vpop.f32.mrf.mxu0
  %v6809 = vadd.f32 0.0, %v6808
  %6810 = vmatmul.f32.gmra.mxu0 %v6696
  %v6811 = vpop.f32.mrf.mxu0
  %v6812 = vadd.f32 0.0, %v6811
  %6813 = vdwg.mxu0
  %v6815 = vsel %vm14, %v6568, 0
  %v6818 = vsel %vm14, %v6569, 0
  %v6821 = vsel %vm14, %v6570, 0
  %v6824 = vsel %vm14, %v6571, 0
  %v6827 = vsel %vm14, %v6572, 0
  %v6830 = vsel %vm14, %v6573, 0
  %v6833 = vsel %vm14, %v6574, 0
  %v6836 = vsel %vm14, %v6575, 0
  %v6839 = vsel %vm14, %v6576, 0
  %v6842 = vsel %vm14, %v6577, 0
  %v6845 = vsel %vm14, %v6578, 0
  %v6848 = vsel %vm14, %v6579, 0
  %v6851 = vsel %vm14, %v6580, 0
  %v6854 = vsel %vm14, %v6581, 0
  %v6857 = vsel %vm14, %v6582, 0
  %v6860 = vsel %vm14, %v6583, 0
  %v6863 = vsel %vm14, %v6584, 0
  %v6866 = vsel %vm14, %v6585, 0
  %v6869 = vsel %vm14, %v6586, 0
  %v6872 = vsel %vm14, %v6587, 0
  %v6875 = vsel %vm14, %v6588, 0
  %v6878 = vsel %vm14, %v6589, 0
  %v6881 = vsel %vm14, %v6590, 0
  %v6884 = vsel %vm14, %v6591, 0
  %v6887 = vsel %vm14, %v6592, 0
  %v6890 = vsel %vm14, %v6593, 0
  %v6893 = vsel %vm14, %v6594, 0
  %v6896 = vsel %vm14, %v6595, 0
  %v6899 = vsel %vm14, %v6596, 0
  %v6902 = vsel %vm14, %v6597, 0
  %v6905 = vsel %vm14, %v6598, 0
  %v6908 = vsel %vm14, %v6599, 0
  %v6911 = vsel %vm328, %v6600, 0
  %6913 = vmatpush.msra.mxu0 0.0
  %6914 = vmatpush.msra.mxu0 0.0
  %6915 = vmatpush.msra.mxu0 0.0
  %6916 = vmatpush.msra.mxu0 0.0
  %6917 = vmatpush.msra.mxu0 0.0
  %6918 = vmatpush.msra.mxu0 0.0
  %6919 = vmatpush.msra.mxu0 0.0
  %6920 = vmatpush.msra.mxu0 0.0
  %6921 = vmatpush.msra.mxu0 0.0
  %6922 = vmatpush.msra.mxu0 0.0
  %6923 = vmatpush.msra.mxu0 0.0
  %6924 = vmatpush.msra.mxu0 0.0
  %6925 = vmatpush.msra.mxu0 0.0
  %6926 = vmatpush.msra.mxu0 0.0
  %6927 = vmatpush.msra.mxu0 0.0
  %6928 = vmatpush.msra.mxu0 %v6911
  %6929 = vmatmul.f32.gmra.mxu0 %v6815
  %v6930 = vpop.f32.mrf.mxu0
  %v6931 = vadd.f32 %v6719, %v6930
  %6932 = vmatmul.f32.gmra.mxu0 %v6818
  %v6933 = vpop.f32.mrf.mxu0
  %v6934 = vadd.f32 %v6722, %v6933
  %6935 = vmatmul.f32.gmra.mxu0 %v6821
  %v6936 = vpop.f32.mrf.mxu0
  %v6937 = vadd.f32 %v6725, %v6936
  %6938 = vmatmul.f32.gmra.mxu0 %v6824
  %v6939 = vpop.f32.mrf.mxu0
  %v6940 = vadd.f32 %v6728, %v6939
  %6941 = vmatmul.f32.gmra.mxu0 %v6827
  %v6942 = vpop.f32.mrf.mxu0
  %v6943 = vadd.f32 %v6731, %v6942
  %6944 = vmatmul.f32.gmra.mxu0 %v6830
  %v6945 = vpop.f32.mrf.mxu0
  %v6946 = vadd.f32 %v6734, %v6945
  %6947 = vmatmul.f32.gmra.mxu0 %v6833
  %v6948 = vpop.f32.mrf.mxu0
  %v6949 = vadd.f32 %v6737, %v6948
  %6950 = vmatmul.f32.gmra.mxu0 %v6836
  %v6951 = vpop.f32.mrf.mxu0
  %v6952 = vadd.f32 %v6740, %v6951
  %6953 = vmatmul.f32.gmra.mxu0 %v6839
  %v6954 = vpop.f32.mrf.mxu0
  %v6955 = vadd.f32 %v6743, %v6954
  %6956 = vmatmul.f32.gmra.mxu0 %v6842
  %v6957 = vpop.f32.mrf.mxu0
  %v6958 = vadd.f32 %v6746, %v6957
  %6959 = vmatmul.f32.gmra.mxu0 %v6845
  %v6960 = vpop.f32.mrf.mxu0
  %v6961 = vadd.f32 %v6749, %v6960
  %6962 = vmatmul.f32.gmra.mxu0 %v6848
  %v6963 = vpop.f32.mrf.mxu0
  %v6964 = vadd.f32 %v6752, %v6963
  %6965 = vmatmul.f32.gmra.mxu0 %v6851
  %v6966 = vpop.f32.mrf.mxu0
  %v6967 = vadd.f32 %v6755, %v6966
  %6968 = vmatmul.f32.gmra.mxu0 %v6854
  %v6969 = vpop.f32.mrf.mxu0
  %v6970 = vadd.f32 %v6758, %v6969
  %6971 = vmatmul.f32.gmra.mxu0 %v6857
  %v6972 = vpop.f32.mrf.mxu0
  %v6973 = vadd.f32 %v6761, %v6972
  %6974 = vmatmul.f32.gmra.mxu0 %v6860
  %v6975 = vpop.f32.mrf.mxu0
  %v6976 = vadd.f32 %v6764, %v6975
  %6977 = vmatmul.f32.gmra.mxu0 %v6863
  %v6978 = vpop.f32.mrf.mxu0
  %v6979 = vadd.f32 %v6767, %v6978
  %6980 = vmatmul.f32.gmra.mxu0 %v6866
  %v6981 = vpop.f32.mrf.mxu0
  %v6982 = vadd.f32 %v6770, %v6981
  %6983 = vmatmul.f32.gmra.mxu0 %v6869
  %v6984 = vpop.f32.mrf.mxu0
  %v6985 = vadd.f32 %v6773, %v6984
  %6986 = vmatmul.f32.gmra.mxu0 %v6872
  %v6987 = vpop.f32.mrf.mxu0
  %v6988 = vadd.f32 %v6776, %v6987
  %6989 = vmatmul.f32.gmra.mxu0 %v6875
  %v6990 = vpop.f32.mrf.mxu0
  %v6991 = vadd.f32 %v6779, %v6990
  %6992 = vmatmul.f32.gmra.mxu0 %v6878
  %v6993 = vpop.f32.mrf.mxu0
  %v6994 = vadd.f32 %v6782, %v6993
  %6995 = vmatmul.f32.gmra.mxu0 %v6881
  %v6996 = vpop.f32.mrf.mxu0
  %v6997 = vadd.f32 %v6785, %v6996
  %6998 = vmatmul.f32.gmra.mxu0 %v6884
  %v6999 = vpop.f32.mrf.mxu0
  %v7000 = vadd.f32 %v6788, %v6999
  %7001 = vmatmul.f32.gmra.mxu0 %v6887
  %v7002 = vpop.f32.mrf.mxu0
  %v7003 = vadd.f32 %v6791, %v7002
  %7004 = vmatmul.f32.gmra.mxu0 %v6890
  %v7005 = vpop.f32.mrf.mxu0
  %v7006 = vadd.f32 %v6794, %v7005
  %7007 = vmatmul.f32.gmra.mxu0 %v6893
  %v7008 = vpop.f32.mrf.mxu0
  %v7009 = vadd.f32 %v6797, %v7008
  %7010 = vmatmul.f32.gmra.mxu0 %v6896
  %v7011 = vpop.f32.mrf.mxu0
  %v7012 = vadd.f32 %v6800, %v7011
  %7013 = vmatmul.f32.gmra.mxu0 %v6899
  %v7014 = vpop.f32.mrf.mxu0
  %v7015 = vadd.f32 %v6803, %v7014
  %7016 = vmatmul.f32.gmra.mxu0 %v6902
  %v7017 = vpop.f32.mrf.mxu0
  %v7018 = vadd.f32 %v6806, %v7017
  %7019 = vmatmul.f32.gmra.mxu0 %v6905
  %v7020 = vpop.f32.mrf.mxu0
  %v7021 = vadd.f32 %v6809, %v7020
  %7022 = vmatmul.f32.gmra.mxu0 %v6908
  %v7023 = vpop.f32.mrf.mxu0
  %v7024 = vadd.f32 %v6812, %v7023
  %7025 = vdwg.mxu0
  %v7026 = vrot.slane %v6472, 1
  %v7027 = vrot.slane %v6473, 1
  %v7028 = vrot.slane %v6474, 1
  %v7029 = vrot.slane %v6475, 1
  %v7030 = vrot.slane %v6476, 1
  %v7031 = vrot.slane %v6477, 1
  %v7032 = vrot.slane %v6478, 1
  %v7033 = vrot.slane %v6479, 1
  %v7034 = vrot.slane %v6480, 1
  %v7035 = vrot.slane %v6481, 1
  %v7036 = vrot.slane %v6482, 1
  %v7037 = vrot.slane %v6483, 1
  %v7038 = vrot.slane %v6484, 1
  %v7039 = vrot.slane %v6485, 1
  %v7040 = vrot.slane %v6486, 1
  %v7041 = vrot.slane %v6487, 1
  %v7042 = vrot.slane %v6488, 1
  %v7043 = vrot.slane %v6489, 1
  %v7044 = vrot.slane %v6490, 1
  %v7045 = vrot.slane %v6491, 1
  %v7046 = vrot.slane %v6492, 1
  %v7047 = vrot.slane %v6493, 1
  %v7048 = vrot.slane %v6494, 1
  %v7049 = vrot.slane %v6495, 1
  %v7050 = vrot.slane %v6496, 1
  %v7051 = vrot.slane %v6497, 1
  %v7052 = vrot.slane %v6498, 1
  %v7053 = vrot.slane %v6499, 1
  %v7054 = vrot.slane %v6500, 1
  %v7055 = vrot.slane %v6501, 1
  %v7056 = vrot.slane %v6502, 1
  %v7057 = vrot.slane %v6503, 1
  %v7058 = vsel %vm689, %v7056, %v7057
  %v7059 = vsel %vm689, %v7055, %v7056
  %v7060 = vsel %vm689, %v7054, %v7055
  %v7061 = vsel %vm689, %v7053, %v7054
  %v7062 = vsel %vm689, %v7052, %v7053
  %v7063 = vsel %vm689, %v7051, %v7052
  %v7064 = vsel %vm689, %v7050, %v7051
  %v7065 = vsel %vm689, %v7049, %v7050
  %v7066 = vsel %vm689, %v7048, %v7049
  %v7067 = vsel %vm689, %v7047, %v7048
  %v7068 = vsel %vm689, %v7046, %v7047
  %v7069 = vsel %vm689, %v7045, %v7046
  %v7070 = vsel %vm689, %v7044, %v7045
  %v7071 = vsel %vm689, %v7043, %v7044
  %v7072 = vsel %vm689, %v7042, %v7043
  %v7073 = vsel %vm689, %v7041, %v7042
  %v7074 = vsel %vm689, %v7040, %v7041
  %v7075 = vsel %vm689, %v7039, %v7040
  %v7076 = vsel %vm689, %v7038, %v7039
  %v7077 = vsel %vm689, %v7037, %v7038
  %v7078 = vsel %vm689, %v7036, %v7037
  %v7079 = vsel %vm689, %v7035, %v7036
  %v7080 = vsel %vm689, %v7034, %v7035
  %v7081 = vsel %vm689, %v7033, %v7034
  %v7082 = vsel %vm689, %v7032, %v7033
  %v7083 = vsel %vm689, %v7031, %v7032
  %v7084 = vsel %vm689, %v7030, %v7031
  %v7085 = vsel %vm689, %v7029, %v7030
  %v7086 = vsel %vm689, %v7028, %v7029
  %v7087 = vsel %vm689, %v7027, %v7028
  %v7088 = vsel %vm689, %v7026, %v7027
  %v7089 = vsel %vm689, %v7057, %v7026
  %v7090 = vmul.f32 %v7088, %v33
  %v7091 = vmul.f32 %v7087, %v34
  %v7092 = vmul.f32 %v7086, %v33
  %v7093 = vmul.f32 %v7085, %v34
  %v7094 = vmul.f32 %v7084, %v33
  %v7095 = vmul.f32 %v7083, %v34
  %v7096 = vmul.f32 %v7082, %v33
  %v7097 = vmul.f32 %v7081, %v34
  %v7098 = vmul.f32 %v7080, %v33
  %v7099 = vmul.f32 %v7079, %v34
  %v7100 = vmul.f32 %v7078, %v33
  %v7101 = vmul.f32 %v7077, %v34
  %v7102 = vmul.f32 %v7076, %v33
  %v7103 = vmul.f32 %v7075, %v34
  %v7104 = vmul.f32 %v7074, %v33
  %v7105 = vmul.f32 %v7073, %v34
  %v7106 = vmul.f32 %v7072, %v33
  %v7107 = vmul.f32 %v7071, %v34
  %v7108 = vmul.f32 %v7070, %v33
  %v7109 = vmul.f32 %v7069, %v34
  %v7110 = vmul.f32 %v7068, %v33
  %v7111 = vmul.f32 %v7067, %v34
  %v7112 = vmul.f32 %v7066, %v33
  %v7113 = vmul.f32 %v7065, %v34
  %v7114 = vmul.f32 %v7064, %v33
  %v7115 = vmul.f32 %v7063, %v34
  %v7116 = vmul.f32 %v7062, %v33
  %v7117 = vmul.f32 %v7061, %v34
  %v7118 = vmul.f32 %v7060, %v33
  %v7119 = vmul.f32 %v7059, %v34
  %v7120 = vmul.f32 %v7058, %v33
  %v7121 = vmul.f32 %v7089, %v34
  %v7122 = vld [vmem:[%s754] sm:$0xf]
  %v7124 = vsel %vm14, %v7090, 0
  %v7127 = vsel %vm14, %v7091, 0
  %v7130 = vsel %vm14, %v7092, 0
  %v7133 = vsel %vm14, %v7093, 0
  %v7136 = vsel %vm14, %v7094, 0
  %v7139 = vsel %vm14, %v7095, 0
  %v7142 = vsel %vm14, %v7096, 0
  %v7145 = vsel %vm14, %v7097, 0
  %v7148 = vsel %vm14, %v7098, 0
  %v7151 = vsel %vm14, %v7099, 0
  %v7154 = vsel %vm14, %v7100, 0
  %v7157 = vsel %vm14, %v7101, 0
  %v7160 = vsel %vm14, %v7102, 0
  %v7163 = vsel %vm14, %v7103, 0
  %v7166 = vsel %vm14, %v7104, 0
  %v7169 = vsel %vm14, %v7105, 0
  %v7172 = vsel %vm14, %v7106, 0
  %v7175 = vsel %vm14, %v7107, 0
  %v7178 = vsel %vm14, %v7108, 0
  %v7181 = vsel %vm14, %v7109, 0
  %v7184 = vsel %vm14, %v7110, 0
  %v7187 = vsel %vm14, %v7111, 0
  %v7190 = vsel %vm14, %v7112, 0
  %v7193 = vsel %vm14, %v7113, 0
  %v7196 = vsel %vm14, %v7114, 0
  %v7199 = vsel %vm14, %v7115, 0
  %v7202 = vsel %vm14, %v7116, 0
  %v7205 = vsel %vm14, %v7117, 0
  %v7208 = vsel %vm14, %v7118, 0
  %v7211 = vsel %vm14, %v7119, 0
  %v7214 = vsel %vm14, %v7120, 0
  %v7217 = vsel %vm14, %v7121, 0
  %v7220 = vsel %vm328, %v7122, 0
  %7222 = vmatpush.msra.mxu0 0.0
  %7223 = vmatpush.msra.mxu0 0.0
  %7224 = vmatpush.msra.mxu0 0.0
  %7225 = vmatpush.msra.mxu0 0.0
  %7226 = vmatpush.msra.mxu0 0.0
  %7227 = vmatpush.msra.mxu0 0.0
  %7228 = vmatpush.msra.mxu0 0.0
  %7229 = vmatpush.msra.mxu0 0.0
  %7230 = vmatpush.msra.mxu0 0.0
  %7231 = vmatpush.msra.mxu0 0.0
  %7232 = vmatpush.msra.mxu0 0.0
  %7233 = vmatpush.msra.mxu0 0.0
  %7234 = vmatpush.msra.mxu0 0.0
  %7235 = vmatpush.msra.mxu0 0.0
  %7236 = vmatpush.msra.mxu0 0.0
  %7237 = vmatpush.msra.mxu0 %v7220
  %7238 = vmatmul.f32.gmra.mxu0 %v7124
  %v7239 = vpop.f32.mrf.mxu0
  %v7240 = vadd.f32 0.0, %v7239
  %7241 = vmatmul.f32.gmra.mxu0 %v7127
  %v7242 = vpop.f32.mrf.mxu0
  %v7243 = vadd.f32 0.0, %v7242
  %7244 = vmatmul.f32.gmra.mxu0 %v7130
  %v7245 = vpop.f32.mrf.mxu0
  %v7246 = vadd.f32 0.0, %v7245
  %7247 = vmatmul.f32.gmra.mxu0 %v7133
  %v7248 = vpop.f32.mrf.mxu0
  %v7249 = vadd.f32 0.0, %v7248
  %7250 = vmatmul.f32.gmra.mxu0 %v7136
  %v7251 = vpop.f32.mrf.mxu0
  %v7252 = vadd.f32 0.0, %v7251
  %7253 = vmatmul.f32.gmra.mxu0 %v7139
  %v7254 = vpop.f32.mrf.mxu0
  %v7255 = vadd.f32 0.0, %v7254
  %7256 = vmatmul.f32.gmra.mxu0 %v7142
  %v7257 = vpop.f32.mrf.mxu0
  %v7258 = vadd.f32 0.0, %v7257
  %7259 = vmatmul.f32.gmra.mxu0 %v7145
  %v7260 = vpop.f32.mrf.mxu0
  %v7261 = vadd.f32 0.0, %v7260
  %7262 = vmatmul.f32.gmra.mxu0 %v7148
  %v7263 = vpop.f32.mrf.mxu0
  %v7264 = vadd.f32 0.0, %v7263
  %7265 = vmatmul.f32.gmra.mxu0 %v7151
  %v7266 = vpop.f32.mrf.mxu0
  %v7267 = vadd.f32 0.0, %v7266
  %7268 = vmatmul.f32.gmra.mxu0 %v7154
  %v7269 = vpop.f32.mrf.mxu0
  %v7270 = vadd.f32 0.0, %v7269
  %7271 = vmatmul.f32.gmra.mxu0 %v7157
  %v7272 = vpop.f32.mrf.mxu0
  %v7273 = vadd.f32 0.0, %v7272
  %7274 = vmatmul.f32.gmra.mxu0 %v7160
  %v7275 = vpop.f32.mrf.mxu0
  %v7276 = vadd.f32 0.0, %v7275
  %7277 = vmatmul.f32.gmra.mxu0 %v7163
  %v7278 = vpop.f32.mrf.mxu0
  %v7279 = vadd.f32 0.0, %v7278
  %7280 = vmatmul.f32.gmra.mxu0 %v7166
  %v7281 = vpop.f32.mrf.mxu0
  %v7282 = vadd.f32 0.0, %v7281
  %7283 = vmatmul.f32.gmra.mxu0 %v7169
  %v7284 = vpop.f32.mrf.mxu0
  %v7285 = vadd.f32 0.0, %v7284
  %7286 = vmatmul.f32.gmra.mxu0 %v7172
  %v7287 = vpop.f32.mrf.mxu0
  %v7288 = vadd.f32 0.0, %v7287
  %7289 = vmatmul.f32.gmra.mxu0 %v7175
  %v7290 = vpop.f32.mrf.mxu0
  %v7291 = vadd.f32 0.0, %v7290
  %7292 = vmatmul.f32.gmra.mxu0 %v7178
  %v7293 = vpop.f32.mrf.mxu0
  %v7294 = vadd.f32 0.0, %v7293
  %7295 = vmatmul.f32.gmra.mxu0 %v7181
  %v7296 = vpop.f32.mrf.mxu0
  %v7297 = vadd.f32 0.0, %v7296
  %7298 = vmatmul.f32.gmra.mxu0 %v7184
  %v7299 = vpop.f32.mrf.mxu0
  %v7300 = vadd.f32 0.0, %v7299
  %7301 = vmatmul.f32.gmra.mxu0 %v7187
  %v7302 = vpop.f32.mrf.mxu0
  %v7303 = vadd.f32 0.0, %v7302
  %7304 = vmatmul.f32.gmra.mxu0 %v7190
  %v7305 = vpop.f32.mrf.mxu0
  %v7306 = vadd.f32 0.0, %v7305
  %7307 = vmatmul.f32.gmra.mxu0 %v7193
  %v7308 = vpop.f32.mrf.mxu0
  %v7309 = vadd.f32 0.0, %v7308
  %7310 = vmatmul.f32.gmra.mxu0 %v7196
  %v7311 = vpop.f32.mrf.mxu0
  %v7312 = vadd.f32 0.0, %v7311
  %7313 = vmatmul.f32.gmra.mxu0 %v7199
  %v7314 = vpop.f32.mrf.mxu0
  %v7315 = vadd.f32 0.0, %v7314
  %7316 = vmatmul.f32.gmra.mxu0 %v7202
  %v7317 = vpop.f32.mrf.mxu0
  %v7318 = vadd.f32 0.0, %v7317
  %7319 = vmatmul.f32.gmra.mxu0 %v7205
  %v7320 = vpop.f32.mrf.mxu0
  %v7321 = vadd.f32 0.0, %v7320
  %7322 = vmatmul.f32.gmra.mxu0 %v7208
  %v7323 = vpop.f32.mrf.mxu0
  %v7324 = vadd.f32 0.0, %v7323
  %7325 = vmatmul.f32.gmra.mxu0 %v7211
  %v7326 = vpop.f32.mrf.mxu0
  %v7327 = vadd.f32 0.0, %v7326
  %7328 = vmatmul.f32.gmra.mxu0 %v7214
  %v7329 = vpop.f32.mrf.mxu0
  %v7330 = vadd.f32 0.0, %v7329
  %7331 = vmatmul.f32.gmra.mxu0 %v7217
  %v7332 = vpop.f32.mrf.mxu0
  %v7333 = vadd.f32 0.0, %v7332
  %7334 = vdwg.mxu0
  %v7335 = vadd.f32 %v6931, %v7240
  %v7336 = vadd.f32 %v6934, %v7243
  %v7337 = vadd.f32 %v6937, %v7246
  %v7338 = vadd.f32 %v6940, %v7249
  %v7339 = vadd.f32 %v6943, %v7252
  %v7340 = vadd.f32 %v6946, %v7255
  %v7341 = vadd.f32 %v6949, %v7258
  %v7342 = vadd.f32 %v6952, %v7261
  %v7343 = vadd.f32 %v6955, %v7264
  %v7344 = vadd.f32 %v6958, %v7267
  %v7345 = vadd.f32 %v6961, %v7270
  %v7346 = vadd.f32 %v6964, %v7273
  %v7347 = vadd.f32 %v6967, %v7276
  %v7348 = vadd.f32 %v6970, %v7279
  %v7349 = vadd.f32 %v6973, %v7282
  %v7350 = vadd.f32 %v6976, %v7285
  %v7351 = vadd.f32 %v6979, %v7288
  %v7352 = vadd.f32 %v6982, %v7291
  %v7353 = vadd.f32 %v6985, %v7294
  %v7354 = vadd.f32 %v6988, %v7297
  %v7355 = vadd.f32 %v6991, %v7300
  %v7356 = vadd.f32 %v6994, %v7303
  %v7357 = vadd.f32 %v6997, %v7306
  %v7358 = vadd.f32 %v7000, %v7309
  %v7359 = vadd.f32 %v7003, %v7312
  %v7360 = vadd.f32 %v7006, %v7315
  %v7361 = vadd.f32 %v7009, %v7318
  %v7362 = vadd.f32 %v7012, %v7321
  %v7363 = vadd.f32 %v7015, %v7324
  %v7364 = vadd.f32 %v7018, %v7327
  %v7365 = vadd.f32 %v7021, %v7330
  %v7366 = vadd.f32 %v7024, %v7333
  %v7367 = vld [vmem:[%s67] sm:$0xff]
  %v7368 = vld [vmem:[%s67 + $0x8] sm:$0xff]
  %v7369 = vld [vmem:[%s67 + $0x10] sm:$0xff]
  %v7370 = vld [vmem:[%s67 + $0x18] sm:$0xff]
  %v7371 = vld [vmem:[%s67 + $0x20] sm:$0xff]
  %v7372 = vld [vmem:[%s67 + $0x28] sm:$0xff]
  %v7373 = vld [vmem:[%s67 + $0x30] sm:$0xff]
  %v7374 = vld [vmem:[%s67 + $0x38] sm:$0xff]
  %v7375 = vld [vmem:[%s67 + $0x40] sm:$0xff]
  %v7376 = vld [vmem:[%s67 + $0x48] sm:$0xff]
  %v7377 = vld [vmem:[%s67 + $0x50] sm:$0xff]
  %v7378 = vld [vmem:[%s67 + $0x58] sm:$0xff]
  %v7379 = vld [vmem:[%s67 + $0x60] sm:$0xff]
  %v7380 = vld [vmem:[%s67 + $0x68] sm:$0xff]
  %v7381 = vld [vmem:[%s67 + $0x70] sm:$0xff]
  %v7382 = vld [vmem:[%s67 + $0x78] sm:$0xff]
  %v7383 = vld [vmem:[%s67 + $0x80] sm:$0xff]
  %v7384 = vld [vmem:[%s67 + $0x88] sm:$0xff]
  %v7385 = vld [vmem:[%s67 + $0x90] sm:$0xff]
  %v7386 = vld [vmem:[%s67 + $0x98] sm:$0xff]
  %v7387 = vld [vmem:[%s67 + $0xa0] sm:$0xff]
  %v7388 = vld [vmem:[%s67 + $0xa8] sm:$0xff]
  %v7389 = vld [vmem:[%s67 + $0xb0] sm:$0xff]
  %v7390 = vld [vmem:[%s67 + $0xb8] sm:$0xff]
  %v7391 = vld [vmem:[%s67 + $0xc0] sm:$0xff]
  %v7392 = vld [vmem:[%s67 + $0xc8] sm:$0xff]
  %v7393 = vld [vmem:[%s67 + $0xd0] sm:$0xff]
  %v7394 = vld [vmem:[%s67 + $0xd8] sm:$0xff]
  %v7395 = vld [vmem:[%s67 + $0xe0] sm:$0xff]
  %v7396 = vld [vmem:[%s67 + $0xe8] sm:$0xff]
  %v7397 = vld [vmem:[%s67 + $0xf0] sm:$0xff]
  %v7398 = vld [vmem:[%s67 + $0xf8] sm:$0xff]
  %v7399 = vrot.slane %v7367, 7
  %v7400 = vrot.slane %v7368, 7
  %v7401 = vrot.slane %v7369, 7
  %v7402 = vrot.slane %v7370, 7
  %v7403 = vrot.slane %v7371, 7
  %v7404 = vrot.slane %v7372, 7
  %v7405 = vrot.slane %v7373, 7
  %v7406 = vrot.slane %v7374, 7
  %v7407 = vrot.slane %v7375, 7
  %v7408 = vrot.slane %v7376, 7
  %v7409 = vrot.slane %v7377, 7
  %v7410 = vrot.slane %v7378, 7
  %v7411 = vrot.slane %v7379, 7
  %v7412 = vrot.slane %v7380, 7
  %v7413 = vrot.slane %v7381, 7
  %v7414 = vrot.slane %v7382, 7
  %v7415 = vrot.slane %v7383, 7
  %v7416 = vrot.slane %v7384, 7
  %v7417 = vrot.slane %v7385, 7
  %v7418 = vrot.slane %v7386, 7
  %v7419 = vrot.slane %v7387, 7
  %v7420 = vrot.slane %v7388, 7
  %v7421 = vrot.slane %v7389, 7
  %v7422 = vrot.slane %v7390, 7
  %v7423 = vrot.slane %v7391, 7
  %v7424 = vrot.slane %v7392, 7
  %v7425 = vrot.slane %v7393, 7
  %v7426 = vrot.slane %v7394, 7
  %v7427 = vrot.slane %v7395, 7
  %v7428 = vrot.slane %v7396, 7
  %v7429 = vrot.slane %v7397, 7
  %v7430 = vrot.slane %v7398, 7
  %v7431 = vsel %vm164, %v7429, %v7430
  %v7432 = vsel %vm164, %v7428, %v7429
  %v7433 = vsel %vm164, %v7427, %v7428
  %v7434 = vsel %vm164, %v7426, %v7427
  %v7435 = vsel %vm164, %v7425, %v7426
  %v7436 = vsel %vm164, %v7424, %v7425
  %v7437 = vsel %vm164, %v7423, %v7424
  %v7438 = vsel %vm164, %v7422, %v7423
  %v7439 = vsel %vm164, %v7421, %v7422
  %v7440 = vsel %vm164, %v7420, %v7421
  %v7441 = vsel %vm164, %v7419, %v7420
  %v7442 = vsel %vm164, %v7418, %v7419
  %v7443 = vsel %vm164, %v7417, %v7418
  %v7444 = vsel %vm164, %v7416, %v7417
  %v7445 = vsel %vm164, %v7415, %v7416
  %v7446 = vsel %vm164, %v7414, %v7415
  %v7447 = vsel %vm164, %v7413, %v7414
  %v7448 = vsel %vm164, %v7412, %v7413
  %v7449 = vsel %vm164, %v7411, %v7412
  %v7450 = vsel %vm164, %v7410, %v7411
  %v7451 = vsel %vm164, %v7409, %v7410
  %v7452 = vsel %vm164, %v7408, %v7409
  %v7453 = vsel %vm164, %v7407, %v7408
  %v7454 = vsel %vm164, %v7406, %v7407
  %v7455 = vsel %vm164, %v7405, %v7406
  %v7456 = vsel %vm164, %v7404, %v7405
  %v7457 = vsel %vm164, %v7403, %v7404
  %v7458 = vsel %vm164, %v7402, %v7403
  %v7459 = vsel %vm164, %v7401, %v7402
  %v7460 = vsel %vm164, %v7400, %v7401
  %v7461 = vsel %vm164, %v7399, %v7400
  %v7462 = vsel %vm164, %v7430, %v7399
  %v7463 = vmul.f32 %v7462, %v27
  %v7464 = vmul.f32 %v7461, %v28
  %v7465 = vmul.f32 %v7460, %v27
  %v7466 = vmul.f32 %v7459, %v28
  %v7467 = vmul.f32 %v7458, %v27
  %v7468 = vmul.f32 %v7457, %v28
  %v7469 = vmul.f32 %v7456, %v27
  %v7470 = vmul.f32 %v7455, %v28
  %v7471 = vmul.f32 %v7454, %v27
  %v7472 = vmul.f32 %v7453, %v28
  %v7473 = vmul.f32 %v7452, %v27
  %v7474 = vmul.f32 %v7451, %v28
  %v7475 = vmul.f32 %v7450, %v27
  %v7476 = vmul.f32 %v7449, %v28
  %v7477 = vmul.f32 %v7448, %v27
  %v7478 = vmul.f32 %v7447, %v28
  %v7479 = vmul.f32 %v7446, %v27
  %v7480 = vmul.f32 %v7445, %v28
  %v7481 = vmul.f32 %v7444, %v27
  %v7482 = vmul.f32 %v7443, %v28
  %v7483 = vmul.f32 %v7442, %v27
  %v7484 = vmul.f32 %v7441, %v28
  %v7485 = vmul.f32 %v7440, %v27
  %v7486 = vmul.f32 %v7439, %v28
  %v7487 = vmul.f32 %v7438, %v27
  %v7488 = vmul.f32 %v7437, %v28
  %v7489 = vmul.f32 %v7436, %v27
  %v7490 = vmul.f32 %v7435, %v28
  %v7491 = vmul.f32 %v7434, %v27
  %v7492 = vmul.f32 %v7433, %v28
  %v7493 = vmul.f32 %v7432, %v27
  %v7494 = vmul.f32 %v7431, %v28
  %v7495 = vld [vmem:[%s1128] sm:$0xf]
  %v7497 = vsel %vm14, %v7463, 0
  %v7500 = vsel %vm14, %v7464, 0
  %v7503 = vsel %vm14, %v7465, 0
  %v7506 = vsel %vm14, %v7466, 0
  %v7509 = vsel %vm14, %v7467, 0
  %v7512 = vsel %vm14, %v7468, 0
  %v7515 = vsel %vm14, %v7469, 0
  %v7518 = vsel %vm14, %v7470, 0
  %v7521 = vsel %vm14, %v7471, 0
  %v7524 = vsel %vm14, %v7472, 0
  %v7527 = vsel %vm14, %v7473, 0
  %v7530 = vsel %vm14, %v7474, 0
  %v7533 = vsel %vm14, %v7475, 0
  %v7536 = vsel %vm14, %v7476, 0
  %v7539 = vsel %vm14, %v7477, 0
  %v7542 = vsel %vm14, %v7478, 0
  %v7545 = vsel %vm14, %v7479, 0
  %v7548 = vsel %vm14, %v7480, 0
  %v7551 = vsel %vm14, %v7481, 0
  %v7554 = vsel %vm14, %v7482, 0
  %v7557 = vsel %vm14, %v7483, 0
  %v7560 = vsel %vm14, %v7484, 0
  %v7563 = vsel %vm14, %v7485, 0
  %v7566 = vsel %vm14, %v7486, 0
  %v7569 = vsel %vm14, %v7487, 0
  %v7572 = vsel %vm14, %v7488, 0
  %v7575 = vsel %vm14, %v7489, 0
  %v7578 = vsel %vm14, %v7490, 0
  %v7581 = vsel %vm14, %v7491, 0
  %v7584 = vsel %vm14, %v7492, 0
  %v7587 = vsel %vm14, %v7493, 0
  %v7590 = vsel %vm14, %v7494, 0
  %v7593 = vsel %vm328, %v7495, 0
  %7595 = vmatpush.msra.mxu0 0.0
  %7596 = vmatpush.msra.mxu0 0.0
  %7597 = vmatpush.msra.mxu0 0.0
  %7598 = vmatpush.msra.mxu0 0.0
  %7599 = vmatpush.msra.mxu0 0.0
  %7600 = vmatpush.msra.mxu0 0.0
  %7601 = vmatpush.msra.mxu0 0.0
  %7602 = vmatpush.msra.mxu0 0.0
  %7603 = vmatpush.msra.mxu0 0.0
  %7604 = vmatpush.msra.mxu0 0.0
  %7605 = vmatpush.msra.mxu0 0.0
  %7606 = vmatpush.msra.mxu0 0.0
  %7607 = vmatpush.msra.mxu0 0.0
  %7608 = vmatpush.msra.mxu0 0.0
  %7609 = vmatpush.msra.mxu0 0.0
  %7610 = vmatpush.msra.mxu0 %v7593
  %7611 = vmatmul.f32.gmra.mxu0 %v7497
  %v7612 = vpop.f32.mrf.mxu0
  %v7613 = vadd.f32 0.0, %v7612
  %7614 = vmatmul.f32.gmra.mxu0 %v7500
  %v7615 = vpop.f32.mrf.mxu0
  %v7616 = vadd.f32 0.0, %v7615
  %7617 = vmatmul.f32.gmra.mxu0 %v7503
  %v7618 = vpop.f32.mrf.mxu0
  %v7619 = vadd.f32 0.0, %v7618
  %7620 = vmatmul.f32.gmra.mxu0 %v7506
  %v7621 = vpop.f32.mrf.mxu0
  %v7622 = vadd.f32 0.0, %v7621
  %7623 = vmatmul.f32.gmra.mxu0 %v7509
  %v7624 = vpop.f32.mrf.mxu0
  %v7625 = vadd.f32 0.0, %v7624
  %7626 = vmatmul.f32.gmra.mxu0 %v7512
  %v7627 = vpop.f32.mrf.mxu0
  %v7628 = vadd.f32 0.0, %v7627
  %7629 = vmatmul.f32.gmra.mxu0 %v7515
  %v7630 = vpop.f32.mrf.mxu0
  %v7631 = vadd.f32 0.0, %v7630
  %7632 = vmatmul.f32.gmra.mxu0 %v7518
  %v7633 = vpop.f32.mrf.mxu0
  %v7634 = vadd.f32 0.0, %v7633
  %7635 = vmatmul.f32.gmra.mxu0 %v7521
  %v7636 = vpop.f32.mrf.mxu0
  %v7637 = vadd.f32 0.0, %v7636
  %7638 = vmatmul.f32.gmra.mxu0 %v7524
  %v7639 = vpop.f32.mrf.mxu0
  %v7640 = vadd.f32 0.0, %v7639
  %7641 = vmatmul.f32.gmra.mxu0 %v7527
  %v7642 = vpop.f32.mrf.mxu0
  %v7643 = vadd.f32 0.0, %v7642
  %7644 = vmatmul.f32.gmra.mxu0 %v7530
  %v7645 = vpop.f32.mrf.mxu0
  %v7646 = vadd.f32 0.0, %v7645
  %7647 = vmatmul.f32.gmra.mxu0 %v7533
  %v7648 = vpop.f32.mrf.mxu0
  %v7649 = vadd.f32 0.0, %v7648
  %7650 = vmatmul.f32.gmra.mxu0 %v7536
  %v7651 = vpop.f32.mrf.mxu0
  %v7652 = vadd.f32 0.0, %v7651
  %7653 = vmatmul.f32.gmra.mxu0 %v7539
  %v7654 = vpop.f32.mrf.mxu0
  %v7655 = vadd.f32 0.0, %v7654
  %7656 = vmatmul.f32.gmra.mxu0 %v7542
  %v7657 = vpop.f32.mrf.mxu0
  %v7658 = vadd.f32 0.0, %v7657
  %7659 = vmatmul.f32.gmra.mxu0 %v7545
  %v7660 = vpop.f32.mrf.mxu0
  %v7661 = vadd.f32 0.0, %v7660
  %7662 = vmatmul.f32.gmra.mxu0 %v7548
  %v7663 = vpop.f32.mrf.mxu0
  %v7664 = vadd.f32 0.0, %v7663
  %7665 = vmatmul.f32.gmra.mxu0 %v7551
  %v7666 = vpop.f32.mrf.mxu0
  %v7667 = vadd.f32 0.0, %v7666
  %7668 = vmatmul.f32.gmra.mxu0 %v7554
  %v7669 = vpop.f32.mrf.mxu0
  %v7670 = vadd.f32 0.0, %v7669
  %7671 = vmatmul.f32.gmra.mxu0 %v7557
  %v7672 = vpop.f32.mrf.mxu0
  %v7673 = vadd.f32 0.0, %v7672
  %7674 = vmatmul.f32.gmra.mxu0 %v7560
  %v7675 = vpop.f32.mrf.mxu0
  %v7676 = vadd.f32 0.0, %v7675
  %7677 = vmatmul.f32.gmra.mxu0 %v7563
  %v7678 = vpop.f32.mrf.mxu0
  %v7679 = vadd.f32 0.0, %v7678
  %7680 = vmatmul.f32.gmra.mxu0 %v7566
  %v7681 = vpop.f32.mrf.mxu0
  %v7682 = vadd.f32 0.0, %v7681
  %7683 = vmatmul.f32.gmra.mxu0 %v7569
  %v7684 = vpop.f32.mrf.mxu0
  %v7685 = vadd.f32 0.0, %v7684
  %7686 = vmatmul.f32.gmra.mxu0 %v7572
  %v7687 = vpop.f32.mrf.mxu0
  %v7688 = vadd.f32 0.0, %v7687
  %7689 = vmatmul.f32.gmra.mxu0 %v7575
  %v7690 = vpop.f32.mrf.mxu0
  %v7691 = vadd.f32 0.0, %v7690
  %7692 = vmatmul.f32.gmra.mxu0 %v7578
  %v7693 = vpop.f32.mrf.mxu0
  %v7694 = vadd.f32 0.0, %v7693
  %7695 = vmatmul.f32.gmra.mxu0 %v7581
  %v7696 = vpop.f32.mrf.mxu0
  %v7697 = vadd.f32 0.0, %v7696
  %7698 = vmatmul.f32.gmra.mxu0 %v7584
  %v7699 = vpop.f32.mrf.mxu0
  %v7700 = vadd.f32 0.0, %v7699
  %7701 = vmatmul.f32.gmra.mxu0 %v7587
  %v7702 = vpop.f32.mrf.mxu0
  %v7703 = vadd.f32 0.0, %v7702
  %7704 = vmatmul.f32.gmra.mxu0 %v7590
  %v7705 = vpop.f32.mrf.mxu0
  %v7706 = vadd.f32 0.0, %v7705
  %7707 = vdwg.mxu0
  %v7708 = vadd.f32 %v7335, %v7613
  %v7709 = vadd.f32 %v7336, %v7616
  %v7710 = vadd.f32 %v7337, %v7619
  %v7711 = vadd.f32 %v7338, %v7622
  %v7712 = vadd.f32 %v7339, %v7625
  %v7713 = vadd.f32 %v7340, %v7628
  %v7714 = vadd.f32 %v7341, %v7631
  %v7715 = vadd.f32 %v7342, %v7634
  %v7716 = vadd.f32 %v7343, %v7637
  %v7717 = vadd.f32 %v7344, %v7640
  %v7718 = vadd.f32 %v7345, %v7643
  %v7719 = vadd.f32 %v7346, %v7646
  %v7720 = vadd.f32 %v7347, %v7649
  %v7721 = vadd.f32 %v7348, %v7652
  %v7722 = vadd.f32 %v7349, %v7655
  %v7723 = vadd.f32 %v7350, %v7658
  %v7724 = vadd.f32 %v7351, %v7661
  %v7725 = vadd.f32 %v7352, %v7664
  %v7726 = vadd.f32 %v7353, %v7667
  %v7727 = vadd.f32 %v7354, %v7670
  %v7728 = vadd.f32 %v7355, %v7673
  %v7729 = vadd.f32 %v7356, %v7676
  %v7730 = vadd.f32 %v7357, %v7679
  %v7731 = vadd.f32 %v7358, %v7682
  %v7732 = vadd.f32 %v7359, %v7685
  %v7733 = vadd.f32 %v7360, %v7688
  %v7734 = vadd.f32 %v7361, %v7691
  %v7735 = vadd.f32 %v7362, %v7694
  %v7736 = vadd.f32 %v7363, %v7697
  %v7737 = vadd.f32 %v7364, %v7700
  %v7738 = vadd.f32 %v7365, %v7703
  %v7739 = vadd.f32 %v7366, %v7706
  %v7740 = vld [vmem:[%s1374] sm:$0xf]
  %v7742 = vsel %vm14, %v7367, 0
  %v7745 = vsel %vm14, %v7368, 0
  %v7748 = vsel %vm14, %v7369, 0
  %v7751 = vsel %vm14, %v7370, 0
  %v7754 = vsel %vm14, %v7371, 0
  %v7757 = vsel %vm14, %v7372, 0
  %v7760 = vsel %vm14, %v7373, 0
  %v7763 = vsel %vm14, %v7374, 0
  %v7766 = vsel %vm14, %v7375, 0
  %v7769 = vsel %vm14, %v7376, 0
  %v7772 = vsel %vm14, %v7377, 0
  %v7775 = vsel %vm14, %v7378, 0
  %v7778 = vsel %vm14, %v7379, 0
  %v7781 = vsel %vm14, %v7380, 0
  %v7784 = vsel %vm14, %v7381, 0
  %v7787 = vsel %vm14, %v7382, 0
  %v7790 = vsel %vm14, %v7383, 0
  %v7793 = vsel %vm14, %v7384, 0
  %v7796 = vsel %vm14, %v7385, 0
  %v7799 = vsel %vm14, %v7386, 0
  %v7802 = vsel %vm14, %v7387, 0
  %v7805 = vsel %vm14, %v7388, 0
  %v7808 = vsel %vm14, %v7389, 0
  %v7811 = vsel %vm14, %v7390, 0
  %v7814 = vsel %vm14, %v7391, 0
  %v7817 = vsel %vm14, %v7392, 0
  %v7820 = vsel %vm14, %v7393, 0
  %v7823 = vsel %vm14, %v7394, 0
  %v7826 = vsel %vm14, %v7395, 0
  %v7829 = vsel %vm14, %v7396, 0
  %v7832 = vsel %vm14, %v7397, 0
  %v7835 = vsel %vm14, %v7398, 0
  %v7838 = vsel %vm328, %v7740, 0
  %7840 = vmatpush.msra.mxu0 0.0
  %7841 = vmatpush.msra.mxu0 0.0
  %7842 = vmatpush.msra.mxu0 0.0
  %7843 = vmatpush.msra.mxu0 0.0
  %7844 = vmatpush.msra.mxu0 0.0
  %7845 = vmatpush.msra.mxu0 0.0
  %7846 = vmatpush.msra.mxu0 0.0
  %7847 = vmatpush.msra.mxu0 0.0
  %7848 = vmatpush.msra.mxu0 0.0
  %7849 = vmatpush.msra.mxu0 0.0
  %7850 = vmatpush.msra.mxu0 0.0
  %7851 = vmatpush.msra.mxu0 0.0
  %7852 = vmatpush.msra.mxu0 0.0
  %7853 = vmatpush.msra.mxu0 0.0
  %7854 = vmatpush.msra.mxu0 0.0
  %7855 = vmatpush.msra.mxu0 %v7838
  %7856 = vmatmul.f32.gmra.mxu0 %v7742
  %v7857 = vpop.f32.mrf.mxu0
  %v7858 = vadd.f32 0.0, %v7857
  %7859 = vmatmul.f32.gmra.mxu0 %v7745
  %v7860 = vpop.f32.mrf.mxu0
  %v7861 = vadd.f32 0.0, %v7860
  %7862 = vmatmul.f32.gmra.mxu0 %v7748
  %v7863 = vpop.f32.mrf.mxu0
  %v7864 = vadd.f32 0.0, %v7863
  %7865 = vmatmul.f32.gmra.mxu0 %v7751
  %v7866 = vpop.f32.mrf.mxu0
  %v7867 = vadd.f32 0.0, %v7866
  %7868 = vmatmul.f32.gmra.mxu0 %v7754
  %v7869 = vpop.f32.mrf.mxu0
  %v7870 = vadd.f32 0.0, %v7869
  %7871 = vmatmul.f32.gmra.mxu0 %v7757
  %v7872 = vpop.f32.mrf.mxu0
  %v7873 = vadd.f32 0.0, %v7872
  %7874 = vmatmul.f32.gmra.mxu0 %v7760
  %v7875 = vpop.f32.mrf.mxu0
  %v7876 = vadd.f32 0.0, %v7875
  %7877 = vmatmul.f32.gmra.mxu0 %v7763
  %v7878 = vpop.f32.mrf.mxu0
  %v7879 = vadd.f32 0.0, %v7878
  %7880 = vmatmul.f32.gmra.mxu0 %v7766
  %v7881 = vpop.f32.mrf.mxu0
  %v7882 = vadd.f32 0.0, %v7881
  %7883 = vmatmul.f32.gmra.mxu0 %v7769
  %v7884 = vpop.f32.mrf.mxu0
  %v7885 = vadd.f32 0.0, %v7884
  %7886 = vmatmul.f32.gmra.mxu0 %v7772
  %v7887 = vpop.f32.mrf.mxu0
  %v7888 = vadd.f32 0.0, %v7887
  %7889 = vmatmul.f32.gmra.mxu0 %v7775
  %v7890 = vpop.f32.mrf.mxu0
  %v7891 = vadd.f32 0.0, %v7890
  %7892 = vmatmul.f32.gmra.mxu0 %v7778
  %v7893 = vpop.f32.mrf.mxu0
  %v7894 = vadd.f32 0.0, %v7893
  %7895 = vmatmul.f32.gmra.mxu0 %v7781
  %v7896 = vpop.f32.mrf.mxu0
  %v7897 = vadd.f32 0.0, %v7896
  %7898 = vmatmul.f32.gmra.mxu0 %v7784
  %v7899 = vpop.f32.mrf.mxu0
  %v7900 = vadd.f32 0.0, %v7899
  %7901 = vmatmul.f32.gmra.mxu0 %v7787
  %v7902 = vpop.f32.mrf.mxu0
  %v7903 = vadd.f32 0.0, %v7902
  %7904 = vmatmul.f32.gmra.mxu0 %v7790
  %v7905 = vpop.f32.mrf.mxu0
  %v7906 = vadd.f32 0.0, %v7905
  %7907 = vmatmul.f32.gmra.mxu0 %v7793
  %v7908 = vpop.f32.mrf.mxu0
  %v7909 = vadd.f32 0.0, %v7908
  %7910 = vmatmul.f32.gmra.mxu0 %v7796
  %v7911 = vpop.f32.mrf.mxu0
  %v7912 = vadd.f32 0.0, %v7911
  %7913 = vmatmul.f32.gmra.mxu0 %v7799
  %v7914 = vpop.f32.mrf.mxu0
  %v7915 = vadd.f32 0.0, %v7914
  %7916 = vmatmul.f32.gmra.mxu0 %v7802
  %v7917 = vpop.f32.mrf.mxu0
  %v7918 = vadd.f32 0.0, %v7917
  %7919 = vmatmul.f32.gmra.mxu0 %v7805
  %v7920 = vpop.f32.mrf.mxu0
  %v7921 = vadd.f32 0.0, %v7920
  %7922 = vmatmul.f32.gmra.mxu0 %v7808
  %v7923 = vpop.f32.mrf.mxu0
  %v7924 = vadd.f32 0.0, %v7923
  %7925 = vmatmul.f32.gmra.mxu0 %v7811
  %v7926 = vpop.f32.mrf.mxu0
  %v7927 = vadd.f32 0.0, %v7926
  %7928 = vmatmul.f32.gmra.mxu0 %v7814
  %v7929 = vpop.f32.mrf.mxu0
  %v7930 = vadd.f32 0.0, %v7929
  %7931 = vmatmul.f32.gmra.mxu0 %v7817
  %v7932 = vpop.f32.mrf.mxu0
  %v7933 = vadd.f32 0.0, %v7932
  %7934 = vmatmul.f32.gmra.mxu0 %v7820
  %v7935 = vpop.f32.mrf.mxu0
  %v7936 = vadd.f32 0.0, %v7935
  %7937 = vmatmul.f32.gmra.mxu0 %v7823
  %v7938 = vpop.f32.mrf.mxu0
  %v7939 = vadd.f32 0.0, %v7938
  %7940 = vmatmul.f32.gmra.mxu0 %v7826
  %v7941 = vpop.f32.mrf.mxu0
  %v7942 = vadd.f32 0.0, %v7941
  %7943 = vmatmul.f32.gmra.mxu0 %v7829
  %v7944 = vpop.f32.mrf.mxu0
  %v7945 = vadd.f32 0.0, %v7944
  %7946 = vmatmul.f32.gmra.mxu0 %v7832
  %v7947 = vpop.f32.mrf.mxu0
  %v7948 = vadd.f32 0.0, %v7947
  %7949 = vmatmul.f32.gmra.mxu0 %v7835
  %v7950 = vpop.f32.mrf.mxu0
  %v7951 = vadd.f32 0.0, %v7950
  %7952 = vdwg.mxu0
  %v7953 = vadd.f32 %v7708, %v7858
  %v7954 = vadd.f32 %v7709, %v7861
  %v7955 = vadd.f32 %v7710, %v7864
  %v7956 = vadd.f32 %v7711, %v7867
  %v7957 = vadd.f32 %v7712, %v7870
  %v7958 = vadd.f32 %v7713, %v7873
  %v7959 = vadd.f32 %v7714, %v7876
  %v7960 = vadd.f32 %v7715, %v7879
  %v7961 = vadd.f32 %v7716, %v7882
  %v7962 = vadd.f32 %v7717, %v7885
  %v7963 = vadd.f32 %v7718, %v7888
  %v7964 = vadd.f32 %v7719, %v7891
  %v7965 = vadd.f32 %v7720, %v7894
  %v7966 = vadd.f32 %v7721, %v7897
  %v7967 = vadd.f32 %v7722, %v7900
  %v7968 = vadd.f32 %v7723, %v7903
  %v7969 = vadd.f32 %v7724, %v7906
  %v7970 = vadd.f32 %v7725, %v7909
  %v7971 = vadd.f32 %v7726, %v7912
  %v7972 = vadd.f32 %v7727, %v7915
  %v7973 = vadd.f32 %v7728, %v7918
  %v7974 = vadd.f32 %v7729, %v7921
  %v7975 = vadd.f32 %v7730, %v7924
  %v7976 = vadd.f32 %v7731, %v7927
  %v7977 = vadd.f32 %v7732, %v7930
  %v7978 = vadd.f32 %v7733, %v7933
  %v7979 = vadd.f32 %v7734, %v7936
  %v7980 = vadd.f32 %v7735, %v7939
  %v7981 = vadd.f32 %v7736, %v7942
  %v7982 = vadd.f32 %v7737, %v7945
  %v7983 = vadd.f32 %v7738, %v7948
  %v7984 = vadd.f32 %v7739, %v7951
  %v7985 = vrot.slane %v7367, 1
  %v7986 = vrot.slane %v7368, 1
  %v7987 = vrot.slane %v7369, 1
  %v7988 = vrot.slane %v7370, 1
  %v7989 = vrot.slane %v7371, 1
  %v7990 = vrot.slane %v7372, 1
  %v7991 = vrot.slane %v7373, 1
  %v7992 = vrot.slane %v7374, 1
  %v7993 = vrot.slane %v7375, 1
  %v7994 = vrot.slane %v7376, 1
  %v7995 = vrot.slane %v7377, 1
  %v7996 = vrot.slane %v7378, 1
  %v7997 = vrot.slane %v7379, 1
  %v7998 = vrot.slane %v7380, 1
  %v7999 = vrot.slane %v7381, 1
  %v8000 = vrot.slane %v7382, 1
  %v8001 = vrot.slane %v7383, 1
  %v8002 = vrot.slane %v7384, 1
  %v8003 = vrot.slane %v7385, 1
  %v8004 = vrot.slane %v7386, 1
  %v8005 = vrot.slane %v7387, 1
  %v8006 = vrot.slane %v7388, 1
  %v8007 = vrot.slane %v7389, 1
  %v8008 = vrot.slane %v7390, 1
  %v8009 = vrot.slane %v7391, 1
  %v8010 = vrot.slane %v7392, 1
  %v8011 = vrot.slane %v7393, 1
  %v8012 = vrot.slane %v7394, 1
  %v8013 = vrot.slane %v7395, 1
  %v8014 = vrot.slane %v7396, 1
  %v8015 = vrot.slane %v7397, 1
  %v8016 = vrot.slane %v7398, 1
  %v8017 = vsel %vm689, %v8015, %v8016
  %v8018 = vsel %vm689, %v8014, %v8015
  %v8019 = vsel %vm689, %v8013, %v8014
  %v8020 = vsel %vm689, %v8012, %v8013
  %v8021 = vsel %vm689, %v8011, %v8012
  %v8022 = vsel %vm689, %v8010, %v8011
  %v8023 = vsel %vm689, %v8009, %v8010
  %v8024 = vsel %vm689, %v8008, %v8009
  %v8025 = vsel %vm689, %v8007, %v8008
  %v8026 = vsel %vm689, %v8006, %v8007
  %v8027 = vsel %vm689, %v8005, %v8006
  %v8028 = vsel %vm689, %v8004, %v8005
  %v8029 = vsel %vm689, %v8003, %v8004
  %v8030 = vsel %vm689, %v8002, %v8003
  %v8031 = vsel %vm689, %v8001, %v8002
  %v8032 = vsel %vm689, %v8000, %v8001
  %v8033 = vsel %vm689, %v7999, %v8000
  %v8034 = vsel %vm689, %v7998, %v7999
  %v8035 = vsel %vm689, %v7997, %v7998
  %v8036 = vsel %vm689, %v7996, %v7997
  %v8037 = vsel %vm689, %v7995, %v7996
  %v8038 = vsel %vm689, %v7994, %v7995
  %v8039 = vsel %vm689, %v7993, %v7994
  %v8040 = vsel %vm689, %v7992, %v7993
  %v8041 = vsel %vm689, %v7991, %v7992
  %v8042 = vsel %vm689, %v7990, %v7991
  %v8043 = vsel %vm689, %v7989, %v7990
  %v8044 = vsel %vm689, %v7988, %v7989
  %v8045 = vsel %vm689, %v7987, %v7988
  %v8046 = vsel %vm689, %v7986, %v7987
  %v8047 = vsel %vm689, %v7985, %v7986
  %v8048 = vsel %vm689, %v8016, %v7985
  %v8049 = vmul.f32 %v8047, %v33
  %v8050 = vmul.f32 %v8046, %v34
  %v8051 = vmul.f32 %v8045, %v33
  %v8052 = vmul.f32 %v8044, %v34
  %v8053 = vmul.f32 %v8043, %v33
  %v8054 = vmul.f32 %v8042, %v34
  %v8055 = vmul.f32 %v8041, %v33
  %v8056 = vmul.f32 %v8040, %v34
  %v8057 = vmul.f32 %v8039, %v33
  %v8058 = vmul.f32 %v8038, %v34
  %v8059 = vmul.f32 %v8037, %v33
  %v8060 = vmul.f32 %v8036, %v34
  %v8061 = vmul.f32 %v8035, %v33
  %v8062 = vmul.f32 %v8034, %v34
  %v8063 = vmul.f32 %v8033, %v33
  %v8064 = vmul.f32 %v8032, %v34
  %v8065 = vmul.f32 %v8031, %v33
  %v8066 = vmul.f32 %v8030, %v34
  %v8067 = vmul.f32 %v8029, %v33
  %v8068 = vmul.f32 %v8028, %v34
  %v8069 = vmul.f32 %v8027, %v33
  %v8070 = vmul.f32 %v8026, %v34
  %v8071 = vmul.f32 %v8025, %v33
  %v8072 = vmul.f32 %v8024, %v34
  %v8073 = vmul.f32 %v8023, %v33
  %v8074 = vmul.f32 %v8022, %v34
  %v8075 = vmul.f32 %v8021, %v33
  %v8076 = vmul.f32 %v8020, %v34
  %v8077 = vmul.f32 %v8019, %v33
  %v8078 = vmul.f32 %v8018, %v34
  %v8079 = vmul.f32 %v8017, %v33
  %v8080 = vmul.f32 %v8048, %v34
  %v8081 = vld [vmem:[%s1716] sm:$0xf]
  %v8083 = vsel %vm14, %v8049, 0
  %v8086 = vsel %vm14, %v8050, 0
  %v8089 = vsel %vm14, %v8051, 0
  %v8092 = vsel %vm14, %v8052, 0
  %v8095 = vsel %vm14, %v8053, 0
  %v8098 = vsel %vm14, %v8054, 0
  %v8101 = vsel %vm14, %v8055, 0
  %v8104 = vsel %vm14, %v8056, 0
  %v8107 = vsel %vm14, %v8057, 0
  %v8110 = vsel %vm14, %v8058, 0
  %v8113 = vsel %vm14, %v8059, 0
  %v8116 = vsel %vm14, %v8060, 0
  %v8119 = vsel %vm14, %v8061, 0
  %v8122 = vsel %vm14, %v8062, 0
  %v8125 = vsel %vm14, %v8063, 0
  %v8128 = vsel %vm14, %v8064, 0
  %v8131 = vsel %vm14, %v8065, 0
  %v8134 = vsel %vm14, %v8066, 0
  %v8137 = vsel %vm14, %v8067, 0
  %v8140 = vsel %vm14, %v8068, 0
  %v8143 = vsel %vm14, %v8069, 0
  %v8146 = vsel %vm14, %v8070, 0
  %v8149 = vsel %vm14, %v8071, 0
  %v8152 = vsel %vm14, %v8072, 0
  %v8155 = vsel %vm14, %v8073, 0
  %v8158 = vsel %vm14, %v8074, 0
  %v8161 = vsel %vm14, %v8075, 0
  %v8164 = vsel %vm14, %v8076, 0
  %v8167 = vsel %vm14, %v8077, 0
  %v8170 = vsel %vm14, %v8078, 0
  %v8173 = vsel %vm14, %v8079, 0
  %v8176 = vsel %vm14, %v8080, 0
  %v8179 = vsel %vm328, %v8081, 0
  %8181 = vmatpush.msra.mxu0 0.0
  %8182 = vmatpush.msra.mxu0 0.0
  %8183 = vmatpush.msra.mxu0 0.0
  %8184 = vmatpush.msra.mxu0 0.0
  %8185 = vmatpush.msra.mxu0 0.0
  %8186 = vmatpush.msra.mxu0 0.0
  %8187 = vmatpush.msra.mxu0 0.0
  %8188 = vmatpush.msra.mxu0 0.0
  %8189 = vmatpush.msra.mxu0 0.0
  %8190 = vmatpush.msra.mxu0 0.0
  %8191 = vmatpush.msra.mxu0 0.0
  %8192 = vmatpush.msra.mxu0 0.0
  %8193 = vmatpush.msra.mxu0 0.0
  %8194 = vmatpush.msra.mxu0 0.0
  %8195 = vmatpush.msra.mxu0 0.0
  %8196 = vmatpush.msra.mxu0 %v8179
  %8197 = vmatmul.f32.gmra.mxu0 %v8083
  %v8198 = vpop.f32.mrf.mxu0
  %v8199 = vadd.f32 0.0, %v8198
  %8200 = vmatmul.f32.gmra.mxu0 %v8086
  %v8201 = vpop.f32.mrf.mxu0
  %v8202 = vadd.f32 0.0, %v8201
  %8203 = vmatmul.f32.gmra.mxu0 %v8089
  %v8204 = vpop.f32.mrf.mxu0
  %v8205 = vadd.f32 0.0, %v8204
  %8206 = vmatmul.f32.gmra.mxu0 %v8092
  %v8207 = vpop.f32.mrf.mxu0
  %v8208 = vadd.f32 0.0, %v8207
  %8209 = vmatmul.f32.gmra.mxu0 %v8095
  %v8210 = vpop.f32.mrf.mxu0
  %v8211 = vadd.f32 0.0, %v8210
  %8212 = vmatmul.f32.gmra.mxu0 %v8098
  %v8213 = vpop.f32.mrf.mxu0
  %v8214 = vadd.f32 0.0, %v8213
  %8215 = vmatmul.f32.gmra.mxu0 %v8101
  %v8216 = vpop.f32.mrf.mxu0
  %v8217 = vadd.f32 0.0, %v8216
  %8218 = vmatmul.f32.gmra.mxu0 %v8104
  %v8219 = vpop.f32.mrf.mxu0
  %v8220 = vadd.f32 0.0, %v8219
  %8221 = vmatmul.f32.gmra.mxu0 %v8107
  %v8222 = vpop.f32.mrf.mxu0
  %v8223 = vadd.f32 0.0, %v8222
  %8224 = vmatmul.f32.gmra.mxu0 %v8110
  %v8225 = vpop.f32.mrf.mxu0
  %v8226 = vadd.f32 0.0, %v8225
  %8227 = vmatmul.f32.gmra.mxu0 %v8113
  %v8228 = vpop.f32.mrf.mxu0
  %v8229 = vadd.f32 0.0, %v8228
  %8230 = vmatmul.f32.gmra.mxu0 %v8116
  %v8231 = vpop.f32.mrf.mxu0
  %v8232 = vadd.f32 0.0, %v8231
  %8233 = vmatmul.f32.gmra.mxu0 %v8119
  %v8234 = vpop.f32.mrf.mxu0
  %v8235 = vadd.f32 0.0, %v8234
  %8236 = vmatmul.f32.gmra.mxu0 %v8122
  %v8237 = vpop.f32.mrf.mxu0
  %v8238 = vadd.f32 0.0, %v8237
  %8239 = vmatmul.f32.gmra.mxu0 %v8125
  %v8240 = vpop.f32.mrf.mxu0
  %v8241 = vadd.f32 0.0, %v8240
  %8242 = vmatmul.f32.gmra.mxu0 %v8128
  %v8243 = vpop.f32.mrf.mxu0
  %v8244 = vadd.f32 0.0, %v8243
  %8245 = vmatmul.f32.gmra.mxu0 %v8131
  %v8246 = vpop.f32.mrf.mxu0
  %v8247 = vadd.f32 0.0, %v8246
  %8248 = vmatmul.f32.gmra.mxu0 %v8134
  %v8249 = vpop.f32.mrf.mxu0
  %v8250 = vadd.f32 0.0, %v8249
  %8251 = vmatmul.f32.gmra.mxu0 %v8137
  %v8252 = vpop.f32.mrf.mxu0
  %v8253 = vadd.f32 0.0, %v8252
  %8254 = vmatmul.f32.gmra.mxu0 %v8140
  %v8255 = vpop.f32.mrf.mxu0
  %v8256 = vadd.f32 0.0, %v8255
  %8257 = vmatmul.f32.gmra.mxu0 %v8143
  %v8258 = vpop.f32.mrf.mxu0
  %v8259 = vadd.f32 0.0, %v8258
  %8260 = vmatmul.f32.gmra.mxu0 %v8146
  %v8261 = vpop.f32.mrf.mxu0
  %v8262 = vadd.f32 0.0, %v8261
  %8263 = vmatmul.f32.gmra.mxu0 %v8149
  %v8264 = vpop.f32.mrf.mxu0
  %v8265 = vadd.f32 0.0, %v8264
  %8266 = vmatmul.f32.gmra.mxu0 %v8152
  %v8267 = vpop.f32.mrf.mxu0
  %v8268 = vadd.f32 0.0, %v8267
  %8269 = vmatmul.f32.gmra.mxu0 %v8155
  %v8270 = vpop.f32.mrf.mxu0
  %v8271 = vadd.f32 0.0, %v8270
  %8272 = vmatmul.f32.gmra.mxu0 %v8158
  %v8273 = vpop.f32.mrf.mxu0
  %v8274 = vadd.f32 0.0, %v8273
  %8275 = vmatmul.f32.gmra.mxu0 %v8161
  %v8276 = vpop.f32.mrf.mxu0
  %v8277 = vadd.f32 0.0, %v8276
  %8278 = vmatmul.f32.gmra.mxu0 %v8164
  %v8279 = vpop.f32.mrf.mxu0
  %v8280 = vadd.f32 0.0, %v8279
  %8281 = vmatmul.f32.gmra.mxu0 %v8167
  %v8282 = vpop.f32.mrf.mxu0
  %v8283 = vadd.f32 0.0, %v8282
  %8284 = vmatmul.f32.gmra.mxu0 %v8170
  %v8285 = vpop.f32.mrf.mxu0
  %v8286 = vadd.f32 0.0, %v8285
  %8287 = vmatmul.f32.gmra.mxu0 %v8173
  %v8288 = vpop.f32.mrf.mxu0
  %v8289 = vadd.f32 0.0, %v8288
  %8290 = vmatmul.f32.gmra.mxu0 %v8176
  %v8291 = vpop.f32.mrf.mxu0
  %v8292 = vadd.f32 0.0, %v8291
  %8293 = vdwg.mxu0
  %v8294 = vadd.f32 %v7953, %v8199
  %v8295 = vadd.f32 %v7954, %v8202
  %v8296 = vadd.f32 %v7955, %v8205
  %v8297 = vadd.f32 %v7956, %v8208
  %v8298 = vadd.f32 %v7957, %v8211
  %v8299 = vadd.f32 %v7958, %v8214
  %v8300 = vadd.f32 %v7959, %v8217
  %v8301 = vadd.f32 %v7960, %v8220
  %v8302 = vadd.f32 %v7961, %v8223
  %v8303 = vadd.f32 %v7962, %v8226
  %v8304 = vadd.f32 %v7963, %v8229
  %v8305 = vadd.f32 %v7964, %v8232
  %v8306 = vadd.f32 %v7965, %v8235
  %v8307 = vadd.f32 %v7966, %v8238
  %v8308 = vadd.f32 %v7967, %v8241
  %v8309 = vadd.f32 %v7968, %v8244
  %v8310 = vadd.f32 %v7969, %v8247
  %v8311 = vadd.f32 %v7970, %v8250
  %v8312 = vadd.f32 %v7971, %v8253
  %v8313 = vadd.f32 %v7972, %v8256
  %v8314 = vadd.f32 %v7973, %v8259
  %v8315 = vadd.f32 %v7974, %v8262
  %v8316 = vadd.f32 %v7975, %v8265
  %v8317 = vadd.f32 %v7976, %v8268
  %v8318 = vadd.f32 %v7977, %v8271
  %v8319 = vadd.f32 %v7978, %v8274
  %v8320 = vadd.f32 %v7979, %v8277
  %v8321 = vadd.f32 %v7980, %v8280
  %v8322 = vadd.f32 %v7981, %v8283
  %v8323 = vadd.f32 %v7982, %v8286
  %v8324 = vadd.f32 %v7983, %v8289
  %v8325 = vadd.f32 %v7984, %v8292
  %v8326 = vld [vmem:[%s1962] sm:$0xff]
  %v8327 = vld [vmem:[%s1962 + $0x8] sm:$0xff]
  %v8328 = vld [vmem:[%s1962 + $0x10] sm:$0xff]
  %v8329 = vld [vmem:[%s1962 + $0x18] sm:$0xff]
  %v8330 = vld [vmem:[%s1962 + $0x20] sm:$0xff]
  %v8331 = vld [vmem:[%s1962 + $0x28] sm:$0xff]
  %v8332 = vld [vmem:[%s1962 + $0x30] sm:$0xff]
  %v8333 = vld [vmem:[%s1962 + $0x38] sm:$0xff]
  %v8334 = vld [vmem:[%s1962 + $0x40] sm:$0xff]
  %v8335 = vld [vmem:[%s1962 + $0x48] sm:$0xff]
  %v8336 = vld [vmem:[%s1962 + $0x50] sm:$0xff]
  %v8337 = vld [vmem:[%s1962 + $0x58] sm:$0xff]
  %v8338 = vld [vmem:[%s1962 + $0x60] sm:$0xff]
  %v8339 = vld [vmem:[%s1962 + $0x68] sm:$0xff]
  %v8340 = vld [vmem:[%s1962 + $0x70] sm:$0xff]
  %v8341 = vld [vmem:[%s1962 + $0x78] sm:$0xff]
  %v8342 = vld [vmem:[%s1962 + $0x80] sm:$0xff]
  %v8343 = vld [vmem:[%s1962 + $0x88] sm:$0xff]
  %v8344 = vld [vmem:[%s1962 + $0x90] sm:$0xff]
  %v8345 = vld [vmem:[%s1962 + $0x98] sm:$0xff]
  %v8346 = vld [vmem:[%s1962 + $0xa0] sm:$0xff]
  %v8347 = vld [vmem:[%s1962 + $0xa8] sm:$0xff]
  %v8348 = vld [vmem:[%s1962 + $0xb0] sm:$0xff]
  %v8349 = vld [vmem:[%s1962 + $0xb8] sm:$0xff]
  %v8350 = vld [vmem:[%s1962 + $0xc0] sm:$0xff]
  %v8351 = vld [vmem:[%s1962 + $0xc8] sm:$0xff]
  %v8352 = vld [vmem:[%s1962 + $0xd0] sm:$0xff]
  %v8353 = vld [vmem:[%s1962 + $0xd8] sm:$0xff]
  %v8354 = vld [vmem:[%s1962 + $0xe0] sm:$0xff]
  %v8355 = vld [vmem:[%s1962 + $0xe8] sm:$0xff]
  %v8356 = vld [vmem:[%s1962 + $0xf0] sm:$0xff]
  %v8357 = vld [vmem:[%s1962 + $0xf8] sm:$0xff]
  %v8358 = vrot.slane %v8326, 7
  %v8359 = vrot.slane %v8327, 7
  %v8360 = vrot.slane %v8328, 7
  %v8361 = vrot.slane %v8329, 7
  %v8362 = vrot.slane %v8330, 7
  %v8363 = vrot.slane %v8331, 7
  %v8364 = vrot.slane %v8332, 7
  %v8365 = vrot.slane %v8333, 7
  %v8366 = vrot.slane %v8334, 7
  %v8367 = vrot.slane %v8335, 7
  %v8368 = vrot.slane %v8336, 7
  %v8369 = vrot.slane %v8337, 7
  %v8370 = vrot.slane %v8338, 7
  %v8371 = vrot.slane %v8339, 7
  %v8372 = vrot.slane %v8340, 7
  %v8373 = vrot.slane %v8341, 7
  %v8374 = vrot.slane %v8342, 7
  %v8375 = vrot.slane %v8343, 7
  %v8376 = vrot.slane %v8344, 7
  %v8377 = vrot.slane %v8345, 7
  %v8378 = vrot.slane %v8346, 7
  %v8379 = vrot.slane %v8347, 7
  %v8380 = vrot.slane %v8348, 7
  %v8381 = vrot.slane %v8349, 7
  %v8382 = vrot.slane %v8350, 7
  %v8383 = vrot.slane %v8351, 7
  %v8384 = vrot.slane %v8352, 7
  %v8385 = vrot.slane %v8353, 7
  %v8386 = vrot.slane %v8354, 7
  %v8387 = vrot.slane %v8355, 7
  %v8388 = vrot.slane %v8356, 7
  %v8389 = vrot.slane %v8357, 7
  %v8390 = vsel %vm164, %v8388, %v8389
  %v8391 = vsel %vm164, %v8387, %v8388
  %v8392 = vsel %vm164, %v8386, %v8387
  %v8393 = vsel %vm164, %v8385, %v8386
  %v8394 = vsel %vm164, %v8384, %v8385
  %v8395 = vsel %vm164, %v8383, %v8384
  %v8396 = vsel %vm164, %v8382, %v8383
  %v8397 = vsel %vm164, %v8381, %v8382
  %v8398 = vsel %vm164, %v8380, %v8381
  %v8399 = vsel %vm164, %v8379, %v8380
  %v8400 = vsel %vm164, %v8378, %v8379
  %v8401 = vsel %vm164, %v8377, %v8378
  %v8402 = vsel %vm164, %v8376, %v8377
  %v8403 = vsel %vm164, %v8375, %v8376
  %v8404 = vsel %vm164, %v8374, %v8375
  %v8405 = vsel %vm164, %v8373, %v8374
  %v8406 = vsel %vm164, %v8372, %v8373
  %v8407 = vsel %vm164, %v8371, %v8372
  %v8408 = vsel %vm164, %v8370, %v8371
  %v8409 = vsel %vm164, %v8369, %v8370
  %v8410 = vsel %vm164, %v8368, %v8369
  %v8411 = vsel %vm164, %v8367, %v8368
  %v8412 = vsel %vm164, %v8366, %v8367
  %v8413 = vsel %vm164, %v8365, %v8366
  %v8414 = vsel %vm164, %v8364, %v8365
  %v8415 = vsel %vm164, %v8363, %v8364
  %v8416 = vsel %vm164, %v8362, %v8363
  %v8417 = vsel %vm164, %v8361, %v8362
  %v8418 = vsel %vm164, %v8360, %v8361
  %v8419 = vsel %vm164, %v8359, %v8360
  %v8420 = vsel %vm164, %v8358, %v8359
  %v8421 = vsel %vm164, %v8389, %v8358
  %v8422 = vmul.f32 %v8421, %v27
  %v8423 = vmul.f32 %v8420, %v28
  %v8424 = vmul.f32 %v8419, %v27
  %v8425 = vmul.f32 %v8418, %v28
  %v8426 = vmul.f32 %v8417, %v27
  %v8427 = vmul.f32 %v8416, %v28
  %v8428 = vmul.f32 %v8415, %v27
  %v8429 = vmul.f32 %v8414, %v28
  %v8430 = vmul.f32 %v8413, %v27
  %v8431 = vmul.f32 %v8412, %v28
  %v8432 = vmul.f32 %v8411, %v27
  %v8433 = vmul.f32 %v8410, %v28
  %v8434 = vmul.f32 %v8409, %v27
  %v8435 = vmul.f32 %v8408, %v28
  %v8436 = vmul.f32 %v8407, %v27
  %v8437 = vmul.f32 %v8406, %v28
  %v8438 = vmul.f32 %v8405, %v27
  %v8439 = vmul.f32 %v8404, %v28
  %v8440 = vmul.f32 %v8403, %v27
  %v8441 = vmul.f32 %v8402, %v28
  %v8442 = vmul.f32 %v8401, %v27
  %v8443 = vmul.f32 %v8400, %v28
  %v8444 = vmul.f32 %v8399, %v27
  %v8445 = vmul.f32 %v8398, %v28
  %v8446 = vmul.f32 %v8397, %v27
  %v8447 = vmul.f32 %v8396, %v28
  %v8448 = vmul.f32 %v8395, %v27
  %v8449 = vmul.f32 %v8394, %v28
  %v8450 = vmul.f32 %v8393, %v27
  %v8451 = vmul.f32 %v8392, %v28
  %v8452 = vmul.f32 %v8391, %v27
  %v8453 = vmul.f32 %v8390, %v28
  %v8454 = vld [vmem:[%s2091] sm:$0xf]
  %v8456 = vsel %vm14, %v8422, 0
  %v8459 = vsel %vm14, %v8423, 0
  %v8462 = vsel %vm14, %v8424, 0
  %v8465 = vsel %vm14, %v8425, 0
  %v8468 = vsel %vm14, %v8426, 0
  %v8471 = vsel %vm14, %v8427, 0
  %v8474 = vsel %vm14, %v8428, 0
  %v8477 = vsel %vm14, %v8429, 0
  %v8480 = vsel %vm14, %v8430, 0
  %v8483 = vsel %vm14, %v8431, 0
  %v8486 = vsel %vm14, %v8432, 0
  %v8489 = vsel %vm14, %v8433, 0
  %v8492 = vsel %vm14, %v8434, 0
  %v8495 = vsel %vm14, %v8435, 0
  %v8498 = vsel %vm14, %v8436, 0
  %v8501 = vsel %vm14, %v8437, 0
  %v8504 = vsel %vm14, %v8438, 0
  %v8507 = vsel %vm14, %v8439, 0
  %v8510 = vsel %vm14, %v8440, 0
  %v8513 = vsel %vm14, %v8441, 0
  %v8516 = vsel %vm14, %v8442, 0
  %v8519 = vsel %vm14, %v8443, 0
  %v8522 = vsel %vm14, %v8444, 0
  %v8525 = vsel %vm14, %v8445, 0
  %v8528 = vsel %vm14, %v8446, 0
  %v8531 = vsel %vm14, %v8447, 0
  %v8534 = vsel %vm14, %v8448, 0
  %v8537 = vsel %vm14, %v8449, 0
  %v8540 = vsel %vm14, %v8450, 0
  %v8543 = vsel %vm14, %v8451, 0
  %v8546 = vsel %vm14, %v8452, 0
  %v8549 = vsel %vm14, %v8453, 0
  %v8552 = vsel %vm328, %v8454, 0
  %8554 = vmatpush.msra.mxu0 0.0
  %8555 = vmatpush.msra.mxu0 0.0
  %8556 = vmatpush.msra.mxu0 0.0
  %8557 = vmatpush.msra.mxu0 0.0
  %8558 = vmatpush.msra.mxu0 0.0
  %8559 = vmatpush.msra.mxu0 0.0
  %8560 = vmatpush.msra.mxu0 0.0
  %8561 = vmatpush.msra.mxu0 0.0
  %8562 = vmatpush.msra.mxu0 0.0
  %8563 = vmatpush.msra.mxu0 0.0
  %8564 = vmatpush.msra.mxu0 0.0
  %8565 = vmatpush.msra.mxu0 0.0
  %8566 = vmatpush.msra.mxu0 0.0
  %8567 = vmatpush.msra.mxu0 0.0
  %8568 = vmatpush.msra.mxu0 0.0
  %8569 = vmatpush.msra.mxu0 %v8552
  %8570 = vmatmul.f32.gmra.mxu0 %v8456
  %v8571 = vpop.f32.mrf.mxu0
  %v8572 = vadd.f32 0.0, %v8571
  %8573 = vmatmul.f32.gmra.mxu0 %v8459
  %v8574 = vpop.f32.mrf.mxu0
  %v8575 = vadd.f32 0.0, %v8574
  %8576 = vmatmul.f32.gmra.mxu0 %v8462
  %v8577 = vpop.f32.mrf.mxu0
  %v8578 = vadd.f32 0.0, %v8577
  %8579 = vmatmul.f32.gmra.mxu0 %v8465
  %v8580 = vpop.f32.mrf.mxu0
  %v8581 = vadd.f32 0.0, %v8580
  %8582 = vmatmul.f32.gmra.mxu0 %v8468
  %v8583 = vpop.f32.mrf.mxu0
  %v8584 = vadd.f32 0.0, %v8583
  %8585 = vmatmul.f32.gmra.mxu0 %v8471
  %v8586 = vpop.f32.mrf.mxu0
  %v8587 = vadd.f32 0.0, %v8586
  %8588 = vmatmul.f32.gmra.mxu0 %v8474
  %v8589 = vpop.f32.mrf.mxu0
  %v8590 = vadd.f32 0.0, %v8589
  %8591 = vmatmul.f32.gmra.mxu0 %v8477
  %v8592 = vpop.f32.mrf.mxu0
  %v8593 = vadd.f32 0.0, %v8592
  %8594 = vmatmul.f32.gmra.mxu0 %v8480
  %v8595 = vpop.f32.mrf.mxu0
  %v8596 = vadd.f32 0.0, %v8595
  %8597 = vmatmul.f32.gmra.mxu0 %v8483
  %v8598 = vpop.f32.mrf.mxu0
  %v8599 = vadd.f32 0.0, %v8598
  %8600 = vmatmul.f32.gmra.mxu0 %v8486
  %v8601 = vpop.f32.mrf.mxu0
  %v8602 = vadd.f32 0.0, %v8601
  %8603 = vmatmul.f32.gmra.mxu0 %v8489
  %v8604 = vpop.f32.mrf.mxu0
  %v8605 = vadd.f32 0.0, %v8604
  %8606 = vmatmul.f32.gmra.mxu0 %v8492
  %v8607 = vpop.f32.mrf.mxu0
  %v8608 = vadd.f32 0.0, %v8607
  %8609 = vmatmul.f32.gmra.mxu0 %v8495
  %v8610 = vpop.f32.mrf.mxu0
  %v8611 = vadd.f32 0.0, %v8610
  %8612 = vmatmul.f32.gmra.mxu0 %v8498
  %v8613 = vpop.f32.mrf.mxu0
  %v8614 = vadd.f32 0.0, %v8613
  %8615 = vmatmul.f32.gmra.mxu0 %v8501
  %v8616 = vpop.f32.mrf.mxu0
  %v8617 = vadd.f32 0.0, %v8616
  %8618 = vmatmul.f32.gmra.mxu0 %v8504
  %v8619 = vpop.f32.mrf.mxu0
  %v8620 = vadd.f32 0.0, %v8619
  %8621 = vmatmul.f32.gmra.mxu0 %v8507
  %v8622 = vpop.f32.mrf.mxu0
  %v8623 = vadd.f32 0.0, %v8622
  %8624 = vmatmul.f32.gmra.mxu0 %v8510
  %v8625 = vpop.f32.mrf.mxu0
  %v8626 = vadd.f32 0.0, %v8625
  %8627 = vmatmul.f32.gmra.mxu0 %v8513
  %v8628 = vpop.f32.mrf.mxu0
  %v8629 = vadd.f32 0.0, %v8628
  %8630 = vmatmul.f32.gmra.mxu0 %v8516
  %v8631 = vpop.f32.mrf.mxu0
  %v8632 = vadd.f32 0.0, %v8631
  %8633 = vmatmul.f32.gmra.mxu0 %v8519
  %v8634 = vpop.f32.mrf.mxu0
  %v8635 = vadd.f32 0.0, %v8634
  %8636 = vmatmul.f32.gmra.mxu0 %v8522
  %v8637 = vpop.f32.mrf.mxu0
  %v8638 = vadd.f32 0.0, %v8637
  %8639 = vmatmul.f32.gmra.mxu0 %v8525
  %v8640 = vpop.f32.mrf.mxu0
  %v8641 = vadd.f32 0.0, %v8640
  %8642 = vmatmul.f32.gmra.mxu0 %v8528
  %v8643 = vpop.f32.mrf.mxu0
  %v8644 = vadd.f32 0.0, %v8643
  %8645 = vmatmul.f32.gmra.mxu0 %v8531
  %v8646 = vpop.f32.mrf.mxu0
  %v8647 = vadd.f32 0.0, %v8646
  %8648 = vmatmul.f32.gmra.mxu0 %v8534
  %v8649 = vpop.f32.mrf.mxu0
  %v8650 = vadd.f32 0.0, %v8649
  %8651 = vmatmul.f32.gmra.mxu0 %v8537
  %v8652 = vpop.f32.mrf.mxu0
  %v8653 = vadd.f32 0.0, %v8652
  %8654 = vmatmul.f32.gmra.mxu0 %v8540
  %v8655 = vpop.f32.mrf.mxu0
  %v8656 = vadd.f32 0.0, %v8655
  %8657 = vmatmul.f32.gmra.mxu0 %v8543
  %v8658 = vpop.f32.mrf.mxu0
  %v8659 = vadd.f32 0.0, %v8658
  %8660 = vmatmul.f32.gmra.mxu0 %v8546
  %v8661 = vpop.f32.mrf.mxu0
  %v8662 = vadd.f32 0.0, %v8661
  %8663 = vmatmul.f32.gmra.mxu0 %v8549
  %v8664 = vpop.f32.mrf.mxu0
  %v8665 = vadd.f32 0.0, %v8664
  %8666 = vdwg.mxu0
  %v8667 = vadd.f32 %v8294, %v8572
  %v8668 = vadd.f32 %v8295, %v8575
  %v8669 = vadd.f32 %v8296, %v8578
  %v8670 = vadd.f32 %v8297, %v8581
  %v8671 = vadd.f32 %v8298, %v8584
  %v8672 = vadd.f32 %v8299, %v8587
  %v8673 = vadd.f32 %v8300, %v8590
  %v8674 = vadd.f32 %v8301, %v8593
  %v8675 = vadd.f32 %v8302, %v8596
  %v8676 = vadd.f32 %v8303, %v8599
  %v8677 = vadd.f32 %v8304, %v8602
  %v8678 = vadd.f32 %v8305, %v8605
  %v8679 = vadd.f32 %v8306, %v8608
  %v8680 = vadd.f32 %v8307, %v8611
  %v8681 = vadd.f32 %v8308, %v8614
  %v8682 = vadd.f32 %v8309, %v8617
  %v8683 = vadd.f32 %v8310, %v8620
  %v8684 = vadd.f32 %v8311, %v8623
  %v8685 = vadd.f32 %v8312, %v8626
  %v8686 = vadd.f32 %v8313, %v8629
  %v8687 = vadd.f32 %v8314, %v8632
  %v8688 = vadd.f32 %v8315, %v8635
  %v8689 = vadd.f32 %v8316, %v8638
  %v8690 = vadd.f32 %v8317, %v8641
  %v8691 = vadd.f32 %v8318, %v8644
  %v8692 = vadd.f32 %v8319, %v8647
  %v8693 = vadd.f32 %v8320, %v8650
  %v8694 = vadd.f32 %v8321, %v8653
  %v8695 = vadd.f32 %v8322, %v8656
  %v8696 = vadd.f32 %v8323, %v8659
  %v8697 = vadd.f32 %v8324, %v8662
  %v8698 = vadd.f32 %v8325, %v8665
  %v8699 = vld [vmem:[%s2337] sm:$0xf]
  %v8701 = vsel %vm14, %v8326, 0
  %v8704 = vsel %vm14, %v8327, 0
  %v8707 = vsel %vm14, %v8328, 0
  %v8710 = vsel %vm14, %v8329, 0
  %v8713 = vsel %vm14, %v8330, 0
  %v8716 = vsel %vm14, %v8331, 0
  %v8719 = vsel %vm14, %v8332, 0
  %v8722 = vsel %vm14, %v8333, 0
  %v8725 = vsel %vm14, %v8334, 0
  %v8728 = vsel %vm14, %v8335, 0
  %v8731 = vsel %vm14, %v8336, 0
  %v8734 = vsel %vm14, %v8337, 0
  %v8737 = vsel %vm14, %v8338, 0
  %v8740 = vsel %vm14, %v8339, 0
  %v8743 = vsel %vm14, %v8340, 0
  %v8746 = vsel %vm14, %v8341, 0
  %v8749 = vsel %vm14, %v8342, 0
  %v8752 = vsel %vm14, %v8343, 0
  %v8755 = vsel %vm14, %v8344, 0
  %v8758 = vsel %vm14, %v8345, 0
  %v8761 = vsel %vm14, %v8346, 0
  %v8764 = vsel %vm14, %v8347, 0
  %v8767 = vsel %vm14, %v8348, 0
  %v8770 = vsel %vm14, %v8349, 0
  %v8773 = vsel %vm14, %v8350, 0
  %v8776 = vsel %vm14, %v8351, 0
  %v8779 = vsel %vm14, %v8352, 0
  %v8782 = vsel %vm14, %v8353, 0
  %v8785 = vsel %vm14, %v8354, 0
  %v8788 = vsel %vm14, %v8355, 0
  %v8791 = vsel %vm14, %v8356, 0
  %v8794 = vsel %vm14, %v8357, 0
  %v8797 = vsel %vm328, %v8699, 0
  %8799 = vmatpush.msra.mxu0 0.0
  %8800 = vmatpush.msra.mxu0 0.0
  %8801 = vmatpush.msra.mxu0 0.0
  %8802 = vmatpush.msra.mxu0 0.0
  %8803 = vmatpush.msra.mxu0 0.0
  %8804 = vmatpush.msra.mxu0 0.0
  %8805 = vmatpush.msra.mxu0 0.0
  %8806 = vmatpush.msra.mxu0 0.0
  %8807 = vmatpush.msra.mxu0 0.0
  %8808 = vmatpush.msra.mxu0 0.0
  %8809 = vmatpush.msra.mxu0 0.0
  %8810 = vmatpush.msra.mxu0 0.0
  %8811 = vmatpush.msra.mxu0 0.0
  %8812 = vmatpush.msra.mxu0 0.0
  %8813 = vmatpush.msra.mxu0 0.0
  %8814 = vmatpush.msra.mxu0 %v8797
  %8815 = vmatmul.f32.gmra.mxu0 %v8701
  %v8816 = vpop.f32.mrf.mxu0
  %v8817 = vadd.f32 0.0, %v8816
  %8818 = vmatmul.f32.gmra.mxu0 %v8704
  %v8819 = vpop.f32.mrf.mxu0
  %v8820 = vadd.f32 0.0, %v8819
  %8821 = vmatmul.f32.gmra.mxu0 %v8707
  %v8822 = vpop.f32.mrf.mxu0
  %v8823 = vadd.f32 0.0, %v8822
  %8824 = vmatmul.f32.gmra.mxu0 %v8710
  %v8825 = vpop.f32.mrf.mxu0
  %v8826 = vadd.f32 0.0, %v8825
  %8827 = vmatmul.f32.gmra.mxu0 %v8713
  %v8828 = vpop.f32.mrf.mxu0
  %v8829 = vadd.f32 0.0, %v8828
  %8830 = vmatmul.f32.gmra.mxu0 %v8716
  %v8831 = vpop.f32.mrf.mxu0
  %v8832 = vadd.f32 0.0, %v8831
  %8833 = vmatmul.f32.gmra.mxu0 %v8719
  %v8834 = vpop.f32.mrf.mxu0
  %v8835 = vadd.f32 0.0, %v8834
  %8836 = vmatmul.f32.gmra.mxu0 %v8722
  %v8837 = vpop.f32.mrf.mxu0
  %v8838 = vadd.f32 0.0, %v8837
  %8839 = vmatmul.f32.gmra.mxu0 %v8725
  %v8840 = vpop.f32.mrf.mxu0
  %v8841 = vadd.f32 0.0, %v8840
  %8842 = vmatmul.f32.gmra.mxu0 %v8728
  %v8843 = vpop.f32.mrf.mxu0
  %v8844 = vadd.f32 0.0, %v8843
  %8845 = vmatmul.f32.gmra.mxu0 %v8731
  %v8846 = vpop.f32.mrf.mxu0
  %v8847 = vadd.f32 0.0, %v8846
  %8848 = vmatmul.f32.gmra.mxu0 %v8734
  %v8849 = vpop.f32.mrf.mxu0
  %v8850 = vadd.f32 0.0, %v8849
  %8851 = vmatmul.f32.gmra.mxu0 %v8737
  %v8852 = vpop.f32.mrf.mxu0
  %v8853 = vadd.f32 0.0, %v8852
  %8854 = vmatmul.f32.gmra.mxu0 %v8740
  %v8855 = vpop.f32.mrf.mxu0
  %v8856 = vadd.f32 0.0, %v8855
  %8857 = vmatmul.f32.gmra.mxu0 %v8743
  %v8858 = vpop.f32.mrf.mxu0
  %v8859 = vadd.f32 0.0, %v8858
  %8860 = vmatmul.f32.gmra.mxu0 %v8746
  %v8861 = vpop.f32.mrf.mxu0
  %v8862 = vadd.f32 0.0, %v8861
  %8863 = vmatmul.f32.gmra.mxu0 %v8749
  %v8864 = vpop.f32.mrf.mxu0
  %v8865 = vadd.f32 0.0, %v8864
  %8866 = vmatmul.f32.gmra.mxu0 %v8752
  %v8867 = vpop.f32.mrf.mxu0
  %v8868 = vadd.f32 0.0, %v8867
  %8869 = vmatmul.f32.gmra.mxu0 %v8755
  %v8870 = vpop.f32.mrf.mxu0
  %v8871 = vadd.f32 0.0, %v8870
  %8872 = vmatmul.f32.gmra.mxu0 %v8758
  %v8873 = vpop.f32.mrf.mxu0
  %v8874 = vadd.f32 0.0, %v8873
  %8875 = vmatmul.f32.gmra.mxu0 %v8761
  %v8876 = vpop.f32.mrf.mxu0
  %v8877 = vadd.f32 0.0, %v8876
  %8878 = vmatmul.f32.gmra.mxu0 %v8764
  %v8879 = vpop.f32.mrf.mxu0
  %v8880 = vadd.f32 0.0, %v8879
  %8881 = vmatmul.f32.gmra.mxu0 %v8767
  %v8882 = vpop.f32.mrf.mxu0
  %v8883 = vadd.f32 0.0, %v8882
  %8884 = vmatmul.f32.gmra.mxu0 %v8770
  %v8885 = vpop.f32.mrf.mxu0
  %v8886 = vadd.f32 0.0, %v8885
  %8887 = vmatmul.f32.gmra.mxu0 %v8773
  %v8888 = vpop.f32.mrf.mxu0
  %v8889 = vadd.f32 0.0, %v8888
  %8890 = vmatmul.f32.gmra.mxu0 %v8776
  %v8891 = vpop.f32.mrf.mxu0
  %v8892 = vadd.f32 0.0, %v8891
  %8893 = vmatmul.f32.gmra.mxu0 %v8779
  %v8894 = vpop.f32.mrf.mxu0
  %v8895 = vadd.f32 0.0, %v8894
  %8896 = vmatmul.f32.gmra.mxu0 %v8782
  %v8897 = vpop.f32.mrf.mxu0
  %v8898 = vadd.f32 0.0, %v8897
  %8899 = vmatmul.f32.gmra.mxu0 %v8785
  %v8900 = vpop.f32.mrf.mxu0
  %v8901 = vadd.f32 0.0, %v8900
  %8902 = vmatmul.f32.gmra.mxu0 %v8788
  %v8903 = vpop.f32.mrf.mxu0
  %v8904 = vadd.f32 0.0, %v8903
  %8905 = vmatmul.f32.gmra.mxu0 %v8791
  %v8906 = vpop.f32.mrf.mxu0
  %v8907 = vadd.f32 0.0, %v8906
  %8908 = vmatmul.f32.gmra.mxu0 %v8794
  %v8909 = vpop.f32.mrf.mxu0
  %v8910 = vadd.f32 0.0, %v8909
  %8911 = vdwg.mxu0
  %v8912 = vadd.f32 %v8667, %v8817
  %v8913 = vadd.f32 %v8668, %v8820
  %v8914 = vadd.f32 %v8669, %v8823
  %v8915 = vadd.f32 %v8670, %v8826
  %v8916 = vadd.f32 %v8671, %v8829
  %v8917 = vadd.f32 %v8672, %v8832
  %v8918 = vadd.f32 %v8673, %v8835
  %v8919 = vadd.f32 %v8674, %v8838
  %v8920 = vadd.f32 %v8675, %v8841
  %v8921 = vadd.f32 %v8676, %v8844
  %v8922 = vadd.f32 %v8677, %v8847
  %v8923 = vadd.f32 %v8678, %v8850
  %v8924 = vadd.f32 %v8679, %v8853
  %v8925 = vadd.f32 %v8680, %v8856
  %v8926 = vadd.f32 %v8681, %v8859
  %v8927 = vadd.f32 %v8682, %v8862
  %v8928 = vadd.f32 %v8683, %v8865
  %v8929 = vadd.f32 %v8684, %v8868
  %v8930 = vadd.f32 %v8685, %v8871
  %v8931 = vadd.f32 %v8686, %v8874
  %v8932 = vadd.f32 %v8687, %v8877
  %v8933 = vadd.f32 %v8688, %v8880
  %v8934 = vadd.f32 %v8689, %v8883
  %v8935 = vadd.f32 %v8690, %v8886
  %v8936 = vadd.f32 %v8691, %v8889
  %v8937 = vadd.f32 %v8692, %v8892
  %v8938 = vadd.f32 %v8693, %v8895
  %v8939 = vadd.f32 %v8694, %v8898
  %v8940 = vadd.f32 %v8695, %v8901
  %v8941 = vadd.f32 %v8696, %v8904
  %v8942 = vadd.f32 %v8697, %v8907
  %v8943 = vadd.f32 %v8698, %v8910
  %v8944 = vrot.slane %v8326, 1
  %v8945 = vrot.slane %v8327, 1
  %v8946 = vrot.slane %v8328, 1
  %v8947 = vrot.slane %v8329, 1
  %v8948 = vrot.slane %v8330, 1
  %v8949 = vrot.slane %v8331, 1
  %v8950 = vrot.slane %v8332, 1
  %v8951 = vrot.slane %v8333, 1
  %v8952 = vrot.slane %v8334, 1
  %v8953 = vrot.slane %v8335, 1
  %v8954 = vrot.slane %v8336, 1
  %v8955 = vrot.slane %v8337, 1
  %v8956 = vrot.slane %v8338, 1
  %v8957 = vrot.slane %v8339, 1
  %v8958 = vrot.slane %v8340, 1
  %v8959 = vrot.slane %v8341, 1
  %v8960 = vrot.slane %v8342, 1
  %v8961 = vrot.slane %v8343, 1
  %v8962 = vrot.slane %v8344, 1
  %v8963 = vrot.slane %v8345, 1
  %v8964 = vrot.slane %v8346, 1
  %v8965 = vrot.slane %v8347, 1
  %v8966 = vrot.slane %v8348, 1
  %v8967 = vrot.slane %v8349, 1
  %v8968 = vrot.slane %v8350, 1
  %v8969 = vrot.slane %v8351, 1
  %v8970 = vrot.slane %v8352, 1
  %v8971 = vrot.slane %v8353, 1
  %v8972 = vrot.slane %v8354, 1
  %v8973 = vrot.slane %v8355, 1
  %v8974 = vrot.slane %v8356, 1
  %v8975 = vrot.slane %v8357, 1
  %v8976 = vsel %vm689, %v8974, %v8975
  %v8977 = vsel %vm689, %v8973, %v8974
  %v8978 = vsel %vm689, %v8972, %v8973
  %v8979 = vsel %vm689, %v8971, %v8972
  %v8980 = vsel %vm689, %v8970, %v8971
  %v8981 = vsel %vm689, %v8969, %v8970
  %v8982 = vsel %vm689, %v8968, %v8969
  %v8983 = vsel %vm689, %v8967, %v8968
  %v8984 = vsel %vm689, %v8966, %v8967
  %v8985 = vsel %vm689, %v8965, %v8966
  %v8986 = vsel %vm689, %v8964, %v8965
  %v8987 = vsel %vm689, %v8963, %v8964
  %v8988 = vsel %vm689, %v8962, %v8963
  %v8989 = vsel %vm689, %v8961, %v8962
  %v8990 = vsel %vm689, %v8960, %v8961
  %v8991 = vsel %vm689, %v8959, %v8960
  %v8992 = vsel %vm689, %v8958, %v8959
  %v8993 = vsel %vm689, %v8957, %v8958
  %v8994 = vsel %vm689, %v8956, %v8957
  %v8995 = vsel %vm689, %v8955, %v8956
  %v8996 = vsel %vm689, %v8954, %v8955
  %v8997 = vsel %vm689, %v8953, %v8954
  %v8998 = vsel %vm689, %v8952, %v8953
  %v8999 = vsel %vm689, %v8951, %v8952
  %v9000 = vsel %vm689, %v8950, %v8951
  %v9001 = vsel %vm689, %v8949, %v8950
  %v9002 = vsel %vm689, %v8948, %v8949
  %v9003 = vsel %vm689, %v8947, %v8948
  %v9004 = vsel %vm689, %v8946, %v8947
  %v9005 = vsel %vm689, %v8945, %v8946
  %v9006 = vsel %vm689, %v8944, %v8945
  %v9007 = vsel %vm689, %v8975, %v8944
  %v9008 = vmul.f32 %v9006, %v33
  %v9009 = vmul.f32 %v9005, %v34
  %v9010 = vmul.f32 %v9004, %v33
  %v9011 = vmul.f32 %v9003, %v34
  %v9012 = vmul.f32 %v9002, %v33
  %v9013 = vmul.f32 %v9001, %v34
  %v9014 = vmul.f32 %v9000, %v33
  %v9015 = vmul.f32 %v8999, %v34
  %v9016 = vmul.f32 %v8998, %v33
  %v9017 = vmul.f32 %v8997, %v34
  %v9018 = vmul.f32 %v8996, %v33
  %v9019 = vmul.f32 %v8995, %v34
  %v9020 = vmul.f32 %v8994, %v33
  %v9021 = vmul.f32 %v8993, %v34
  %v9022 = vmul.f32 %v8992, %v33
  %v9023 = vmul.f32 %v8991, %v34
  %v9024 = vmul.f32 %v8990, %v33
  %v9025 = vmul.f32 %v8989, %v34
  %v9026 = vmul.f32 %v8988, %v33
  %v9027 = vmul.f32 %v8987, %v34
  %v9028 = vmul.f32 %v8986, %v33
  %v9029 = vmul.f32 %v8985, %v34
  %v9030 = vmul.f32 %v8984, %v33
  %v9031 = vmul.f32 %v8983, %v34
  %v9032 = vmul.f32 %v8982, %v33
  %v9033 = vmul.f32 %v8981, %v34
  %v9034 = vmul.f32 %v8980, %v33
  %v9035 = vmul.f32 %v8979, %v34
  %v9036 = vmul.f32 %v8978, %v33
  %v9037 = vmul.f32 %v8977, %v34
  %v9038 = vmul.f32 %v8976, %v33
  %v9039 = vmul.f32 %v9007, %v34
  %v9040 = vld [vmem:[%s2679] sm:$0xf]
  %v9042 = vsel %vm14, %v9008, 0
  %v9045 = vsel %vm14, %v9009, 0
  %v9048 = vsel %vm14, %v9010, 0
  %v9051 = vsel %vm14, %v9011, 0
  %v9054 = vsel %vm14, %v9012, 0
  %v9057 = vsel %vm14, %v9013, 0
  %v9060 = vsel %vm14, %v9014, 0
  %v9063 = vsel %vm14, %v9015, 0
  %v9066 = vsel %vm14, %v9016, 0
  %v9069 = vsel %vm14, %v9017, 0
  %v9072 = vsel %vm14, %v9018, 0
  %v9075 = vsel %vm14, %v9019, 0
  %v9078 = vsel %vm14, %v9020, 0
  %v9081 = vsel %vm14, %v9021, 0
  %v9084 = vsel %vm14, %v9022, 0
  %v9087 = vsel %vm14, %v9023, 0
  %v9090 = vsel %vm14, %v9024, 0
  %v9093 = vsel %vm14, %v9025, 0
  %v9096 = vsel %vm14, %v9026, 0
  %v9099 = vsel %vm14, %v9027, 0
  %v9102 = vsel %vm14, %v9028, 0
  %v9105 = vsel %vm14, %v9029, 0
  %v9108 = vsel %vm14, %v9030, 0
  %v9111 = vsel %vm14, %v9031, 0
  %v9114 = vsel %vm14, %v9032, 0
  %v9117 = vsel %vm14, %v9033, 0
  %v9120 = vsel %vm14, %v9034, 0
  %v9123 = vsel %vm14, %v9035, 0
  %v9126 = vsel %vm14, %v9036, 0
  %v9129 = vsel %vm14, %v9037, 0
  %v9132 = vsel %vm14, %v9038, 0
  %v9135 = vsel %vm14, %v9039, 0
  %v9138 = vsel %vm328, %v9040, 0
  %9140 = vmatpush.msra.mxu0 0.0
  %9141 = vmatpush.msra.mxu0 0.0
  %9142 = vmatpush.msra.mxu0 0.0
  %9143 = vmatpush.msra.mxu0 0.0
  %9144 = vmatpush.msra.mxu0 0.0
  %9145 = vmatpush.msra.mxu0 0.0
  %9146 = vmatpush.msra.mxu0 0.0
  %9147 = vmatpush.msra.mxu0 0.0
  %9148 = vmatpush.msra.mxu0 0.0
  %9149 = vmatpush.msra.mxu0 0.0
  %9150 = vmatpush.msra.mxu0 0.0
  %9151 = vmatpush.msra.mxu0 0.0
  %9152 = vmatpush.msra.mxu0 0.0
  %9153 = vmatpush.msra.mxu0 0.0
  %9154 = vmatpush.msra.mxu0 0.0
  %9155 = vmatpush.msra.mxu0 %v9138
  %9156 = vmatmul.f32.gmra.mxu0 %v9042
  %v9157 = vpop.f32.mrf.mxu0
  %v9158 = vadd.f32 0.0, %v9157
  %9159 = vmatmul.f32.gmra.mxu0 %v9045
  %v9160 = vpop.f32.mrf.mxu0
  %v9161 = vadd.f32 0.0, %v9160
  %9162 = vmatmul.f32.gmra.mxu0 %v9048
  %v9163 = vpop.f32.mrf.mxu0
  %v9164 = vadd.f32 0.0, %v9163
  %9165 = vmatmul.f32.gmra.mxu0 %v9051
  %v9166 = vpop.f32.mrf.mxu0
  %v9167 = vadd.f32 0.0, %v9166
  %9168 = vmatmul.f32.gmra.mxu0 %v9054
  %v9169 = vpop.f32.mrf.mxu0
  %v9170 = vadd.f32 0.0, %v9169
  %9171 = vmatmul.f32.gmra.mxu0 %v9057
  %v9172 = vpop.f32.mrf.mxu0
  %v9173 = vadd.f32 0.0, %v9172
  %9174 = vmatmul.f32.gmra.mxu0 %v9060
  %v9175 = vpop.f32.mrf.mxu0
  %v9176 = vadd.f32 0.0, %v9175
  %9177 = vmatmul.f32.gmra.mxu0 %v9063
  %v9178 = vpop.f32.mrf.mxu0
  %v9179 = vadd.f32 0.0, %v9178
  %9180 = vmatmul.f32.gmra.mxu0 %v9066
  %v9181 = vpop.f32.mrf.mxu0
  %v9182 = vadd.f32 0.0, %v9181
  %9183 = vmatmul.f32.gmra.mxu0 %v9069
  %v9184 = vpop.f32.mrf.mxu0
  %v9185 = vadd.f32 0.0, %v9184
  %9186 = vmatmul.f32.gmra.mxu0 %v9072
  %v9187 = vpop.f32.mrf.mxu0
  %v9188 = vadd.f32 0.0, %v9187
  %9189 = vmatmul.f32.gmra.mxu0 %v9075
  %v9190 = vpop.f32.mrf.mxu0
  %v9191 = vadd.f32 0.0, %v9190
  %9192 = vmatmul.f32.gmra.mxu0 %v9078
  %v9193 = vpop.f32.mrf.mxu0
  %v9194 = vadd.f32 0.0, %v9193
  %9195 = vmatmul.f32.gmra.mxu0 %v9081
  %v9196 = vpop.f32.mrf.mxu0
  %v9197 = vadd.f32 0.0, %v9196
  %9198 = vmatmul.f32.gmra.mxu0 %v9084
  %v9199 = vpop.f32.mrf.mxu0
  %v9200 = vadd.f32 0.0, %v9199
  %9201 = vmatmul.f32.gmra.mxu0 %v9087
  %v9202 = vpop.f32.mrf.mxu0
  %v9203 = vadd.f32 0.0, %v9202
  %9204 = vmatmul.f32.gmra.mxu0 %v9090
  %v9205 = vpop.f32.mrf.mxu0
  %v9206 = vadd.f32 0.0, %v9205
  %9207 = vmatmul.f32.gmra.mxu0 %v9093
  %v9208 = vpop.f32.mrf.mxu0
  %v9209 = vadd.f32 0.0, %v9208
  %9210 = vmatmul.f32.gmra.mxu0 %v9096
  %v9211 = vpop.f32.mrf.mxu0
  %v9212 = vadd.f32 0.0, %v9211
  %9213 = vmatmul.f32.gmra.mxu0 %v9099
  %v9214 = vpop.f32.mrf.mxu0
  %v9215 = vadd.f32 0.0, %v9214
  %9216 = vmatmul.f32.gmra.mxu0 %v9102
  %v9217 = vpop.f32.mrf.mxu0
  %v9218 = vadd.f32 0.0, %v9217
  %9219 = vmatmul.f32.gmra.mxu0 %v9105
  %v9220 = vpop.f32.mrf.mxu0
  %v9221 = vadd.f32 0.0, %v9220
  %9222 = vmatmul.f32.gmra.mxu0 %v9108
  %v9223 = vpop.f32.mrf.mxu0
  %v9224 = vadd.f32 0.0, %v9223
  %9225 = vmatmul.f32.gmra.mxu0 %v9111
  %v9226 = vpop.f32.mrf.mxu0
  %v9227 = vadd.f32 0.0, %v9226
  %9228 = vmatmul.f32.gmra.mxu0 %v9114
  %v9229 = vpop.f32.mrf.mxu0
  %v9230 = vadd.f32 0.0, %v9229
  %9231 = vmatmul.f32.gmra.mxu0 %v9117
  %v9232 = vpop.f32.mrf.mxu0
  %v9233 = vadd.f32 0.0, %v9232
  %9234 = vmatmul.f32.gmra.mxu0 %v9120
  %v9235 = vpop.f32.mrf.mxu0
  %v9236 = vadd.f32 0.0, %v9235
  %9237 = vmatmul.f32.gmra.mxu0 %v9123
  %v9238 = vpop.f32.mrf.mxu0
  %v9239 = vadd.f32 0.0, %v9238
  %9240 = vmatmul.f32.gmra.mxu0 %v9126
  %v9241 = vpop.f32.mrf.mxu0
  %v9242 = vadd.f32 0.0, %v9241
  %9243 = vmatmul.f32.gmra.mxu0 %v9129
  %v9244 = vpop.f32.mrf.mxu0
  %v9245 = vadd.f32 0.0, %v9244
  %9246 = vmatmul.f32.gmra.mxu0 %v9132
  %v9247 = vpop.f32.mrf.mxu0
  %v9248 = vadd.f32 0.0, %v9247
  %9249 = vmatmul.f32.gmra.mxu0 %v9135
  %v9250 = vpop.f32.mrf.mxu0
  %v9251 = vadd.f32 0.0, %v9250
  %9252 = vdwg.mxu0
  %v9253 = vadd.f32 %v8912, %v9158
  %v9254 = vadd.f32 %v8913, %v9161
  %v9255 = vadd.f32 %v8914, %v9164
  %v9256 = vadd.f32 %v8915, %v9167
  %v9257 = vadd.f32 %v8916, %v9170
  %v9258 = vadd.f32 %v8917, %v9173
  %v9259 = vadd.f32 %v8918, %v9176
  %v9260 = vadd.f32 %v8919, %v9179
  %v9261 = vadd.f32 %v8920, %v9182
  %v9262 = vadd.f32 %v8921, %v9185
  %v9263 = vadd.f32 %v8922, %v9188
  %v9264 = vadd.f32 %v8923, %v9191
  %v9265 = vadd.f32 %v8924, %v9194
  %v9266 = vadd.f32 %v8925, %v9197
  %v9267 = vadd.f32 %v8926, %v9200
  %v9268 = vadd.f32 %v8927, %v9203
  %v9269 = vadd.f32 %v8928, %v9206
  %v9270 = vadd.f32 %v8929, %v9209
  %v9271 = vadd.f32 %v8930, %v9212
  %v9272 = vadd.f32 %v8931, %v9215
  %v9273 = vadd.f32 %v8932, %v9218
  %v9274 = vadd.f32 %v8933, %v9221
  %v9275 = vadd.f32 %v8934, %v9224
  %v9276 = vadd.f32 %v8935, %v9227
  %v9277 = vadd.f32 %v8936, %v9230
  %v9278 = vadd.f32 %v8937, %v9233
  %v9279 = vadd.f32 %v8938, %v9236
  %v9280 = vadd.f32 %v8939, %v9239
  %v9281 = vadd.f32 %v8940, %v9242
  %v9282 = vadd.f32 %v8941, %v9245
  %v9283 = vadd.f32 %v8942, %v9248
  %v9284 = vadd.f32 %v8943, %v9251
  %v9285 = vsel %vm14, %v9253, 0.0
  %v9286 = vsel %vm14, %v9254, 0.0
  %v9287 = vadd.f32 %v9285, %v9286
  %v9288 = vsel %vm14, %v9255, 0.0
  %v9289 = vadd.f32 %v9287, %v9288
  %v9290 = vsel %vm14, %v9256, 0.0
  %v9291 = vadd.f32 %v9289, %v9290
  %v9292 = vsel %vm14, %v9257, 0.0
  %v9293 = vadd.f32 %v9291, %v9292
  %v9294 = vsel %vm14, %v9258, 0.0
  %v9295 = vadd.f32 %v9293, %v9294
  %v9296 = vsel %vm14, %v9259, 0.0
  %v9297 = vadd.f32 %v9295, %v9296
  %v9298 = vsel %vm14, %v9260, 0.0
  %v9299 = vadd.f32 %v9297, %v9298
  %v9300 = vsel %vm14, %v9261, 0.0
  %v9301 = vadd.f32 %v9299, %v9300
  %v9302 = vsel %vm14, %v9262, 0.0
  %v9303 = vadd.f32 %v9301, %v9302
  %v9304 = vsel %vm14, %v9263, 0.0
  %v9305 = vadd.f32 %v9303, %v9304
  %v9306 = vsel %vm14, %v9264, 0.0
  %v9307 = vadd.f32 %v9305, %v9306
  %v9308 = vsel %vm14, %v9265, 0.0
  %v9309 = vadd.f32 %v9307, %v9308
  %v9310 = vsel %vm14, %v9266, 0.0
  %v9311 = vadd.f32 %v9309, %v9310
  %v9312 = vsel %vm14, %v9267, 0.0
  %v9313 = vadd.f32 %v9311, %v9312
  %v9314 = vsel %vm14, %v9268, 0.0
  %v9315 = vadd.f32 %v9313, %v9314
  %v9316 = vsel %vm14, %v9269, 0.0
  %v9317 = vadd.f32 %v9315, %v9316
  %v9318 = vsel %vm14, %v9270, 0.0
  %v9319 = vadd.f32 %v9317, %v9318
  %v9320 = vsel %vm14, %v9271, 0.0
  %v9321 = vadd.f32 %v9319, %v9320
  %v9322 = vsel %vm14, %v9272, 0.0
  %v9323 = vadd.f32 %v9321, %v9322
  %v9324 = vsel %vm14, %v9273, 0.0
  %v9325 = vadd.f32 %v9323, %v9324
  %v9326 = vsel %vm14, %v9274, 0.0
  %v9327 = vadd.f32 %v9325, %v9326
  %v9328 = vsel %vm14, %v9275, 0.0
  %v9329 = vadd.f32 %v9327, %v9328
  %v9330 = vsel %vm14, %v9276, 0.0
  %v9331 = vadd.f32 %v9329, %v9330
  %v9332 = vsel %vm14, %v9277, 0.0
  %v9333 = vadd.f32 %v9331, %v9332
  %v9334 = vsel %vm14, %v9278, 0.0
  %v9335 = vadd.f32 %v9333, %v9334
  %v9336 = vsel %vm14, %v9279, 0.0
  %v9337 = vadd.f32 %v9335, %v9336
  %v9338 = vsel %vm14, %v9280, 0.0
  %v9339 = vadd.f32 %v9337, %v9338
  %v9340 = vsel %vm14, %v9281, 0.0
  %v9341 = vadd.f32 %v9339, %v9340
  %v9342 = vsel %vm14, %v9282, 0.0
  %v9343 = vadd.f32 %v9341, %v9342
  %v9344 = vsel %vm14, %v9283, 0.0
  %v9345 = vadd.f32 %v9343, %v9344
  %v9346 = vsel %vm14, %v9284, 0.0
  %v9347 = vadd.f32 %v9345, %v9346
  %v9348 = vrot.slane %v9347, 4
  %v9349 = vadd.f32 %v9347, %v9348
  %v9350 = vrot.slane %v9349, 2
  %v9351 = vadd.f32 %v9349, %v9350
  %v9352 = vrot.slane %v9351, 1
  %v9353 = vadd.f32 %v9351, %v9352
  %v9354 = vmul.f32 %v9353, %v3000
  %v9355 = vsub.f32 %v9253, %v9354
  %v9356 = vsub.f32 %v9254, %v9354
  %v9357 = vsub.f32 %v9255, %v9354
  %v9358 = vsub.f32 %v9256, %v9354
  %v9359 = vsub.f32 %v9257, %v9354
  %v9360 = vsub.f32 %v9258, %v9354
  %v9361 = vsub.f32 %v9259, %v9354
  %v9362 = vsub.f32 %v9260, %v9354
  %v9363 = vsub.f32 %v9261, %v9354
  %v9364 = vsub.f32 %v9262, %v9354
  %v9365 = vsub.f32 %v9263, %v9354
  %v9366 = vsub.f32 %v9264, %v9354
  %v9367 = vsub.f32 %v9265, %v9354
  %v9368 = vsub.f32 %v9266, %v9354
  %v9369 = vsub.f32 %v9267, %v9354
  %v9370 = vsub.f32 %v9268, %v9354
  %v9371 = vsub.f32 %v9269, %v9354
  %v9372 = vsub.f32 %v9270, %v9354
  %v9373 = vsub.f32 %v9271, %v9354
  %v9374 = vsub.f32 %v9272, %v9354
  %v9375 = vsub.f32 %v9273, %v9354
  %v9376 = vsub.f32 %v9274, %v9354
  %v9377 = vsub.f32 %v9275, %v9354
  %v9378 = vsub.f32 %v9276, %v9354
  %v9379 = vsub.f32 %v9277, %v9354
  %v9380 = vsub.f32 %v9278, %v9354
  %v9381 = vsub.f32 %v9279, %v9354
  %v9382 = vsub.f32 %v9280, %v9354
  %v9383 = vsub.f32 %v9281, %v9354
  %v9384 = vsub.f32 %v9282, %v9354
  %v9385 = vsub.f32 %v9283, %v9354
  %v9386 = vsub.f32 %v9284, %v9354
  %v9387 = vmul.f32 %v9355, %v9355
  %v9388 = vmul.f32 %v9356, %v9356
  %v9389 = vmul.f32 %v9357, %v9357
  %v9390 = vmul.f32 %v9358, %v9358
  %v9391 = vmul.f32 %v9359, %v9359
  %v9392 = vmul.f32 %v9360, %v9360
  %v9393 = vmul.f32 %v9361, %v9361
  %v9394 = vmul.f32 %v9362, %v9362
  %v9395 = vmul.f32 %v9363, %v9363
  %v9396 = vmul.f32 %v9364, %v9364
  %v9397 = vmul.f32 %v9365, %v9365
  %v9398 = vmul.f32 %v9366, %v9366
  %v9399 = vmul.f32 %v9367, %v9367
  %v9400 = vmul.f32 %v9368, %v9368
  %v9401 = vmul.f32 %v9369, %v9369
  %v9402 = vmul.f32 %v9370, %v9370
  %v9403 = vmul.f32 %v9371, %v9371
  %v9404 = vmul.f32 %v9372, %v9372
  %v9405 = vmul.f32 %v9373, %v9373
  %v9406 = vmul.f32 %v9374, %v9374
  %v9407 = vmul.f32 %v9375, %v9375
  %v9408 = vmul.f32 %v9376, %v9376
  %v9409 = vmul.f32 %v9377, %v9377
  %v9410 = vmul.f32 %v9378, %v9378
  %v9411 = vmul.f32 %v9379, %v9379
  %v9412 = vmul.f32 %v9380, %v9380
  %v9413 = vmul.f32 %v9381, %v9381
  %v9414 = vmul.f32 %v9382, %v9382
  %v9415 = vmul.f32 %v9383, %v9383
  %v9416 = vmul.f32 %v9384, %v9384
  %v9417 = vmul.f32 %v9385, %v9385
  %v9418 = vmul.f32 %v9386, %v9386
  %v9419 = vsel %vm14, %v9387, 0.0
  %v9420 = vsel %vm14, %v9388, 0.0
  %v9421 = vadd.f32 %v9419, %v9420
  %v9422 = vsel %vm14, %v9389, 0.0
  %v9423 = vadd.f32 %v9421, %v9422
  %v9424 = vsel %vm14, %v9390, 0.0
  %v9425 = vadd.f32 %v9423, %v9424
  %v9426 = vsel %vm14, %v9391, 0.0
  %v9427 = vadd.f32 %v9425, %v9426
  %v9428 = vsel %vm14, %v9392, 0.0
  %v9429 = vadd.f32 %v9427, %v9428
  %v9430 = vsel %vm14, %v9393, 0.0
  %v9431 = vadd.f32 %v9429, %v9430
  %v9432 = vsel %vm14, %v9394, 0.0
  %v9433 = vadd.f32 %v9431, %v9432
  %v9434 = vsel %vm14, %v9395, 0.0
  %v9435 = vadd.f32 %v9433, %v9434
  %v9436 = vsel %vm14, %v9396, 0.0
  %v9437 = vadd.f32 %v9435, %v9436
  %v9438 = vsel %vm14, %v9397, 0.0
  %v9439 = vadd.f32 %v9437, %v9438
  %v9440 = vsel %vm14, %v9398, 0.0
  %v9441 = vadd.f32 %v9439, %v9440
  %v9442 = vsel %vm14, %v9399, 0.0
  %v9443 = vadd.f32 %v9441, %v9442
  %v9444 = vsel %vm14, %v9400, 0.0
  %v9445 = vadd.f32 %v9443, %v9444
  %v9446 = vsel %vm14, %v9401, 0.0
  %v9447 = vadd.f32 %v9445, %v9446
  %v9448 = vsel %vm14, %v9402, 0.0
  %v9449 = vadd.f32 %v9447, %v9448
  %v9450 = vsel %vm14, %v9403, 0.0
  %v9451 = vadd.f32 %v9449, %v9450
  %v9452 = vsel %vm14, %v9404, 0.0
  %v9453 = vadd.f32 %v9451, %v9452
  %v9454 = vsel %vm14, %v9405, 0.0
  %v9455 = vadd.f32 %v9453, %v9454
  %v9456 = vsel %vm14, %v9406, 0.0
  %v9457 = vadd.f32 %v9455, %v9456
  %v9458 = vsel %vm14, %v9407, 0.0
  %v9459 = vadd.f32 %v9457, %v9458
  %v9460 = vsel %vm14, %v9408, 0.0
  %v9461 = vadd.f32 %v9459, %v9460
  %v9462 = vsel %vm14, %v9409, 0.0
  %v9463 = vadd.f32 %v9461, %v9462
  %v9464 = vsel %vm14, %v9410, 0.0
  %v9465 = vadd.f32 %v9463, %v9464
  %v9466 = vsel %vm14, %v9411, 0.0
  %v9467 = vadd.f32 %v9465, %v9466
  %v9468 = vsel %vm14, %v9412, 0.0
  %v9469 = vadd.f32 %v9467, %v9468
  %v9470 = vsel %vm14, %v9413, 0.0
  %v9471 = vadd.f32 %v9469, %v9470
  %v9472 = vsel %vm14, %v9414, 0.0
  %v9473 = vadd.f32 %v9471, %v9472
  %v9474 = vsel %vm14, %v9415, 0.0
  %v9475 = vadd.f32 %v9473, %v9474
  %v9476 = vsel %vm14, %v9416, 0.0
  %v9477 = vadd.f32 %v9475, %v9476
  %v9478 = vsel %vm14, %v9417, 0.0
  %v9479 = vadd.f32 %v9477, %v9478
  %v9480 = vsel %vm14, %v9418, 0.0
  %v9481 = vadd.f32 %v9479, %v9480
  %v9482 = vrot.slane %v9481, 4
  %v9483 = vadd.f32 %v9481, %v9482
  %v9484 = vrot.slane %v9483, 2
  %v9485 = vadd.f32 %v9483, %v9484
  %v9486 = vrot.slane %v9485, 1
  %v9487 = vadd.f32 %v9485, %v9486
  %v9488 = vmul.f32 %v9487, %v3000
  %v9489 = vadd.f32 %v9488, 1e-05
  %v9490 = vrsqrt.pop %v9489
  %v9491 = vmul.f32 %v9490, %v9489
  %v9492 = vmul.f32 %v9491, %v9490
  %v9493 = vmul.f32 0.5, %v9492
  %v9494 = vsub.f32 1.5, %v9493
  %v9495 = vmul.f32 %v9490, %v9494
  %vm9496 = vweird.f32 %v9489
  %vm9497 = vweird.f32 %v9490
  %vm9498 = vmor %vm9496, %vm9497
  %v9499 = vsel %vm9498, %v9490, %v9495
  %v9500 = vmul.f32 %v9355, %v9499
  %v9501 = vmul.f32 %v9356, %v9499
  %v9502 = vmul.f32 %v9357, %v9499
  %v9503 = vmul.f32 %v9358, %v9499
  %v9504 = vmul.f32 %v9359, %v9499
  %v9505 = vmul.f32 %v9360, %v9499
  %v9506 = vmul.f32 %v9361, %v9499
  %v9507 = vmul.f32 %v9362, %v9499
  %v9508 = vmul.f32 %v9363, %v9499
  %v9509 = vmul.f32 %v9364, %v9499
  %v9510 = vmul.f32 %v9365, %v9499
  %v9511 = vmul.f32 %v9366, %v9499
  %v9512 = vmul.f32 %v9367, %v9499
  %v9513 = vmul.f32 %v9368, %v9499
  %v9514 = vmul.f32 %v9369, %v9499
  %v9515 = vmul.f32 %v9370, %v9499
  %v9516 = vmul.f32 %v9371, %v9499
  %v9517 = vmul.f32 %v9372, %v9499
  %v9518 = vmul.f32 %v9373, %v9499
  %v9519 = vmul.f32 %v9374, %v9499
  %v9520 = vmul.f32 %v9375, %v9499
  %v9521 = vmul.f32 %v9376, %v9499
  %v9522 = vmul.f32 %v9377, %v9499
  %v9523 = vmul.f32 %v9378, %v9499
  %v9524 = vmul.f32 %v9379, %v9499
  %v9525 = vmul.f32 %v9380, %v9499
  %v9526 = vmul.f32 %v9381, %v9499
  %v9527 = vmul.f32 %v9382, %v9499
  %v9528 = vmul.f32 %v9383, %v9499
  %v9529 = vmul.f32 %v9384, %v9499
  %v9530 = vmul.f32 %v9385, %v9499
  %v9531 = vmul.f32 %v9386, %v9499
  %v9532 = vmax.f32 %v9500, 0.0
  %v9533 = vmax.f32 %v9501, 0.0
  %v9534 = vmax.f32 %v9502, 0.0
  %v9535 = vmax.f32 %v9503, 0.0
  %v9536 = vmax.f32 %v9504, 0.0
  %v9537 = vmax.f32 %v9505, 0.0
  %v9538 = vmax.f32 %v9506, 0.0
  %v9539 = vmax.f32 %v9507, 0.0
  %v9540 = vmax.f32 %v9508, 0.0
  %v9541 = vmax.f32 %v9509, 0.0
  %v9542 = vmax.f32 %v9510, 0.0
  %v9543 = vmax.f32 %v9511, 0.0
  %v9544 = vmax.f32 %v9512, 0.0
  %v9545 = vmax.f32 %v9513, 0.0
  %v9546 = vmax.f32 %v9514, 0.0
  %v9547 = vmax.f32 %v9515, 0.0
  %v9548 = vmax.f32 %v9516, 0.0
  %v9549 = vmax.f32 %v9517, 0.0
  %v9550 = vmax.f32 %v9518, 0.0
  %v9551 = vmax.f32 %v9519, 0.0
  %v9552 = vmax.f32 %v9520, 0.0
  %v9553 = vmax.f32 %v9521, 0.0
  %v9554 = vmax.f32 %v9522, 0.0
  %v9555 = vmax.f32 %v9523, 0.0
  %v9556 = vmax.f32 %v9524, 0.0
  %v9557 = vmax.f32 %v9525, 0.0
  %v9558 = vmax.f32 %v9526, 0.0
  %v9559 = vmax.f32 %v9527, 0.0
  %v9560 = vmax.f32 %v9528, 0.0
  %v9561 = vmax.f32 %v9529, 0.0
  %v9562 = vmax.f32 %v9530, 0.0
  %v9563 = vmax.f32 %v9531, 0.0
  %9564 = vst.msk [vmem:[%s67] sm:$0xff] %vm14, %v9532
  %9565 = vst.msk [vmem:[%s67 + $0x8] sm:$0xff] %vm14, %v9533
  %9566 = vst.msk [vmem:[%s67 + $0x10] sm:$0xff] %vm14, %v9534
  %9567 = vst.msk [vmem:[%s67 + $0x18] sm:$0xff] %vm14, %v9535
  %9568 = vst.msk [vmem:[%s67 + $0x20] sm:$0xff] %vm14, %v9536
  %9569 = vst.msk [vmem:[%s67 + $0x28] sm:$0xff] %vm14, %v9537
  %9570 = vst.msk [vmem:[%s67 + $0x30] sm:$0xff] %vm14, %v9538
  %9571 = vst.msk [vmem:[%s67 + $0x38] sm:$0xff] %vm14, %v9539
  %9572 = vst.msk [vmem:[%s67 + $0x40] sm:$0xff] %vm14, %v9540
  %9573 = vst.msk [vmem:[%s67 + $0x48] sm:$0xff] %vm14, %v9541
  %9574 = vst.msk [vmem:[%s67 + $0x50] sm:$0xff] %vm14, %v9542
  %9575 = vst.msk [vmem:[%s67 + $0x58] sm:$0xff] %vm14, %v9543
  %9576 = vst.msk [vmem:[%s67 + $0x60] sm:$0xff] %vm14, %v9544
  %9577 = vst.msk [vmem:[%s67 + $0x68] sm:$0xff] %vm14, %v9545
  %9578 = vst.msk [vmem:[%s67 + $0x70] sm:$0xff] %vm14, %v9546
  %9579 = vst.msk [vmem:[%s67 + $0x78] sm:$0xff] %vm14, %v9547
  %9580 = vst.msk [vmem:[%s67 + $0x80] sm:$0xff] %vm14, %v9548
  %9581 = vst.msk [vmem:[%s67 + $0x88] sm:$0xff] %vm14, %v9549
  %9582 = vst.msk [vmem:[%s67 + $0x90] sm:$0xff] %vm14, %v9550
  %9583 = vst.msk [vmem:[%s67 + $0x98] sm:$0xff] %vm14, %v9551
  %9584 = vst.msk [vmem:[%s67 + $0xa0] sm:$0xff] %vm14, %v9552
  %9585 = vst.msk [vmem:[%s67 + $0xa8] sm:$0xff] %vm14, %v9553
  %9586 = vst.msk [vmem:[%s67 + $0xb0] sm:$0xff] %vm14, %v9554
  %9587 = vst.msk [vmem:[%s67 + $0xb8] sm:$0xff] %vm14, %v9555
  %9588 = vst.msk [vmem:[%s67 + $0xc0] sm:$0xff] %vm14, %v9556
  %9589 = vst.msk [vmem:[%s67 + $0xc8] sm:$0xff] %vm14, %v9557
  %9590 = vst.msk [vmem:[%s67 + $0xd0] sm:$0xff] %vm14, %v9558
  %9591 = vst.msk [vmem:[%s67 + $0xd8] sm:$0xff] %vm14, %v9559
  %9592 = vst.msk [vmem:[%s67 + $0xe0] sm:$0xff] %vm14, %v9560
  %9593 = vst.msk [vmem:[%s67 + $0xe8] sm:$0xff] %vm14, %v9561
  %9594 = vst.msk [vmem:[%s67 + $0xf0] sm:$0xff] %vm14, %v9562
  %9595 = vst.msk [vmem:[%s67 + $0xf8] sm:$0xff] %vm14, %v9563
  %v9596 = vld [vmem:[#allocation2] sm:$0xff]
  %v9597 = vld [vmem:[#allocation2 + $0x8] sm:$0xff]
  %v9598 = vld [vmem:[#allocation2 + $0x10] sm:$0xff]
  %v9599 = vld [vmem:[#allocation2 + $0x18] sm:$0xff]
  %v9600 = vld [vmem:[#allocation2 + $0x20] sm:$0xff]
  %v9601 = vld [vmem:[#allocation2 + $0x28] sm:$0xff]
  %v9602 = vld [vmem:[#allocation2 + $0x30] sm:$0xff]
  %v9603 = vld [vmem:[#allocation2 + $0x38] sm:$0xff]
  %v9604 = vld [vmem:[#allocation2 + $0x40] sm:$0xff]
  %v9605 = vld [vmem:[#allocation2 + $0x48] sm:$0xff]
  %v9606 = vld [vmem:[#allocation2 + $0x50] sm:$0xff]
  %v9607 = vld [vmem:[#allocation2 + $0x58] sm:$0xff]
  %v9608 = vld [vmem:[#allocation2 + $0x60] sm:$0xff]
  %v9609 = vld [vmem:[#allocation2 + $0x68] sm:$0xff]
  %v9610 = vld [vmem:[#allocation2 + $0x70] sm:$0xff]
  %v9611 = vld [vmem:[#allocation2 + $0x78] sm:$0xff]
  %v9612 = vld [vmem:[#allocation2 + $0x80] sm:$0xff]
  %v9613 = vld [vmem:[#allocation2 + $0x88] sm:$0xff]
  %v9614 = vld [vmem:[#allocation2 + $0x90] sm:$0xff]
  %v9615 = vld [vmem:[#allocation2 + $0x98] sm:$0xff]
  %v9616 = vld [vmem:[#allocation2 + $0xa0] sm:$0xff]
  %v9617 = vld [vmem:[#allocation2 + $0xa8] sm:$0xff]
  %v9618 = vld [vmem:[#allocation2 + $0xb0] sm:$0xff]
  %v9619 = vld [vmem:[#allocation2 + $0xb8] sm:$0xff]
  %v9620 = vld [vmem:[#allocation2 + $0xc0] sm:$0xff]
  %v9621 = vld [vmem:[#allocation2 + $0xc8] sm:$0xff]
  %v9622 = vld [vmem:[#allocation2 + $0xd0] sm:$0xff]
  %v9623 = vld [vmem:[#allocation2 + $0xd8] sm:$0xff]
  %v9624 = vld [vmem:[#allocation2 + $0xe0] sm:$0xff]
  %v9625 = vld [vmem:[#allocation2 + $0xe8] sm:$0xff]
  %v9626 = vld [vmem:[#allocation2 + $0xf0] sm:$0xff]
  %v9627 = vld [vmem:[#allocation2 + $0xf8] sm:$0xff]
  %v9628 = vrot.slane %v9596, 7
  %v9629 = vrot.slane %v9597, 7
  %v9630 = vrot.slane %v9598, 7
  %v9631 = vrot.slane %v9599, 7
  %v9632 = vrot.slane %v9600, 7
  %v9633 = vrot.slane %v9601, 7
  %v9634 = vrot.slane %v9602, 7
  %v9635 = vrot.slane %v9603, 7
  %v9636 = vrot.slane %v9604, 7
  %v9637 = vrot.slane %v9605, 7
  %v9638 = vrot.slane %v9606, 7
  %v9639 = vrot.slane %v9607, 7
  %v9640 = vrot.slane %v9608, 7
  %v9641 = vrot.slane %v9609, 7
  %v9642 = vrot.slane %v9610, 7
  %v9643 = vrot.slane %v9611, 7
  %v9644 = vrot.slane %v9612, 7
  %v9645 = vrot.slane %v9613, 7
  %v9646 = vrot.slane %v9614, 7
  %v9647 = vrot.slane %v9615, 7
  %v9648 = vrot.slane %v9616, 7
  %v9649 = vrot.slane %v9617, 7
  %v9650 = vrot.slane %v9618, 7
  %v9651 = vrot.slane %v9619, 7
  %v9652 = vrot.slane %v9620, 7
  %v9653 = vrot.slane %v9621, 7
  %v9654 = vrot.slane %v9622, 7
  %v9655 = vrot.slane %v9623, 7
  %v9656 = vrot.slane %v9624, 7
  %v9657 = vrot.slane %v9625, 7
  %v9658 = vrot.slane %v9626, 7
  %v9659 = vrot.slane %v9627, 7
  %v9660 = vsel %vm164, %v9658, %v9659
  %v9661 = vsel %vm164, %v9657, %v9658
  %v9662 = vsel %vm164, %v9656, %v9657
  %v9663 = vsel %vm164, %v9655, %v9656
  %v9664 = vsel %vm164, %v9654, %v9655
  %v9665 = vsel %vm164, %v9653, %v9654
  %v9666 = vsel %vm164, %v9652, %v9653
  %v9667 = vsel %vm164, %v9651, %v9652
  %v9668 = vsel %vm164, %v9650, %v9651
  %v9669 = vsel %vm164, %v9649, %v9650
  %v9670 = vsel %vm164, %v9648, %v9649
  %v9671 = vsel %vm164, %v9647, %v9648
  %v9672 = vsel %vm164, %v9646, %v9647
  %v9673 = vsel %vm164, %v9645, %v9646
  %v9674 = vsel %vm164, %v9644, %v9645
  %v9675 = vsel %vm164, %v9643, %v9644
  %v9676 = vsel %vm164, %v9642, %v9643
  %v9677 = vsel %vm164, %v9641, %v9642
  %v9678 = vsel %vm164, %v9640, %v9641
  %v9679 = vsel %vm164, %v9639, %v9640
  %v9680 = vsel %vm164, %v9638, %v9639
  %v9681 = vsel %vm164, %v9637, %v9638
  %v9682 = vsel %vm164, %v9636, %v9637
  %v9683 = vsel %vm164, %v9635, %v9636
  %v9684 = vsel %vm164, %v9634, %v9635
  %v9685 = vsel %vm164, %v9633, %v9634
  %v9686 = vsel %vm164, %v9632, %v9633
  %v9687 = vsel %vm164, %v9631, %v9632
  %v9688 = vsel %vm164, %v9630, %v9631
  %v9689 = vsel %vm164, %v9629, %v9630
  %v9690 = vsel %vm164, %v9628, %v9629
  %v9691 = vsel %vm164, %v9659, %v9628
  %v9692 = vmul.f32 %v9691, %v27
  %v9693 = vmul.f32 %v9690, %v28
  %v9694 = vmul.f32 %v9689, %v27
  %v9695 = vmul.f32 %v9688, %v28
  %v9696 = vmul.f32 %v9687, %v27
  %v9697 = vmul.f32 %v9686, %v28
  %v9698 = vmul.f32 %v9685, %v27
  %v9699 = vmul.f32 %v9684, %v28
  %v9700 = vmul.f32 %v9683, %v27
  %v9701 = vmul.f32 %v9682, %v28
  %v9702 = vmul.f32 %v9681, %v27
  %v9703 = vmul.f32 %v9680, %v28
  %v9704 = vmul.f32 %v9679, %v27
  %v9705 = vmul.f32 %v9678, %v28
  %v9706 = vmul.f32 %v9677, %v27
  %v9707 = vmul.f32 %v9676, %v28
  %v9708 = vmul.f32 %v9675, %v27
  %v9709 = vmul.f32 %v9674, %v28
  %v9710 = vmul.f32 %v9673, %v27
  %v9711 = vmul.f32 %v9672, %v28
  %v9712 = vmul.f32 %v9671, %v27
  %v9713 = vmul.f32 %v9670, %v28
  %v9714 = vmul.f32 %v9669, %v27
  %v9715 = vmul.f32 %v9668, %v28
  %v9716 = vmul.f32 %v9667, %v27
  %v9717 = vmul.f32 %v9666, %v28
  %v9718 = vmul.f32 %v9665, %v27
  %v9719 = vmul.f32 %v9664, %v28
  %v9720 = vmul.f32 %v9663, %v27
  %v9721 = vmul.f32 %v9662, %v28
  %v9722 = vmul.f32 %v9661, %v27
  %v9723 = vmul.f32 %v9660, %v28
  %v9724 = vld [vmem:[%s2] sm:$0xf]
  %v9725 = vld [vmem:[%s3372] sm:$0xf]
  %v9727 = vsel %vm14, %v9596, 0
  %v9730 = vsel %vm14, %v9597, 0
  %v9733 = vsel %vm14, %v9598, 0
  %v9736 = vsel %vm14, %v9599, 0
  %v9739 = vsel %vm14, %v9600, 0
  %v9742 = vsel %vm14, %v9601, 0
  %v9745 = vsel %vm14, %v9602, 0
  %v9748 = vsel %vm14, %v9603, 0
  %v9751 = vsel %vm14, %v9604, 0
  %v9754 = vsel %vm14, %v9605, 0
  %v9757 = vsel %vm14, %v9606, 0
  %v9760 = vsel %vm14, %v9607, 0
  %v9763 = vsel %vm14, %v9608, 0
  %v9766 = vsel %vm14, %v9609, 0
  %v9769 = vsel %vm14, %v9610, 0
  %v9772 = vsel %vm14, %v9611, 0
  %v9775 = vsel %vm14, %v9612, 0
  %v9778 = vsel %vm14, %v9613, 0
  %v9781 = vsel %vm14, %v9614, 0
  %v9784 = vsel %vm14, %v9615, 0
  %v9787 = vsel %vm14, %v9616, 0
  %v9790 = vsel %vm14, %v9617, 0
  %v9793 = vsel %vm14, %v9618, 0
  %v9796 = vsel %vm14, %v9619, 0
  %v9799 = vsel %vm14, %v9620, 0
  %v9802 = vsel %vm14, %v9621, 0
  %v9805 = vsel %vm14, %v9622, 0
  %v9808 = vsel %vm14, %v9623, 0
  %v9811 = vsel %vm14, %v9624, 0
  %v9814 = vsel %vm14, %v9625, 0
  %v9817 = vsel %vm14, %v9626, 0
  %v9820 = vsel %vm14, %v9627, 0
  %v9823 = vsel %vm328, %v9725, 0
  %9825 = vmatpush.msra.mxu0 0.0
  %9826 = vmatpush.msra.mxu0 0.0
  %9827 = vmatpush.msra.mxu0 0.0
  %9828 = vmatpush.msra.mxu0 0.0
  %9829 = vmatpush.msra.mxu0 0.0
  %9830 = vmatpush.msra.mxu0 0.0
  %9831 = vmatpush.msra.mxu0 0.0
  %9832 = vmatpush.msra.mxu0 0.0
  %9833 = vmatpush.msra.mxu0 0.0
  %9834 = vmatpush.msra.mxu0 0.0
  %9835 = vmatpush.msra.mxu0 0.0
  %9836 = vmatpush.msra.mxu0 0.0
  %9837 = vmatpush.msra.mxu0 0.0
  %9838 = vmatpush.msra.mxu0 0.0
  %9839 = vmatpush.msra.mxu0 0.0
  %9840 = vmatpush.msra.mxu0 %v9823
  %9841 = vmatmul.f32.gmra.mxu0 %v9727
  %v9842 = vpop.f32.mrf.mxu0
  %v9843 = vadd.f32 0.0, %v9842
  %9844 = vmatmul.f32.gmra.mxu0 %v9730
  %v9845 = vpop.f32.mrf.mxu0
  %v9846 = vadd.f32 0.0, %v9845
  %9847 = vmatmul.f32.gmra.mxu0 %v9733
  %v9848 = vpop.f32.mrf.mxu0
  %v9849 = vadd.f32 0.0, %v9848
  %9850 = vmatmul.f32.gmra.mxu0 %v9736
  %v9851 = vpop.f32.mrf.mxu0
  %v9852 = vadd.f32 0.0, %v9851
  %9853 = vmatmul.f32.gmra.mxu0 %v9739
  %v9854 = vpop.f32.mrf.mxu0
  %v9855 = vadd.f32 0.0, %v9854
  %9856 = vmatmul.f32.gmra.mxu0 %v9742
  %v9857 = vpop.f32.mrf.mxu0
  %v9858 = vadd.f32 0.0, %v9857
  %9859 = vmatmul.f32.gmra.mxu0 %v9745
  %v9860 = vpop.f32.mrf.mxu0
  %v9861 = vadd.f32 0.0, %v9860
  %9862 = vmatmul.f32.gmra.mxu0 %v9748
  %v9863 = vpop.f32.mrf.mxu0
  %v9864 = vadd.f32 0.0, %v9863
  %9865 = vmatmul.f32.gmra.mxu0 %v9751
  %v9866 = vpop.f32.mrf.mxu0
  %v9867 = vadd.f32 0.0, %v9866
  %9868 = vmatmul.f32.gmra.mxu0 %v9754
  %v9869 = vpop.f32.mrf.mxu0
  %v9870 = vadd.f32 0.0, %v9869
  %9871 = vmatmul.f32.gmra.mxu0 %v9757
  %v9872 = vpop.f32.mrf.mxu0
  %v9873 = vadd.f32 0.0, %v9872
  %9874 = vmatmul.f32.gmra.mxu0 %v9760
  %v9875 = vpop.f32.mrf.mxu0
  %v9876 = vadd.f32 0.0, %v9875
  %9877 = vmatmul.f32.gmra.mxu0 %v9763
  %v9878 = vpop.f32.mrf.mxu0
  %v9879 = vadd.f32 0.0, %v9878
  %9880 = vmatmul.f32.gmra.mxu0 %v9766
  %v9881 = vpop.f32.mrf.mxu0
  %v9882 = vadd.f32 0.0, %v9881
  %9883 = vmatmul.f32.gmra.mxu0 %v9769
  %v9884 = vpop.f32.mrf.mxu0
  %v9885 = vadd.f32 0.0, %v9884
  %9886 = vmatmul.f32.gmra.mxu0 %v9772
  %v9887 = vpop.f32.mrf.mxu0
  %v9888 = vadd.f32 0.0, %v9887
  %9889 = vmatmul.f32.gmra.mxu0 %v9775
  %v9890 = vpop.f32.mrf.mxu0
  %v9891 = vadd.f32 0.0, %v9890
  %9892 = vmatmul.f32.gmra.mxu0 %v9778
  %v9893 = vpop.f32.mrf.mxu0
  %v9894 = vadd.f32 0.0, %v9893
  %9895 = vmatmul.f32.gmra.mxu0 %v9781
  %v9896 = vpop.f32.mrf.mxu0
  %v9897 = vadd.f32 0.0, %v9896
  %9898 = vmatmul.f32.gmra.mxu0 %v9784
  %v9899 = vpop.f32.mrf.mxu0
  %v9900 = vadd.f32 0.0, %v9899
  %9901 = vmatmul.f32.gmra.mxu0 %v9787
  %v9902 = vpop.f32.mrf.mxu0
  %v9903 = vadd.f32 0.0, %v9902
  %9904 = vmatmul.f32.gmra.mxu0 %v9790
  %v9905 = vpop.f32.mrf.mxu0
  %v9906 = vadd.f32 0.0, %v9905
  %9907 = vmatmul.f32.gmra.mxu0 %v9793
  %v9908 = vpop.f32.mrf.mxu0
  %v9909 = vadd.f32 0.0, %v9908
  %9910 = vmatmul.f32.gmra.mxu0 %v9796
  %v9911 = vpop.f32.mrf.mxu0
  %v9912 = vadd.f32 0.0, %v9911
  %9913 = vmatmul.f32.gmra.mxu0 %v9799
  %v9914 = vpop.f32.mrf.mxu0
  %v9915 = vadd.f32 0.0, %v9914
  %9916 = vmatmul.f32.gmra.mxu0 %v9802
  %v9917 = vpop.f32.mrf.mxu0
  %v9918 = vadd.f32 0.0, %v9917
  %9919 = vmatmul.f32.gmra.mxu0 %v9805
  %v9920 = vpop.f32.mrf.mxu0
  %v9921 = vadd.f32 0.0, %v9920
  %9922 = vmatmul.f32.gmra.mxu0 %v9808
  %v9923 = vpop.f32.mrf.mxu0
  %v9924 = vadd.f32 0.0, %v9923
  %9925 = vmatmul.f32.gmra.mxu0 %v9811
  %v9926 = vpop.f32.mrf.mxu0
  %v9927 = vadd.f32 0.0, %v9926
  %9928 = vmatmul.f32.gmra.mxu0 %v9814
  %v9929 = vpop.f32.mrf.mxu0
  %v9930 = vadd.f32 0.0, %v9929
  %9931 = vmatmul.f32.gmra.mxu0 %v9817
  %v9932 = vpop.f32.mrf.mxu0
  %v9933 = vadd.f32 0.0, %v9932
  %9934 = vmatmul.f32.gmra.mxu0 %v9820
  %v9935 = vpop.f32.mrf.mxu0
  %v9936 = vadd.f32 0.0, %v9935
  %9937 = vdwg.mxu0
  %v9939 = vsel %vm14, %v9692, 0
  %v9942 = vsel %vm14, %v9693, 0
  %v9945 = vsel %vm14, %v9694, 0
  %v9948 = vsel %vm14, %v9695, 0
  %v9951 = vsel %vm14, %v9696, 0
  %v9954 = vsel %vm14, %v9697, 0
  %v9957 = vsel %vm14, %v9698, 0
  %v9960 = vsel %vm14, %v9699, 0
  %v9963 = vsel %vm14, %v9700, 0
  %v9966 = vsel %vm14, %v9701, 0
  %v9969 = vsel %vm14, %v9702, 0
  %v9972 = vsel %vm14, %v9703, 0
  %v9975 = vsel %vm14, %v9704, 0
  %v9978 = vsel %vm14, %v9705, 0
  %v9981 = vsel %vm14, %v9706, 0
  %v9984 = vsel %vm14, %v9707, 0
  %v9987 = vsel %vm14, %v9708, 0
  %v9990 = vsel %vm14, %v9709, 0
  %v9993 = vsel %vm14, %v9710, 0
  %v9996 = vsel %vm14, %v9711, 0
  %v9999 = vsel %vm14, %v9712, 0
  %v10002 = vsel %vm14, %v9713, 0
  %v10005 = vsel %vm14, %v9714, 0
  %v10008 = vsel %vm14, %v9715, 0
  %v10011 = vsel %vm14, %v9716, 0
  %v10014 = vsel %vm14, %v9717, 0
  %v10017 = vsel %vm14, %v9718, 0
  %v10020 = vsel %vm14, %v9719, 0
  %v10023 = vsel %vm14, %v9720, 0
  %v10026 = vsel %vm14, %v9721, 0
  %v10029 = vsel %vm14, %v9722, 0
  %v10032 = vsel %vm14, %v9723, 0
  %v10035 = vsel %vm328, %v9724, 0
  %10037 = vmatpush.msra.mxu0 0.0
  %10038 = vmatpush.msra.mxu0 0.0
  %10039 = vmatpush.msra.mxu0 0.0
  %10040 = vmatpush.msra.mxu0 0.0
  %10041 = vmatpush.msra.mxu0 0.0
  %10042 = vmatpush.msra.mxu0 0.0
  %10043 = vmatpush.msra.mxu0 0.0
  %10044 = vmatpush.msra.mxu0 0.0
  %10045 = vmatpush.msra.mxu0 0.0
  %10046 = vmatpush.msra.mxu0 0.0
  %10047 = vmatpush.msra.mxu0 0.0
  %10048 = vmatpush.msra.mxu0 0.0
  %10049 = vmatpush.msra.mxu0 0.0
  %10050 = vmatpush.msra.mxu0 0.0
  %10051 = vmatpush.msra.mxu0 0.0
  %10052 = vmatpush.msra.mxu0 %v10035
  %10053 = vmatmul.f32.gmra.mxu0 %v9939
  %v10054 = vpop.f32.mrf.mxu0
  %v10055 = vadd.f32 %v9843, %v10054
  %10056 = vmatmul.f32.gmra.mxu0 %v9942
  %v10057 = vpop.f32.mrf.mxu0
  %v10058 = vadd.f32 %v9846, %v10057
  %10059 = vmatmul.f32.gmra.mxu0 %v9945
  %v10060 = vpop.f32.mrf.mxu0
  %v10061 = vadd.f32 %v9849, %v10060
  %10062 = vmatmul.f32.gmra.mxu0 %v9948
  %v10063 = vpop.f32.mrf.mxu0
  %v10064 = vadd.f32 %v9852, %v10063
  %10065 = vmatmul.f32.gmra.mxu0 %v9951
  %v10066 = vpop.f32.mrf.mxu0
  %v10067 = vadd.f32 %v9855, %v10066
  %10068 = vmatmul.f32.gmra.mxu0 %v9954
  %v10069 = vpop.f32.mrf.mxu0
  %v10070 = vadd.f32 %v9858, %v10069
  %10071 = vmatmul.f32.gmra.mxu0 %v9957
  %v10072 = vpop.f32.mrf.mxu0
  %v10073 = vadd.f32 %v9861, %v10072
  %10074 = vmatmul.f32.gmra.mxu0 %v9960
  %v10075 = vpop.f32.mrf.mxu0
  %v10076 = vadd.f32 %v9864, %v10075
  %10077 = vmatmul.f32.gmra.mxu0 %v9963
  %v10078 = vpop.f32.mrf.mxu0
  %v10079 = vadd.f32 %v9867, %v10078
  %10080 = vmatmul.f32.gmra.mxu0 %v9966
  %v10081 = vpop.f32.mrf.mxu0
  %v10082 = vadd.f32 %v9870, %v10081
  %10083 = vmatmul.f32.gmra.mxu0 %v9969
  %v10084 = vpop.f32.mrf.mxu0
  %v10085 = vadd.f32 %v9873, %v10084
  %10086 = vmatmul.f32.gmra.mxu0 %v9972
  %v10087 = vpop.f32.mrf.mxu0
  %v10088 = vadd.f32 %v9876, %v10087
  %10089 = vmatmul.f32.gmra.mxu0 %v9975
  %v10090 = vpop.f32.mrf.mxu0
  %v10091 = vadd.f32 %v9879, %v10090
  %10092 = vmatmul.f32.gmra.mxu0 %v9978
  %v10093 = vpop.f32.mrf.mxu0
  %v10094 = vadd.f32 %v9882, %v10093
  %10095 = vmatmul.f32.gmra.mxu0 %v9981
  %v10096 = vpop.f32.mrf.mxu0
  %v10097 = vadd.f32 %v9885, %v10096
  %10098 = vmatmul.f32.gmra.mxu0 %v9984
  %v10099 = vpop.f32.mrf.mxu0
  %v10100 = vadd.f32 %v9888, %v10099
  %10101 = vmatmul.f32.gmra.mxu0 %v9987
  %v10102 = vpop.f32.mrf.mxu0
  %v10103 = vadd.f32 %v9891, %v10102
  %10104 = vmatmul.f32.gmra.mxu0 %v9990
  %v10105 = vpop.f32.mrf.mxu0
  %v10106 = vadd.f32 %v9894, %v10105
  %10107 = vmatmul.f32.gmra.mxu0 %v9993
  %v10108 = vpop.f32.mrf.mxu0
  %v10109 = vadd.f32 %v9897, %v10108
  %10110 = vmatmul.f32.gmra.mxu0 %v9996
  %v10111 = vpop.f32.mrf.mxu0
  %v10112 = vadd.f32 %v9900, %v10111
  %10113 = vmatmul.f32.gmra.mxu0 %v9999
  %v10114 = vpop.f32.mrf.mxu0
  %v10115 = vadd.f32 %v9903, %v10114
  %10116 = vmatmul.f32.gmra.mxu0 %v10002
  %v10117 = vpop.f32.mrf.mxu0
  %v10118 = vadd.f32 %v9906, %v10117
  %10119 = vmatmul.f32.gmra.mxu0 %v10005
  %v10120 = vpop.f32.mrf.mxu0
  %v10121 = vadd.f32 %v9909, %v10120
  %10122 = vmatmul.f32.gmra.mxu0 %v10008
  %v10123 = vpop.f32.mrf.mxu0
  %v10124 = vadd.f32 %v9912, %v10123
  %10125 = vmatmul.f32.gmra.mxu0 %v10011
  %v10126 = vpop.f32.mrf.mxu0
  %v10127 = vadd.f32 %v9915, %v10126
  %10128 = vmatmul.f32.gmra.mxu0 %v10014
  %v10129 = vpop.f32.mrf.mxu0
  %v10130 = vadd.f32 %v9918, %v10129
  %10131 = vmatmul.f32.gmra.mxu0 %v10017
  %v10132 = vpop.f32.mrf.mxu0
  %v10133 = vadd.f32 %v9921, %v10132
  %10134 = vmatmul.f32.gmra.mxu0 %v10020
  %v10135 = vpop.f32.mrf.mxu0
  %v10136 = vadd.f32 %v9924, %v10135
  %10137 = vmatmul.f32.gmra.mxu0 %v10023
  %v10138 = vpop.f32.mrf.mxu0
  %v10139 = vadd.f32 %v9927, %v10138
  %10140 = vmatmul.f32.gmra.mxu0 %v10026
  %v10141 = vpop.f32.mrf.mxu0
  %v10142 = vadd.f32 %v9930, %v10141
  %10143 = vmatmul.f32.gmra.mxu0 %v10029
  %v10144 = vpop.f32.mrf.mxu0
  %v10145 = vadd.f32 %v9933, %v10144
  %10146 = vmatmul.f32.gmra.mxu0 %v10032
  %v10147 = vpop.f32.mrf.mxu0
  %v10148 = vadd.f32 %v9936, %v10147
  %10149 = vdwg.mxu0
  %v10150 = vrot.slane %v9596, 1
  %v10151 = vrot.slane %v9597, 1
  %v10152 = vrot.slane %v9598, 1
  %v10153 = vrot.slane %v9599, 1
  %v10154 = vrot.slane %v9600, 1
  %v10155 = vrot.slane %v9601, 1
  %v10156 = vrot.slane %v9602, 1
  %v10157 = vrot.slane %v9603, 1
  %v10158 = vrot.slane %v9604, 1
  %v10159 = vrot.slane %v9605, 1
  %v10160 = vrot.slane %v9606, 1
  %v10161 = vrot.slane %v9607, 1
  %v10162 = vrot.slane %v9608, 1
  %v10163 = vrot.slane %v9609, 1
  %v10164 = vrot.slane %v9610, 1
  %v10165 = vrot.slane %v9611, 1
  %v10166 = vrot.slane %v9612, 1
  %v10167 = vrot.slane %v9613, 1
  %v10168 = vrot.slane %v9614, 1
  %v10169 = vrot.slane %v9615, 1
  %v10170 = vrot.slane %v9616, 1
  %v10171 = vrot.slane %v9617, 1
  %v10172 = vrot.slane %v9618, 1
  %v10173 = vrot.slane %v9619, 1
  %v10174 = vrot.slane %v9620, 1
  %v10175 = vrot.slane %v9621, 1
  %v10176 = vrot.slane %v9622, 1
  %v10177 = vrot.slane %v9623, 1
  %v10178 = vrot.slane %v9624, 1
  %v10179 = vrot.slane %v9625, 1
  %v10180 = vrot.slane %v9626, 1
  %v10181 = vrot.slane %v9627, 1
  %v10182 = vsel %vm689, %v10180, %v10181
  %v10183 = vsel %vm689, %v10179, %v10180
  %v10184 = vsel %vm689, %v10178, %v10179
  %v10185 = vsel %vm689, %v10177, %v10178
  %v10186 = vsel %vm689, %v10176, %v10177
  %v10187 = vsel %vm689, %v10175, %v10176
  %v10188 = vsel %vm689, %v10174, %v10175
  %v10189 = vsel %vm689, %v10173, %v10174
  %v10190 = vsel %vm689, %v10172, %v10173
  %v10191 = vsel %vm689, %v10171, %v10172
  %v10192 = vsel %vm689, %v10170, %v10171
  %v10193 = vsel %vm689, %v10169, %v10170
  %v10194 = vsel %vm689, %v10168, %v10169
  %v10195 = vsel %vm689, %v10167, %v10168
  %v10196 = vsel %vm689, %v10166, %v10167
  %v10197 = vsel %vm689, %v10165, %v10166
  %v10198 = vsel %vm689, %v10164, %v10165
  %v10199 = vsel %vm689, %v10163, %v10164
  %v10200 = vsel %vm689, %v10162, %v10163
  %v10201 = vsel %vm689, %v10161, %v10162
  %v10202 = vsel %vm689, %v10160, %v10161
  %v10203 = vsel %vm689, %v10159, %v10160
  %v10204 = vsel %vm689, %v10158, %v10159
  %v10205 = vsel %vm689, %v10157, %v10158
  %v10206 = vsel %vm689, %v10156, %v10157
  %v10207 = vsel %vm689, %v10155, %v10156
  %v10208 = vsel %vm689, %v10154, %v10155
  %v10209 = vsel %vm689, %v10153, %v10154
  %v10210 = vsel %vm689, %v10152, %v10153
  %v10211 = vsel %vm689, %v10151, %v10152
  %v10212 = vsel %vm689, %v10150, %v10151
  %v10213 = vsel %vm689, %v10181, %v10150
  %v10214 = vmul.f32 %v10212, %v33
  %v10215 = vmul.f32 %v10211, %v34
  %v10216 = vmul.f32 %v10210, %v33
  %v10217 = vmul.f32 %v10209, %v34
  %v10218 = vmul.f32 %v10208, %v33
  %v10219 = vmul.f32 %v10207, %v34
  %v10220 = vmul.f32 %v10206, %v33
  %v10221 = vmul.f32 %v10205, %v34
  %v10222 = vmul.f32 %v10204, %v33
  %v10223 = vmul.f32 %v10203, %v34
  %v10224 = vmul.f32 %v10202, %v33
  %v10225 = vmul.f32 %v10201, %v34
  %v10226 = vmul.f32 %v10200, %v33
  %v10227 = vmul.f32 %v10199, %v34
  %v10228 = vmul.f32 %v10198, %v33
  %v10229 = vmul.f32 %v10197, %v34
  %v10230 = vmul.f32 %v10196, %v33
  %v10231 = vmul.f32 %v10195, %v34
  %v10232 = vmul.f32 %v10194, %v33
  %v10233 = vmul.f32 %v10193, %v34
  %v10234 = vmul.f32 %v10192, %v33
  %v10235 = vmul.f32 %v10191, %v34
  %v10236 = vmul.f32 %v10190, %v33
  %v10237 = vmul.f32 %v10189, %v34
  %v10238 = vmul.f32 %v10188, %v33
  %v10239 = vmul.f32 %v10187, %v34
  %v10240 = vmul.f32 %v10186, %v33
  %v10241 = vmul.f32 %v10185, %v34
  %v10242 = vmul.f32 %v10184, %v33
  %v10243 = vmul.f32 %v10183, %v34
  %v10244 = vmul.f32 %v10182, %v33
  %v10245 = vmul.f32 %v10213, %v34
  %v10246 = vld [vmem:[%s3894] sm:$0xf]
  %v10248 = vsel %vm14, %v10214, 0
  %v10251 = vsel %vm14, %v10215, 0
  %v10254 = vsel %vm14, %v10216, 0
  %v10257 = vsel %vm14, %v10217, 0
  %v10260 = vsel %vm14, %v10218, 0
  %v10263 = vsel %vm14, %v10219, 0
  %v10266 = vsel %vm14, %v10220, 0
  %v10269 = vsel %vm14, %v10221, 0
  %v10272 = vsel %vm14, %v10222, 0
  %v10275 = vsel %vm14, %v10223, 0
  %v10278 = vsel %vm14, %v10224, 0
  %v10281 = vsel %vm14, %v10225, 0
  %v10284 = vsel %vm14, %v10226, 0
  %v10287 = vsel %vm14, %v10227, 0
  %v10290 = vsel %vm14, %v10228, 0
  %v10293 = vsel %vm14, %v10229, 0
  %v10296 = vsel %vm14, %v10230, 0
  %v10299 = vsel %vm14, %v10231, 0
  %v10302 = vsel %vm14, %v10232, 0
  %v10305 = vsel %vm14, %v10233, 0
  %v10308 = vsel %vm14, %v10234, 0
  %v10311 = vsel %vm14, %v10235, 0
  %v10314 = vsel %vm14, %v10236, 0
  %v10317 = vsel %vm14, %v10237, 0
  %v10320 = vsel %vm14, %v10238, 0
  %v10323 = vsel %vm14, %v10239, 0
  %v10326 = vsel %vm14, %v10240, 0
  %v10329 = vsel %vm14, %v10241, 0
  %v10332 = vsel %vm14, %v10242, 0
  %v10335 = vsel %vm14, %v10243, 0
  %v10338 = vsel %vm14, %v10244, 0
  %v10341 = vsel %vm14, %v10245, 0
  %v10344 = vsel %vm328, %v10246, 0
  %10346 = vmatpush.msra.mxu0 0.0
  %10347 = vmatpush.msra.mxu0 0.0
  %10348 = vmatpush.msra.mxu0 0.0
  %10349 = vmatpush.msra.mxu0 0.0
  %10350 = vmatpush.msra.mxu0 0.0
  %10351 = vmatpush.msra.mxu0 0.0
  %10352 = vmatpush.msra.mxu0 0.0
  %10353 = vmatpush.msra.mxu0 0.0
  %10354 = vmatpush.msra.mxu0 0.0
  %10355 = vmatpush.msra.mxu0 0.0
  %10356 = vmatpush.msra.mxu0 0.0
  %10357 = vmatpush.msra.mxu0 0.0
  %10358 = vmatpush.msra.mxu0 0.0
  %10359 = vmatpush.msra.mxu0 0.0
  %10360 = vmatpush.msra.mxu0 0.0
  %10361 = vmatpush.msra.mxu0 %v10344
  %10362 = vmatmul.f32.gmra.mxu0 %v10248
  %v10363 = vpop.f32.mrf.mxu0
  %v10364 = vadd.f32 0.0, %v10363
  %10365 = vmatmul.f32.gmra.mxu0 %v10251
  %v10366 = vpop.f32.mrf.mxu0
  %v10367 = vadd.f32 0.0, %v10366
  %10368 = vmatmul.f32.gmra.mxu0 %v10254
  %v10369 = vpop.f32.mrf.mxu0
  %v10370 = vadd.f32 0.0, %v10369
  %10371 = vmatmul.f32.gmra.mxu0 %v10257
  %v10372 = vpop.f32.mrf.mxu0
  %v10373 = vadd.f32 0.0, %v10372
  %10374 = vmatmul.f32.gmra.mxu0 %v10260
  %v10375 = vpop.f32.mrf.mxu0
  %v10376 = vadd.f32 0.0, %v10375
  %10377 = vmatmul.f32.gmra.mxu0 %v10263
  %v10378 = vpop.f32.mrf.mxu0
  %v10379 = vadd.f32 0.0, %v10378
  %10380 = vmatmul.f32.gmra.mxu0 %v10266
  %v10381 = vpop.f32.mrf.mxu0
  %v10382 = vadd.f32 0.0, %v10381
  %10383 = vmatmul.f32.gmra.mxu0 %v10269
  %v10384 = vpop.f32.mrf.mxu0
  %v10385 = vadd.f32 0.0, %v10384
  %10386 = vmatmul.f32.gmra.mxu0 %v10272
  %v10387 = vpop.f32.mrf.mxu0
  %v10388 = vadd.f32 0.0, %v10387
  %10389 = vmatmul.f32.gmra.mxu0 %v10275
  %v10390 = vpop.f32.mrf.mxu0
  %v10391 = vadd.f32 0.0, %v10390
  %10392 = vmatmul.f32.gmra.mxu0 %v10278
  %v10393 = vpop.f32.mrf.mxu0
  %v10394 = vadd.f32 0.0, %v10393
  %10395 = vmatmul.f32.gmra.mxu0 %v10281
  %v10396 = vpop.f32.mrf.mxu0
  %v10397 = vadd.f32 0.0, %v10396
  %10398 = vmatmul.f32.gmra.mxu0 %v10284
  %v10399 = vpop.f32.mrf.mxu0
  %v10400 = vadd.f32 0.0, %v10399
  %10401 = vmatmul.f32.gmra.mxu0 %v10287
  %v10402 = vpop.f32.mrf.mxu0
  %v10403 = vadd.f32 0.0, %v10402
  %10404 = vmatmul.f32.gmra.mxu0 %v10290
  %v10405 = vpop.f32.mrf.mxu0
  %v10406 = vadd.f32 0.0, %v10405
  %10407 = vmatmul.f32.gmra.mxu0 %v10293
  %v10408 = vpop.f32.mrf.mxu0
  %v10409 = vadd.f32 0.0, %v10408
  %10410 = vmatmul.f32.gmra.mxu0 %v10296
  %v10411 = vpop.f32.mrf.mxu0
  %v10412 = vadd.f32 0.0, %v10411
  %10413 = vmatmul.f32.gmra.mxu0 %v10299
  %v10414 = vpop.f32.mrf.mxu0
  %v10415 = vadd.f32 0.0, %v10414
  %10416 = vmatmul.f32.gmra.mxu0 %v10302
  %v10417 = vpop.f32.mrf.mxu0
  %v10418 = vadd.f32 0.0, %v10417
  %10419 = vmatmul.f32.gmra.mxu0 %v10305
  %v10420 = vpop.f32.mrf.mxu0
  %v10421 = vadd.f32 0.0, %v10420
  %10422 = vmatmul.f32.gmra.mxu0 %v10308
  %v10423 = vpop.f32.mrf.mxu0
  %v10424 = vadd.f32 0.0, %v10423
  %10425 = vmatmul.f32.gmra.mxu0 %v10311
  %v10426 = vpop.f32.mrf.mxu0
  %v10427 = vadd.f32 0.0, %v10426
  %10428 = vmatmul.f32.gmra.mxu0 %v10314
  %v10429 = vpop.f32.mrf.mxu0
  %v10430 = vadd.f32 0.0, %v10429
  %10431 = vmatmul.f32.gmra.mxu0 %v10317
  %v10432 = vpop.f32.mrf.mxu0
  %v10433 = vadd.f32 0.0, %v10432
  %10434 = vmatmul.f32.gmra.mxu0 %v10320
  %v10435 = vpop.f32.mrf.mxu0
  %v10436 = vadd.f32 0.0, %v10435
  %10437 = vmatmul.f32.gmra.mxu0 %v10323
  %v10438 = vpop.f32.mrf.mxu0
  %v10439 = vadd.f32 0.0, %v10438
  %10440 = vmatmul.f32.gmra.mxu0 %v10326
  %v10441 = vpop.f32.mrf.mxu0
  %v10442 = vadd.f32 0.0, %v10441
  %10443 = vmatmul.f32.gmra.mxu0 %v10329
  %v10444 = vpop.f32.mrf.mxu0
  %v10445 = vadd.f32 0.0, %v10444
  %10446 = vmatmul.f32.gmra.mxu0 %v10332
  %v10447 = vpop.f32.mrf.mxu0
  %v10448 = vadd.f32 0.0, %v10447
  %10449 = vmatmul.f32.gmra.mxu0 %v10335
  %v10450 = vpop.f32.mrf.mxu0
  %v10451 = vadd.f32 0.0, %v10450
  %10452 = vmatmul.f32.gmra.mxu0 %v10338
  %v10453 = vpop.f32.mrf.mxu0
  %v10454 = vadd.f32 0.0, %v10453
  %10455 = vmatmul.f32.gmra.mxu0 %v10341
  %v10456 = vpop.f32.mrf.mxu0
  %v10457 = vadd.f32 0.0, %v10456
  %10458 = vdwg.mxu0
  %v10459 = vadd.f32 %v10055, %v10364
  %v10460 = vadd.f32 %v10058, %v10367
  %v10461 = vadd.f32 %v10061, %v10370
  %v10462 = vadd.f32 %v10064, %v10373
  %v10463 = vadd.f32 %v10067, %v10376
  %v10464 = vadd.f32 %v10070, %v10379
  %v10465 = vadd.f32 %v10073, %v10382
  %v10466 = vadd.f32 %v10076, %v10385
  %v10467 = vadd.f32 %v10079, %v10388
  %v10468 = vadd.f32 %v10082, %v10391
  %v10469 = vadd.f32 %v10085, %v10394
  %v10470 = vadd.f32 %v10088, %v10397
  %v10471 = vadd.f32 %v10091, %v10400
  %v10472 = vadd.f32 %v10094, %v10403
  %v10473 = vadd.f32 %v10097, %v10406
  %v10474 = vadd.f32 %v10100, %v10409
  %v10475 = vadd.f32 %v10103, %v10412
  %v10476 = vadd.f32 %v10106, %v10415
  %v10477 = vadd.f32 %v10109, %v10418
  %v10478 = vadd.f32 %v10112, %v10421
  %v10479 = vadd.f32 %v10115, %v10424
  %v10480 = vadd.f32 %v10118, %v10427
  %v10481 = vadd.f32 %v10121, %v10430
  %v10482 = vadd.f32 %v10124, %v10433
  %v10483 = vadd.f32 %v10127, %v10436
  %v10484 = vadd.f32 %v10130, %v10439
  %v10485 = vadd.f32 %v10133, %v10442
  %v10486 = vadd.f32 %v10136, %v10445
  %v10487 = vadd.f32 %v10139, %v10448
  %v10488 = vadd.f32 %v10142, %v10451
  %v10489 = vadd.f32 %v10145, %v10454
  %v10490 = vadd.f32 %v10148, %v10457
  %v10491 = vld [vmem:[%s67] sm:$0xff]
  %v10492 = vld [vmem:[%s67 + $0x8] sm:$0xff]
  %v10493 = vld [vmem:[%s67 + $0x10] sm:$0xff]
  %v10494 = vld [vmem:[%s67 + $0x18] sm:$0xff]
  %v10495 = vld [vmem:[%s67 + $0x20] sm:$0xff]
  %v10496 = vld [vmem:[%s67 + $0x28] sm:$0xff]
  %v10497 = vld [vmem:[%s67 + $0x30] sm:$0xff]
  %v10498 = vld [vmem:[%s67 + $0x38] sm:$0xff]
  %v10499 = vld [vmem:[%s67 + $0x40] sm:$0xff]
  %v10500 = vld [vmem:[%s67 + $0x48] sm:$0xff]
  %v10501 = vld [vmem:[%s67 + $0x50] sm:$0xff]
  %v10502 = vld [vmem:[%s67 + $0x58] sm:$0xff]
  %v10503 = vld [vmem:[%s67 + $0x60] sm:$0xff]
  %v10504 = vld [vmem:[%s67 + $0x68] sm:$0xff]
  %v10505 = vld [vmem:[%s67 + $0x70] sm:$0xff]
  %v10506 = vld [vmem:[%s67 + $0x78] sm:$0xff]
  %v10507 = vld [vmem:[%s67 + $0x80] sm:$0xff]
  %v10508 = vld [vmem:[%s67 + $0x88] sm:$0xff]
  %v10509 = vld [vmem:[%s67 + $0x90] sm:$0xff]
  %v10510 = vld [vmem:[%s67 + $0x98] sm:$0xff]
  %v10511 = vld [vmem:[%s67 + $0xa0] sm:$0xff]
  %v10512 = vld [vmem:[%s67 + $0xa8] sm:$0xff]
  %v10513 = vld [vmem:[%s67 + $0xb0] sm:$0xff]
  %v10514 = vld [vmem:[%s67 + $0xb8] sm:$0xff]
  %v10515 = vld [vmem:[%s67 + $0xc0] sm:$0xff]
  %v10516 = vld [vmem:[%s67 + $0xc8] sm:$0xff]
  %v10517 = vld [vmem:[%s67 + $0xd0] sm:$0xff]
  %v10518 = vld [vmem:[%s67 + $0xd8] sm:$0xff]
  %v10519 = vld [vmem:[%s67 + $0xe0] sm:$0xff]
  %v10520 = vld [vmem:[%s67 + $0xe8] sm:$0xff]
  %v10521 = vld [vmem:[%s67 + $0xf0] sm:$0xff]
  %v10522 = vld [vmem:[%s67 + $0xf8] sm:$0xff]
  %v10523 = vrot.slane %v10491, 7
  %v10524 = vrot.slane %v10492, 7
  %v10525 = vrot.slane %v10493, 7
  %v10526 = vrot.slane %v10494, 7
  %v10527 = vrot.slane %v10495, 7
  %v10528 = vrot.slane %v10496, 7
  %v10529 = vrot.slane %v10497, 7
  %v10530 = vrot.slane %v10498, 7
  %v10531 = vrot.slane %v10499, 7
  %v10532 = vrot.slane %v10500, 7
  %v10533 = vrot.slane %v10501, 7
  %v10534 = vrot.slane %v10502, 7
  %v10535 = vrot.slane %v10503, 7
  %v10536 = vrot.slane %v10504, 7
  %v10537 = vrot.slane %v10505, 7
  %v10538 = vrot.slane %v10506, 7
  %v10539 = vrot.slane %v10507, 7
  %v10540 = vrot.slane %v10508, 7
  %v10541 = vrot.slane %v10509, 7
  %v10542 = vrot.slane %v10510, 7
  %v10543 = vrot.slane %v10511, 7
  %v10544 = vrot.slane %v10512, 7
  %v10545 = vrot.slane %v10513, 7
  %v10546 = vrot.slane %v10514, 7
  %v10547 = vrot.slane %v10515, 7
  %v10548 = vrot.slane %v10516, 7
  %v10549 = vrot.slane %v10517, 7
  %v10550 = vrot.slane %v10518, 7
  %v10551 = vrot.slane %v10519, 7
  %v10552 = vrot.slane %v10520, 7
  %v10553 = vrot.slane %v10521, 7
  %v10554 = vrot.slane %v10522, 7
  %v10555 = vsel %vm164, %v10553, %v10554
  %v10556 = vsel %vm164, %v10552, %v10553
  %v10557 = vsel %vm164, %v10551, %v10552
  %v10558 = vsel %vm164, %v10550, %v10551
  %v10559 = vsel %vm164, %v10549, %v10550
  %v10560 = vsel %vm164, %v10548, %v10549
  %v10561 = vsel %vm164, %v10547, %v10548
  %v10562 = vsel %vm164, %v10546, %v10547
  %v10563 = vsel %vm164, %v10545, %v10546
  %v10564 = vsel %vm164, %v10544, %v10545
  %v10565 = vsel %vm164, %v10543, %v10544
  %v10566 = vsel %vm164, %v10542, %v10543
  %v10567 = vsel %vm164, %v10541, %v10542
  %v10568 = vsel %vm164, %v10540, %v10541
  %v10569 = vsel %vm164, %v10539, %v10540
  %v10570 = vsel %vm164, %v10538, %v10539
  %v10571 = vsel %vm164, %v10537, %v10538
  %v10572 = vsel %vm164, %v10536, %v10537
  %v10573 = vsel %vm164, %v10535, %v10536
  %v10574 = vsel %vm164, %v10534, %v10535
  %v10575 = vsel %vm164, %v10533, %v10534
  %v10576 = vsel %vm164, %v10532, %v10533
  %v10577 = vsel %vm164, %v10531, %v10532
  %v10578 = vsel %vm164, %v10530, %v10531
  %v10579 = vsel %vm164, %v10529, %v10530
  %v10580 = vsel %vm164, %v10528, %v10529
  %v10581 = vsel %vm164, %v10527, %v10528
  %v10582 = vsel %vm164, %v10526, %v10527
  %v10583 = vsel %vm164, %v10525, %v10526
  %v10584 = vsel %vm164, %v10524, %v10525
  %v10585 = vsel %vm164, %v10523, %v10524
  %v10586 = vsel %vm164, %v10554, %v10523
  %v10587 = vmul.f32 %v10586, %v27
  %v10588 = vmul.f32 %v10585, %v28
  %v10589 = vmul.f32 %v10584, %v27
  %v10590 = vmul.f32 %v10583, %v28
  %v10591 = vmul.f32 %v10582, %v27
  %v10592 = vmul.f32 %v10581, %v28
  %v10593 = vmul.f32 %v10580, %v27
  %v10594 = vmul.f32 %v10579, %v28
  %v10595 = vmul.f32 %v10578, %v27
  %v10596 = vmul.f32 %v10577, %v28
  %v10597 = vmul.f32 %v10576, %v27
  %v10598 = vmul.f32 %v10575, %v28
  %v10599 = vmul.f32 %v10574, %v27
  %v10600 = vmul.f32 %v10573, %v28
  %v10601 = vmul.f32 %v10572, %v27
  %v10602 = vmul.f32 %v10571, %v28
  %v10603 = vmul.f32 %v10570, %v27
  %v10604 = vmul.f32 %v10569, %v28
  %v10605 = vmul.f32 %v10568, %v27
  %v10606 = vmul.f32 %v10567, %v28
  %v10607 = vmul.f32 %v10566, %v27
  %v10608 = vmul.f32 %v10565, %v28
  %v10609 = vmul.f32 %v10564, %v27
  %v10610 = vmul.f32 %v10563, %v28
  %v10611 = vmul.f32 %v10562, %v27
  %v10612 = vmul.f32 %v10561, %v28
  %v10613 = vmul.f32 %v10560, %v27
  %v10614 = vmul.f32 %v10559, %v28
  %v10615 = vmul.f32 %v10558, %v27
  %v10616 = vmul.f32 %v10557, %v28
  %v10617 = vmul.f32 %v10556, %v27
  %v10618 = vmul.f32 %v10555, %v28
  %v10619 = vld [vmem:[%s4268] sm:$0xf]
  %v10621 = vsel %vm14, %v10587, 0
  %v10624 = vsel %vm14, %v10588, 0
  %v10627 = vsel %vm14, %v10589, 0
  %v10630 = vsel %vm14, %v10590, 0
  %v10633 = vsel %vm14, %v10591, 0
  %v10636 = vsel %vm14, %v10592, 0
  %v10639 = vsel %vm14, %v10593, 0
  %v10642 = vsel %vm14, %v10594, 0
  %v10645 = vsel %vm14, %v10595, 0
  %v10648 = vsel %vm14, %v10596, 0
  %v10651 = vsel %vm14, %v10597, 0
  %v10654 = vsel %vm14, %v10598, 0
  %v10657 = vsel %vm14, %v10599, 0
  %v10660 = vsel %vm14, %v10600, 0
  %v10663 = vsel %vm14, %v10601, 0
  %v10666 = vsel %vm14, %v10602, 0
  %v10669 = vsel %vm14, %v10603, 0
  %v10672 = vsel %vm14, %v10604, 0
  %v10675 = vsel %vm14, %v10605, 0
  %v10678 = vsel %vm14, %v10606, 0
  %v10681 = vsel %vm14, %v10607, 0
  %v10684 = vsel %vm14, %v10608, 0
  %v10687 = vsel %vm14, %v10609, 0
  %v10690 = vsel %vm14, %v10610, 0
  %v10693 = vsel %vm14, %v10611, 0
  %v10696 = vsel %vm14, %v10612, 0
  %v10699 = vsel %vm14, %v10613, 0
  %v10702 = vsel %vm14, %v10614, 0
  %v10705 = vsel %vm14, %v10615, 0
  %v10708 = vsel %vm14, %v10616, 0
  %v10711 = vsel %vm14, %v10617, 0
  %v10714 = vsel %vm14, %v10618, 0
  %v10717 = vsel %vm328, %v10619, 0
  %10719 = vmatpush.msra.mxu0 0.0
  %10720 = vmatpush.msra.mxu0 0.0
  %10721 = vmatpush.msra.mxu0 0.0
  %10722 = vmatpush.msra.mxu0 0.0
  %10723 = vmatpush.msra.mxu0 0.0
  %10724 = vmatpush.msra.mxu0 0.0
  %10725 = vmatpush.msra.mxu0 0.0
  %10726 = vmatpush.msra.mxu0 0.0
  %10727 = vmatpush.msra.mxu0 0.0
  %10728 = vmatpush.msra.mxu0 0.0
  %10729 = vmatpush.msra.mxu0 0.0
  %10730 = vmatpush.msra.mxu0 0.0
  %10731 = vmatpush.msra.mxu0 0.0
  %10732 = vmatpush.msra.mxu0 0.0
  %10733 = vmatpush.msra.mxu0 0.0
  %10734 = vmatpush.msra.mxu0 %v10717
  %10735 = vmatmul.f32.gmra.mxu0 %v10621
  %v10736 = vpop.f32.mrf.mxu0
  %v10737 = vadd.f32 0.0, %v10736
  %10738 = vmatmul.f32.gmra.mxu0 %v10624
  %v10739 = vpop.f32.mrf.mxu0
  %v10740 = vadd.f32 0.0, %v10739
  %10741 = vmatmul.f32.gmra.mxu0 %v10627
  %v10742 = vpop.f32.mrf.mxu0
  %v10743 = vadd.f32 0.0, %v10742
  %10744 = vmatmul.f32.gmra.mxu0 %v10630
  %v10745 = vpop.f32.mrf.mxu0
  %v10746 = vadd.f32 0.0, %v10745
  %10747 = vmatmul.f32.gmra.mxu0 %v10633
  %v10748 = vpop.f32.mrf.mxu0
  %v10749 = vadd.f32 0.0, %v10748
  %10750 = vmatmul.f32.gmra.mxu0 %v10636
  %v10751 = vpop.f32.mrf.mxu0
  %v10752 = vadd.f32 0.0, %v10751
  %10753 = vmatmul.f32.gmra.mxu0 %v10639
  %v10754 = vpop.f32.mrf.mxu0
  %v10755 = vadd.f32 0.0, %v10754
  %10756 = vmatmul.f32.gmra.mxu0 %v10642
  %v10757 = vpop.f32.mrf.mxu0
  %v10758 = vadd.f32 0.0, %v10757
  %10759 = vmatmul.f32.gmra.mxu0 %v10645
  %v10760 = vpop.f32.mrf.mxu0
  %v10761 = vadd.f32 0.0, %v10760
  %10762 = vmatmul.f32.gmra.mxu0 %v10648
  %v10763 = vpop.f32.mrf.mxu0
  %v10764 = vadd.f32 0.0, %v10763
  %10765 = vmatmul.f32.gmra.mxu0 %v10651
  %v10766 = vpop.f32.mrf.mxu0
  %v10767 = vadd.f32 0.0, %v10766
  %10768 = vmatmul.f32.gmra.mxu0 %v10654
  %v10769 = vpop.f32.mrf.mxu0
  %v10770 = vadd.f32 0.0, %v10769
  %10771 = vmatmul.f32.gmra.mxu0 %v10657
  %v10772 = vpop.f32.mrf.mxu0
  %v10773 = vadd.f32 0.0, %v10772
  %10774 = vmatmul.f32.gmra.mxu0 %v10660
  %v10775 = vpop.f32.mrf.mxu0
  %v10776 = vadd.f32 0.0, %v10775
  %10777 = vmatmul.f32.gmra.mxu0 %v10663
  %v10778 = vpop.f32.mrf.mxu0
  %v10779 = vadd.f32 0.0, %v10778
  %10780 = vmatmul.f32.gmra.mxu0 %v10666
  %v10781 = vpop.f32.mrf.mxu0
  %v10782 = vadd.f32 0.0, %v10781
  %10783 = vmatmul.f32.gmra.mxu0 %v10669
  %v10784 = vpop.f32.mrf.mxu0
  %v10785 = vadd.f32 0.0, %v10784
  %10786 = vmatmul.f32.gmra.mxu0 %v10672
  %v10787 = vpop.f32.mrf.mxu0
  %v10788 = vadd.f32 0.0, %v10787
  %10789 = vmatmul.f32.gmra.mxu0 %v10675
  %v10790 = vpop.f32.mrf.mxu0
  %v10791 = vadd.f32 0.0, %v10790
  %10792 = vmatmul.f32.gmra.mxu0 %v10678
  %v10793 = vpop.f32.mrf.mxu0
  %v10794 = vadd.f32 0.0, %v10793
  %10795 = vmatmul.f32.gmra.mxu0 %v10681
  %v10796 = vpop.f32.mrf.mxu0
  %v10797 = vadd.f32 0.0, %v10796
  %10798 = vmatmul.f32.gmra.mxu0 %v10684
  %v10799 = vpop.f32.mrf.mxu0
  %v10800 = vadd.f32 0.0, %v10799
  %10801 = vmatmul.f32.gmra.mxu0 %v10687
  %v10802 = vpop.f32.mrf.mxu0
  %v10803 = vadd.f32 0.0, %v10802
  %10804 = vmatmul.f32.gmra.mxu0 %v10690
  %v10805 = vpop.f32.mrf.mxu0
  %v10806 = vadd.f32 0.0, %v10805
  %10807 = vmatmul.f32.gmra.mxu0 %v10693
  %v10808 = vpop.f32.mrf.mxu0
  %v10809 = vadd.f32 0.0, %v10808
  %10810 = vmatmul.f32.gmra.mxu0 %v10696
  %v10811 = vpop.f32.mrf.mxu0
  %v10812 = vadd.f32 0.0, %v10811
  %10813 = vmatmul.f32.gmra.mxu0 %v10699
  %v10814 = vpop.f32.mrf.mxu0
  %v10815 = vadd.f32 0.0, %v10814
  %10816 = vmatmul.f32.gmra.mxu0 %v10702
  %v10817 = vpop.f32.mrf.mxu0
  %v10818 = vadd.f32 0.0, %v10817
  %10819 = vmatmul.f32.gmra.mxu0 %v10705
  %v10820 = vpop.f32.mrf.mxu0
  %v10821 = vadd.f32 0.0, %v10820
  %10822 = vmatmul.f32.gmra.mxu0 %v10708
  %v10823 = vpop.f32.mrf.mxu0
  %v10824 = vadd.f32 0.0, %v10823
  %10825 = vmatmul.f32.gmra.mxu0 %v10711
  %v10826 = vpop.f32.mrf.mxu0
  %v10827 = vadd.f32 0.0, %v10826
  %10828 = vmatmul.f32.gmra.mxu0 %v10714
  %v10829 = vpop.f32.mrf.mxu0
  %v10830 = vadd.f32 0.0, %v10829
  %10831 = vdwg.mxu0
  %v10832 = vadd.f32 %v10459, %v10737
  %v10833 = vadd.f32 %v10460, %v10740
  %v10834 = vadd.f32 %v10461, %v10743
  %v10835 = vadd.f32 %v10462, %v10746
  %v10836 = vadd.f32 %v10463, %v10749
  %v10837 = vadd.f32 %v10464, %v10752
  %v10838 = vadd.f32 %v10465, %v10755
  %v10839 = vadd.f32 %v10466, %v10758
  %v10840 = vadd.f32 %v10467, %v10761
  %v10841 = vadd.f32 %v10468, %v10764
  %v10842 = vadd.f32 %v10469, %v10767
  %v10843 = vadd.f32 %v10470, %v10770
  %v10844 = vadd.f32 %v10471, %v10773
  %v10845 = vadd.f32 %v10472, %v10776
  %v10846 = vadd.f32 %v10473, %v10779
  %v10847 = vadd.f32 %v10474, %v10782
  %v10848 = vadd.f32 %v10475, %v10785
  %v10849 = vadd.f32 %v10476, %v10788
  %v10850 = vadd.f32 %v10477, %v10791
  %v10851 = vadd.f32 %v10478, %v10794
  %v10852 = vadd.f32 %v10479, %v10797
  %v10853 = vadd.f32 %v10480, %v10800
  %v10854 = vadd.f32 %v10481, %v10803
  %v10855 = vadd.f32 %v10482, %v10806
  %v10856 = vadd.f32 %v10483, %v10809
  %v10857 = vadd.f32 %v10484, %v10812
  %v10858 = vadd.f32 %v10485, %v10815
  %v10859 = vadd.f32 %v10486, %v10818
  %v10860 = vadd.f32 %v10487, %v10821
  %v10861 = vadd.f32 %v10488, %v10824
  %v10862 = vadd.f32 %v10489, %v10827
  %v10863 = vadd.f32 %v10490, %v10830
  %v10864 = vld [vmem:[%s4514] sm:$0xf]
  %v10866 = vsel %vm14, %v10491, 0
  %v10869 = vsel %vm14, %v10492, 0
  %v10872 = vsel %vm14, %v10493, 0
  %v10875 = vsel %vm14, %v10494, 0
  %v10878 = vsel %vm14, %v10495, 0
  %v10881 = vsel %vm14, %v10496, 0
  %v10884 = vsel %vm14, %v10497, 0
  %v10887 = vsel %vm14, %v10498, 0
  %v10890 = vsel %vm14, %v10499, 0
  %v10893 = vsel %vm14, %v10500, 0
  %v10896 = vsel %vm14, %v10501, 0
  %v10899 = vsel %vm14, %v10502, 0
  %v10902 = vsel %vm14, %v10503, 0
  %v10905 = vsel %vm14, %v10504, 0
  %v10908 = vsel %vm14, %v10505, 0
  %v10911 = vsel %vm14, %v10506, 0
  %v10914 = vsel %vm14, %v10507, 0
  %v10917 = vsel %vm14, %v10508, 0
  %v10920 = vsel %vm14, %v10509, 0
  %v10923 = vsel %vm14, %v10510, 0
  %v10926 = vsel %vm14, %v10511, 0
  %v10929 = vsel %vm14, %v10512, 0
  %v10932 = vsel %vm14, %v10513, 0
  %v10935 = vsel %vm14, %v10514, 0
  %v10938 = vsel %vm14, %v10515, 0
  %v10941 = vsel %vm14, %v10516, 0
  %v10944 = vsel %vm14, %v10517, 0
  %v10947 = vsel %vm14, %v10518, 0
  %v10950 = vsel %vm14, %v10519, 0
  %v10953 = vsel %vm14, %v10520, 0
  %v10956 = vsel %vm14, %v10521, 0
  %v10959 = vsel %vm14, %v10522, 0
  %v10962 = vsel %vm328, %v10864, 0
  %10964 = vmatpush.msra.mxu0 0.0
  %10965 = vmatpush.msra.mxu0 0.0
  %10966 = vmatpush.msra.mxu0 0.0
  %10967 = vmatpush.msra.mxu0 0.0
  %10968 = vmatpush.msra.mxu0 0.0
  %10969 = vmatpush.msra.mxu0 0.0
  %10970 = vmatpush.msra.mxu0 0.0
  %10971 = vmatpush.msra.mxu0 0.0
  %10972 = vmatpush.msra.mxu0 0.0
  %10973 = vmatpush.msra.mxu0 0.0
  %10974 = vmatpush.msra.mxu0 0.0
  %10975 = vmatpush.msra.mxu0 0.0
  %10976 = vmatpush.msra.mxu0 0.0
  %10977 = vmatpush.msra.mxu0 0.0
  %10978 = vmatpush.msra.mxu0 0.0
  %10979 = vmatpush.msra.mxu0 %v10962
  %10980 = vmatmul.f32.gmra.mxu0 %v10866
  %v10981 = vpop.f32.mrf.mxu0
  %v10982 = vadd.f32 0.0, %v10981
  %10983 = vmatmul.f32.gmra.mxu0 %v10869
  %v10984 = vpop.f32.mrf.mxu0
  %v10985 = vadd.f32 0.0, %v10984
  %10986 = vmatmul.f32.gmra.mxu0 %v10872
  %v10987 = vpop.f32.mrf.mxu0
  %v10988 = vadd.f32 0.0, %v10987
  %10989 = vmatmul.f32.gmra.mxu0 %v10875
  %v10990 = vpop.f32.mrf.mxu0
  %v10991 = vadd.f32 0.0, %v10990
  %10992 = vmatmul.f32.gmra.mxu0 %v10878
  %v10993 = vpop.f32.mrf.mxu0
  %v10994 = vadd.f32 0.0, %v10993
  %10995 = vmatmul.f32.gmra.mxu0 %v10881
  %v10996 = vpop.f32.mrf.mxu0
  %v10997 = vadd.f32 0.0, %v10996
  %10998 = vmatmul.f32.gmra.mxu0 %v10884
  %v10999 = vpop.f32.mrf.mxu0
  %v11000 = vadd.f32 0.0, %v10999
  %11001 = vmatmul.f32.gmra.mxu0 %v10887
  %v11002 = vpop.f32.mrf.mxu0
  %v11003 = vadd.f32 0.0, %v11002
  %11004 = vmatmul.f32.gmra.mxu0 %v10890
  %v11005 = vpop.f32.mrf.mxu0
  %v11006 = vadd.f32 0.0, %v11005
  %11007 = vmatmul.f32.gmra.mxu0 %v10893
  %v11008 = vpop.f32.mrf.mxu0
  %v11009 = vadd.f32 0.0, %v11008
  %11010 = vmatmul.f32.gmra.mxu0 %v10896
  %v11011 = vpop.f32.mrf.mxu0
  %v11012 = vadd.f32 0.0, %v11011
  %11013 = vmatmul.f32.gmra.mxu0 %v10899
  %v11014 = vpop.f32.mrf.mxu0
  %v11015 = vadd.f32 0.0, %v11014
  %11016 = vmatmul.f32.gmra.mxu0 %v10902
  %v11017 = vpop.f32.mrf.mxu0
  %v11018 = vadd.f32 0.0, %v11017
  %11019 = vmatmul.f32.gmra.mxu0 %v10905
  %v11020 = vpop.f32.mrf.mxu0
  %v11021 = vadd.f32 0.0, %v11020
  %11022 = vmatmul.f32.gmra.mxu0 %v10908
  %v11023 = vpop.f32.mrf.mxu0
  %v11024 = vadd.f32 0.0, %v11023
  %11025 = vmatmul.f32.gmra.mxu0 %v10911
  %v11026 = vpop.f32.mrf.mxu0
  %v11027 = vadd.f32 0.0, %v11026
  %11028 = vmatmul.f32.gmra.mxu0 %v10914
  %v11029 = vpop.f32.mrf.mxu0
  %v11030 = vadd.f32 0.0, %v11029
  %11031 = vmatmul.f32.gmra.mxu0 %v10917
  %v11032 = vpop.f32.mrf.mxu0
  %v11033 = vadd.f32 0.0, %v11032
  %11034 = vmatmul.f32.gmra.mxu0 %v10920
  %v11035 = vpop.f32.mrf.mxu0
  %v11036 = vadd.f32 0.0, %v11035
  %11037 = vmatmul.f32.gmra.mxu0 %v10923
  %v11038 = vpop.f32.mrf.mxu0
  %v11039 = vadd.f32 0.0, %v11038
  %11040 = vmatmul.f32.gmra.mxu0 %v10926
  %v11041 = vpop.f32.mrf.mxu0
  %v11042 = vadd.f32 0.0, %v11041
  %11043 = vmatmul.f32.gmra.mxu0 %v10929
  %v11044 = vpop.f32.mrf.mxu0
  %v11045 = vadd.f32 0.0, %v11044
  %11046 = vmatmul.f32.gmra.mxu0 %v10932
  %v11047 = vpop.f32.mrf.mxu0
  %v11048 = vadd.f32 0.0, %v11047
  %11049 = vmatmul.f32.gmra.mxu0 %v10935
  %v11050 = vpop.f32.mrf.mxu0
  %v11051 = vadd.f32 0.0, %v11050
  %11052 = vmatmul.f32.gmra.mxu0 %v10938
  %v11053 = vpop.f32.mrf.mxu0
  %v11054 = vadd.f32 0.0, %v11053
  %11055 = vmatmul.f32.gmra.mxu0 %v10941
  %v11056 = vpop.f32.mrf.mxu0
  %v11057 = vadd.f32 0.0, %v11056
  %11058 = vmatmul.f32.gmra.mxu0 %v10944
  %v11059 = vpop.f32.mrf.mxu0
  %v11060 = vadd.f32 0.0, %v11059
  %11061 = vmatmul.f32.gmra.mxu0 %v10947
  %v11062 = vpop.f32.mrf.mxu0
  %v11063 = vadd.f32 0.0, %v11062
  %11064 = vmatmul.f32.gmra.mxu0 %v10950
  %v11065 = vpop.f32.mrf.mxu0
  %v11066 = vadd.f32 0.0, %v11065
  %11067 = vmatmul.f32.gmra.mxu0 %v10953
  %v11068 = vpop.f32.mrf.mxu0
  %v11069 = vadd.f32 0.0, %v11068
  %11070 = vmatmul.f32.gmra.mxu0 %v10956
  %v11071 = vpop.f32.mrf.mxu0
  %v11072 = vadd.f32 0.0, %v11071
  %11073 = vmatmul.f32.gmra.mxu0 %v10959
  %v11074 = vpop.f32.mrf.mxu0
  %v11075 = vadd.f32 0.0, %v11074
  %11076 = vdwg.mxu0
  %v11077 = vadd.f32 %v10832, %v10982
  %v11078 = vadd.f32 %v10833, %v10985
  %v11079 = vadd.f32 %v10834, %v10988
  %v11080 = vadd.f32 %v10835, %v10991
  %v11081 = vadd.f32 %v10836, %v10994
  %v11082 = vadd.f32 %v10837, %v10997
  %v11083 = vadd.f32 %v10838, %v11000
  %v11084 = vadd.f32 %v10839, %v11003
  %v11085 = vadd.f32 %v10840, %v11006
  %v11086 = vadd.f32 %v10841, %v11009
  %v11087 = vadd.f32 %v10842, %v11012
  %v11088 = vadd.f32 %v10843, %v11015
  %v11089 = vadd.f32 %v10844, %v11018
  %v11090 = vadd.f32 %v10845, %v11021
  %v11091 = vadd.f32 %v10846, %v11024
  %v11092 = vadd.f32 %v10847, %v11027
  %v11093 = vadd.f32 %v10848, %v11030
  %v11094 = vadd.f32 %v10849, %v11033
  %v11095 = vadd.f32 %v10850, %v11036
  %v11096 = vadd.f32 %v10851, %v11039
  %v11097 = vadd.f32 %v10852, %v11042
  %v11098 = vadd.f32 %v10853, %v11045
  %v11099 = vadd.f32 %v10854, %v11048
  %v11100 = vadd.f32 %v10855, %v11051
  %v11101 = vadd.f32 %v10856, %v11054
  %v11102 = vadd.f32 %v10857, %v11057
  %v11103 = vadd.f32 %v10858, %v11060
  %v11104 = vadd.f32 %v10859, %v11063
  %v11105 = vadd.f32 %v10860, %v11066
  %v11106 = vadd.f32 %v10861, %v11069
  %v11107 = vadd.f32 %v10862, %v11072
  %v11108 = vadd.f32 %v10863, %v11075
  %v11109 = vrot.slane %v10491, 1
  %v11110 = vrot.slane %v10492, 1
  %v11111 = vrot.slane %v10493, 1
  %v11112 = vrot.slane %v10494, 1
  %v11113 = vrot.slane %v10495, 1
  %v11114 = vrot.slane %v10496, 1
  %v11115 = vrot.slane %v10497, 1
  %v11116 = vrot.slane %v10498, 1
  %v11117 = vrot.slane %v10499, 1
  %v11118 = vrot.slane %v10500, 1
  %v11119 = vrot.slane %v10501, 1
  %v11120 = vrot.slane %v10502, 1
  %v11121 = vrot.slane %v10503, 1
  %v11122 = vrot.slane %v10504, 1
  %v11123 = vrot.slane %v10505, 1
  %v11124 = vrot.slane %v10506, 1
  %v11125 = vrot.slane %v10507, 1
  %v11126 = vrot.slane %v10508, 1
  %v11127 = vrot.slane %v10509, 1
  %v11128 = vrot.slane %v10510, 1
  %v11129 = vrot.slane %v10511, 1
  %v11130 = vrot.slane %v10512, 1
  %v11131 = vrot.slane %v10513, 1
  %v11132 = vrot.slane %v10514, 1
  %v11133 = vrot.slane %v10515, 1
  %v11134 = vrot.slane %v10516, 1
  %v11135 = vrot.slane %v10517, 1
  %v11136 = vrot.slane %v10518, 1
  %v11137 = vrot.slane %v10519, 1
  %v11138 = vrot.slane %v10520, 1
  %v11139 = vrot.slane %v10521, 1
  %v11140 = vrot.slane %v10522, 1
  %v11141 = vsel %vm689, %v11139, %v11140
  %v11142 = vsel %vm689, %v11138, %v11139
  %v11143 = vsel %vm689, %v11137, %v11138
  %v11144 = vsel %vm689, %v11136, %v11137
  %v11145 = vsel %vm689, %v11135, %v11136
  %v11146 = vsel %vm689, %v11134, %v11135
  %v11147 = vsel %vm689, %v11133, %v11134
  %v11148 = vsel %vm689, %v11132, %v11133
  %v11149 = vsel %vm689, %v11131, %v11132
  %v11150 = vsel %vm689, %v11130, %v11131
  %v11151 = vsel %vm689, %v11129, %v11130
  %v11152 = vsel %vm689, %v11128, %v11129
  %v11153 = vsel %vm689, %v11127, %v11128
  %v11154 = vsel %vm689, %v11126, %v11127
  %v11155 = vsel %vm689, %v11125, %v11126
  %v11156 = vsel %vm689, %v11124, %v11125
  %v11157 = vsel %vm689, %v11123, %v11124
  %v11158 = vsel %vm689, %v11122, %v11123
  %v11159 = vsel %vm689, %v11121, %v11122
  %v11160 = vsel %vm689, %v11120, %v11121
  %v11161 = vsel %vm689, %v11119, %v11120
  %v11162 = vsel %vm689, %v11118, %v11119
  %v11163 = vsel %vm689, %v11117, %v11118
  %v11164 = vsel %vm689, %v11116, %v11117
  %v11165 = vsel %vm689, %v11115, %v11116
  %v11166 = vsel %vm689, %v11114, %v11115
  %v11167 = vsel %vm689, %v11113, %v11114
  %v11168 = vsel %vm689, %v11112, %v11113
  %v11169 = vsel %vm689, %v11111, %v11112
  %v11170 = vsel %vm689, %v11110, %v11111
  %v11171 = vsel %vm689, %v11109, %v11110
  %v11172 = vsel %vm689, %v11140, %v11109
  %v11173 = vmul.f32 %v11171, %v33
  %v11174 = vmul.f32 %v11170, %v34
  %v11175 = vmul.f32 %v11169, %v33
  %v11176 = vmul.f32 %v11168, %v34
  %v11177 = vmul.f32 %v11167, %v33
  %v11178 = vmul.f32 %v11166, %v34
  %v11179 = vmul.f32 %v11165, %v33
  %v11180 = vmul.f32 %v11164, %v34
  %v11181 = vmul.f32 %v11163, %v33
  %v11182 = vmul.f32 %v11162, %v34
  %v11183 = vmul.f32 %v11161, %v33
  %v11184 = vmul.f32 %v11160, %v34
  %v11185 = vmul.f32 %v11159, %v33
  %v11186 = vmul.f32 %v11158, %v34
  %v11187 = vmul.f32 %v11157, %v33
  %v11188 = vmul.f32 %v11156, %v34
  %v11189 = vmul.f32 %v11155, %v33
  %v11190 = vmul.f32 %v11154, %v34
  %v11191 = vmul.f32 %v11153, %v33
  %v11192 = vmul.f32 %v11152, %v34
  %v11193 = vmul.f32 %v11151, %v33
  %v11194 = vmul.f32 %v11150, %v34
  %v11195 = vmul.f32 %v11149, %v33
  %v11196 = vmul.f32 %v11148, %v34
  %v11197 = vmul.f32 %v11147, %v33
  %v11198 = vmul.f32 %v11146, %v34
  %v11199 = vmul.f32 %v11145, %v33
  %v11200 = vmul.f32 %v11144, %v34
  %v11201 = vmul.f32 %v11143, %v33
  %v11202 = vmul.f32 %v11142, %v34
  %v11203 = vmul.f32 %v11141, %v33
  %v11204 = vmul.f32 %v11172, %v34
  %v11205 = vld [vmem:[%s4856] sm:$0xf]
  %v11207 = vsel %vm14, %v11173, 0
  %v11210 = vsel %vm14, %v11174, 0
  %v11213 = vsel %vm14, %v11175, 0
  %v11216 = vsel %vm14, %v11176, 0
  %v11219 = vsel %vm14, %v11177, 0
  %v11222 = vsel %vm14, %v11178, 0
  %v11225 = vsel %vm14, %v11179, 0
  %v11228 = vsel %vm14, %v11180, 0
  %v11231 = vsel %vm14, %v11181, 0
  %v11234 = vsel %vm14, %v11182, 0
  %v11237 = vsel %vm14, %v11183, 0
  %v11240 = vsel %vm14, %v11184, 0
  %v11243 = vsel %vm14, %v11185, 0
  %v11246 = vsel %vm14, %v11186, 0
  %v11249 = vsel %vm14, %v11187, 0
  %v11252 = vsel %vm14, %v11188, 0
  %v11255 = vsel %vm14, %v11189, 0
  %v11258 = vsel %vm14, %v11190, 0
  %v11261 = vsel %vm14, %v11191, 0
  %v11264 = vsel %vm14, %v11192, 0
  %v11267 = vsel %vm14, %v11193, 0
  %v11270 = vsel %vm14, %v11194, 0
  %v11273 = vsel %vm14, %v11195, 0
  %v11276 = vsel %vm14, %v11196, 0
  %v11279 = vsel %vm14, %v11197, 0
  %v11282 = vsel %vm14, %v11198, 0
  %v11285 = vsel %vm14, %v11199, 0
  %v11288 = vsel %vm14, %v11200, 0
  %v11291 = vsel %vm14, %v11201, 0
  %v11294 = vsel %vm14, %v11202, 0
  %v11297 = vsel %vm14, %v11203, 0
  %v11300 = vsel %vm14, %v11204, 0
  %v11303 = vsel %vm328, %v11205, 0
  %11305 = vmatpush.msra.mxu0 0.0
  %11306 = vmatpush.msra.mxu0 0.0
  %11307 = vmatpush.msra.mxu0 0.0
  %11308 = vmatpush.msra.mxu0 0.0
  %11309 = vmatpush.msra.mxu0 0.0
  %11310 = vmatpush.msra.mxu0 0.0
  %11311 = vmatpush.msra.mxu0 0.0
  %11312 = vmatpush.msra.mxu0 0.0
  %11313 = vmatpush.msra.mxu0 0.0
  %11314 = vmatpush.msra.mxu0 0.0
  %11315 = vmatpush.msra.mxu0 0.0
  %11316 = vmatpush.msra.mxu0 0.0
  %11317 = vmatpush.msra.mxu0 0.0
  %11318 = vmatpush.msra.mxu0 0.0
  %11319 = vmatpush.msra.mxu0 0.0
  %11320 = vmatpush.msra.mxu0 %v11303
  %11321 = vmatmul.f32.gmra.mxu0 %v11207
  %v11322 = vpop.f32.mrf.mxu0
  %v11323 = vadd.f32 0.0, %v11322
  %11324 = vmatmul.f32.gmra.mxu0 %v11210
  %v11325 = vpop.f32.mrf.mxu0
  %v11326 = vadd.f32 0.0, %v11325
  %11327 = vmatmul.f32.gmra.mxu0 %v11213
  %v11328 = vpop.f32.mrf.mxu0
  %v11329 = vadd.f32 0.0, %v11328
  %11330 = vmatmul.f32.gmra.mxu0 %v11216
  %v11331 = vpop.f32.mrf.mxu0
  %v11332 = vadd.f32 0.0, %v11331
  %11333 = vmatmul.f32.gmra.mxu0 %v11219
  %v11334 = vpop.f32.mrf.mxu0
  %v11335 = vadd.f32 0.0, %v11334
  %11336 = vmatmul.f32.gmra.mxu0 %v11222
  %v11337 = vpop.f32.mrf.mxu0
  %v11338 = vadd.f32 0.0, %v11337
  %11339 = vmatmul.f32.gmra.mxu0 %v11225
  %v11340 = vpop.f32.mrf.mxu0
  %v11341 = vadd.f32 0.0, %v11340
  %11342 = vmatmul.f32.gmra.mxu0 %v11228
  %v11343 = vpop.f32.mrf.mxu0
  %v11344 = vadd.f32 0.0, %v11343
  %11345 = vmatmul.f32.gmra.mxu0 %v11231
  %v11346 = vpop.f32.mrf.mxu0
  %v11347 = vadd.f32 0.0, %v11346
  %11348 = vmatmul.f32.gmra.mxu0 %v11234
  %v11349 = vpop.f32.mrf.mxu0
  %v11350 = vadd.f32 0.0, %v11349
  %11351 = vmatmul.f32.gmra.mxu0 %v11237
  %v11352 = vpop.f32.mrf.mxu0
  %v11353 = vadd.f32 0.0, %v11352
  %11354 = vmatmul.f32.gmra.mxu0 %v11240
  %v11355 = vpop.f32.mrf.mxu0
  %v11356 = vadd.f32 0.0, %v11355
  %11357 = vmatmul.f32.gmra.mxu0 %v11243
  %v11358 = vpop.f32.mrf.mxu0
  %v11359 = vadd.f32 0.0, %v11358
  %11360 = vmatmul.f32.gmra.mxu0 %v11246
  %v11361 = vpop.f32.mrf.mxu0
  %v11362 = vadd.f32 0.0, %v11361
  %11363 = vmatmul.f32.gmra.mxu0 %v11249
  %v11364 = vpop.f32.mrf.mxu0
  %v11365 = vadd.f32 0.0, %v11364
  %11366 = vmatmul.f32.gmra.mxu0 %v11252
  %v11367 = vpop.f32.mrf.mxu0
  %v11368 = vadd.f32 0.0, %v11367
  %11369 = vmatmul.f32.gmra.mxu0 %v11255
  %v11370 = vpop.f32.mrf.mxu0
  %v11371 = vadd.f32 0.0, %v11370
  %11372 = vmatmul.f32.gmra.mxu0 %v11258
  %v11373 = vpop.f32.mrf.mxu0
  %v11374 = vadd.f32 0.0, %v11373
  %11375 = vmatmul.f32.gmra.mxu0 %v11261
  %v11376 = vpop.f32.mrf.mxu0
  %v11377 = vadd.f32 0.0, %v11376
  %11378 = vmatmul.f32.gmra.mxu0 %v11264
  %v11379 = vpop.f32.mrf.mxu0
  %v11380 = vadd.f32 0.0, %v11379
  %11381 = vmatmul.f32.gmra.mxu0 %v11267
  %v11382 = vpop.f32.mrf.mxu0
  %v11383 = vadd.f32 0.0, %v11382
  %11384 = vmatmul.f32.gmra.mxu0 %v11270
  %v11385 = vpop.f32.mrf.mxu0
  %v11386 = vadd.f32 0.0, %v11385
  %11387 = vmatmul.f32.gmra.mxu0 %v11273
  %v11388 = vpop.f32.mrf.mxu0
  %v11389 = vadd.f32 0.0, %v11388
  %11390 = vmatmul.f32.gmra.mxu0 %v11276
  %v11391 = vpop.f32.mrf.mxu0
  %v11392 = vadd.f32 0.0, %v11391
  %11393 = vmatmul.f32.gmra.mxu0 %v11279
  %v11394 = vpop.f32.mrf.mxu0
  %v11395 = vadd.f32 0.0, %v11394
  %11396 = vmatmul.f32.gmra.mxu0 %v11282
  %v11397 = vpop.f32.mrf.mxu0
  %v11398 = vadd.f32 0.0, %v11397
  %11399 = vmatmul.f32.gmra.mxu0 %v11285
  %v11400 = vpop.f32.mrf.mxu0
  %v11401 = vadd.f32 0.0, %v11400
  %11402 = vmatmul.f32.gmra.mxu0 %v11288
  %v11403 = vpop.f32.mrf.mxu0
  %v11404 = vadd.f32 0.0, %v11403
  %11405 = vmatmul.f32.gmra.mxu0 %v11291
  %v11406 = vpop.f32.mrf.mxu0
  %v11407 = vadd.f32 0.0, %v11406
  %11408 = vmatmul.f32.gmra.mxu0 %v11294
  %v11409 = vpop.f32.mrf.mxu0
  %v11410 = vadd.f32 0.0, %v11409
  %11411 = vmatmul.f32.gmra.mxu0 %v11297
  %v11412 = vpop.f32.mrf.mxu0
  %v11413 = vadd.f32 0.0, %v11412
  %11414 = vmatmul.f32.gmra.mxu0 %v11300
  %v11415 = vpop.f32.mrf.mxu0
  %v11416 = vadd.f32 0.0, %v11415
  %11417 = vdwg.mxu0
  %v11418 = vadd.f32 %v11077, %v11323
  %v11419 = vadd.f32 %v11078, %v11326
  %v11420 = vadd.f32 %v11079, %v11329
  %v11421 = vadd.f32 %v11080, %v11332
  %v11422 = vadd.f32 %v11081, %v11335
  %v11423 = vadd.f32 %v11082, %v11338
  %v11424 = vadd.f32 %v11083, %v11341
  %v11425 = vadd.f32 %v11084, %v11344
  %v11426 = vadd.f32 %v11085, %v11347
  %v11427 = vadd.f32 %v11086, %v11350
  %v11428 = vadd.f32 %v11087, %v11353
  %v11429 = vadd.f32 %v11088, %v11356
  %v11430 = vadd.f32 %v11089, %v11359
  %v11431 = vadd.f32 %v11090, %v11362
  %v11432 = vadd.f32 %v11091, %v11365
  %v11433 = vadd.f32 %v11092, %v11368
  %v11434 = vadd.f32 %v11093, %v11371
  %v11435 = vadd.f32 %v11094, %v11374
  %v11436 = vadd.f32 %v11095, %v11377
  %v11437 = vadd.f32 %v11096, %v11380
  %v11438 = vadd.f32 %v11097, %v11383
  %v11439 = vadd.f32 %v11098, %v11386
  %v11440 = vadd.f32 %v11099, %v11389
  %v11441 = vadd.f32 %v11100, %v11392
  %v11442 = vadd.f32 %v11101, %v11395
  %v11443 = vadd.f32 %v11102, %v11398
  %v11444 = vadd.f32 %v11103, %v11401
  %v11445 = vadd.f32 %v11104, %v11404
  %v11446 = vadd.f32 %v11105, %v11407
  %v11447 = vadd.f32 %v11106, %v11410
  %v11448 = vadd.f32 %v11107, %v11413
  %v11449 = vadd.f32 %v11108, %v11416
  %v11450 = vld [vmem:[%s1962] sm:$0xff]
  %v11451 = vld [vmem:[%s1962 + $0x8] sm:$0xff]
  %v11452 = vld [vmem:[%s1962 + $0x10] sm:$0xff]
  %v11453 = vld [vmem:[%s1962 + $0x18] sm:$0xff]
  %v11454 = vld [vmem:[%s1962 + $0x20] sm:$0xff]
  %v11455 = vld [vmem:[%s1962 + $0x28] sm:$0xff]
  %v11456 = vld [vmem:[%s1962 + $0x30] sm:$0xff]
  %v11457 = vld [vmem:[%s1962 + $0x38] sm:$0xff]
  %v11458 = vld [vmem:[%s1962 + $0x40] sm:$0xff]
  %v11459 = vld [vmem:[%s1962 + $0x48] sm:$0xff]
  %v11460 = vld [vmem:[%s1962 + $0x50] sm:$0xff]
  %v11461 = vld [vmem:[%s1962 + $0x58] sm:$0xff]
  %v11462 = vld [vmem:[%s1962 + $0x60] sm:$0xff]
  %v11463 = vld [vmem:[%s1962 + $0x68] sm:$0xff]
  %v11464 = vld [vmem:[%s1962 + $0x70] sm:$0xff]
  %v11465 = vld [vmem:[%s1962 + $0x78] sm:$0xff]
  %v11466 = vld [vmem:[%s1962 + $0x80] sm:$0xff]
  %v11467 = vld [vmem:[%s1962 + $0x88] sm:$0xff]
  %v11468 = vld [vmem:[%s1962 + $0x90] sm:$0xff]
  %v11469 = vld [vmem:[%s1962 + $0x98] sm:$0xff]
  %v11470 = vld [vmem:[%s1962 + $0xa0] sm:$0xff]
  %v11471 = vld [vmem:[%s1962 + $0xa8] sm:$0xff]
  %v11472 = vld [vmem:[%s1962 + $0xb0] sm:$0xff]
  %v11473 = vld [vmem:[%s1962 + $0xb8] sm:$0xff]
  %v11474 = vld [vmem:[%s1962 + $0xc0] sm:$0xff]
  %v11475 = vld [vmem:[%s1962 + $0xc8] sm:$0xff]
  %v11476 = vld [vmem:[%s1962 + $0xd0] sm:$0xff]
  %v11477 = vld [vmem:[%s1962 + $0xd8] sm:$0xff]
  %v11478 = vld [vmem:[%s1962 + $0xe0] sm:$0xff]
  %v11479 = vld [vmem:[%s1962 + $0xe8] sm:$0xff]
  %v11480 = vld [vmem:[%s1962 + $0xf0] sm:$0xff]
  %v11481 = vld [vmem:[%s1962 + $0xf8] sm:$0xff]
  %v11482 = vrot.slane %v11450, 7
  %v11483 = vrot.slane %v11451, 7
  %v11484 = vrot.slane %v11452, 7
  %v11485 = vrot.slane %v11453, 7
  %v11486 = vrot.slane %v11454, 7
  %v11487 = vrot.slane %v11455, 7
  %v11488 = vrot.slane %v11456, 7
  %v11489 = vrot.slane %v11457, 7
  %v11490 = vrot.slane %v11458, 7
  %v11491 = vrot.slane %v11459, 7
  %v11492 = vrot.slane %v11460, 7
  %v11493 = vrot.slane %v11461, 7
  %v11494 = vrot.slane %v11462, 7
  %v11495 = vrot.slane %v11463, 7
  %v11496 = vrot.slane %v11464, 7
  %v11497 = vrot.slane %v11465, 7
  %v11498 = vrot.slane %v11466, 7
  %v11499 = vrot.slane %v11467, 7
  %v11500 = vrot.slane %v11468, 7
  %v11501 = vrot.slane %v11469, 7
  %v11502 = vrot.slane %v11470, 7
  %v11503 = vrot.slane %v11471, 7
  %v11504 = vrot.slane %v11472, 7
  %v11505 = vrot.slane %v11473, 7
  %v11506 = vrot.slane %v11474, 7
  %v11507 = vrot.slane %v11475, 7
  %v11508 = vrot.slane %v11476, 7
  %v11509 = vrot.slane %v11477, 7
  %v11510 = vrot.slane %v11478, 7
  %v11511 = vrot.slane %v11479, 7
  %v11512 = vrot.slane %v11480, 7
  %v11513 = vrot.slane %v11481, 7
  %v11514 = vsel %vm164, %v11512, %v11513
  %v11515 = vsel %vm164, %v11511, %v11512
  %v11516 = vsel %vm164, %v11510, %v11511
  %v11517 = vsel %vm164, %v11509, %v11510
  %v11518 = vsel %vm164, %v11508, %v11509
  %v11519 = vsel %vm164, %v11507, %v11508
  %v11520 = vsel %vm164, %v11506, %v11507
  %v11521 = vsel %vm164, %v11505, %v11506
  %v11522 = vsel %vm164, %v11504, %v11505
  %v11523 = vsel %vm164, %v11503, %v11504
  %v11524 = vsel %vm164, %v11502, %v11503
  %v11525 = vsel %vm164, %v11501, %v11502
  %v11526 = vsel %vm164, %v11500, %v11501
  %v11527 = vsel %vm164, %v11499, %v11500
  %v11528 = vsel %vm164, %v11498, %v11499
  %v11529 = vsel %vm164, %v11497, %v11498
  %v11530 = vsel %vm164, %v11496, %v11497
  %v11531 = vsel %vm164, %v11495, %v11496
  %v11532 = vsel %vm164, %v11494, %v11495
  %v11533 = vsel %vm164, %v11493, %v11494
  %v11534 = vsel %vm164, %v11492, %v11493
  %v11535 = vsel %vm164, %v11491, %v11492
  %v11536 = vsel %vm164, %v11490, %v11491
  %v11537 = vsel %vm164, %v11489, %v11490
  %v11538 = vsel %vm164, %v11488, %v11489
  %v11539 = vsel %vm164, %v11487, %v11488
  %v11540 = vsel %vm164, %v11486, %v11487
  %v11541 = vsel %vm164, %v11485, %v11486
  %v11542 = vsel %vm164, %v11484, %v11485
  %v11543 = vsel %vm164, %v11483, %v11484
  %v11544 = vsel %vm164, %v11482, %v11483
  %v11545 = vsel %vm164, %v11513, %v11482
  %v11546 = vmul.f32 %v11545, %v27
  %v11547 = vmul.f32 %v11544, %v28
  %v11548 = vmul.f32 %v11543, %v27
  %v11549 = vmul.f32 %v11542, %v28
  %v11550 = vmul.f32 %v11541, %v27
  %v11551 = vmul.f32 %v11540, %v28
  %v11552 = vmul.f32 %v11539, %v27
  %v11553 = vmul.f32 %v11538, %v28
  %v11554 = vmul.f32 %v11537, %v27
  %v11555 = vmul.f32 %v11536, %v28
  %v11556 = vmul.f32 %v11535, %v27
  %v11557 = vmul.f32 %v11534, %v28
  %v11558 = vmul.f32 %v11533, %v27
  %v11559 = vmul.f32 %v11532, %v28
  %v11560 = vmul.f32 %v11531, %v27
  %v11561 = vmul.f32 %v11530, %v28
  %v11562 = vmul.f32 %v11529, %v27
  %v11563 = vmul.f32 %v11528, %v28
  %v11564 = vmul.f32 %v11527, %v27
  %v11565 = vmul.f32 %v11526, %v28
  %v11566 = vmul.f32 %v11525, %v27
  %v11567 = vmul.f32 %v11524, %v28
  %v11568 = vmul.f32 %v11523, %v27
  %v11569 = vmul.f32 %v11522, %v28
  %v11570 = vmul.f32 %v11521, %v27
  %v11571 = vmul.f32 %v11520, %v28
  %v11572 = vmul.f32 %v11519, %v27
  %v11573 = vmul.f32 %v11518, %v28
  %v11574 = vmul.f32 %v11517, %v27
  %v11575 = vmul.f32 %v11516, %v28
  %v11576 = vmul.f32 %v11515, %v27
  %v11577 = vmul.f32 %v11514, %v28
  %v11578 = vld [vmem:[%s5230] sm:$0xf]
  %v11580 = vsel %vm14, %v11546, 0
  %v11583 = vsel %vm14, %v11547, 0
  %v11586 = vsel %vm14, %v11548, 0
  %v11589 = vsel %vm14, %v11549, 0
  %v11592 = vsel %vm14, %v11550, 0
  %v11595 = vsel %vm14, %v11551, 0
  %v11598 = vsel %vm14, %v11552, 0
  %v11601 = vsel %vm14, %v11553, 0
  %v11604 = vsel %vm14, %v11554, 0
  %v11607 = vsel %vm14, %v11555, 0
  %v11610 = vsel %vm14, %v11556, 0
  %v11613 = vsel %vm14, %v11557, 0
  %v11616 = vsel %vm14, %v11558, 0
  %v11619 = vsel %vm14, %v11559, 0
  %v11622 = vsel %vm14, %v11560, 0
  %v11625 = vsel %vm14, %v11561, 0
  %v11628 = vsel %vm14, %v11562, 0
  %v11631 = vsel %vm14, %v11563, 0
  %v11634 = vsel %vm14, %v11564, 0
  %v11637 = vsel %vm14, %v11565, 0
  %v11640 = vsel %vm14, %v11566, 0
  %v11643 = vsel %vm14, %v11567, 0
  %v11646 = vsel %vm14, %v11568, 0
  %v11649 = vsel %vm14, %v11569, 0
  %v11652 = vsel %vm14, %v11570, 0
  %v11655 = vsel %vm14, %v11571, 0
  %v11658 = vsel %vm14, %v11572, 0
  %v11661 = vsel %vm14, %v11573, 0
  %v11664 = vsel %vm14, %v11574, 0
  %v11667 = vsel %vm14, %v11575, 0
  %v11670 = vsel %vm14, %v11576, 0
  %v11673 = vsel %vm14, %v11577, 0
  %v11676 = vsel %vm328, %v11578, 0
  %11678 = vmatpush.msra.mxu0 0.0
  %11679 = vmatpush.msra.mxu0 0.0
  %11680 = vmatpush.msra.mxu0 0.0
  %11681 = vmatpush.msra.mxu0 0.0
  %11682 = vmatpush.msra.mxu0 0.0
  %11683 = vmatpush.msra.mxu0 0.0
  %11684 = vmatpush.msra.mxu0 0.0
  %11685 = vmatpush.msra.mxu0 0.0
  %11686 = vmatpush.msra.mxu0 0.0
  %11687 = vmatpush.msra.mxu0 0.0
  %11688 = vmatpush.msra.mxu0 0.0
  %11689 = vmatpush.msra.mxu0 0.0
  %11690 = vmatpush.msra.mxu0 0.0
  %11691 = vmatpush.msra.mxu0 0.0
  %11692 = vmatpush.msra.mxu0 0.0
  %11693 = vmatpush.msra.mxu0 %v11676
  %11694 = vmatmul.f32.gmra.mxu0 %v11580
  %v11695 = vpop.f32.mrf.mxu0
  %v11696 = vadd.f32 0.0, %v11695
  %11697 = vmatmul.f32.gmra.mxu0 %v11583
  %v11698 = vpop.f32.mrf.mxu0
  %v11699 = vadd.f32 0.0, %v11698
  %11700 = vmatmul.f32.gmra.mxu0 %v11586
  %v11701 = vpop.f32.mrf.mxu0
  %v11702 = vadd.f32 0.0, %v11701
  %11703 = vmatmul.f32.gmra.mxu0 %v11589
  %v11704 = vpop.f32.mrf.mxu0
  %v11705 = vadd.f32 0.0, %v11704
  %11706 = vmatmul.f32.gmra.mxu0 %v11592
  %v11707 = vpop.f32.mrf.mxu0
  %v11708 = vadd.f32 0.0, %v11707
  %11709 = vmatmul.f32.gmra.mxu0 %v11595
  %v11710 = vpop.f32.mrf.mxu0
  %v11711 = vadd.f32 0.0, %v11710
  %11712 = vmatmul.f32.gmra.mxu0 %v11598
  %v11713 = vpop.f32.mrf.mxu0
  %v11714 = vadd.f32 0.0, %v11713
  %11715 = vmatmul.f32.gmra.mxu0 %v11601
  %v11716 = vpop.f32.mrf.mxu0
  %v11717 = vadd.f32 0.0, %v11716
  %11718 = vmatmul.f32.gmra.mxu0 %v11604
  %v11719 = vpop.f32.mrf.mxu0
  %v11720 = vadd.f32 0.0, %v11719
  %11721 = vmatmul.f32.gmra.mxu0 %v11607
  %v11722 = vpop.f32.mrf.mxu0
  %v11723 = vadd.f32 0.0, %v11722
  %11724 = vmatmul.f32.gmra.mxu0 %v11610
  %v11725 = vpop.f32.mrf.mxu0
  %v11726 = vadd.f32 0.0, %v11725
  %11727 = vmatmul.f32.gmra.mxu0 %v11613
  %v11728 = vpop.f32.mrf.mxu0
  %v11729 = vadd.f32 0.0, %v11728
  %11730 = vmatmul.f32.gmra.mxu0 %v11616
  %v11731 = vpop.f32.mrf.mxu0
  %v11732 = vadd.f32 0.0, %v11731
  %11733 = vmatmul.f32.gmra.mxu0 %v11619
  %v11734 = vpop.f32.mrf.mxu0
  %v11735 = vadd.f32 0.0, %v11734
  %11736 = vmatmul.f32.gmra.mxu0 %v11622
  %v11737 = vpop.f32.mrf.mxu0
  %v11738 = vadd.f32 0.0, %v11737
  %11739 = vmatmul.f32.gmra.mxu0 %v11625
  %v11740 = vpop.f32.mrf.mxu0
  %v11741 = vadd.f32 0.0, %v11740
  %11742 = vmatmul.f32.gmra.mxu0 %v11628
  %v11743 = vpop.f32.mrf.mxu0
  %v11744 = vadd.f32 0.0, %v11743
  %11745 = vmatmul.f32.gmra.mxu0 %v11631
  %v11746 = vpop.f32.mrf.mxu0
  %v11747 = vadd.f32 0.0, %v11746
  %11748 = vmatmul.f32.gmra.mxu0 %v11634
  %v11749 = vpop.f32.mrf.mxu0
  %v11750 = vadd.f32 0.0, %v11749
  %11751 = vmatmul.f32.gmra.mxu0 %v11637
  %v11752 = vpop.f32.mrf.mxu0
  %v11753 = vadd.f32 0.0, %v11752
  %11754 = vmatmul.f32.gmra.mxu0 %v11640
  %v11755 = vpop.f32.mrf.mxu0
  %v11756 = vadd.f32 0.0, %v11755
  %11757 = vmatmul.f32.gmra.mxu0 %v11643
  %v11758 = vpop.f32.mrf.mxu0
  %v11759 = vadd.f32 0.0, %v11758
  %11760 = vmatmul.f32.gmra.mxu0 %v11646
  %v11761 = vpop.f32.mrf.mxu0
  %v11762 = vadd.f32 0.0, %v11761
  %11763 = vmatmul.f32.gmra.mxu0 %v11649
  %v11764 = vpop.f32.mrf.mxu0
  %v11765 = vadd.f32 0.0, %v11764
  %11766 = vmatmul.f32.gmra.mxu0 %v11652
  %v11767 = vpop.f32.mrf.mxu0
  %v11768 = vadd.f32 0.0, %v11767
  %11769 = vmatmul.f32.gmra.mxu0 %v11655
  %v11770 = vpop.f32.mrf.mxu0
  %v11771 = vadd.f32 0.0, %v11770
  %11772 = vmatmul.f32.gmra.mxu0 %v11658
  %v11773 = vpop.f32.mrf.mxu0
  %v11774 = vadd.f32 0.0, %v11773
  %11775 = vmatmul.f32.gmra.mxu0 %v11661
  %v11776 = vpop.f32.mrf.mxu0
  %v11777 = vadd.f32 0.0, %v11776
  %11778 = vmatmul.f32.gmra.mxu0 %v11664
  %v11779 = vpop.f32.mrf.mxu0
  %v11780 = vadd.f32 0.0, %v11779
  %11781 = vmatmul.f32.gmra.mxu0 %v11667
  %v11782 = vpop.f32.mrf.mxu0
  %v11783 = vadd.f32 0.0, %v11782
  %11784 = vmatmul.f32.gmra.mxu0 %v11670
  %v11785 = vpop.f32.mrf.mxu0
  %v11786 = vadd.f32 0.0, %v11785
  %11787 = vmatmul.f32.gmra.mxu0 %v11673
  %v11788 = vpop.f32.mrf.mxu0
  %v11789 = vadd.f32 0.0, %v11788
  %11790 = vdwg.mxu0
  %v11791 = vadd.f32 %v11418, %v11696
  %v11792 = vadd.f32 %v11419, %v11699
  %v11793 = vadd.f32 %v11420, %v11702
  %v11794 = vadd.f32 %v11421, %v11705
  %v11795 = vadd.f32 %v11422, %v11708
  %v11796 = vadd.f32 %v11423, %v11711
  %v11797 = vadd.f32 %v11424, %v11714
  %v11798 = vadd.f32 %v11425, %v11717
  %v11799 = vadd.f32 %v11426, %v11720
  %v11800 = vadd.f32 %v11427, %v11723
  %v11801 = vadd.f32 %v11428, %v11726
  %v11802 = vadd.f32 %v11429, %v11729
  %v11803 = vadd.f32 %v11430, %v11732
  %v11804 = vadd.f32 %v11431, %v11735
  %v11805 = vadd.f32 %v11432, %v11738
  %v11806 = vadd.f32 %v11433, %v11741
  %v11807 = vadd.f32 %v11434, %v11744
  %v11808 = vadd.f32 %v11435, %v11747
  %v11809 = vadd.f32 %v11436, %v11750
  %v11810 = vadd.f32 %v11437, %v11753
  %v11811 = vadd.f32 %v11438, %v11756
  %v11812 = vadd.f32 %v11439, %v11759
  %v11813 = vadd.f32 %v11440, %v11762
  %v11814 = vadd.f32 %v11441, %v11765
  %v11815 = vadd.f32 %v11442, %v11768
  %v11816 = vadd.f32 %v11443, %v11771
  %v11817 = vadd.f32 %v11444, %v11774
  %v11818 = vadd.f32 %v11445, %v11777
  %v11819 = vadd.f32 %v11446, %v11780
  %v11820 = vadd.f32 %v11447, %v11783
  %v11821 = vadd.f32 %v11448, %v11786
  %v11822 = vadd.f32 %v11449, %v11789
  %v11823 = vld [vmem:[%s5476] sm:$0xf]
  %v11825 = vsel %vm14, %v11450, 0
  %v11828 = vsel %vm14, %v11451, 0
  %v11831 = vsel %vm14, %v11452, 0
  %v11834 = vsel %vm14, %v11453, 0
  %v11837 = vsel %vm14, %v11454, 0
  %v11840 = vsel %vm14, %v11455, 0
  %v11843 = vsel %vm14, %v11456, 0
  %v11846 = vsel %vm14, %v11457, 0
  %v11849 = vsel %vm14, %v11458, 0
  %v11852 = vsel %vm14, %v11459, 0
  %v11855 = vsel %vm14, %v11460, 0
  %v11858 = vsel %vm14, %v11461, 0
  %v11861 = vsel %vm14, %v11462, 0
  %v11864 = vsel %vm14, %v11463, 0
  %v11867 = vsel %vm14, %v11464, 0
  %v11870 = vsel %vm14, %v11465, 0
  %v11873 = vsel %vm14, %v11466, 0
  %v11876 = vsel %vm14, %v11467, 0
  %v11879 = vsel %vm14, %v11468, 0
  %v11882 = vsel %vm14, %v11469, 0
  %v11885 = vsel %vm14, %v11470, 0
  %v11888 = vsel %vm14, %v11471, 0
  %v11891 = vsel %vm14, %v11472, 0
  %v11894 = vsel %vm14, %v11473, 0
  %v11897 = vsel %vm14, %v11474, 0
  %v11900 = vsel %vm14, %v11475, 0
  %v11903 = vsel %vm14, %v11476, 0
  %v11906 = vsel %vm14, %v11477, 0
  %v11909 = vsel %vm14, %v11478, 0
  %v11912 = vsel %vm14, %v11479, 0
  %v11915 = vsel %vm14, %v11480, 0
  %v11918 = vsel %vm14, %v11481, 0
  %v11921 = vsel %vm328, %v11823, 0
  %11923 = vmatpush.msra.mxu0 0.0
  %11924 = vmatpush.msra.mxu0 0.0
  %11925 = vmatpush.msra.mxu0 0.0
  %11926 = vmatpush.msra.mxu0 0.0
  %11927 = vmatpush.msra.mxu0 0.0
  %11928 = vmatpush.msra.mxu0 0.0
  %11929 = vmatpush.msra.mxu0 0.0
  %11930 = vmatpush.msra.mxu0 0.0
  %11931 = vmatpush.msra.mxu0 0.0
  %11932 = vmatpush.msra.mxu0 0.0
  %11933 = vmatpush.msra.mxu0 0.0
  %11934 = vmatpush.msra.mxu0 0.0
  %11935 = vmatpush.msra.mxu0 0.0
  %11936 = vmatpush.msra.mxu0 0.0
  %11937 = vmatpush.msra.mxu0 0.0
  %11938 = vmatpush.msra.mxu0 %v11921
  %11939 = vmatmul.f32.gmra.mxu0 %v11825
  %v11940 = vpop.f32.mrf.mxu0
  %v11941 = vadd.f32 0.0, %v11940
  %11942 = vmatmul.f32.gmra.mxu0 %v11828
  %v11943 = vpop.f32.mrf.mxu0
  %v11944 = vadd.f32 0.0, %v11943
  %11945 = vmatmul.f32.gmra.mxu0 %v11831
  %v11946 = vpop.f32.mrf.mxu0
  %v11947 = vadd.f32 0.0, %v11946
  %11948 = vmatmul.f32.gmra.mxu0 %v11834
  %v11949 = vpop.f32.mrf.mxu0
  %v11950 = vadd.f32 0.0, %v11949
  %11951 = vmatmul.f32.gmra.mxu0 %v11837
  %v11952 = vpop.f32.mrf.mxu0
  %v11953 = vadd.f32 0.0, %v11952
  %11954 = vmatmul.f32.gmra.mxu0 %v11840
  %v11955 = vpop.f32.mrf.mxu0
  %v11956 = vadd.f32 0.0, %v11955
  %11957 = vmatmul.f32.gmra.mxu0 %v11843
  %v11958 = vpop.f32.mrf.mxu0
  %v11959 = vadd.f32 0.0, %v11958
  %11960 = vmatmul.f32.gmra.mxu0 %v11846
  %v11961 = vpop.f32.mrf.mxu0
  %v11962 = vadd.f32 0.0, %v11961
  %11963 = vmatmul.f32.gmra.mxu0 %v11849
  %v11964 = vpop.f32.mrf.mxu0
  %v11965 = vadd.f32 0.0, %v11964
  %11966 = vmatmul.f32.gmra.mxu0 %v11852
  %v11967 = vpop.f32.mrf.mxu0
  %v11968 = vadd.f32 0.0, %v11967
  %11969 = vmatmul.f32.gmra.mxu0 %v11855
  %v11970 = vpop.f32.mrf.mxu0
  %v11971 = vadd.f32 0.0, %v11970
  %11972 = vmatmul.f32.gmra.mxu0 %v11858
  %v11973 = vpop.f32.mrf.mxu0
  %v11974 = vadd.f32 0.0, %v11973
  %11975 = vmatmul.f32.gmra.mxu0 %v11861
  %v11976 = vpop.f32.mrf.mxu0
  %v11977 = vadd.f32 0.0, %v11976
  %11978 = vmatmul.f32.gmra.mxu0 %v11864
  %v11979 = vpop.f32.mrf.mxu0
  %v11980 = vadd.f32 0.0, %v11979
  %11981 = vmatmul.f32.gmra.mxu0 %v11867
  %v11982 = vpop.f32.mrf.mxu0
  %v11983 = vadd.f32 0.0, %v11982
  %11984 = vmatmul.f32.gmra.mxu0 %v11870
  %v11985 = vpop.f32.mrf.mxu0
  %v11986 = vadd.f32 0.0, %v11985
  %11987 = vmatmul.f32.gmra.mxu0 %v11873
  %v11988 = vpop.f32.mrf.mxu0
  %v11989 = vadd.f32 0.0, %v11988
  %11990 = vmatmul.f32.gmra.mxu0 %v11876
  %v11991 = vpop.f32.mrf.mxu0
  %v11992 = vadd.f32 0.0, %v11991
  %11993 = vmatmul.f32.gmra.mxu0 %v11879
  %v11994 = vpop.f32.mrf.mxu0
  %v11995 = vadd.f32 0.0, %v11994
  %11996 = vmatmul.f32.gmra.mxu0 %v11882
  %v11997 = vpop.f32.mrf.mxu0
  %v11998 = vadd.f32 0.0, %v11997
  %11999 = vmatmul.f32.gmra.mxu0 %v11885
  %v12000 = vpop.f32.mrf.mxu0
  %v12001 = vadd.f32 0.0, %v12000
  %12002 = vmatmul.f32.gmra.mxu0 %v11888
  %v12003 = vpop.f32.mrf.mxu0
  %v12004 = vadd.f32 0.0, %v12003
  %12005 = vmatmul.f32.gmra.mxu0 %v11891
  %v12006 = vpop.f32.mrf.mxu0
  %v12007 = vadd.f32 0.0, %v12006
  %12008 = vmatmul.f32.gmra.mxu0 %v11894
  %v12009 = vpop.f32.mrf.mxu0
  %v12010 = vadd.f32 0.0, %v12009
  %12011 = vmatmul.f32.gmra.mxu0 %v11897
  %v12012 = vpop.f32.mrf.mxu0
  %v12013 = vadd.f32 0.0, %v12012
  %12014 = vmatmul.f32.gmra.mxu0 %v11900
  %v12015 = vpop.f32.mrf.mxu0
  %v12016 = vadd.f32 0.0, %v12015
  %12017 = vmatmul.f32.gmra.mxu0 %v11903
  %v12018 = vpop.f32.mrf.mxu0
  %v12019 = vadd.f32 0.0, %v12018
  %12020 = vmatmul.f32.gmra.mxu0 %v11906
  %v12021 = vpop.f32.mrf.mxu0
  %v12022 = vadd.f32 0.0, %v12021
  %12023 = vmatmul.f32.gmra.mxu0 %v11909
  %v12024 = vpop.f32.mrf.mxu0
  %v12025 = vadd.f32 0.0, %v12024
  %12026 = vmatmul.f32.gmra.mxu0 %v11912
  %v12027 = vpop.f32.mrf.mxu0
  %v12028 = vadd.f32 0.0, %v12027
  %12029 = vmatmul.f32.gmra.mxu0 %v11915
  %v12030 = vpop.f32.mrf.mxu0
  %v12031 = vadd.f32 0.0, %v12030
  %12032 = vmatmul.f32.gmra.mxu0 %v11918
  %v12033 = vpop.f32.mrf.mxu0
  %v12034 = vadd.f32 0.0, %v12033
  %12035 = vdwg.mxu0
  %v12036 = vadd.f32 %v11791, %v11941
  %v12037 = vadd.f32 %v11792, %v11944
  %v12038 = vadd.f32 %v11793, %v11947
  %v12039 = vadd.f32 %v11794, %v11950
  %v12040 = vadd.f32 %v11795, %v11953
  %v12041 = vadd.f32 %v11796, %v11956
  %v12042 = vadd.f32 %v11797, %v11959
  %v12043 = vadd.f32 %v11798, %v11962
  %v12044 = vadd.f32 %v11799, %v11965
  %v12045 = vadd.f32 %v11800, %v11968
  %v12046 = vadd.f32 %v11801, %v11971
  %v12047 = vadd.f32 %v11802, %v11974
  %v12048 = vadd.f32 %v11803, %v11977
  %v12049 = vadd.f32 %v11804, %v11980
  %v12050 = vadd.f32 %v11805, %v11983
  %v12051 = vadd.f32 %v11806, %v11986
  %v12052 = vadd.f32 %v11807, %v11989
  %v12053 = vadd.f32 %v11808, %v11992
  %v12054 = vadd.f32 %v11809, %v11995
  %v12055 = vadd.f32 %v11810, %v11998
  %v12056 = vadd.f32 %v11811, %v12001
  %v12057 = vadd.f32 %v11812, %v12004
  %v12058 = vadd.f32 %v11813, %v12007
  %v12059 = vadd.f32 %v11814, %v12010
  %v12060 = vadd.f32 %v11815, %v12013
  %v12061 = vadd.f32 %v11816, %v12016
  %v12062 = vadd.f32 %v11817, %v12019
  %v12063 = vadd.f32 %v11818, %v12022
  %v12064 = vadd.f32 %v11819, %v12025
  %v12065 = vadd.f32 %v11820, %v12028
  %v12066 = vadd.f32 %v11821, %v12031
  %v12067 = vadd.f32 %v11822, %v12034
  %v12068 = vrot.slane %v11450, 1
  %v12069 = vrot.slane %v11451, 1
  %v12070 = vrot.slane %v11452, 1
  %v12071 = vrot.slane %v11453, 1
  %v12072 = vrot.slane %v11454, 1
  %v12073 = vrot.slane %v11455, 1
  %v12074 = vrot.slane %v11456, 1
  %v12075 = vrot.slane %v11457, 1
  %v12076 = vrot.slane %v11458, 1
  %v12077 = vrot.slane %v11459, 1
  %v12078 = vrot.slane %v11460, 1
  %v12079 = vrot.slane %v11461, 1
  %v12080 = vrot.slane %v11462, 1
  %v12081 = vrot.slane %v11463, 1
  %v12082 = vrot.slane %v11464, 1
  %v12083 = vrot.slane %v11465, 1
  %v12084 = vrot.slane %v11466, 1
  %v12085 = vrot.slane %v11467, 1
  %v12086 = vrot.slane %v11468, 1
  %v12087 = vrot.slane %v11469, 1
  %v12088 = vrot.slane %v11470, 1
  %v12089 = vrot.slane %v11471, 1
  %v12090 = vrot.slane %v11472, 1
  %v12091 = vrot.slane %v11473, 1
  %v12092 = vrot.slane %v11474, 1
  %v12093 = vrot.slane %v11475, 1
  %v12094 = vrot.slane %v11476, 1
  %v12095 = vrot.slane %v11477, 1
  %v12096 = vrot.slane %v11478, 1
  %v12097 = vrot.slane %v11479, 1
  %v12098 = vrot.slane %v11480, 1
  %v12099 = vrot.slane %v11481, 1
  %v12100 = vsel %vm689, %v12098, %v12099
  %v12101 = vsel %vm689, %v12097, %v12098
  %v12102 = vsel %vm689, %v12096, %v12097
  %v12103 = vsel %vm689, %v12095, %v12096
  %v12104 = vsel %vm689, %v12094, %v12095
  %v12105 = vsel %vm689, %v12093, %v12094
  %v12106 = vsel %vm689, %v12092, %v12093
  %v12107 = vsel %vm689, %v12091, %v12092
  %v12108 = vsel %vm689, %v12090, %v12091
  %v12109 = vsel %vm689, %v12089, %v12090
  %v12110 = vsel %vm689, %v12088, %v12089
  %v12111 = vsel %vm689, %v12087, %v12088
  %v12112 = vsel %vm689, %v12086, %v12087
  %v12113 = vsel %vm689, %v12085, %v12086
  %v12114 = vsel %vm689, %v12084, %v12085
  %v12115 = vsel %vm689, %v12083, %v12084
  %v12116 = vsel %vm689, %v12082, %v12083
  %v12117 = vsel %vm689, %v12081, %v12082
  %v12118 = vsel %vm689, %v12080, %v12081
  %v12119 = vsel %vm689, %v12079, %v12080
  %v12120 = vsel %vm689, %v12078, %v12079
  %v12121 = vsel %vm689, %v12077, %v12078
  %v12122 = vsel %vm689, %v12076, %v12077
  %v12123 = vsel %vm689, %v12075, %v12076
  %v12124 = vsel %vm689, %v12074, %v12075
  %v12125 = vsel %vm689, %v12073, %v12074
  %v12126 = vsel %vm689, %v12072, %v12073
  %v12127 = vsel %vm689, %v12071, %v12072
  %v12128 = vsel %vm689, %v12070, %v12071
  %v12129 = vsel %vm689, %v12069, %v12070
  %v12130 = vsel %vm689, %v12068, %v12069
  %v12131 = vsel %vm689, %v12099, %v12068
  %v12132 = vmul.f32 %v12130, %v33
  %v12133 = vmul.f32 %v12129, %v34
  %v12134 = vmul.f32 %v12128, %v33
  %v12135 = vmul.f32 %v12127, %v34
  %v12136 = vmul.f32 %v12126, %v33
  %v12137 = vmul.f32 %v12125, %v34
  %v12138 = vmul.f32 %v12124, %v33
  %v12139 = vmul.f32 %v12123, %v34
  %v12140 = vmul.f32 %v12122, %v33
  %v12141 = vmul.f32 %v12121, %v34
  %v12142 = vmul.f32 %v12120, %v33
  %v12143 = vmul.f32 %v12119, %v34
  %v12144 = vmul.f32 %v12118, %v33
  %v12145 = vmul.f32 %v12117, %v34
  %v12146 = vmul.f32 %v12116, %v33
  %v12147 = vmul.f32 %v12115, %v34
  %v12148 = vmul.f32 %v12114, %v33
  %v12149 = vmul.f32 %v12113, %v34
  %v12150 = vmul.f32 %v12112, %v33
  %v12151 = vmul.f32 %v12111, %v34
  %v12152 = vmul.f32 %v12110, %v33
  %v12153 = vmul.f32 %v12109, %v34
  %v12154 = vmul.f32 %v12108, %v33
  %v12155 = vmul.f32 %v12107, %v34
  %v12156 = vmul.f32 %v12106, %v33
  %v12157 = vmul.f32 %v12105, %v34
  %v12158 = vmul.f32 %v12104, %v33
  %v12159 = vmul.f32 %v12103, %v34
  %v12160 = vmul.f32 %v12102, %v33
  %v12161 = vmul.f32 %v12101, %v34
  %v12162 = vmul.f32 %v12100, %v33
  %v12163 = vmul.f32 %v12131, %v34
  %v12164 = vld [vmem:[%s5818] sm:$0xf]
  %v12166 = vsel %vm14, %v12132, 0
  %v12169 = vsel %vm14, %v12133, 0
  %v12172 = vsel %vm14, %v12134, 0
  %v12175 = vsel %vm14, %v12135, 0
  %v12178 = vsel %vm14, %v12136, 0
  %v12181 = vsel %vm14, %v12137, 0
  %v12184 = vsel %vm14, %v12138, 0
  %v12187 = vsel %vm14, %v12139, 0
  %v12190 = vsel %vm14, %v12140, 0
  %v12193 = vsel %vm14, %v12141, 0
  %v12196 = vsel %vm14, %v12142, 0
  %v12199 = vsel %vm14, %v12143, 0
  %v12202 = vsel %vm14, %v12144, 0
  %v12205 = vsel %vm14, %v12145, 0
  %v12208 = vsel %vm14, %v12146, 0
  %v12211 = vsel %vm14, %v12147, 0
  %v12214 = vsel %vm14, %v12148, 0
  %v12217 = vsel %vm14, %v12149, 0
  %v12220 = vsel %vm14, %v12150, 0
  %v12223 = vsel %vm14, %v12151, 0
  %v12226 = vsel %vm14, %v12152, 0
  %v12229 = vsel %vm14, %v12153, 0
  %v12232 = vsel %vm14, %v12154, 0
  %v12235 = vsel %vm14, %v12155, 0
  %v12238 = vsel %vm14, %v12156, 0
  %v12241 = vsel %vm14, %v12157, 0
  %v12244 = vsel %vm14, %v12158, 0
  %v12247 = vsel %vm14, %v12159, 0
  %v12250 = vsel %vm14, %v12160, 0
  %v12253 = vsel %vm14, %v12161, 0
  %v12256 = vsel %vm14, %v12162, 0
  %v12259 = vsel %vm14, %v12163, 0
  %v12262 = vsel %vm328, %v12164, 0
  %12264 = vmatpush.msra.mxu0 0.0
  %12265 = vmatpush.msra.mxu0 0.0
  %12266 = vmatpush.msra.mxu0 0.0
  %12267 = vmatpush.msra.mxu0 0.0
  %12268 = vmatpush.msra.mxu0 0.0
  %12269 = vmatpush.msra.mxu0 0.0
  %12270 = vmatpush.msra.mxu0 0.0
  %12271 = vmatpush.msra.mxu0 0.0
  %12272 = vmatpush.msra.mxu0 0.0
  %12273 = vmatpush.msra.mxu0 0.0
  %12274 = vmatpush.msra.mxu0 0.0
  %12275 = vmatpush.msra.mxu0 0.0
  %12276 = vmatpush.msra.mxu0 0.0
  %12277 = vmatpush.msra.mxu0 0.0
  %12278 = vmatpush.msra.mxu0 0.0
  %12279 = vmatpush.msra.mxu0 %v12262
  %12280 = vmatmul.f32.gmra.mxu0 %v12166
  %v12281 = vpop.f32.mrf.mxu0
  %v12282 = vadd.f32 0.0, %v12281
  %12283 = vmatmul.f32.gmra.mxu0 %v12169
  %v12284 = vpop.f32.mrf.mxu0
  %v12285 = vadd.f32 0.0, %v12284
  %12286 = vmatmul.f32.gmra.mxu0 %v12172
  %v12287 = vpop.f32.mrf.mxu0
  %v12288 = vadd.f32 0.0, %v12287
  %12289 = vmatmul.f32.gmra.mxu0 %v12175
  %v12290 = vpop.f32.mrf.mxu0
  %v12291 = vadd.f32 0.0, %v12290
  %12292 = vmatmul.f32.gmra.mxu0 %v12178
  %v12293 = vpop.f32.mrf.mxu0
  %v12294 = vadd.f32 0.0, %v12293
  %12295 = vmatmul.f32.gmra.mxu0 %v12181
  %v12296 = vpop.f32.mrf.mxu0
  %v12297 = vadd.f32 0.0, %v12296
  %12298 = vmatmul.f32.gmra.mxu0 %v12184
  %v12299 = vpop.f32.mrf.mxu0
  %v12300 = vadd.f32 0.0, %v12299
  %12301 = vmatmul.f32.gmra.mxu0 %v12187
  %v12302 = vpop.f32.mrf.mxu0
  %v12303 = vadd.f32 0.0, %v12302
  %12304 = vmatmul.f32.gmra.mxu0 %v12190
  %v12305 = vpop.f32.mrf.mxu0
  %v12306 = vadd.f32 0.0, %v12305
  %12307 = vmatmul.f32.gmra.mxu0 %v12193
  %v12308 = vpop.f32.mrf.mxu0
  %v12309 = vadd.f32 0.0, %v12308
  %12310 = vmatmul.f32.gmra.mxu0 %v12196
  %v12311 = vpop.f32.mrf.mxu0
  %v12312 = vadd.f32 0.0, %v12311
  %12313 = vmatmul.f32.gmra.mxu0 %v12199
  %v12314 = vpop.f32.mrf.mxu0
  %v12315 = vadd.f32 0.0, %v12314
  %12316 = vmatmul.f32.gmra.mxu0 %v12202
  %v12317 = vpop.f32.mrf.mxu0
  %v12318 = vadd.f32 0.0, %v12317
  %12319 = vmatmul.f32.gmra.mxu0 %v12205
  %v12320 = vpop.f32.mrf.mxu0
  %v12321 = vadd.f32 0.0, %v12320
  %12322 = vmatmul.f32.gmra.mxu0 %v12208
  %v12323 = vpop.f32.mrf.mxu0
  %v12324 = vadd.f32 0.0, %v12323
  %12325 = vmatmul.f32.gmra.mxu0 %v12211
  %v12326 = vpop.f32.mrf.mxu0
  %v12327 = vadd.f32 0.0, %v12326
  %12328 = vmatmul.f32.gmra.mxu0 %v12214
  %v12329 = vpop.f32.mrf.mxu0
  %v12330 = vadd.f32 0.0, %v12329
  %12331 = vmatmul.f32.gmra.mxu0 %v12217
  %v12332 = vpop.f32.mrf.mxu0
  %v12333 = vadd.f32 0.0, %v12332
  %12334 = vmatmul.f32.gmra.mxu0 %v12220
  %v12335 = vpop.f32.mrf.mxu0
  %v12336 = vadd.f32 0.0, %v12335
  %12337 = vmatmul.f32.gmra.mxu0 %v12223
  %v12338 = vpop.f32.mrf.mxu0
  %v12339 = vadd.f32 0.0, %v12338
  %12340 = vmatmul.f32.gmra.mxu0 %v12226
  %v12341 = vpop.f32.mrf.mxu0
  %v12342 = vadd.f32 0.0, %v12341
  %12343 = vmatmul.f32.gmra.mxu0 %v12229
  %v12344 = vpop.f32.mrf.mxu0
  %v12345 = vadd.f32 0.0, %v12344
  %12346 = vmatmul.f32.gmra.mxu0 %v12232
  %v12347 = vpop.f32.mrf.mxu0
  %v12348 = vadd.f32 0.0, %v12347
  %12349 = vmatmul.f32.gmra.mxu0 %v12235
  %v12350 = vpop.f32.mrf.mxu0
  %v12351 = vadd.f32 0.0, %v12350
  %12352 = vmatmul.f32.gmra.mxu0 %v12238
  %v12353 = vpop.f32.mrf.mxu0
  %v12354 = vadd.f32 0.0, %v12353
  %12355 = vmatmul.f32.gmra.mxu0 %v12241
  %v12356 = vpop.f32.mrf.mxu0
  %v12357 = vadd.f32 0.0, %v12356
  %12358 = vmatmul.f32.gmra.mxu0 %v12244
  %v12359 = vpop.f32.mrf.mxu0
  %v12360 = vadd.f32 0.0, %v12359
  %12361 = vmatmul.f32.gmra.mxu0 %v12247
  %v12362 = vpop.f32.mrf.mxu0
  %v12363 = vadd.f32 0.0, %v12362
  %12364 = vmatmul.f32.gmra.mxu0 %v12250
  %v12365 = vpop.f32.mrf.mxu0
  %v12366 = vadd.f32 0.0, %v12365
  %12367 = vmatmul.f32.gmra.mxu0 %v12253
  %v12368 = vpop.f32.mrf.mxu0
  %v12369 = vadd.f32 0.0, %v12368
  %12370 = vmatmul.f32.gmra.mxu0 %v12256
  %v12371 = vpop.f32.mrf.mxu0
  %v12372 = vadd.f32 0.0, %v12371
  %12373 = vmatmul.f32.gmra.mxu0 %v12259
  %v12374 = vpop.f32.mrf.mxu0
  %v12375 = vadd.f32 0.0, %v12374
  %12376 = vdwg.mxu0
  %v12377 = vadd.f32 %v12036, %v12282
  %v12378 = vadd.f32 %v12037, %v12285
  %v12379 = vadd.f32 %v12038, %v12288
  %v12380 = vadd.f32 %v12039, %v12291
  %v12381 = vadd.f32 %v12040, %v12294
  %v12382 = vadd.f32 %v12041, %v12297
  %v12383 = vadd.f32 %v12042, %v12300
  %v12384 = vadd.f32 %v12043, %v12303
  %v12385 = vadd.f32 %v12044, %v12306
  %v12386 = vadd.f32 %v12045, %v12309
  %v12387 = vadd.f32 %v12046, %v12312
  %v12388 = vadd.f32 %v12047, %v12315
  %v12389 = vadd.f32 %v12048, %v12318
  %v12390 = vadd.f32 %v12049, %v12321
  %v12391 = vadd.f32 %v12050, %v12324
  %v12392 = vadd.f32 %v12051, %v12327
  %v12393 = vadd.f32 %v12052, %v12330
  %v12394 = vadd.f32 %v12053, %v12333
  %v12395 = vadd.f32 %v12054, %v12336
  %v12396 = vadd.f32 %v12055, %v12339
  %v12397 = vadd.f32 %v12056, %v12342
  %v12398 = vadd.f32 %v12057, %v12345
  %v12399 = vadd.f32 %v12058, %v12348
  %v12400 = vadd.f32 %v12059, %v12351
  %v12401 = vadd.f32 %v12060, %v12354
  %v12402 = vadd.f32 %v12061, %v12357
  %v12403 = vadd.f32 %v12062, %v12360
  %v12404 = vadd.f32 %v12063, %v12363
  %v12405 = vadd.f32 %v12064, %v12366
  %v12406 = vadd.f32 %v12065, %v12369
  %v12407 = vadd.f32 %v12066, %v12372
  %v12408 = vadd.f32 %v12067, %v12375
  %v12409 = vsel %vm14, %v12377, 0.0
  %v12410 = vsel %vm14, %v12378, 0.0
  %v12411 = vadd.f32 %v12409, %v12410
  %v12412 = vsel %vm14, %v12379, 0.0
  %v12413 = vadd.f32 %v12411, %v12412
  %v12414 = vsel %vm14, %v12380, 0.0
  %v12415 = vadd.f32 %v12413, %v12414
  %v12416 = vsel %vm14, %v12381, 0.0
  %v12417 = vadd.f32 %v12415, %v12416
  %v12418 = vsel %vm14, %v12382, 0.0
  %v12419 = vadd.f32 %v12417, %v12418
  %v12420 = vsel %vm14, %v12383, 0.0
  %v12421 = vadd.f32 %v12419, %v12420
  %v12422 = vsel %vm14, %v12384, 0.0
  %v12423 = vadd.f32 %v12421, %v12422
  %v12424 = vsel %vm14, %v12385, 0.0
  %v12425 = vadd.f32 %v12423, %v12424
  %v12426 = vsel %vm14, %v12386, 0.0
  %v12427 = vadd.f32 %v12425, %v12426
  %v12428 = vsel %vm14, %v12387, 0.0
  %v12429 = vadd.f32 %v12427, %v12428
  %v12430 = vsel %vm14, %v12388, 0.0
  %v12431 = vadd.f32 %v12429, %v12430
  %v12432 = vsel %vm14, %v12389, 0.0
  %v12433 = vadd.f32 %v12431, %v12432
  %v12434 = vsel %vm14, %v12390, 0.0
  %v12435 = vadd.f32 %v12433, %v12434
  %v12436 = vsel %vm14, %v12391, 0.0
  %v12437 = vadd.f32 %v12435, %v12436
  %v12438 = vsel %vm14, %v12392, 0.0
  %v12439 = vadd.f32 %v12437, %v12438
  %v12440 = vsel %vm14, %v12393, 0.0
  %v12441 = vadd.f32 %v12439, %v12440
  %v12442 = vsel %vm14, %v12394, 0.0
  %v12443 = vadd.f32 %v12441, %v12442
  %v12444 = vsel %vm14, %v12395, 0.0
  %v12445 = vadd.f32 %v12443, %v12444
  %v12446 = vsel %vm14, %v12396, 0.0
  %v12447 = vadd.f32 %v12445, %v12446
  %v12448 = vsel %vm14, %v12397, 0.0
  %v12449 = vadd.f32 %v12447, %v12448
  %v12450 = vsel %vm14, %v12398, 0.0
  %v12451 = vadd.f32 %v12449, %v12450
  %v12452 = vsel %vm14, %v12399, 0.0
  %v12453 = vadd.f32 %v12451, %v12452
  %v12454 = vsel %vm14, %v12400, 0.0
  %v12455 = vadd.f32 %v12453, %v12454
  %v12456 = vsel %vm14, %v12401, 0.0
  %v12457 = vadd.f32 %v12455, %v12456
  %v12458 = vsel %vm14, %v12402, 0.0
  %v12459 = vadd.f32 %v12457, %v12458
  %v12460 = vsel %vm14, %v12403, 0.0
  %v12461 = vadd.f32 %v12459, %v12460
  %v12462 = vsel %vm14, %v12404, 0.0
  %v12463 = vadd.f32 %v12461, %v12462
  %v12464 = vsel %vm14, %v12405, 0.0
  %v12465 = vadd.f32 %v12463, %v12464
  %v12466 = vsel %vm14, %v12406, 0.0
  %v12467 = vadd.f32 %v12465, %v12466
  %v12468 = vsel %vm14, %v12407, 0.0
  %v12469 = vadd.f32 %v12467, %v12468
  %v12470 = vsel %vm14, %v12408, 0.0
  %v12471 = vadd.f32 %v12469, %v12470
  %v12472 = vrot.slane %v12471, 4
  %v12473 = vadd.f32 %v12471, %v12472
  %v12474 = vrot.slane %v12473, 2
  %v12475 = vadd.f32 %v12473, %v12474
  %v12476 = vrot.slane %v12475, 1
  %v12477 = vadd.f32 %v12475, %v12476
  %v12478 = vmul.f32 %v12477, %v3000
  %v12479 = vsub.f32 %v12377, %v12478
  %v12480 = vsub.f32 %v12378, %v12478
  %v12481 = vsub.f32 %v12379, %v12478
  %v12482 = vsub.f32 %v12380, %v12478
  %v12483 = vsub.f32 %v12381, %v12478
  %v12484 = vsub.f32 %v12382, %v12478
  %v12485 = vsub.f32 %v12383, %v12478
  %v12486 = vsub.f32 %v12384, %v12478
  %v12487 = vsub.f32 %v12385, %v12478
  %v12488 = vsub.f32 %v12386, %v12478
  %v12489 = vsub.f32 %v12387, %v12478
  %v12490 = vsub.f32 %v12388, %v12478
  %v12491 = vsub.f32 %v12389, %v12478
  %v12492 = vsub.f32 %v12390, %v12478
  %v12493 = vsub.f32 %v12391, %v12478
  %v12494 = vsub.f32 %v12392, %v12478
  %v12495 = vsub.f32 %v12393, %v12478
  %v12496 = vsub.f32 %v12394, %v12478
  %v12497 = vsub.f32 %v12395, %v12478
  %v12498 = vsub.f32 %v12396, %v12478
  %v12499 = vsub.f32 %v12397, %v12478
  %v12500 = vsub.f32 %v12398, %v12478
  %v12501 = vsub.f32 %v12399, %v12478
  %v12502 = vsub.f32 %v12400, %v12478
  %v12503 = vsub.f32 %v12401, %v12478
  %v12504 = vsub.f32 %v12402, %v12478
  %v12505 = vsub.f32 %v12403, %v12478
  %v12506 = vsub.f32 %v12404, %v12478
  %v12507 = vsub.f32 %v12405, %v12478
  %v12508 = vsub.f32 %v12406, %v12478
  %v12509 = vsub.f32 %v12407, %v12478
  %v12510 = vsub.f32 %v12408, %v12478
  %v12511 = vmul.f32 %v12479, %v12479
  %v12512 = vmul.f32 %v12480, %v12480
  %v12513 = vmul.f32 %v12481, %v12481
  %v12514 = vmul.f32 %v12482, %v12482
  %v12515 = vmul.f32 %v12483, %v12483
  %v12516 = vmul.f32 %v12484, %v12484
  %v12517 = vmul.f32 %v12485, %v12485
  %v12518 = vmul.f32 %v12486, %v12486
  %v12519 = vmul.f32 %v12487, %v12487
  %v12520 = vmul.f32 %v12488, %v12488
  %v12521 = vmul.f32 %v12489, %v12489
  %v12522 = vmul.f32 %v12490, %v12490
  %v12523 = vmul.f32 %v12491, %v12491
  %v12524 = vmul.f32 %v12492, %v12492
  %v12525 = vmul.f32 %v12493, %v12493
  %v12526 = vmul.f32 %v12494, %v12494
  %v12527 = vmul.f32 %v12495, %v12495
  %v12528 = vmul.f32 %v12496, %v12496
  %v12529 = vmul.f32 %v12497, %v12497
  %v12530 = vmul.f32 %v12498, %v12498
  %v12531 = vmul.f32 %v12499, %v12499
  %v12532 = vmul.f32 %v12500, %v12500
  %v12533 = vmul.f32 %v12501, %v12501
  %v12534 = vmul.f32 %v12502, %v12502
  %v12535 = vmul.f32 %v12503, %v12503
  %v12536 = vmul.f32 %v12504, %v12504
  %v12537 = vmul.f32 %v12505, %v12505
  %v12538 = vmul.f32 %v12506, %v12506
  %v12539 = vmul.f32 %v12507, %v12507
  %v12540 = vmul.f32 %v12508, %v12508
  %v12541 = vmul.f32 %v12509, %v12509
  %v12542 = vmul.f32 %v12510, %v12510
  %v12543 = vsel %vm14, %v12511, 0.0
  %v12544 = vsel %vm14, %v12512, 0.0
  %v12545 = vadd.f32 %v12543, %v12544
  %v12546 = vsel %vm14, %v12513, 0.0
  %v12547 = vadd.f32 %v12545, %v12546
  %v12548 = vsel %vm14, %v12514, 0.0
  %v12549 = vadd.f32 %v12547, %v12548
  %v12550 = vsel %vm14, %v12515, 0.0
  %v12551 = vadd.f32 %v12549, %v12550
  %v12552 = vsel %vm14, %v12516, 0.0
  %v12553 = vadd.f32 %v12551, %v12552
  %v12554 = vsel %vm14, %v12517, 0.0
  %v12555 = vadd.f32 %v12553, %v12554
  %v12556 = vsel %vm14, %v12518, 0.0
  %v12557 = vadd.f32 %v12555, %v12556
  %v12558 = vsel %vm14, %v12519, 0.0
  %v12559 = vadd.f32 %v12557, %v12558
  %v12560 = vsel %vm14, %v12520, 0.0
  %v12561 = vadd.f32 %v12559, %v12560
  %v12562 = vsel %vm14, %v12521, 0.0
  %v12563 = vadd.f32 %v12561, %v12562
  %v12564 = vsel %vm14, %v12522, 0.0
  %v12565 = vadd.f32 %v12563, %v12564
  %v12566 = vsel %vm14, %v12523, 0.0
  %v12567 = vadd.f32 %v12565, %v12566
  %v12568 = vsel %vm14, %v12524, 0.0
  %v12569 = vadd.f32 %v12567, %v12568
  %v12570 = vsel %vm14, %v12525, 0.0
  %v12571 = vadd.f32 %v12569, %v12570
  %v12572 = vsel %vm14, %v12526, 0.0
  %v12573 = vadd.f32 %v12571, %v12572
  %v12574 = vsel %vm14, %v12527, 0.0
  %v12575 = vadd.f32 %v12573, %v12574
  %v12576 = vsel %vm14, %v12528, 0.0
  %v12577 = vadd.f32 %v12575, %v12576
  %v12578 = vsel %vm14, %v12529, 0.0
  %v12579 = vadd.f32 %v12577, %v12578
  %v12580 = vsel %vm14, %v12530, 0.0
  %v12581 = vadd.f32 %v12579, %v12580
  %v12582 = vsel %vm14, %v12531, 0.0
  %v12583 = vadd.f32 %v12581, %v12582
  %v12584 = vsel %vm14, %v12532, 0.0
  %v12585 = vadd.f32 %v12583, %v12584
  %v12586 = vsel %vm14, %v12533, 0.0
  %v12587 = vadd.f32 %v12585, %v12586
  %v12588 = vsel %vm14, %v12534, 0.0
  %v12589 = vadd.f32 %v12587, %v12588
  %v12590 = vsel %vm14, %v12535, 0.0
  %v12591 = vadd.f32 %v12589, %v12590
  %v12592 = vsel %vm14, %v12536, 0.0
  %v12593 = vadd.f32 %v12591, %v12592
  %v12594 = vsel %vm14, %v12537, 0.0
  %v12595 = vadd.f32 %v12593, %v12594
  %v12596 = vsel %vm14, %v12538, 0.0
  %v12597 = vadd.f32 %v12595, %v12596
  %v12598 = vsel %vm14, %v12539, 0.0
  %v12599 = vadd.f32 %v12597, %v12598
  %v12600 = vsel %vm14, %v12540, 0.0
  %v12601 = vadd.f32 %v12599, %v12600
  %v12602 = vsel %vm14, %v12541, 0.0
  %v12603 = vadd.f32 %v12601, %v12602
  %v12604 = vsel %vm14, %v12542, 0.0
  %v12605 = vadd.f32 %v12603, %v12604
  %v12606 = vrot.slane %v12605, 4
  %v12607 = vadd.f32 %v12605, %v12606
  %v12608 = vrot.slane %v12607, 2
  %v12609 = vadd.f32 %v12607, %v12608
  %v12610 = vrot.slane %v12609, 1
  %v12611 = vadd.f32 %v12609, %v12610
  %v12612 = vmul.f32 %v12611, %v3000
  %v12613 = vadd.f32 %v12612, 1e-05
  %v12614 = vrsqrt.pop %v12613
  %v12615 = vmul.f32 %v12614, %v12613
  %v12616 = vmul.f32 %v12615, %v12614
  %v12617 = vmul.f32 0.5, %v12616
  %v12618 = vsub.f32 1.5, %v12617
  %v12619 = vmul.f32 %v12614, %v12618
  %vm12620 = vweird.f32 %v12613
  %vm12621 = vweird.f32 %v12614
  %vm12622 = vmor %vm12620, %vm12621
  %v12623 = vsel %vm12622, %v12614, %v12619
  %v12624 = vmul.f32 %v12479, %v12623
  %v12625 = vmul.f32 %v12480, %v12623
  %v12626 = vmul.f32 %v12481, %v12623
  %v12627 = vmul.f32 %v12482, %v12623
  %v12628 = vmul.f32 %v12483, %v12623
  %v12629 = vmul.f32 %v12484, %v12623
  %v12630 = vmul.f32 %v12485, %v12623
  %v12631 = vmul.f32 %v12486, %v12623
  %v12632 = vmul.f32 %v12487, %v12623
  %v12633 = vmul.f32 %v12488, %v12623
  %v12634 = vmul.f32 %v12489, %v12623
  %v12635 = vmul.f32 %v12490, %v12623
  %v12636 = vmul.f32 %v12491, %v12623
  %v12637 = vmul.f32 %v12492, %v12623
  %v12638 = vmul.f32 %v12493, %v12623
  %v12639 = vmul.f32 %v12494, %v12623
  %v12640 = vmul.f32 %v12495, %v12623
  %v12641 = vmul.f32 %v12496, %v12623
  %v12642 = vmul.f32 %v12497, %v12623
  %v12643 = vmul.f32 %v12498, %v12623
  %v12644 = vmul.f32 %v12499, %v12623
  %v12645 = vmul.f32 %v12500, %v12623
  %v12646 = vmul.f32 %v12501, %v12623
  %v12647 = vmul.f32 %v12502, %v12623
  %v12648 = vmul.f32 %v12503, %v12623
  %v12649 = vmul.f32 %v12504, %v12623
  %v12650 = vmul.f32 %v12505, %v12623
  %v12651 = vmul.f32 %v12506, %v12623
  %v12652 = vmul.f32 %v12507, %v12623
  %v12653 = vmul.f32 %v12508, %v12623
  %v12654 = vmul.f32 %v12509, %v12623
  %v12655 = vmul.f32 %v12510, %v12623
  %v12656 = vld [vmem:[%s6407] sm:$0xff]
  %v12657 = vld [vmem:[%s6407 + $0x8] sm:$0xff]
  %v12658 = vld [vmem:[%s6407 + $0x10] sm:$0xff]
  %v12659 = vld [vmem:[%s6407 + $0x18] sm:$0xff]
  %v12660 = vld [vmem:[%s6407 + $0x20] sm:$0xff]
  %v12661 = vld [vmem:[%s6407 + $0x28] sm:$0xff]
  %v12662 = vld [vmem:[%s6407 + $0x30] sm:$0xff]
  %v12663 = vld [vmem:[%s6407 + $0x38] sm:$0xff]
  %v12664 = vld [vmem:[%s6407 + $0x40] sm:$0xff]
  %v12665 = vld [vmem:[%s6407 + $0x48] sm:$0xff]
  %v12666 = vld [vmem:[%s6407 + $0x50] sm:$0xff]
  %v12667 = vld [vmem:[%s6407 + $0x58] sm:$0xff]
  %v12668 = vld [vmem:[%s6407 + $0x60] sm:$0xff]
  %v12669 = vld [vmem:[%s6407 + $0x68] sm:$0xff]
  %v12670 = vld [vmem:[%s6407 + $0x70] sm:$0xff]
  %v12671 = vld [vmem:[%s6407 + $0x78] sm:$0xff]
  %v12672 = vld [vmem:[%s6407 + $0x80] sm:$0xff]
  %v12673 = vld [vmem:[%s6407 + $0x88] sm:$0xff]
  %v12674 = vld [vmem:[%s6407 + $0x90] sm:$0xff]
  %v12675 = vld [vmem:[%s6407 + $0x98] sm:$0xff]
  %v12676 = vld [vmem:[%s6407 + $0xa0] sm:$0xff]
  %v12677 = vld [vmem:[%s6407 + $0xa8] sm:$0xff]
  %v12678 = vld [vmem:[%s6407 + $0xb0] sm:$0xff]
  %v12679 = vld [vmem:[%s6407 + $0xb8] sm:$0xff]
  %v12680 = vld [vmem:[%s6407 + $0xc0] sm:$0xff]
  %v12681 = vld [vmem:[%s6407 + $0xc8] sm:$0xff]
  %v12682 = vld [vmem:[%s6407 + $0xd0] sm:$0xff]
  %v12683 = vld [vmem:[%s6407 + $0xd8] sm:$0xff]
  %v12684 = vld [vmem:[%s6407 + $0xe0] sm:$0xff]
  %v12685 = vld [vmem:[%s6407 + $0xe8] sm:$0xff]
  %v12686 = vld [vmem:[%s6407 + $0xf0] sm:$0xff]
  %v12687 = vld [vmem:[%s6407 + $0xf8] sm:$0xff]
  %v12688 = vadd.f32 %v12624, %v12656
  %v12689 = vadd.f32 %v12625, %v12657
  %v12690 = vadd.f32 %v12626, %v12658
  %v12691 = vadd.f32 %v12627, %v12659
  %v12692 = vadd.f32 %v12628, %v12660
  %v12693 = vadd.f32 %v12629, %v12661
  %v12694 = vadd.f32 %v12630, %v12662
  %v12695 = vadd.f32 %v12631, %v12663
  %v12696 = vadd.f32 %v12632, %v12664
  %v12697 = vadd.f32 %v12633, %v12665
  %v12698 = vadd.f32 %v12634, %v12666
  %v12699 = vadd.f32 %v12635, %v12667
  %v12700 = vadd.f32 %v12636, %v12668
  %v12701 = vadd.f32 %v12637, %v12669
  %v12702 = vadd.f32 %v12638, %v12670
  %v12703 = vadd.f32 %v12639, %v12671
  %v12704 = vadd.f32 %v12640, %v12672
  %v12705 = vadd.f32 %v12641, %v12673
  %v12706 = vadd.f32 %v12642, %v12674
  %v12707 = vadd.f32 %v12643, %v12675
  %v12708 = vadd.f32 %v12644, %v12676
  %v12709 = vadd.f32 %v12645, %v12677
  %v12710 = vadd.f32 %v12646, %v12678
  %v12711 = vadd.f32 %v12647, %v12679
  %v12712 = vadd.f32 %v12648, %v12680
  %v12713 = vadd.f32 %v12649, %v12681
  %v12714 = vadd.f32 %v12650, %v12682
  %v12715 = vadd.f32 %v12651, %v12683
  %v12716 = vadd.f32 %v12652, %v12684
  %v12717 = vadd.f32 %v12653, %v12685
  %v12718 = vadd.f32 %v12654, %v12686
  %v12719 = vadd.f32 %v12655, %v12687
  %s12720 = scalar_lea.vmem %s3, 256
  %12721 = vst.msk [vmem:[%s12720] sm:$0xff] %vm14, %v12688
  %12722 = vst.msk [vmem:[%s12720 + $0x8] sm:$0xff] %vm14, %v12689
  %12723 = vst.msk [vmem:[%s12720 + $0x10] sm:$0xff] %vm14, %v12690
  %12724 = vst.msk [vmem:[%s12720 + $0x18] sm:$0xff] %vm14, %v12691
  %12725 = vst.msk [vmem:[%s12720 + $0x20] sm:$0xff] %vm14, %v12692
  %12726 = vst.msk [vmem:[%s12720 + $0x28] sm:$0xff] %vm14, %v12693
  %12727 = vst.msk [vmem:[%s12720 + $0x30] sm:$0xff] %vm14, %v12694
  %12728 = vst.msk [vmem:[%s12720 + $0x38] sm:$0xff] %vm14, %v12695
  %12729 = vst.msk [vmem:[%s12720 + $0x40] sm:$0xff] %vm14, %v12696
  %12730 = vst.msk [vmem:[%s12720 + $0x48] sm:$0xff] %vm14, %v12697
  %12731 = vst.msk [vmem:[%s12720 + $0x50] sm:$0xff] %vm14, %v12698
  %12732 = vst.msk [vmem:[%s12720 + $0x58] sm:$0xff] %vm14, %v12699
  %12733 = vst.msk [vmem:[%s12720 + $0x60] sm:$0xff] %vm14, %v12700
  %12734 = vst.msk [vmem:[%s12720 + $0x68] sm:$0xff] %vm14, %v12701
  %12735 = vst.msk [vmem:[%s12720 + $0x70] sm:$0xff] %vm14, %v12702
  %12736 = vst.msk [vmem:[%s12720 + $0x78] sm:$0xff] %vm14, %v12703
  %12737 = vst.msk [vmem:[%s12720 + $0x80] sm:$0xff] %vm14, %v12704
  %12738 = vst.msk [vmem:[%s12720 + $0x88] sm:$0xff] %vm14, %v12705
  %12739 = vst.msk [vmem:[%s12720 + $0x90] sm:$0xff] %vm14, %v12706
  %12740 = vst.msk [vmem:[%s12720 + $0x98] sm:$0xff] %vm14, %v12707
  %12741 = vst.msk [vmem:[%s12720 + $0xa0] sm:$0xff] %vm14, %v12708
  %12742 = vst.msk [vmem:[%s12720 + $0xa8] sm:$0xff] %vm14, %v12709
  %12743 = vst.msk [vmem:[%s12720 + $0xb0] sm:$0xff] %vm14, %v12710
  %12744 = vst.msk [vmem:[%s12720 + $0xb8] sm:$0xff] %vm14, %v12711
  %12745 = vst.msk [vmem:[%s12720 + $0xc0] sm:$0xff] %vm14, %v12712
  %12746 = vst.msk [vmem:[%s12720 + $0xc8] sm:$0xff] %vm14, %v12713
  %12747 = vst.msk [vmem:[%s12720 + $0xd0] sm:$0xff] %vm14, %v12714
  %12748 = vst.msk [vmem:[%s12720 + $0xd8] sm:$0xff] %vm14, %v12715
  %12749 = vst.msk [vmem:[%s12720 + $0xe0] sm:$0xff] %vm14, %v12716
  %12750 = vst.msk [vmem:[%s12720 + $0xe8] sm:$0xff] %vm14, %v12717
  %12751 = vst.msk [vmem:[%s12720 + $0xf0] sm:$0xff] %vm14, %v12718
  %12752 = vst.msk [vmem:[%s12720 + $0xf8] sm:$0xff] %vm14, %v12719
  // Predicated region
  $region14: #{residual_block.1} parent=0 // pred_check
    _
  $region15: #{residual_block.1} parent=0 // pred_check_branch
    %12754 = sbr.rel (0) target = $region17
  $region16: #{residual_block.1} parent=0 // pred_region
    _
  $region17: #{residual_block.1} parent=0 // pred_fallthru
    _
  // Predicated region
  $region18: #{residual_block.1} parent=0 // pred_check
    _
  $region19: #{residual_block.1} parent=0 // pred_check_branch
    %12756 = sbr.rel (0) target = $region21
  $region20: #{residual_block.1} parent=0 // pred_region
    _
  $region21: #{residual_block.1} parent=0 // pred_fallthru
    _

</llo_original>
